<compile_context>
chip_gen: v7x
topology: tpu7x:2x2x1
jax: 0.10.0
libtpu: 0.0.40
codegen_flags: <defaults>
</compile_context>

<pallas_src>
import jax
import jax.numpy as jnp
from jax.experimental import pallas as pl
from jax.experimental.pallas import tpu as pltpu

_LPAD = 8  # sublane-tile-aligned left padding used inside the padded VMEM scratches


# ----------------------------------------------------------------------------
# Kernel 1: fused conv1+BN1+ReLU+pool  ->  conv2+BN2+ReLU+pool   (one batch elem)
# ----------------------------------------------------------------------------
def _fused_conv_kernel(x_ref, w1_ref, s1_ref, c1_ref, w2_ref, s2_ref, c2_ref,
                       o_ref, xp_ref, a1_ref, v1_ref, v2_ref, o2_ref):
    # x_ref  : (1, H, W, 1)            NHWC input (one batch element), f32
    # w1_ref : (3, 3, 1, C1)           conv1 weights (HWIO), f32
    # s1_ref, c1_ref : (1, C1)         folded BatchNorm1 scale / bias
    # w2_ref : (3, 3, C1, C2)          conv2 weights (HWIO), bf16
    # s2_ref, c2_ref : (1, C2)         folded BatchNorm2 scale / bias
    # o_ref  : (1, H//4, W//4, C2)     pooled conv2 output, bf16
    # xp_ref : (H+2, LPAD+W+1, 1)      zero-padded layer-1 input  (VMEM scratch)
    # a1_ref : (H//2+2, LPAD+W//2+1, C1) zero-padded pooled layer-1 activations
    # v1_ref : (W, C1)   scratch (one H-pooled conv1 row pair)
    # v2_ref : (W//2, C2) scratch (one H-pooled conv2 row pair)
    # o2_ref : (H//4, W//4, C2) f32 accumulator for the pooled conv2 output
    H = x_ref.shape[1]
    W = x_ref.shape[2]
    C1 = w1_ref.shape[3]
    C2 = w2_ref.shape[3]
    Ho1, Wo1 = H // 2, W // 2
    Ho2, Wo2 = Ho1 // 2, Wo1 // 2

    s1 = s1_ref[...]
    c1 = c1_ref[...]
    s2 = s2_ref[...]
    c2 = c2_ref[...]

    # ---- stage 0: in-kernel zero padding (fused; no jnp.pad / HBM round trip) ----
    xp_ref[...] = jnp.zeros_like(xp_ref)
    a1_ref[...] = jnp.zeros_like(a1_ref)      # border rows/cols double as conv2 padding
    for i in range(H):                        # copy interior row by row (bounded live range)
        xp_ref[1 + i, pl.ds(_LPAD, W), :] = x_ref[0, i]

    # ---- stage 1: conv1 (Cin=1 -> VPU broadcast) + BN + ReLU + 2x2 max-pool ----
    def conv1_row(h):
        acc = jnp.zeros((W, C1), jnp.float32)
        for dy in range(3):
            for dx in range(3):
                col = xp_ref[h + dy, pl.ds(_LPAD - 1 + dx, W), :]   # (W, 1)
                acc = acc + col * w1_ref[dy, dx]                    # (W,1)*(1,C1)
        return jnp.maximum(acc * s1 + c1, 0.0)

    @pl.loop(0, Ho1)
    def _(ph):
        v1_ref[...] = jnp.maximum(conv1_row(2 * ph), conv1_row(2 * ph + 1))   # pool H
        a1_ref[1 + ph, pl.ds(_LPAD, Wo1), :] = jnp.maximum(                   # pool W
            v1_ref[pl.ds(0, Wo1, 2), :], v1_ref[pl.ds(1, Wo1, 2), :])

    # ---- stage 2: conv2 (bf16 MXU matmuls, f32 accumulate) + BN + ReLU + pool ----
    def conv2_row(h):
        acc = jnp.zeros((Wo1, C2), jnp.float32)
        for dy in range(3):
            for dx in range(3):
                patch = a1_ref[h + dy, pl.ds(_LPAD - 1 + dx, Wo1), :]   # (Wo1, C1)
                acc = acc + jnp.dot(patch.astype(jnp.bfloat16), w2_ref[dy, dx],
                                    preferred_element_type=jnp.float32)
        return jnp.maximum(acc * s2 + c2, 0.0)

    @pl.loop(0, Ho2)
    def _(ph):
        v2_ref[...] = jnp.maximum(conv2_row(2 * ph), conv2_row(2 * ph + 1))   # pool H
        o2_ref[ph] = jnp.maximum(                                             # pool W
            v2_ref[pl.ds(0, Wo2, 2), :], v2_ref[pl.ds(1, Wo2, 2), :])

    # single writeback of the whole pooled block (bf16, fed straight into fc1)
    o_ref[0] = o2_ref[...].astype(o_ref.dtype)


def conv_block(x_nhwc, w1, s1, c1, w2, s2, c2):
    N, H, W, _ = x_nhwc.shape
    C1 = w1.shape[-1]
    C2 = w2.shape[-1]
    Ho1, Wo1 = H // 2, W // 2
    Ho2, Wo2 = Ho1 // 2, Wo1 // 2
    return pl.pallas_call(
        _fused_conv_kernel,
        out_shape=jax.ShapeDtypeStruct((N, Ho2, Wo2, C2), jnp.bfloat16),
        grid_spec=pltpu.PrefetchScalarGridSpec(
            num_scalar_prefetch=0,
            grid=(N,),
            in_specs=[
                pl.BlockSpec((1, H, W, 1), lambda n: (n, 0, 0, 0)),
                pl.BlockSpec((3, 3, 1, C1), lambda n: (0, 0, 0, 0)),
                pl.BlockSpec((1, C1), lambda n: (0, 0)),
                pl.BlockSpec((1, C1), lambda n: (0, 0)),
                pl.BlockSpec((3, 3, C1, C2), lambda n: (0, 0, 0, 0)),
                pl.BlockSpec((1, C2), lambda n: (0, 0)),
                pl.BlockSpec((1, C2), lambda n: (0, 0)),
            ],
            out_specs=pl.BlockSpec((1, Ho2, Wo2, C2), lambda n: (n, 0, 0, 0)),
            scratch_shapes=[
                pltpu.VMEM((H + 2, _LPAD + W + 1, 1), jnp.float32),
                pltpu.VMEM((Ho1 + 2, _LPAD + Wo1 + 1, C1), jnp.float32),
                pltpu.VMEM((W, C1), jnp.float32),
                pltpu.VMEM((Wo1, C2), jnp.float32),
                pltpu.VMEM((Ho2, Wo2, C2), jnp.float32),
            ],
        ),
        compiler_params=pltpu.CompilerParams(
            dimension_semantics=("parallel",),   # batch elems independent -> both TCs on v7x
        ),
    )(x_nhwc, w1, s1, c1, w2, s2, c2)


# ----------------------------------------------------------------------------
# Kernel 2: K-tiled MLP head  (fc1 + ReLU + [dropout=identity] + fc2)
# ----------------------------------------------------------------------------
def _mlp_kernel(x_ref, w1_ref, b1_ref, w2_ref, b2_ref, o_ref, acc_ref):
    k = pl.program_id(0)

    @pl.when(k == 0)
    def _():
        acc_ref[...] = jnp.zeros_like(acc_ref)

    # bf16 x bf16 -> f32 accumulate; w1 chunk k+1 is DMA'd while this runs.
    acc_ref[...] += jnp.dot(x_ref[...], w1_ref[...],
                            preferred_element_type=jnp.float32)

    @pl.when(k == pl.num_programs(0) - 1)
    def _():
        h = jnp.maximum(acc_ref[...] + b1_ref[...], 0.0)
        # TODO(synk): Dropout(p=0.5) is inference-mode identity; training-mode RNG mask not implemented.
        o_ref[...] = (jnp.dot(h, w2_ref[...], preferred_element_type=jnp.float32)
                      + b2_ref[...]).astype(o_ref.dtype)


def mlp_head(x, w1, b1, w2, b2, *, block_k=2048):
    N, F = x.shape
    Hd = w1.shape[1]
    C = w2.shape[1]
    block_k = min(block_k, F)
    assert F % block_k == 0
    return pl.pallas_call(
        _mlp_kernel,
        out_shape=jax.ShapeDtypeStruct((N, C), jnp.float32),
        grid_spec=pltpu.PrefetchScalarGridSpec(
            num_scalar_prefetch=0,
            grid=(F // block_k,),
            in_specs=[
                pl.BlockSpec((N, block_k), lambda k: (0, k)),
                pl.BlockSpec((block_k, Hd), lambda k: (k, 0)),
                pl.BlockSpec((1, Hd), lambda k: (0, 0)),
                pl.BlockSpec((Hd, C), lambda k: (0, 0)),
                pl.BlockSpec((1, C), lambda k: (0, 0)),
            ],
            out_specs=pl.BlockSpec((N, C), lambda k: (0, 0)),
            scratch_shapes=[pltpu.VMEM((N, Hd), jnp.float32)],
        ),
        compiler_params=pltpu.CompilerParams(
            dimension_semantics=("arbitrary",),   # K reduction axis
        ),
    )(x, w1, b1, w2, b2)


# ----------------------------------------------------------------------------
# One-time parameter prep (outside the forward path): fold BN, cast big weights
# to bf16, permute fc1 rows from torch NCHW-flatten order to NHWC-flatten order.
# ----------------------------------------------------------------------------
def prepare_params(p, *, n_mels, time, eps=1e-5):
    s1 = p["g1"] / jnp.sqrt(p["rv1"] + eps)
    c1 = p["be1"] + (p["cb1"] - p["rm1"]) * s1
    s2 = p["g2"] / jnp.sqrt(p["rv2"] + eps)
    c2 = p["be2"] + (p["cb2"] - p["rm2"]) * s2

    ho2, wo2 = n_mels // 4, time // 4
    c2n = p["w2"].shape[-1]
    nhid = p["fw1"].shape[1]
    # torch flatten index is c*ho2*wo2 + h*wo2 + w; kernel flattens NHWC (h, w, c).
    fw1 = (p["fw1"].reshape(c2n, ho2, wo2, nhid)
                   .transpose(1, 2, 0, 3)
                   .reshape(-1, nhid))
    return dict(
        w1=p["w1"],
        s1=s1.reshape(1, -1), c1=c1.reshape(1, -1),
        w2=p["w2"].astype(jnp.bfloat16),
        s2=s2.reshape(1, -1), c2=c2.reshape(1, -1),
        fw1=fw1.astype(jnp.bfloat16), fb1=p["fb1"].reshape(1, -1),
        fw2=p["fw2"], fb2=p["fb2"].reshape(1, -1),
    )


# ----------------------------------------------------------------------------
# Full forward pass: reshape (free) -> fused conv kernel -> reshape (free) -> MLP
# ----------------------------------------------------------------------------
@jax.jit
def audio_cnn_forward(x_nchw, q):
    N, _, H, W = x_nchw.shape
    x = x_nchw.reshape(N, H, W, 1)           # NCHW with C==1 -> NHWC (pure reshape)
    y = conv_block(x, q["w1"], q["s1"], q["c1"], q["w2"], q["s2"], q["c2"])
    y = y.reshape(N, -1)                     # NHWC flatten (fc1 weight pre-permuted)
    return mlp_head(y, q["fw1"], q["fb1"], q["fw2"], q["fb2"])


# ----------------------------------------------------------------------------
# Deterministic synthetic parameters + full-precision JAX reference
# ----------------------------------------------------------------------------
def init_params(key, n_mels, time, n_classes):
    ks = jax.random.split(key, 16)
    nrm = lambda k, shp, s: jax.random.normal(k, shp, jnp.float32) * s
    p = {}
    p["w1"] = nrm(ks[0], (3, 3, 1, 32), 0.2)        # conv1 weights (HWIO)
    p["cb1"] = nrm(ks[1], (32,), 0.05)
    p["g1"] = 1.0 + 0.1 * jax.random.normal(ks[2], (32,), jnp.float32)
    p["be1"] = nrm(ks[3], (32,), 0.05)
    p["rm1"] = nrm(ks[4], (32,), 0.05)
    p["rv1"] = 1.0 + 0.1 * jax.random.uniform(ks[5], (32,), jnp.float32)
    p["w2"] = nrm(ks[6], (3, 3, 32, 64), 0.05)      # conv2 weights (HWIO)
    p["cb2"] = nrm(ks[7], (64,), 0.05)
    p["g2"] = 1.0 + 0.1 * jax.random.normal(ks[8], (64,), jnp.float32)
    p["be2"] = nrm(ks[9], (64,), 0.05)
    p["rm2"] = nrm(ks[10], (64,), 0.05)
    p["rv2"] = 1.0 + 0.1 * jax.random.uniform(ks[11], (64,), jnp.float32)
    feat = 64 * (n_mels // 4) * (time // 4)
    p["fw1"] = nrm(ks[12], (feat, 128), 0.02)       # fc1 (in, out)
    p["fb1"] = nrm(ks[13], (128,), 0.02)
    p["fw2"] = nrm(ks[14], (128, n_classes), 0.05)  # fc2 (in, out)
    p["fb2"] = nrm(ks[15], (n_classes,), 0.05)
    return p


def reference_forward(x_nchw, p):
    eps = 1e-5
    hi = jax.lax.Precision.HIGHEST

    def block(x, w, cb, g, be, rm, rv):
        y = jax.lax.conv_general_dilated(
            x, w, window_strides=(1, 1), padding=((1, 1), (1, 1)),
            dimension_numbers=("NHWC", "HWIO", "NHWC"), precision=hi) + cb
        y = (y - rm) / jnp.sqrt(rv + eps) * g + be
        y = jnp.maximum(y, 0.0)
        return jax.lax.reduce_window(y, -jnp.inf, jax.lax.max,
                                     (1, 2, 2, 1), (1, 2, 2, 1), "VALID")

    x = jnp.transpose(x_nchw, (0, 2, 3, 1))
    x = block(x, p["w1"], p["cb1"], p["g1"], p["be1"], p["rm1"], p["rv1"])
    x = block(x, p["w2"], p["cb2"], p["g2"], p["be2"], p["rm2"], p["rv2"])
    N = x.shape[0]
    x = jnp.transpose(x, (0, 3, 1, 2)).reshape(N, -1)            # torch-order flatten
    h = jnp.maximum(jnp.dot(x, p["fw1"], precision=hi) + p["fb1"], 0.0)
    return jnp.dot(h, p["fw2"], precision=hi) + p["fb2"]


if __name__ == "__main__":
    key = jax.random.PRNGKey(0)
    kx, kp = jax.random.split(key)
    # AudioCNN(n_mels=16) applied to a (N, 1, n_mels, 128) mel-spectrogram:
    # two stride-2 pools give time//4 == 32, matching fc1's `... * 32` factor.
    N, n_mels, T, n_classes = 2, 16, 128, 10
    x = jax.random.normal(kx, (N, 1, n_mels, T), jnp.float32)
    params = init_params(kp, n_mels=n_mels, time=T, n_classes=n_classes)
    prepped = prepare_params(params, n_mels=n_mels, time=T)

    out = jax.block_until_ready(audio_cnn_forward(x, prepped))
    ref = reference_forward(x, params)

    assert out.shape == (N, n_classes), out.shape
    err = float(jnp.max(jnp.abs(out - ref)))
    assert jnp.allclose(out, ref, atol=2e-2, rtol=2e-2), err
    print("KERNEL_OK")
</pallas_src>

<mosaic_0001>
module attributes {stable_mosaic.version = 11 : i64} {
  func.func @_fused_conv_kernel(%arg0: i32, %arg1: memref<1x16x128x1xf32, #tpu.memory_space<vmem>>, %arg2: memref<3x3x1x32xf32, #tpu.memory_space<vmem>>, %arg3: memref<1x32xf32, #tpu.memory_space<vmem>>, %arg4: memref<1x32xf32, #tpu.memory_space<vmem>>, %arg5: memref<3x3x32x64xbf16, #tpu.memory_space<vmem>>, %arg6: memref<1x64xf32, #tpu.memory_space<vmem>>, %arg7: memref<1x64xf32, #tpu.memory_space<vmem>>, %arg8: memref<1x4x32x64xbf16, #tpu.memory_space<vmem>>, %arg9: memref<18x137x1xf32, #tpu.memory_space<vmem>>, %arg10: memref<10x73x32xf32, #tpu.memory_space<vmem>>, %arg11: memref<128x32xf32, #tpu.memory_space<vmem>>, %arg12: memref<64x64xf32, #tpu.memory_space<vmem>>, %arg13: memref<4x32x64xf32, #tpu.memory_space<vmem>>) attributes {dimension_semantics = [#tpu.dimension_semantics<parallel>], iteration_bounds = array<i64: 2>, scalar_prefetch = 0 : i64, scratch_operands = 5 : i64, tpu.core_type = #tpu.core_type<tc>, window_params = [{transform_indices = @transform_0, window_bounds = array<i64: 1, 16, 128, 1>}, {pipeline_mode = #tpu.pipeline_mode<synchronous>, transform_indices = @transform_1, window_bounds = array<i64: 3, 3, 1, 32>}, {pipeline_mode = #tpu.pipeline_mode<synchronous>, transform_indices = @transform_2, window_bounds = array<i64: 1, 32>}, {pipeline_mode = #tpu.pipeline_mode<synchronous>, transform_indices = @transform_3, window_bounds = array<i64: 1, 32>}, {pipeline_mode = #tpu.pipeline_mode<synchronous>, transform_indices = @transform_4, window_bounds = array<i64: 3, 3, 32, 64>}, {pipeline_mode = #tpu.pipeline_mode<synchronous>, transform_indices = @transform_5, window_bounds = array<i64: 1, 64>}, {pipeline_mode = #tpu.pipeline_mode<synchronous>, transform_indices = @transform_6, window_bounds = array<i64: 1, 64>}, {transform_indices = @transform_7, window_bounds = array<i64: 1, 4, 32, 64>}]} {
    %c0 = arith.constant 0 : index
    %c0_0 = arith.constant 0 : index
    %0 = vector.load %arg3[%c0, %c0_0] : memref<1x32xf32, #tpu.memory_space<vmem>>, vector<1x32xf32>
    %c0_1 = arith.constant 0 : index
    %c0_2 = arith.constant 0 : index
    %1 = vector.load %arg4[%c0_1, %c0_2] : memref<1x32xf32, #tpu.memory_space<vmem>>, vector<1x32xf32>
    %c0_3 = arith.constant 0 : index
    %c0_4 = arith.constant 0 : index
    %2 = vector.load %arg6[%c0_3, %c0_4] : memref<1x64xf32, #tpu.memory_space<vmem>>, vector<1x64xf32>
    %c0_5 = arith.constant 0 : index
    %c0_6 = arith.constant 0 : index
    %3 = vector.load %arg7[%c0_5, %c0_6] : memref<1x64xf32, #tpu.memory_space<vmem>>, vector<1x64xf32>
    %cst = arith.constant 0.000000e+00 : f32
    %4 = vector.broadcast %cst : f32 to vector<18x137x1xf32>
    %c0_7 = arith.constant 0 : index
    %c0_8 = arith.constant 0 : index
    %c0_9 = arith.constant 0 : index
    %5 = vector.load %arg9[%c0_7, %c0_8, %c0_9] : memref<18x137x1xf32, #tpu.memory_space<vmem>>, vector<18x137x1xf32>
    tpu.vector_store %arg9[%c0_7, %c0_8, %c0_9], %4 {strides = array<i32>} : memref<18x137x1xf32, #tpu.memory_space<vmem>>, vector<18x137x1xf32>,
    %cst_10 = arith.constant 0.000000e+00 : f32
    %6 = vector.broadcast %cst_10 : f32 to vector<10x73x32xf32>
    %c0_11 = arith.constant 0 : index
    %c0_12 = arith.constant 0 : index
    %c0_13 = arith.constant 0 : index
    %7 = vector.load %arg10[%c0_11, %c0_12, %c0_13] : memref<10x73x32xf32, #tpu.memory_space<vmem>>, vector<10x73x32xf32>
    tpu.vector_store %arg10[%c0_11, %c0_12, %c0_13], %6 {strides = array<i32>} : memref<10x73x32xf32, #tpu.memory_space<vmem>>, vector<10x73x32xf32>,
    %c0_14 = arith.constant 0 : index
    %c0_15 = arith.constant 0 : index
    %c0_16 = arith.constant 0 : index
    %c0_17 = arith.constant 0 : index
    %8 = vector.load %arg1[%c0_14, %c0_15, %c0_16, %c0_17] : memref<1x16x128x1xf32, #tpu.memory_space<vmem>>, vector<1x1x128x1xf32>
    %9 = vector.shape_cast %8 : vector<1x1x128x1xf32> to vector<128x1xf32>
    %c1 = arith.constant 1 : index
    %c8 = arith.constant 8 : index
    %c0_18 = arith.constant 0 : index
    %10 = vector.load %arg9[%c1, %c8, %c0_18] : memref<18x137x1xf32, #tpu.memory_space<vmem>>, vector<1x128x1xf32>
    %11 = vector.shape_cast %10 : vector<1x128x1xf32> to vector<128x1xf32>
    %12 = vector.shape_cast %9 : vector<128x1xf32> to vector<1x128x1xf32>
    tpu.vector_store %arg9[%c1, %c8, %c0_18], %12 {strides = array<i32>} : memref<18x137x1xf32, #tpu.memory_space<vmem>>, vector<1x128x1xf32>,
    %c0_19 = arith.constant 0 : index
    %c1_20 = arith.constant 1 : index
    %c0_21 = arith.constant 0 : index
    %c0_22 = arith.constant 0 : index
    %13 = vector.load %arg1[%c0_19, %c1_20, %c0_21, %c0_22] : memref<1x16x128x1xf32, #tpu.memory_space<vmem>>, vector<1x1x128x1xf32>
    %14 = vector.shape_cast %13 : vector<1x1x128x1xf32> to vector<128x1xf32>
    %c2 = arith.constant 2 : index
    %c8_23 = arith.constant 8 : index
    %c0_24 = arith.constant 0 : index
    %15 = vector.load %arg9[%c2, %c8_23, %c0_24] : memref<18x137x1xf32, #tpu.memory_space<vmem>>, vector<1x128x1xf32>
    %16 = vector.shape_cast %15 : vector<1x128x1xf32> to vector<128x1xf32>
    %17 = vector.shape_cast %14 : vector<128x1xf32> to vector<1x128x1xf32>
    tpu.vector_store %arg9[%c2, %c8_23, %c0_24], %17 {strides = array<i32>} : memref<18x137x1xf32, #tpu.memory_space<vmem>>, vector<1x128x1xf32>,
    %c0_25 = arith.constant 0 : index
    %c2_26 = arith.constant 2 : index
    %c0_27 = arith.constant 0 : index
    %c0_28 = arith.constant 0 : index
    %18 = vector.load %arg1[%c0_25, %c2_26, %c0_27, %c0_28] : memref<1x16x128x1xf32, #tpu.memory_space<vmem>>, vector<1x1x128x1xf32>
    %19 = vector.shape_cast %18 : vector<1x1x128x1xf32> to vector<128x1xf32>
    %c3 = arith.constant 3 : index
    %c8_29 = arith.constant 8 : index
    %c0_30 = arith.constant 0 : index
    %20 = vector.load %arg9[%c3, %c8_29, %c0_30] : memref<18x137x1xf32, #tpu.memory_space<vmem>>, vector<1x128x1xf32>
    %21 = vector.shape_cast %20 : vector<1x128x1xf32> to vector<128x1xf32>
    %22 = vector.shape_cast %19 : vector<128x1xf32> to vector<1x128x1xf32>
    tpu.vector_store %arg9[%c3, %c8_29, %c0_30], %22 {strides = array<i32>} : memref<18x137x1xf32, #tpu.memory_space<vmem>>, vector<1x128x1xf32>,
    %c0_31 = arith.constant 0 : index
    %c3_32 = arith.constant 3 : index
    %c0_33 = arith.constant 0 : index
    %c0_34 = arith.constant 0 : index
    %23 = vector.load %arg1[%c0_31, %c3_32, %c0_33, %c0_34] : memref<1x16x128x1xf32, #tpu.memory_space<vmem>>, vector<1x1x128x1xf32>
    %24 = vector.shape_cast %23 : vector<1x1x128x1xf32> to vector<128x1xf32>
    %c4 = arith.constant 4 : index
    %c8_35 = arith.constant 8 : index
    %c0_36 = arith.constant 0 : index
    %25 = vector.load %arg9[%c4, %c8_35, %c0_36] : memref<18x137x1xf32, #tpu.memory_space<vmem>>, vector<1x128x1xf32>
    %26 = vector.shape_cast %25 : vector<1x128x1xf32> to vector<128x1xf32>
    %27 = vector.shape_cast %24 : vector<128x1xf32> to vector<1x128x1xf32>
    tpu.vector_store %arg9[%c4, %c8_35, %c0_36], %27 {strides = array<i32>} : memref<18x137x1xf32, #tpu.memory_space<vmem>>, vector<1x128x1xf32>,
    %c0_37 = arith.constant 0 : index
    %c4_38 = arith.constant 4 : index
    %c0_39 = arith.constant 0 : index
    %c0_40 = arith.constant 0 : index
    %28 = vector.load %arg1[%c0_37, %c4_38, %c0_39, %c0_40] : memref<1x16x128x1xf32, #tpu.memory_space<vmem>>, vector<1x1x128x1xf32>
    %29 = vector.shape_cast %28 : vector<1x1x128x1xf32> to vector<128x1xf32>
    %c5 = arith.constant 5 : index
    %c8_41 = arith.constant 8 : index
    %c0_42 = arith.constant 0 : index
    %30 = vector.load %arg9[%c5, %c8_41, %c0_42] : memref<18x137x1xf32, #tpu.memory_space<vmem>>, vector<1x128x1xf32>
    %31 = vector.shape_cast %30 : vector<1x128x1xf32> to vector<128x1xf32>
    %32 = vector.shape_cast %29 : vector<128x1xf32> to vector<1x128x1xf32>
    tpu.vector_store %arg9[%c5, %c8_41, %c0_42], %32 {strides = array<i32>} : memref<18x137x1xf32, #tpu.memory_space<vmem>>, vector<1x128x1xf32>,
    %c0_43 = arith.constant 0 : index
    %c5_44 = arith.constant 5 : index
    %c0_45 = arith.constant 0 : index
    %c0_46 = arith.constant 0 : index
    %33 = vector.load %arg1[%c0_43, %c5_44, %c0_45, %c0_46] : memref<1x16x128x1xf32, #tpu.memory_space<vmem>>, vector<1x1x128x1xf32>
    %34 = vector.shape_cast %33 : vector<1x1x128x1xf32> to vector<128x1xf32>
    %c6 = arith.constant 6 : index
    %c8_47 = arith.constant 8 : index
    %c0_48 = arith.constant 0 : index
    %35 = vector.load %arg9[%c6, %c8_47, %c0_48] : memref<18x137x1xf32, #tpu.memory_space<vmem>>, vector<1x128x1xf32>
    %36 = vector.shape_cast %35 : vector<1x128x1xf32> to vector<128x1xf32>
    %37 = vector.shape_cast %34 : vector<128x1xf32> to vector<1x128x1xf32>
    tpu.vector_store %arg9[%c6, %c8_47, %c0_48], %37 {strides = array<i32>} : memref<18x137x1xf32, #tpu.memory_space<vmem>>, vector<1x128x1xf32>,
    %c0_49 = arith.constant 0 : index
    %c6_50 = arith.constant 6 : index
    %c0_51 = arith.constant 0 : index
    %c0_52 = arith.constant 0 : index
    %38 = vector.load %arg1[%c0_49, %c6_50, %c0_51, %c0_52] : memref<1x16x128x1xf32, #tpu.memory_space<vmem>>, vector<1x1x128x1xf32>
    %39 = vector.shape_cast %38 : vector<1x1x128x1xf32> to vector<128x1xf32>
    %c7 = arith.constant 7 : index
    %c8_53 = arith.constant 8 : index
    %c0_54 = arith.constant 0 : index
    %40 = vector.load %arg9[%c7, %c8_53, %c0_54] : memref<18x137x1xf32, #tpu.memory_space<vmem>>, vector<1x128x1xf32>
    %41 = vector.shape_cast %40 : vector<1x128x1xf32> to vector<128x1xf32>
    %42 = vector.shape_cast %39 : vector<128x1xf32> to vector<1x128x1xf32>
    tpu.vector_store %arg9[%c7, %c8_53, %c0_54], %42 {strides = array<i32>} : memref<18x137x1xf32, #tpu.memory_space<vmem>>, vector<1x128x1xf32>,
    %c0_55 = arith.constant 0 : index
    %c7_56 = arith.constant 7 : index
    %c0_57 = arith.constant 0 : index
    %c0_58 = arith.constant 0 : index
    %43 = vector.load %arg1[%c0_55, %c7_56, %c0_57, %c0_58] : memref<1x16x128x1xf32, #tpu.memory_space<vmem>>, vector<1x1x128x1xf32>
    %44 = vector.shape_cast %43 : vector<1x1x128x1xf32> to vector<128x1xf32>
    %c8_59 = arith.constant 8 : index
    %c8_60 = arith.constant 8 : index
    %c0_61 = arith.constant 0 : index
    %45 = vector.load %arg9[%c8_59, %c8_60, %c0_61] : memref<18x137x1xf32, #tpu.memory_space<vmem>>, vector<1x128x1xf32>
    %46 = vector.shape_cast %45 : vector<1x128x1xf32> to vector<128x1xf32>
    %47 = vector.shape_cast %44 : vector<128x1xf32> to vector<1x128x1xf32>
    tpu.vector_store %arg9[%c8_59, %c8_60, %c0_61], %47 {strides = array<i32>} : memref<18x137x1xf32, #tpu.memory_space<vmem>>, vector<1x128x1xf32>,
    %c0_62 = arith.constant 0 : index
    %c8_63 = arith.constant 8 : index
    %c0_64 = arith.constant 0 : index
    %c0_65 = arith.constant 0 : index
    %48 = vector.load %arg1[%c0_62, %c8_63, %c0_64, %c0_65] : memref<1x16x128x1xf32, #tpu.memory_space<vmem>>, vector<1x1x128x1xf32>
    %49 = vector.shape_cast %48 : vector<1x1x128x1xf32> to vector<128x1xf32>
    %c9 = arith.constant 9 : index
    %c8_66 = arith.constant 8 : index
    %c0_67 = arith.constant 0 : index
    %50 = vector.load %arg9[%c9, %c8_66, %c0_67] : memref<18x137x1xf32, #tpu.memory_space<vmem>>, vector<1x128x1xf32>
    %51 = vector.shape_cast %50 : vector<1x128x1xf32> to vector<128x1xf32>
    %52 = vector.shape_cast %49 : vector<128x1xf32> to vector<1x128x1xf32>
    tpu.vector_store %arg9[%c9, %c8_66, %c0_67], %52 {strides = array<i32>} : memref<18x137x1xf32, #tpu.memory_space<vmem>>, vector<1x128x1xf32>,
    %c0_68 = arith.constant 0 : index
    %c9_69 = arith.constant 9 : index
    %c0_70 = arith.constant 0 : index
    %c0_71 = arith.constant 0 : index
    %53 = vector.load %arg1[%c0_68, %c9_69, %c0_70, %c0_71] : memref<1x16x128x1xf32, #tpu.memory_space<vmem>>, vector<1x1x128x1xf32>
    %54 = vector.shape_cast %53 : vector<1x1x128x1xf32> to vector<128x1xf32>
    %c10 = arith.constant 10 : index
    %c8_72 = arith.constant 8 : index
    %c0_73 = arith.constant 0 : index
    %55 = vector.load %arg9[%c10, %c8_72, %c0_73] : memref<18x137x1xf32, #tpu.memory_space<vmem>>, vector<1x128x1xf32>
    %56 = vector.shape_cast %55 : vector<1x128x1xf32> to vector<128x1xf32>
    %57 = vector.shape_cast %54 : vector<128x1xf32> to vector<1x128x1xf32>
    tpu.vector_store %arg9[%c10, %c8_72, %c0_73], %57 {strides = array<i32>} : memref<18x137x1xf32, #tpu.memory_space<vmem>>, vector<1x128x1xf32>,
    %c0_74 = arith.constant 0 : index
    %c10_75 = arith.constant 10 : index
    %c0_76 = arith.constant 0 : index
    %c0_77 = arith.constant 0 : index
    %58 = vector.load %arg1[%c0_74, %c10_75, %c0_76, %c0_77] : memref<1x16x128x1xf32, #tpu.memory_space<vmem>>, vector<1x1x128x1xf32>
    %59 = vector.shape_cast %58 : vector<1x1x128x1xf32> to vector<128x1xf32>
    %c11 = arith.constant 11 : index
    %c8_78 = arith.constant 8 : index
    %c0_79 = arith.constant 0 : index
    %60 = vector.load %arg9[%c11, %c8_78, %c0_79] : memref<18x137x1xf32, #tpu.memory_space<vmem>>, vector<1x128x1xf32>
    %61 = vector.shape_cast %60 : vector<1x128x1xf32> to vector<128x1xf32>
    %62 = vector.shape_cast %59 : vector<128x1xf32> to vector<1x128x1xf32>
    tpu.vector_store %arg9[%c11, %c8_78, %c0_79], %62 {strides = array<i32>} : memref<18x137x1xf32, #tpu.memory_space<vmem>>, vector<1x128x1xf32>,
    %c0_80 = arith.constant 0 : index
    %c11_81 = arith.constant 11 : index
    %c0_82 = arith.constant 0 : index
    %c0_83 = arith.constant 0 : index
    %63 = vector.load %arg1[%c0_80, %c11_81, %c0_82, %c0_83] : memref<1x16x128x1xf32, #tpu.memory_space<vmem>>, vector<1x1x128x1xf32>
    %64 = vector.shape_cast %63 : vector<1x1x128x1xf32> to vector<128x1xf32>
    %c12 = arith.constant 12 : index
    %c8_84 = arith.constant 8 : index
    %c0_85 = arith.constant 0 : index
    %65 = vector.load %arg9[%c12, %c8_84, %c0_85] : memref<18x137x1xf32, #tpu.memory_space<vmem>>, vector<1x128x1xf32>
    %66 = vector.shape_cast %65 : vector<1x128x1xf32> to vector<128x1xf32>
    %67 = vector.shape_cast %64 : vector<128x1xf32> to vector<1x128x1xf32>
    tpu.vector_store %arg9[%c12, %c8_84, %c0_85], %67 {strides = array<i32>} : memref<18x137x1xf32, #tpu.memory_space<vmem>>, vector<1x128x1xf32>,
    %c0_86 = arith.constant 0 : index
    %c12_87 = arith.constant 12 : index
    %c0_88 = arith.constant 0 : index
    %c0_89 = arith.constant 0 : index
    %68 = vector.load %arg1[%c0_86, %c12_87, %c0_88, %c0_89] : memref<1x16x128x1xf32, #tpu.memory_space<vmem>>, vector<1x1x128x1xf32>
    %69 = vector.shape_cast %68 : vector<1x1x128x1xf32> to vector<128x1xf32>
    %c13 = arith.constant 13 : index
    %c8_90 = arith.constant 8 : index
    %c0_91 = arith.constant 0 : index
    %70 = vector.load %arg9[%c13, %c8_90, %c0_91] : memref<18x137x1xf32, #tpu.memory_space<vmem>>, vector<1x128x1xf32>
    %71 = vector.shape_cast %70 : vector<1x128x1xf32> to vector<128x1xf32>
    %72 = vector.shape_cast %69 : vector<128x1xf32> to vector<1x128x1xf32>
    tpu.vector_store %arg9[%c13, %c8_90, %c0_91], %72 {strides = array<i32>} : memref<18x137x1xf32, #tpu.memory_space<vmem>>, vector<1x128x1xf32>,
    %c0_92 = arith.constant 0 : index
    %c13_93 = arith.constant 13 : index
    %c0_94 = arith.constant 0 : index
    %c0_95 = arith.constant 0 : index
    %73 = vector.load %arg1[%c0_92, %c13_93, %c0_94, %c0_95] : memref<1x16x128x1xf32, #tpu.memory_space<vmem>>, vector<1x1x128x1xf32>
    %74 = vector.shape_cast %73 : vector<1x1x128x1xf32> to vector<128x1xf32>
    %c14 = arith.constant 14 : index
    %c8_96 = arith.constant 8 : index
    %c0_97 = arith.constant 0 : index
    %75 = vector.load %arg9[%c14, %c8_96, %c0_97] : memref<18x137x1xf32, #tpu.memory_space<vmem>>, vector<1x128x1xf32>
    %76 = vector.shape_cast %75 : vector<1x128x1xf32> to vector<128x1xf32>
    %77 = vector.shape_cast %74 : vector<128x1xf32> to vector<1x128x1xf32>
    tpu.vector_store %arg9[%c14, %c8_96, %c0_97], %77 {strides = array<i32>} : memref<18x137x1xf32, #tpu.memory_space<vmem>>, vector<1x128x1xf32>,
    %c0_98 = arith.constant 0 : index
    %c14_99 = arith.constant 14 : index
    %c0_100 = arith.constant 0 : index
    %c0_101 = arith.constant 0 : index
    %78 = vector.load %arg1[%c0_98, %c14_99, %c0_100, %c0_101] : memref<1x16x128x1xf32, #tpu.memory_space<vmem>>, vector<1x1x128x1xf32>
    %79 = vector.shape_cast %78 : vector<1x1x128x1xf32> to vector<128x1xf32>
    %c15 = arith.constant 15 : index
    %c8_102 = arith.constant 8 : index
    %c0_103 = arith.constant 0 : index
    %80 = vector.load %arg9[%c15, %c8_102, %c0_103] : memref<18x137x1xf32, #tpu.memory_space<vmem>>, vector<1x128x1xf32>
    %81 = vector.shape_cast %80 : vector<1x128x1xf32> to vector<128x1xf32>
    %82 = vector.shape_cast %79 : vector<128x1xf32> to vector<1x128x1xf32>
    tpu.vector_store %arg9[%c15, %c8_102, %c0_103], %82 {strides = array<i32>} : memref<18x137x1xf32, #tpu.memory_space<vmem>>, vector<1x128x1xf32>,
    %c0_104 = arith.constant 0 : index
    %c15_105 = arith.constant 15 : index
    %c0_106 = arith.constant 0 : index
    %c0_107 = arith.constant 0 : index
    %83 = vector.load %arg1[%c0_104, %c15_105, %c0_106, %c0_107] : memref<1x16x128x1xf32, #tpu.memory_space<vmem>>, vector<1x1x128x1xf32>
    %84 = vector.shape_cast %83 : vector<1x1x128x1xf32> to vector<128x1xf32>
    %c16 = arith.constant 16 : index
    %c8_108 = arith.constant 8 : index
    %c0_109 = arith.constant 0 : index
    %85 = vector.load %arg9[%c16, %c8_108, %c0_109] : memref<18x137x1xf32, #tpu.memory_space<vmem>>, vector<1x128x1xf32>
    %86 = vector.shape_cast %85 : vector<1x128x1xf32> to vector<128x1xf32>
    %87 = vector.shape_cast %84 : vector<128x1xf32> to vector<1x128x1xf32>
    tpu.vector_store %arg9[%c16, %c8_108, %c0_109], %87 {strides = array<i32>} : memref<18x137x1xf32, #tpu.memory_space<vmem>>, vector<1x128x1xf32>,
    %c0_i32 = arith.constant 0 : i32
    %c8_i32 = arith.constant 8 : i32
    %88 = arith.addi %c0_i32, %c8_i32 : i32
    %c1_i32 = arith.constant 1 : i32
    scf.for %arg14 = %c0_i32 to %88 step %c1_i32  : i32 {
      %c1_i32_121 = arith.constant 1 : i32
      %95 = arith.muli %arg14, %c1_i32_121 : i32
      %c0_i32_122 = arith.constant 0 : i32
      %96 = arith.addi %c0_i32_122, %95 : i32
      %c2_i32 = arith.constant 2 : i32
      %97 = arith.muli %c2_i32, %96 : i32
      %cst_123 = arith.constant 0.000000e+00 : f32
      %98 = vector.broadcast %cst_123 : f32 to vector<128x32xf32>
      %c0_i32_124 = arith.constant 0 : i32
      %99 = arith.addi %97, %c0_i32_124 : i32
      %100 = arith.index_cast %99 : i32 to index
      %c7_125 = arith.constant 7 : index
      %c0_126 = arith.constant 0 : index
      %101 = vector.load %arg9[%100, %c7_125, %c0_126] : memref<18x137x1xf32, #tpu.memory_space<vmem>>, vector<1x128x1xf32>
      %102 = vector.shape_cast %101 : vector<1x128x1xf32> to vector<128x1xf32>
      %c0_127 = arith.constant 0 : index
      %c0_128 = arith.constant 0 : index
      %c0_129 = arith.constant 0 : index
      %c0_130 = arith.constant 0 : index
      %103 = vector.load %arg2[%c0_127, %c0_128, %c0_129, %c0_130] : memref<3x3x1x32xf32, #tpu.memory_space<vmem>>, vector<1x1x1x32xf32>
      %104 = vector.shape_cast %103 : vector<1x1x1x32xf32> to vector<1x32xf32>
      %105 = vector.broadcast %102 : vector<128x1xf32> to vector<128x32xf32>
      %106 = vector.broadcast %104 : vector<1x32xf32> to vector<128x32xf32>
      %107 = arith.mulf %105, %106 : vector<128x32xf32>
      %108 = arith.addf %98, %107 : vector<128x32xf32>
      %c0_i32_131 = arith.constant 0 : i32
      %109 = arith.addi %97, %c0_i32_131 : i32
      %110 = arith.index_cast %109 : i32 to index
      %c8_132 = arith.constant 8 : index
      %c0_133 = arith.constant 0 : index
      %111 = vector.load %arg9[%110, %c8_132, %c0_133] : memref<18x137x1xf32, #tpu.memory_space<vmem>>, vector<1x128x1xf32>
      %112 = vector.shape_cast %111 : vector<1x128x1xf32> to vector<128x1xf32>
      %c0_134 = arith.constant 0 : index
      %c1_135 = arith.constant 1 : index
      %c0_136 = arith.constant 0 : index
      %c0_137 = arith.constant 0 : index
      %113 = vector.load %arg2[%c0_134, %c1_135, %c0_136, %c0_137] : memref<3x3x1x32xf32, #tpu.memory_space<vmem>>, vector<1x1x1x32xf32>
      %114 = vector.shape_cast %113 : vector<1x1x1x32xf32> to vector<1x32xf32>
      %115 = vector.broadcast %112 : vector<128x1xf32> to vector<128x32xf32>
      %116 = vector.broadcast %114 : vector<1x32xf32> to vector<128x32xf32>
      %117 = arith.mulf %115, %116 : vector<128x32xf32>
      %118 = arith.addf %108, %117 : vector<128x32xf32>
      %c0_i32_138 = arith.constant 0 : i32
      %119 = arith.addi %97, %c0_i32_138 : i32
      %120 = arith.index_cast %119 : i32 to index
      %c9_139 = arith.constant 9 : index
      %c0_140 = arith.constant 0 : index
      %121 = vector.load %arg9[%120, %c9_139, %c0_140] : memref<18x137x1xf32, #tpu.memory_space<vmem>>, vector<1x128x1xf32>
      %122 = vector.shape_cast %121 : vector<1x128x1xf32> to vector<128x1xf32>
      %c0_141 = arith.constant 0 : index
      %c2_142 = arith.constant 2 : index
      %c0_143 = arith.constant 0 : index
      %c0_144 = arith.constant 0 : index
      %123 = vector.load %arg2[%c0_141, %c2_142, %c0_143, %c0_144] : memref<3x3x1x32xf32, #tpu.memory_space<vmem>>, vector<1x1x1x32xf32>
      %124 = vector.shape_cast %123 : vector<1x1x1x32xf32> to vector<1x32xf32>
      %125 = vector.broadcast %122 : vector<128x1xf32> to vector<128x32xf32>
      %126 = vector.broadcast %124 : vector<1x32xf32> to vector<128x32xf32>
      %127 = arith.mulf %125, %126 : vector<128x32xf32>
      %128 = arith.addf %118, %127 : vector<128x32xf32>
      %c1_i32_145 = arith.constant 1 : i32
      %129 = arith.addi %97, %c1_i32_145 : i32
      %130 = arith.index_cast %129 : i32 to index
      %c7_146 = arith.constant 7 : index
      %c0_147 = arith.constant 0 : index
      %131 = vector.load %arg9[%130, %c7_146, %c0_147] : memref<18x137x1xf32, #tpu.memory_space<vmem>>, vector<1x128x1xf32>
      %132 = vector.shape_cast %131 : vector<1x128x1xf32> to vector<128x1xf32>
      %c1_148 = arith.constant 1 : index
      %c0_149 = arith.constant 0 : index
      %c0_150 = arith.constant 0 : index
      %c0_151 = arith.constant 0 : index
      %133 = vector.load %arg2[%c1_148, %c0_149, %c0_150, %c0_151] : memref<3x3x1x32xf32, #tpu.memory_space<vmem>>, vector<1x1x1x32xf32>
      %134 = vector.shape_cast %133 : vector<1x1x1x32xf32> to vector<1x32xf32>
      %135 = vector.broadcast %132 : vector<128x1xf32> to vector<128x32xf32>
      %136 = vector.broadcast %134 : vector<1x32xf32> to vector<128x32xf32>
      %137 = arith.mulf %135, %136 : vector<128x32xf32>
      %138 = arith.addf %128, %137 : vector<128x32xf32>
      %c1_i32_152 = arith.constant 1 : i32
      %139 = arith.addi %97, %c1_i32_152 : i32
      %140 = arith.index_cast %139 : i32 to index
      %c8_153 = arith.constant 8 : index
      %c0_154 = arith.constant 0 : index
      %141 = vector.load %arg9[%140, %c8_153, %c0_154] : memref<18x137x1xf32, #tpu.memory_space<vmem>>, vector<1x128x1xf32>
      %142 = vector.shape_cast %141 : vector<1x128x1xf32> to vector<128x1xf32>
      %c1_155 = arith.constant 1 : index
      %c1_156 = arith.constant 1 : index
      %c0_157 = arith.constant 0 : index
      %c0_158 = arith.constant 0 : index
      %143 = vector.load %arg2[%c1_155, %c1_156, %c0_157, %c0_158] : memref<3x3x1x32xf32, #tpu.memory_space<vmem>>, vector<1x1x1x32xf32>
      %144 = vector.shape_cast %143 : vector<1x1x1x32xf32> to vector<1x32xf32>
      %145 = vector.broadcast %142 : vector<128x1xf32> to vector<128x32xf32>
      %146 = vector.broadcast %144 : vector<1x32xf32> to vector<128x32xf32>
      %147 = arith.mulf %145, %146 : vector<128x32xf32>
      %148 = arith.addf %138, %147 : vector<128x32xf32>
      %c1_i32_159 = arith.constant 1 : i32
      %149 = arith.addi %97, %c1_i32_159 : i32
      %150 = arith.index_cast %149 : i32 to index
      %c9_160 = arith.constant 9 : index
      %c0_161 = arith.constant 0 : index
      %151 = vector.load %arg9[%150, %c9_160, %c0_161] : memref<18x137x1xf32, #tpu.memory_space<vmem>>, vector<1x128x1xf32>
      %152 = vector.shape_cast %151 : vector<1x128x1xf32> to vector<128x1xf32>
      %c1_162 = arith.constant 1 : index
      %c2_163 = arith.constant 2 : index
      %c0_164 = arith.constant 0 : index
      %c0_165 = arith.constant 0 : index
      %153 = vector.load %arg2[%c1_162, %c2_163, %c0_164, %c0_165] : memref<3x3x1x32xf32, #tpu.memory_space<vmem>>, vector<1x1x1x32xf32>
      %154 = vector.shape_cast %153 : vector<1x1x1x32xf32> to vector<1x32xf32>
      %155 = vector.broadcast %152 : vector<128x1xf32> to vector<128x32xf32>
      %156 = vector.broadcast %154 : vector<1x32xf32> to vector<128x32xf32>
      %157 = arith.mulf %155, %156 : vector<128x32xf32>
      %158 = arith.addf %148, %157 : vector<128x32xf32>
      %c2_i32_166 = arith.constant 2 : i32
      %159 = arith.addi %97, %c2_i32_166 : i32
      %160 = arith.index_cast %159 : i32 to index
      %c7_167 = arith.constant 7 : index
      %c0_168 = arith.constant 0 : index
      %161 = vector.load %arg9[%160, %c7_167, %c0_168] : memref<18x137x1xf32, #tpu.memory_space<vmem>>, vector<1x128x1xf32>
      %162 = vector.shape_cast %161 : vector<1x128x1xf32> to vector<128x1xf32>
      %c2_169 = arith.constant 2 : index
      %c0_170 = arith.constant 0 : index
      %c0_171 = arith.constant 0 : index
      %c0_172 = arith.constant 0 : index
      %163 = vector.load %arg2[%c2_169, %c0_170, %c0_171, %c0_172] : memref<3x3x1x32xf32, #tpu.memory_space<vmem>>, vector<1x1x1x32xf32>
      %164 = vector.shape_cast %163 : vector<1x1x1x32xf32> to vector<1x32xf32>
      %165 = vector.broadcast %162 : vector<128x1xf32> to vector<128x32xf32>
      %166 = vector.broadcast %164 : vector<1x32xf32> to vector<128x32xf32>
      %167 = arith.mulf %165, %166 : vector<128x32xf32>
      %168 = arith.addf %158, %167 : vector<128x32xf32>
      %c2_i32_173 = arith.constant 2 : i32
      %169 = arith.addi %97, %c2_i32_173 : i32
      %170 = arith.index_cast %169 : i32 to index
      %c8_174 = arith.constant 8 : index
      %c0_175 = arith.constant 0 : index
      %171 = vector.load %arg9[%170, %c8_174, %c0_175] : memref<18x137x1xf32, #tpu.memory_space<vmem>>, vector<1x128x1xf32>
      %172 = vector.shape_cast %171 : vector<1x128x1xf32> to vector<128x1xf32>
      %c2_176 = arith.constant 2 : index
      %c1_177 = arith.constant 1 : index
      %c0_178 = arith.constant 0 : index
      %c0_179 = arith.constant 0 : index
      %173 = vector.load %arg2[%c2_176, %c1_177, %c0_178, %c0_179] : memref<3x3x1x32xf32, #tpu.memory_space<vmem>>, vector<1x1x1x32xf32>
      %174 = vector.shape_cast %173 : vector<1x1x1x32xf32> to vector<1x32xf32>
      %175 = vector.broadcast %172 : vector<128x1xf32> to vector<128x32xf32>
      %176 = vector.broadcast %174 : vector<1x32xf32> to vector<128x32xf32>
      %177 = arith.mulf %175, %176 : vector<128x32xf32>
      %178 = arith.addf %168, %177 : vector<128x32xf32>
      %c2_i32_180 = arith.constant 2 : i32
      %179 = arith.addi %97, %c2_i32_180 : i32
      %180 = arith.index_cast %179 : i32 to index
      %c9_181 = arith.constant 9 : index
      %c0_182 = arith.constant 0 : index
      %181 = vector.load %arg9[%180, %c9_181, %c0_182] : memref<18x137x1xf32, #tpu.memory_space<vmem>>, vector<1x128x1xf32>
      %182 = vector.shape_cast %181 : vector<1x128x1xf32> to vector<128x1xf32>
      %c2_183 = arith.constant 2 : index
      %c2_184 = arith.constant 2 : index
      %c0_185 = arith.constant 0 : index
      %c0_186 = arith.constant 0 : index
      %183 = vector.load %arg2[%c2_183, %c2_184, %c0_185, %c0_186] : memref<3x3x1x32xf32, #tpu.memory_space<vmem>>, vector<1x1x1x32xf32>
      %184 = vector.shape_cast %183 : vector<1x1x1x32xf32> to vector<1x32xf32>
      %185 = vector.broadcast %182 : vector<128x1xf32> to vector<128x32xf32>
      %186 = vector.broadcast %184 : vector<1x32xf32> to vector<128x32xf32>
      %187 = arith.mulf %185, %186 : vector<128x32xf32>
      %188 = arith.addf %178, %187 : vector<128x32xf32>
      %189 = vector.broadcast %0 : vector<1x32xf32> to vector<128x32xf32>
      %190 = arith.mulf %188, %189 : vector<128x32xf32>
      %191 = vector.broadcast %1 : vector<1x32xf32> to vector<128x32xf32>
      %192 = arith.addf %190, %191 : vector<128x32xf32>
      %cst_187 = arith.constant 0.000000e+00 : f32
      %193 = vector.broadcast %cst_187 : f32 to vector<128x32xf32>
      %194 = arith.maximumf %192, %193 : vector<128x32xf32>
      %c2_i32_188 = arith.constant 2 : i32
      %195 = arith.muli %c2_i32_188, %96 : i32
      %c1_i32_189 = arith.constant 1 : i32
      %196 = arith.addi %195, %c1_i32_189 : i32
      %cst_190 = arith.constant 0.000000e+00 : f32
      %197 = vector.broadcast %cst_190 : f32 to vector<128x32xf32>
      %c0_i32_191 = arith.constant 0 : i32
      %198 = arith.addi %196, %c0_i32_191 : i32
      %199 = arith.index_cast %198 : i32 to index
      %c7_192 = arith.constant 7 : index
      %c0_193 = arith.constant 0 : index
      %200 = vector.load %arg9[%199, %c7_192, %c0_193] : memref<18x137x1xf32, #tpu.memory_space<vmem>>, vector<1x128x1xf32>
      %201 = vector.shape_cast %200 : vector<1x128x1xf32> to vector<128x1xf32>
      %c0_194 = arith.constant 0 : index
      %c0_195 = arith.constant 0 : index
      %c0_196 = arith.constant 0 : index
      %c0_197 = arith.constant 0 : index
      %202 = vector.load %arg2[%c0_194, %c0_195, %c0_196, %c0_197] : memref<3x3x1x32xf32, #tpu.memory_space<vmem>>, vector<1x1x1x32xf32>
      %203 = vector.shape_cast %202 : vector<1x1x1x32xf32> to vector<1x32xf32>
      %204 = vector.broadcast %201 : vector<128x1xf32> to vector<128x32xf32>
      %205 = vector.broadcast %203 : vector<1x32xf32> to vector<128x32xf32>
      %206 = arith.mulf %204, %205 : vector<128x32xf32>
      %207 = arith.addf %197, %206 : vector<128x32xf32>
      %c0_i32_198 = arith.constant 0 : i32
      %208 = arith.addi %196, %c0_i32_198 : i32
      %209 = arith.index_cast %208 : i32 to index
      %c8_199 = arith.constant 8 : index
      %c0_200 = arith.constant 0 : index
      %210 = vector.load %arg9[%209, %c8_199, %c0_200] : memref<18x137x1xf32, #tpu.memory_space<vmem>>, vector<1x128x1xf32>
      %211 = vector.shape_cast %210 : vector<1x128x1xf32> to vector<128x1xf32>
      %c0_201 = arith.constant 0 : index
      %c1_202 = arith.constant 1 : index
      %c0_203 = arith.constant 0 : index
      %c0_204 = arith.constant 0 : index
      %212 = vector.load %arg2[%c0_201, %c1_202, %c0_203, %c0_204] : memref<3x3x1x32xf32, #tpu.memory_space<vmem>>, vector<1x1x1x32xf32>
      %213 = vector.shape_cast %212 : vector<1x1x1x32xf32> to vector<1x32xf32>
      %214 = vector.broadcast %211 : vector<128x1xf32> to vector<128x32xf32>
      %215 = vector.broadcast %213 : vector<1x32xf32> to vector<128x32xf32>
      %216 = arith.mulf %214, %215 : vector<128x32xf32>
      %217 = arith.addf %207, %216 : vector<128x32xf32>
      %c0_i32_205 = arith.constant 0 : i32
      %218 = arith.addi %196, %c0_i32_205 : i32
      %219 = arith.index_cast %218 : i32 to index
      %c9_206 = arith.constant 9 : index
      %c0_207 = arith.constant 0 : index
      %220 = vector.load %arg9[%219, %c9_206, %c0_207] : memref<18x137x1xf32, #tpu.memory_space<vmem>>, vector<1x128x1xf32>
      %221 = vector.shape_cast %220 : vector<1x128x1xf32> to vector<128x1xf32>
      %c0_208 = arith.constant 0 : index
      %c2_209 = arith.constant 2 : index
      %c0_210 = arith.constant 0 : index
      %c0_211 = arith.constant 0 : index
      %222 = vector.load %arg2[%c0_208, %c2_209, %c0_210, %c0_211] : memref<3x3x1x32xf32, #tpu.memory_space<vmem>>, vector<1x1x1x32xf32>
      %223 = vector.shape_cast %222 : vector<1x1x1x32xf32> to vector<1x32xf32>
      %224 = vector.broadcast %221 : vector<128x1xf32> to vector<128x32xf32>
      %225 = vector.broadcast %223 : vector<1x32xf32> to vector<128x32xf32>
      %226 = arith.mulf %224, %225 : vector<128x32xf32>
      %227 = arith.addf %217, %226 : vector<128x32xf32>
      %c1_i32_212 = arith.constant 1 : i32
      %228 = arith.addi %196, %c1_i32_212 : i32
      %229 = arith.index_cast %228 : i32 to index
      %c7_213 = arith.constant 7 : index
      %c0_214 = arith.constant 0 : index
      %230 = vector.load %arg9[%229, %c7_213, %c0_214] : memref<18x137x1xf32, #tpu.memory_space<vmem>>, vector<1x128x1xf32>
      %231 = vector.shape_cast %230 : vector<1x128x1xf32> to vector<128x1xf32>
      %c1_215 = arith.constant 1 : index
      %c0_216 = arith.constant 0 : index
      %c0_217 = arith.constant 0 : index
      %c0_218 = arith.constant 0 : index
      %232 = vector.load %arg2[%c1_215, %c0_216, %c0_217, %c0_218] : memref<3x3x1x32xf32, #tpu.memory_space<vmem>>, vector<1x1x1x32xf32>
      %233 = vector.shape_cast %232 : vector<1x1x1x32xf32> to vector<1x32xf32>
      %234 = vector.broadcast %231 : vector<128x1xf32> to vector<128x32xf32>
      %235 = vector.broadcast %233 : vector<1x32xf32> to vector<128x32xf32>
      %236 = arith.mulf %234, %235 : vector<128x32xf32>
      %237 = arith.addf %227, %236 : vector<128x32xf32>
      %c1_i32_219 = arith.constant 1 : i32
      %238 = arith.addi %196, %c1_i32_219 : i32
      %239 = arith.index_cast %238 : i32 to index
      %c8_220 = arith.constant 8 : index
      %c0_221 = arith.constant 0 : index
      %240 = vector.load %arg9[%239, %c8_220, %c0_221] : memref<18x137x1xf32, #tpu.memory_space<vmem>>, vector<1x128x1xf32>
      %241 = vector.shape_cast %240 : vector<1x128x1xf32> to vector<128x1xf32>
      %c1_222 = arith.constant 1 : index
      %c1_223 = arith.constant 1 : index
      %c0_224 = arith.constant 0 : index
      %c0_225 = arith.constant 0 : index
      %242 = vector.load %arg2[%c1_222, %c1_223, %c0_224, %c0_225] : memref<3x3x1x32xf32, #tpu.memory_space<vmem>>, vector<1x1x1x32xf32>
      %243 = vector.shape_cast %242 : vector<1x1x1x32xf32> to vector<1x32xf32>
      %244 = vector.broadcast %241 : vector<128x1xf32> to vector<128x32xf32>
      %245 = vector.broadcast %243 : vector<1x32xf32> to vector<128x32xf32>
      %246 = arith.mulf %244, %245 : vector<128x32xf32>
      %247 = arith.addf %237, %246 : vector<128x32xf32>
      %c1_i32_226 = arith.constant 1 : i32
      %248 = arith.addi %196, %c1_i32_226 : i32
      %249 = arith.index_cast %248 : i32 to index
      %c9_227 = arith.constant 9 : index
      %c0_228 = arith.constant 0 : index
      %250 = vector.load %arg9[%249, %c9_227, %c0_228] : memref<18x137x1xf32, #tpu.memory_space<vmem>>, vector<1x128x1xf32>
      %251 = vector.shape_cast %250 : vector<1x128x1xf32> to vector<128x1xf32>
      %c1_229 = arith.constant 1 : index
      %c2_230 = arith.constant 2 : index
      %c0_231 = arith.constant 0 : index
      %c0_232 = arith.constant 0 : index
      %252 = vector.load %arg2[%c1_229, %c2_230, %c0_231, %c0_232] : memref<3x3x1x32xf32, #tpu.memory_space<vmem>>, vector<1x1x1x32xf32>
      %253 = vector.shape_cast %252 : vector<1x1x1x32xf32> to vector<1x32xf32>
      %254 = vector.broadcast %251 : vector<128x1xf32> to vector<128x32xf32>
      %255 = vector.broadcast %253 : vector<1x32xf32> to vector<128x32xf32>
      %256 = arith.mulf %254, %255 : vector<128x32xf32>
      %257 = arith.addf %247, %256 : vector<128x32xf32>
      %c2_i32_233 = arith.constant 2 : i32
      %258 = arith.addi %196, %c2_i32_233 : i32
      %259 = arith.index_cast %258 : i32 to index
      %c7_234 = arith.constant 7 : index
      %c0_235 = arith.constant 0 : index
      %260 = vector.load %arg9[%259, %c7_234, %c0_235] : memref<18x137x1xf32, #tpu.memory_space<vmem>>, vector<1x128x1xf32>
      %261 = vector.shape_cast %260 : vector<1x128x1xf32> to vector<128x1xf32>
      %c2_236 = arith.constant 2 : index
      %c0_237 = arith.constant 0 : index
      %c0_238 = arith.constant 0 : index
      %c0_239 = arith.constant 0 : index
      %262 = vector.load %arg2[%c2_236, %c0_237, %c0_238, %c0_239] : memref<3x3x1x32xf32, #tpu.memory_space<vmem>>, vector<1x1x1x32xf32>
      %263 = vector.shape_cast %262 : vector<1x1x1x32xf32> to vector<1x32xf32>
      %264 = vector.broadcast %261 : vector<128x1xf32> to vector<128x32xf32>
      %265 = vector.broadcast %263 : vector<1x32xf32> to vector<128x32xf32>
      %266 = arith.mulf %264, %265 : vector<128x32xf32>
      %267 = arith.addf %257, %266 : vector<128x32xf32>
      %c2_i32_240 = arith.constant 2 : i32
      %268 = arith.addi %196, %c2_i32_240 : i32
      %269 = arith.index_cast %268 : i32 to index
      %c8_241 = arith.constant 8 : index
      %c0_242 = arith.constant 0 : index
      %270 = vector.load %arg9[%269, %c8_241, %c0_242] : memref<18x137x1xf32, #tpu.memory_space<vmem>>, vector<1x128x1xf32>
      %271 = vector.shape_cast %270 : vector<1x128x1xf32> to vector<128x1xf32>
      %c2_243 = arith.constant 2 : index
      %c1_244 = arith.constant 1 : index
      %c0_245 = arith.constant 0 : index
      %c0_246 = arith.constant 0 : index
      %272 = vector.load %arg2[%c2_243, %c1_244, %c0_245, %c0_246] : memref<3x3x1x32xf32, #tpu.memory_space<vmem>>, vector<1x1x1x32xf32>
      %273 = vector.shape_cast %272 : vector<1x1x1x32xf32> to vector<1x32xf32>
      %274 = vector.broadcast %271 : vector<128x1xf32> to vector<128x32xf32>
      %275 = vector.broadcast %273 : vector<1x32xf32> to vector<128x32xf32>
      %276 = arith.mulf %274, %275 : vector<128x32xf32>
      %277 = arith.addf %267, %276 : vector<128x32xf32>
      %c2_i32_247 = arith.constant 2 : i32
      %278 = arith.addi %196, %c2_i32_247 : i32
      %279 = arith.index_cast %278 : i32 to index
      %c9_248 = arith.constant 9 : index
      %c0_249 = arith.constant 0 : index
      %280 = vector.load %arg9[%279, %c9_248, %c0_249] : memref<18x137x1xf32, #tpu.memory_space<vmem>>, vector<1x128x1xf32>
      %281 = vector.shape_cast %280 : vector<1x128x1xf32> to vector<128x1xf32>
      %c2_250 = arith.constant 2 : index
      %c2_251 = arith.constant 2 : index
      %c0_252 = arith.constant 0 : index
      %c0_253 = arith.constant 0 : index
      %282 = vector.load %arg2[%c2_250, %c2_251, %c0_252, %c0_253] : memref<3x3x1x32xf32, #tpu.memory_space<vmem>>, vector<1x1x1x32xf32>
      %283 = vector.shape_cast %282 : vector<1x1x1x32xf32> to vector<1x32xf32>
      %284 = vector.broadcast %281 : vector<128x1xf32> to vector<128x32xf32>
      %285 = vector.broadcast %283 : vector<1x32xf32> to vector<128x32xf32>
      %286 = arith.mulf %284, %285 : vector<128x32xf32>
      %287 = arith.addf %277, %286 : vector<128x32xf32>
      %288 = vector.broadcast %0 : vector<1x32xf32> to vector<128x32xf32>
      %289 = arith.mulf %287, %288 : vector<128x32xf32>
      %290 = vector.broadcast %1 : vector<1x32xf32> to vector<128x32xf32>
      %291 = arith.addf %289, %290 : vector<128x32xf32>
      %cst_254 = arith.constant 0.000000e+00 : f32
      %292 = vector.broadcast %cst_254 : f32 to vector<128x32xf32>
      %293 = arith.maximumf %291, %292 : vector<128x32xf32>
      %294 = arith.maximumf %194, %293 : vector<128x32xf32>
      %c0_255 = arith.constant 0 : index
      %c0_256 = arith.constant 0 : index
      %295 = vector.load %arg11[%c0_255, %c0_256] : memref<128x32xf32, #tpu.memory_space<vmem>>, vector<128x32xf32>
      tpu.vector_store %arg11[%c0_255, %c0_256], %294 {strides = array<i32>} : memref<128x32xf32, #tpu.memory_space<vmem>>, vector<128x32xf32>,
      %c0_257 = arith.constant 0 : index
      %c0_258 = arith.constant 0 : index
      %296 = tpu.strided_load %arg11[%c0_257, %c0_258] {strides = array<i32: 2, 1>} : memref<128x32xf32, #tpu.memory_space<vmem>>, vector<64x32xf32>
      %c1_259 = arith.constant 1 : index
      %c0_260 = arith.constant 0 : index
      %297 = tpu.strided_load %arg11[%c1_259, %c0_260] {strides = array<i32: 2, 1>} : memref<128x32xf32, #tpu.memory_space<vmem>>, vector<64x32xf32>
      %298 = arith.maximumf %296, %297 : vector<64x32xf32>
      %c1_i32_261 = arith.constant 1 : i32
      %299 = arith.addi %c1_i32_261, %96 : i32
      %300 = arith.index_cast %299 : i32 to index
      %c8_262 = arith.constant 8 : index
      %c0_263 = arith.constant 0 : index
      %301 = vector.load %arg10[%300, %c8_262, %c0_263] : memref<10x73x32xf32, #tpu.memory_space<vmem>>, vector<1x64x32xf32>
      %302 = vector.shape_cast %301 : vector<1x64x32xf32> to vector<64x32xf32>
      %303 = vector.shape_cast %298 : vector<64x32xf32> to vector<1x64x32xf32>
      tpu.vector_store %arg10[%300, %c8_262, %c0_263], %303 {strides = array<i32>} : memref<10x73x32xf32, #tpu.memory_space<vmem>>, vector<1x64x32xf32>,
    }
    %c8_i32_110 = arith.constant 8 : i32
    %c0_i32_111 = arith.constant 0 : i32
    %c4_i32 = arith.constant 4 : i32
    %89 = arith.addi %c0_i32_111, %c4_i32 : i32
    %c1_i32_112 = arith.constant 1 : i32
    scf.for %arg14 = %c0_i32_111 to %89 step %c1_i32_112  : i32 {
      %c1_i32_121 = arith.constant 1 : i32
      %95 = arith.muli %arg14, %c1_i32_121 : i32
      %c0_i32_122 = arith.constant 0 : i32
      %96 = arith.addi %c0_i32_122, %95 : i32
      %c2_i32 = arith.constant 2 : i32
      %97 = arith.muli %c2_i32, %96 : i32
      %cst_123 = arith.constant 0.000000e+00 : f32
      %98 = vector.broadcast %cst_123 : f32 to vector<64x64xf32>
      %c0_i32_124 = arith.constant 0 : i32
      %99 = arith.addi %97, %c0_i32_124 : i32
      %100 = arith.index_cast %99 : i32 to index
      %c7_125 = arith.constant 7 : index
      %c0_126 = arith.constant 0 : index
      %101 = vector.load %arg10[%100, %c7_125, %c0_126] : memref<10x73x32xf32, #tpu.memory_space<vmem>>, vector<1x64x32xf32>
      %102 = vector.shape_cast %101 : vector<1x64x32xf32> to vector<64x32xf32>
      %103 = arith.truncf %102 : vector<64x32xf32> to vector<64x32xbf16>
      %c0_127 = arith.constant 0 : index
      %c0_128 = arith.constant 0 : index
      %c0_129 = arith.constant 0 : index
      %c0_130 = arith.constant 0 : index
      %104 = vector.load %arg5[%c0_127, %c0_128, %c0_129, %c0_130] : memref<3x3x32x64xbf16, #tpu.memory_space<vmem>>, vector<1x1x32x64xbf16>
      %105 = vector.shape_cast %104 : vector<1x1x32x64xbf16> to vector<32x64xbf16>
      %cst_131 = arith.constant dense<0.000000e+00> : vector<64x64xf32>
      %106 = tpu.matmul %103, %105, %cst_131 {dimension_numbers = #tpu.dot_dimension_numbers<[1], [0], [0], [1], [0, 0, 1, 1], [], []>} : vector<64x32xbf16>, vector<32x64xbf16>, vector<64x64xf32> -> vector<64x64xf32>
      %107 = arith.addf %98, %106 : vector<64x64xf32>
      %c0_i32_132 = arith.constant 0 : i32
      %108 = arith.addi %97, %c0_i32_132 : i32
      %109 = arith.index_cast %108 : i32 to index
      %c8_133 = arith.constant 8 : index
      %c0_134 = arith.constant 0 : index
      %110 = vector.load %arg10[%109, %c8_133, %c0_134] : memref<10x73x32xf32, #tpu.memory_space<vmem>>, vector<1x64x32xf32>
      %111 = vector.shape_cast %110 : vector<1x64x32xf32> to vector<64x32xf32>
      %112 = arith.truncf %111 : vector<64x32xf32> to vector<64x32xbf16>
      %c0_135 = arith.constant 0 : index
      %c1_136 = arith.constant 1 : index
      %c0_137 = arith.constant 0 : index
      %c0_138 = arith.constant 0 : index
      %113 = vector.load %arg5[%c0_135, %c1_136, %c0_137, %c0_138] : memref<3x3x32x64xbf16, #tpu.memory_space<vmem>>, vector<1x1x32x64xbf16>
      %114 = vector.shape_cast %113 : vector<1x1x32x64xbf16> to vector<32x64xbf16>
      %cst_139 = arith.constant dense<0.000000e+00> : vector<64x64xf32>
      %115 = tpu.matmul %112, %114, %cst_139 {dimension_numbers = #tpu.dot_dimension_numbers<[1], [0], [0], [1], [0, 0, 1, 1], [], []>} : vector<64x32xbf16>, vector<32x64xbf16>, vector<64x64xf32> -> vector<64x64xf32>
      %116 = arith.addf %107, %115 : vector<64x64xf32>
      %c0_i32_140 = arith.constant 0 : i32
      %117 = arith.addi %97, %c0_i32_140 : i32
      %118 = arith.index_cast %117 : i32 to index
      %c9_141 = arith.constant 9 : index
      %c0_142 = arith.constant 0 : index
      %119 = vector.load %arg10[%118, %c9_141, %c0_142] : memref<10x73x32xf32, #tpu.memory_space<vmem>>, vector<1x64x32xf32>
      %120 = vector.shape_cast %119 : vector<1x64x32xf32> to vector<64x32xf32>
      %121 = arith.truncf %120 : vector<64x32xf32> to vector<64x32xbf16>
      %c0_143 = arith.constant 0 : index
      %c2_144 = arith.constant 2 : index
      %c0_145 = arith.constant 0 : index
      %c0_146 = arith.constant 0 : index
      %122 = vector.load %arg5[%c0_143, %c2_144, %c0_145, %c0_146] : memref<3x3x32x64xbf16, #tpu.memory_space<vmem>>, vector<1x1x32x64xbf16>
      %123 = vector.shape_cast %122 : vector<1x1x32x64xbf16> to vector<32x64xbf16>
      %cst_147 = arith.constant dense<0.000000e+00> : vector<64x64xf32>
      %124 = tpu.matmul %121, %123, %cst_147 {dimension_numbers = #tpu.dot_dimension_numbers<[1], [0], [0], [1], [0, 0, 1, 1], [], []>} : vector<64x32xbf16>, vector<32x64xbf16>, vector<64x64xf32> -> vector<64x64xf32>
      %125 = arith.addf %116, %124 : vector<64x64xf32>
      %c1_i32_148 = arith.constant 1 : i32
      %126 = arith.addi %97, %c1_i32_148 : i32
      %127 = arith.index_cast %126 : i32 to index
      %c7_149 = arith.constant 7 : index
      %c0_150 = arith.constant 0 : index
      %128 = vector.load %arg10[%127, %c7_149, %c0_150] : memref<10x73x32xf32, #tpu.memory_space<vmem>>, vector<1x64x32xf32>
      %129 = vector.shape_cast %128 : vector<1x64x32xf32> to vector<64x32xf32>
      %130 = arith.truncf %129 : vector<64x32xf32> to vector<64x32xbf16>
      %c1_151 = arith.constant 1 : index
      %c0_152 = arith.constant 0 : index
      %c0_153 = arith.constant 0 : index
      %c0_154 = arith.constant 0 : index
      %131 = vector.load %arg5[%c1_151, %c0_152, %c0_153, %c0_154] : memref<3x3x32x64xbf16, #tpu.memory_space<vmem>>, vector<1x1x32x64xbf16>
      %132 = vector.shape_cast %131 : vector<1x1x32x64xbf16> to vector<32x64xbf16>
      %cst_155 = arith.constant dense<0.000000e+00> : vector<64x64xf32>
      %133 = tpu.matmul %130, %132, %cst_155 {dimension_numbers = #tpu.dot_dimension_numbers<[1], [0], [0], [1], [0, 0, 1, 1], [], []>} : vector<64x32xbf16>, vector<32x64xbf16>, vector<64x64xf32> -> vector<64x64xf32>
      %134 = arith.addf %125, %133 : vector<64x64xf32>
      %c1_i32_156 = arith.constant 1 : i32
      %135 = arith.addi %97, %c1_i32_156 : i32
      %136 = arith.index_cast %135 : i32 to index
      %c8_157 = arith.constant 8 : index
      %c0_158 = arith.constant 0 : index
      %137 = vector.load %arg10[%136, %c8_157, %c0_158] : memref<10x73x32xf32, #tpu.memory_space<vmem>>, vector<1x64x32xf32>
      %138 = vector.shape_cast %137 : vector<1x64x32xf32> to vector<64x32xf32>
      %139 = arith.truncf %138 : vector<64x32xf32> to vector<64x32xbf16>
      %c1_159 = arith.constant 1 : index
      %c1_160 = arith.constant 1 : index
      %c0_161 = arith.constant 0 : index
      %c0_162 = arith.constant 0 : index
      %140 = vector.load %arg5[%c1_159, %c1_160, %c0_161, %c0_162] : memref<3x3x32x64xbf16, #tpu.memory_space<vmem>>, vector<1x1x32x64xbf16>
      %141 = vector.shape_cast %140 : vector<1x1x32x64xbf16> to vector<32x64xbf16>
      %cst_163 = arith.constant dense<0.000000e+00> : vector<64x64xf32>
      %142 = tpu.matmul %139, %141, %cst_163 {dimension_numbers = #tpu.dot_dimension_numbers<[1], [0], [0], [1], [0, 0, 1, 1], [], []>} : vector<64x32xbf16>, vector<32x64xbf16>, vector<64x64xf32> -> vector<64x64xf32>
      %143 = arith.addf %134, %142 : vector<64x64xf32>
      %c1_i32_164 = arith.constant 1 : i32
      %144 = arith.addi %97, %c1_i32_164 : i32
      %145 = arith.index_cast %144 : i32 to index
      %c9_165 = arith.constant 9 : index
      %c0_166 = arith.constant 0 : index
      %146 = vector.load %arg10[%145, %c9_165, %c0_166] : memref<10x73x32xf32, #tpu.memory_space<vmem>>, vector<1x64x32xf32>
      %147 = vector.shape_cast %146 : vector<1x64x32xf32> to vector<64x32xf32>
      %148 = arith.truncf %147 : vector<64x32xf32> to vector<64x32xbf16>
      %c1_167 = arith.constant 1 : index
      %c2_168 = arith.constant 2 : index
      %c0_169 = arith.constant 0 : index
      %c0_170 = arith.constant 0 : index
      %149 = vector.load %arg5[%c1_167, %c2_168, %c0_169, %c0_170] : memref<3x3x32x64xbf16, #tpu.memory_space<vmem>>, vector<1x1x32x64xbf16>
      %150 = vector.shape_cast %149 : vector<1x1x32x64xbf16> to vector<32x64xbf16>
      %cst_171 = arith.constant dense<0.000000e+00> : vector<64x64xf32>
      %151 = tpu.matmul %148, %150, %cst_171 {dimension_numbers = #tpu.dot_dimension_numbers<[1], [0], [0], [1], [0, 0, 1, 1], [], []>} : vector<64x32xbf16>, vector<32x64xbf16>, vector<64x64xf32> -> vector<64x64xf32>
      %152 = arith.addf %143, %151 : vector<64x64xf32>
      %c2_i32_172 = arith.constant 2 : i32
      %153 = arith.addi %97, %c2_i32_172 : i32
      %154 = arith.index_cast %153 : i32 to index
      %c7_173 = arith.constant 7 : index
      %c0_174 = arith.constant 0 : index
      %155 = vector.load %arg10[%154, %c7_173, %c0_174] : memref<10x73x32xf32, #tpu.memory_space<vmem>>, vector<1x64x32xf32>
      %156 = vector.shape_cast %155 : vector<1x64x32xf32> to vector<64x32xf32>
      %157 = arith.truncf %156 : vector<64x32xf32> to vector<64x32xbf16>
      %c2_175 = arith.constant 2 : index
      %c0_176 = arith.constant 0 : index
      %c0_177 = arith.constant 0 : index
      %c0_178 = arith.constant 0 : index
      %158 = vector.load %arg5[%c2_175, %c0_176, %c0_177, %c0_178] : memref<3x3x32x64xbf16, #tpu.memory_space<vmem>>, vector<1x1x32x64xbf16>
      %159 = vector.shape_cast %158 : vector<1x1x32x64xbf16> to vector<32x64xbf16>
      %cst_179 = arith.constant dense<0.000000e+00> : vector<64x64xf32>
      %160 = tpu.matmul %157, %159, %cst_179 {dimension_numbers = #tpu.dot_dimension_numbers<[1], [0], [0], [1], [0, 0, 1, 1], [], []>} : vector<64x32xbf16>, vector<32x64xbf16>, vector<64x64xf32> -> vector<64x64xf32>
      %161 = arith.addf %152, %160 : vector<64x64xf32>
      %c2_i32_180 = arith.constant 2 : i32
      %162 = arith.addi %97, %c2_i32_180 : i32
      %163 = arith.index_cast %162 : i32 to index
      %c8_181 = arith.constant 8 : index
      %c0_182 = arith.constant 0 : index
      %164 = vector.load %arg10[%163, %c8_181, %c0_182] : memref<10x73x32xf32, #tpu.memory_space<vmem>>, vector<1x64x32xf32>
      %165 = vector.shape_cast %164 : vector<1x64x32xf32> to vector<64x32xf32>
      %166 = arith.truncf %165 : vector<64x32xf32> to vector<64x32xbf16>
      %c2_183 = arith.constant 2 : index
      %c1_184 = arith.constant 1 : index
      %c0_185 = arith.constant 0 : index
      %c0_186 = arith.constant 0 : index
      %167 = vector.load %arg5[%c2_183, %c1_184, %c0_185, %c0_186] : memref<3x3x32x64xbf16, #tpu.memory_space<vmem>>, vector<1x1x32x64xbf16>
      %168 = vector.shape_cast %167 : vector<1x1x32x64xbf16> to vector<32x64xbf16>
      %cst_187 = arith.constant dense<0.000000e+00> : vector<64x64xf32>
      %169 = tpu.matmul %166, %168, %cst_187 {dimension_numbers = #tpu.dot_dimension_numbers<[1], [0], [0], [1], [0, 0, 1, 1], [], []>} : vector<64x32xbf16>, vector<32x64xbf16>, vector<64x64xf32> -> vector<64x64xf32>
      %170 = arith.addf %161, %169 : vector<64x64xf32>
      %c2_i32_188 = arith.constant 2 : i32
      %171 = arith.addi %97, %c2_i32_188 : i32
      %172 = arith.index_cast %171 : i32 to index
      %c9_189 = arith.constant 9 : index
      %c0_190 = arith.constant 0 : index
      %173 = vector.load %arg10[%172, %c9_189, %c0_190] : memref<10x73x32xf32, #tpu.memory_space<vmem>>, vector<1x64x32xf32>
      %174 = vector.shape_cast %173 : vector<1x64x32xf32> to vector<64x32xf32>
      %175 = arith.truncf %174 : vector<64x32xf32> to vector<64x32xbf16>
      %c2_191 = arith.constant 2 : index
      %c2_192 = arith.constant 2 : index
      %c0_193 = arith.constant 0 : index
      %c0_194 = arith.constant 0 : index
      %176 = vector.load %arg5[%c2_191, %c2_192, %c0_193, %c0_194] : memref<3x3x32x64xbf16, #tpu.memory_space<vmem>>, vector<1x1x32x64xbf16>
      %177 = vector.shape_cast %176 : vector<1x1x32x64xbf16> to vector<32x64xbf16>
      %cst_195 = arith.constant dense<0.000000e+00> : vector<64x64xf32>
      %178 = tpu.matmul %175, %177, %cst_195 {dimension_numbers = #tpu.dot_dimension_numbers<[1], [0], [0], [1], [0, 0, 1, 1], [], []>} : vector<64x32xbf16>, vector<32x64xbf16>, vector<64x64xf32> -> vector<64x64xf32>
      %179 = arith.addf %170, %178 : vector<64x64xf32>
      %180 = vector.broadcast %2 : vector<1x64xf32> to vector<64x64xf32>
      %181 = arith.mulf %179, %180 : vector<64x64xf32>
      %182 = vector.broadcast %3 : vector<1x64xf32> to vector<64x64xf32>
      %183 = arith.addf %181, %182 : vector<64x64xf32>
      %cst_196 = arith.constant 0.000000e+00 : f32
      %184 = vector.broadcast %cst_196 : f32 to vector<64x64xf32>
      %185 = arith.maximumf %183, %184 : vector<64x64xf32>
      %c2_i32_197 = arith.constant 2 : i32
      %186 = arith.muli %c2_i32_197, %96 : i32
      %c1_i32_198 = arith.constant 1 : i32
      %187 = arith.addi %186, %c1_i32_198 : i32
      %cst_199 = arith.constant 0.000000e+00 : f32
      %188 = vector.broadcast %cst_199 : f32 to vector<64x64xf32>
      %c0_i32_200 = arith.constant 0 : i32
      %189 = arith.addi %187, %c0_i32_200 : i32
      %190 = arith.index_cast %189 : i32 to index
      %c7_201 = arith.constant 7 : index
      %c0_202 = arith.constant 0 : index
      %191 = vector.load %arg10[%190, %c7_201, %c0_202] : memref<10x73x32xf32, #tpu.memory_space<vmem>>, vector<1x64x32xf32>
      %192 = vector.shape_cast %191 : vector<1x64x32xf32> to vector<64x32xf32>
      %193 = arith.truncf %192 : vector<64x32xf32> to vector<64x32xbf16>
      %c0_203 = arith.constant 0 : index
      %c0_204 = arith.constant 0 : index
      %c0_205 = arith.constant 0 : index
      %c0_206 = arith.constant 0 : index
      %194 = vector.load %arg5[%c0_203, %c0_204, %c0_205, %c0_206] : memref<3x3x32x64xbf16, #tpu.memory_space<vmem>>, vector<1x1x32x64xbf16>
      %195 = vector.shape_cast %194 : vector<1x1x32x64xbf16> to vector<32x64xbf16>
      %cst_207 = arith.constant dense<0.000000e+00> : vector<64x64xf32>
      %196 = tpu.matmul %193, %195, %cst_207 {dimension_numbers = #tpu.dot_dimension_numbers<[1], [0], [0], [1], [0, 0, 1, 1], [], []>} : vector<64x32xbf16>, vector<32x64xbf16>, vector<64x64xf32> -> vector<64x64xf32>
      %197 = arith.addf %188, %196 : vector<64x64xf32>
      %c0_i32_208 = arith.constant 0 : i32
      %198 = arith.addi %187, %c0_i32_208 : i32
      %199 = arith.index_cast %198 : i32 to index
      %c8_209 = arith.constant 8 : index
      %c0_210 = arith.constant 0 : index
      %200 = vector.load %arg10[%199, %c8_209, %c0_210] : memref<10x73x32xf32, #tpu.memory_space<vmem>>, vector<1x64x32xf32>
      %201 = vector.shape_cast %200 : vector<1x64x32xf32> to vector<64x32xf32>
      %202 = arith.truncf %201 : vector<64x32xf32> to vector<64x32xbf16>
      %c0_211 = arith.constant 0 : index
      %c1_212 = arith.constant 1 : index
      %c0_213 = arith.constant 0 : index
      %c0_214 = arith.constant 0 : index
      %203 = vector.load %arg5[%c0_211, %c1_212, %c0_213, %c0_214] : memref<3x3x32x64xbf16, #tpu.memory_space<vmem>>, vector<1x1x32x64xbf16>
      %204 = vector.shape_cast %203 : vector<1x1x32x64xbf16> to vector<32x64xbf16>
      %cst_215 = arith.constant dense<0.000000e+00> : vector<64x64xf32>
      %205 = tpu.matmul %202, %204, %cst_215 {dimension_numbers = #tpu.dot_dimension_numbers<[1], [0], [0], [1], [0, 0, 1, 1], [], []>} : vector<64x32xbf16>, vector<32x64xbf16>, vector<64x64xf32> -> vector<64x64xf32>
      %206 = arith.addf %197, %205 : vector<64x64xf32>
      %c0_i32_216 = arith.constant 0 : i32
      %207 = arith.addi %187, %c0_i32_216 : i32
      %208 = arith.index_cast %207 : i32 to index
      %c9_217 = arith.constant 9 : index
      %c0_218 = arith.constant 0 : index
      %209 = vector.load %arg10[%208, %c9_217, %c0_218] : memref<10x73x32xf32, #tpu.memory_space<vmem>>, vector<1x64x32xf32>
      %210 = vector.shape_cast %209 : vector<1x64x32xf32> to vector<64x32xf32>
      %211 = arith.truncf %210 : vector<64x32xf32> to vector<64x32xbf16>
      %c0_219 = arith.constant 0 : index
      %c2_220 = arith.constant 2 : index
      %c0_221 = arith.constant 0 : index
      %c0_222 = arith.constant 0 : index
      %212 = vector.load %arg5[%c0_219, %c2_220, %c0_221, %c0_222] : memref<3x3x32x64xbf16, #tpu.memory_space<vmem>>, vector<1x1x32x64xbf16>
      %213 = vector.shape_cast %212 : vector<1x1x32x64xbf16> to vector<32x64xbf16>
      %cst_223 = arith.constant dense<0.000000e+00> : vector<64x64xf32>
      %214 = tpu.matmul %211, %213, %cst_223 {dimension_numbers = #tpu.dot_dimension_numbers<[1], [0], [0], [1], [0, 0, 1, 1], [], []>} : vector<64x32xbf16>, vector<32x64xbf16>, vector<64x64xf32> -> vector<64x64xf32>
      %215 = arith.addf %206, %214 : vector<64x64xf32>
      %c1_i32_224 = arith.constant 1 : i32
      %216 = arith.addi %187, %c1_i32_224 : i32
      %217 = arith.index_cast %216 : i32 to index
      %c7_225 = arith.constant 7 : index
      %c0_226 = arith.constant 0 : index
      %218 = vector.load %arg10[%217, %c7_225, %c0_226] : memref<10x73x32xf32, #tpu.memory_space<vmem>>, vector<1x64x32xf32>
      %219 = vector.shape_cast %218 : vector<1x64x32xf32> to vector<64x32xf32>
      %220 = arith.truncf %219 : vector<64x32xf32> to vector<64x32xbf16>
      %c1_227 = arith.constant 1 : index
      %c0_228 = arith.constant 0 : index
      %c0_229 = arith.constant 0 : index
      %c0_230 = arith.constant 0 : index
      %221 = vector.load %arg5[%c1_227, %c0_228, %c0_229, %c0_230] : memref<3x3x32x64xbf16, #tpu.memory_space<vmem>>, vector<1x1x32x64xbf16>
      %222 = vector.shape_cast %221 : vector<1x1x32x64xbf16> to vector<32x64xbf16>
      %cst_231 = arith.constant dense<0.000000e+00> : vector<64x64xf32>
      %223 = tpu.matmul %220, %222, %cst_231 {dimension_numbers = #tpu.dot_dimension_numbers<[1], [0], [0], [1], [0, 0, 1, 1], [], []>} : vector<64x32xbf16>, vector<32x64xbf16>, vector<64x64xf32> -> vector<64x64xf32>
      %224 = arith.addf %215, %223 : vector<64x64xf32>
      %c1_i32_232 = arith.constant 1 : i32
      %225 = arith.addi %187, %c1_i32_232 : i32
      %226 = arith.index_cast %225 : i32 to index
      %c8_233 = arith.constant 8 : index
      %c0_234 = arith.constant 0 : index
      %227 = vector.load %arg10[%226, %c8_233, %c0_234] : memref<10x73x32xf32, #tpu.memory_space<vmem>>, vector<1x64x32xf32>
      %228 = vector.shape_cast %227 : vector<1x64x32xf32> to vector<64x32xf32>
      %229 = arith.truncf %228 : vector<64x32xf32> to vector<64x32xbf16>
      %c1_235 = arith.constant 1 : index
      %c1_236 = arith.constant 1 : index
      %c0_237 = arith.constant 0 : index
      %c0_238 = arith.constant 0 : index
      %230 = vector.load %arg5[%c1_235, %c1_236, %c0_237, %c0_238] : memref<3x3x32x64xbf16, #tpu.memory_space<vmem>>, vector<1x1x32x64xbf16>
      %231 = vector.shape_cast %230 : vector<1x1x32x64xbf16> to vector<32x64xbf16>
      %cst_239 = arith.constant dense<0.000000e+00> : vector<64x64xf32>
      %232 = tpu.matmul %229, %231, %cst_239 {dimension_numbers = #tpu.dot_dimension_numbers<[1], [0], [0], [1], [0, 0, 1, 1], [], []>} : vector<64x32xbf16>, vector<32x64xbf16>, vector<64x64xf32> -> vector<64x64xf32>
      %233 = arith.addf %224, %232 : vector<64x64xf32>
      %c1_i32_240 = arith.constant 1 : i32
      %234 = arith.addi %187, %c1_i32_240 : i32
      %235 = arith.index_cast %234 : i32 to index
      %c9_241 = arith.constant 9 : index
      %c0_242 = arith.constant 0 : index
      %236 = vector.load %arg10[%235, %c9_241, %c0_242] : memref<10x73x32xf32, #tpu.memory_space<vmem>>, vector<1x64x32xf32>
      %237 = vector.shape_cast %236 : vector<1x64x32xf32> to vector<64x32xf32>
      %238 = arith.truncf %237 : vector<64x32xf32> to vector<64x32xbf16>
      %c1_243 = arith.constant 1 : index
      %c2_244 = arith.constant 2 : index
      %c0_245 = arith.constant 0 : index
      %c0_246 = arith.constant 0 : index
      %239 = vector.load %arg5[%c1_243, %c2_244, %c0_245, %c0_246] : memref<3x3x32x64xbf16, #tpu.memory_space<vmem>>, vector<1x1x32x64xbf16>
      %240 = vector.shape_cast %239 : vector<1x1x32x64xbf16> to vector<32x64xbf16>
      %cst_247 = arith.constant dense<0.000000e+00> : vector<64x64xf32>
      %241 = tpu.matmul %238, %240, %cst_247 {dimension_numbers = #tpu.dot_dimension_numbers<[1], [0], [0], [1], [0, 0, 1, 1], [], []>} : vector<64x32xbf16>, vector<32x64xbf16>, vector<64x64xf32> -> vector<64x64xf32>
      %242 = arith.addf %233, %241 : vector<64x64xf32>
      %c2_i32_248 = arith.constant 2 : i32
      %243 = arith.addi %187, %c2_i32_248 : i32
      %244 = arith.index_cast %243 : i32 to index
      %c7_249 = arith.constant 7 : index
      %c0_250 = arith.constant 0 : index
      %245 = vector.load %arg10[%244, %c7_249, %c0_250] : memref<10x73x32xf32, #tpu.memory_space<vmem>>, vector<1x64x32xf32>
      %246 = vector.shape_cast %245 : vector<1x64x32xf32> to vector<64x32xf32>
      %247 = arith.truncf %246 : vector<64x32xf32> to vector<64x32xbf16>
      %c2_251 = arith.constant 2 : index
      %c0_252 = arith.constant 0 : index
      %c0_253 = arith.constant 0 : index
      %c0_254 = arith.constant 0 : index
      %248 = vector.load %arg5[%c2_251, %c0_252, %c0_253, %c0_254] : memref<3x3x32x64xbf16, #tpu.memory_space<vmem>>, vector<1x1x32x64xbf16>
      %249 = vector.shape_cast %248 : vector<1x1x32x64xbf16> to vector<32x64xbf16>
      %cst_255 = arith.constant dense<0.000000e+00> : vector<64x64xf32>
      %250 = tpu.matmul %247, %249, %cst_255 {dimension_numbers = #tpu.dot_dimension_numbers<[1], [0], [0], [1], [0, 0, 1, 1], [], []>} : vector<64x32xbf16>, vector<32x64xbf16>, vector<64x64xf32> -> vector<64x64xf32>
      %251 = arith.addf %242, %250 : vector<64x64xf32>
      %c2_i32_256 = arith.constant 2 : i32
      %252 = arith.addi %187, %c2_i32_256 : i32
      %253 = arith.index_cast %252 : i32 to index
      %c8_257 = arith.constant 8 : index
      %c0_258 = arith.constant 0 : index
      %254 = vector.load %arg10[%253, %c8_257, %c0_258] : memref<10x73x32xf32, #tpu.memory_space<vmem>>, vector<1x64x32xf32>
      %255 = vector.shape_cast %254 : vector<1x64x32xf32> to vector<64x32xf32>
      %256 = arith.truncf %255 : vector<64x32xf32> to vector<64x32xbf16>
      %c2_259 = arith.constant 2 : index
      %c1_260 = arith.constant 1 : index
      %c0_261 = arith.constant 0 : index
      %c0_262 = arith.constant 0 : index
      %257 = vector.load %arg5[%c2_259, %c1_260, %c0_261, %c0_262] : memref<3x3x32x64xbf16, #tpu.memory_space<vmem>>, vector<1x1x32x64xbf16>
      %258 = vector.shape_cast %257 : vector<1x1x32x64xbf16> to vector<32x64xbf16>
      %cst_263 = arith.constant dense<0.000000e+00> : vector<64x64xf32>
      %259 = tpu.matmul %256, %258, %cst_263 {dimension_numbers = #tpu.dot_dimension_numbers<[1], [0], [0], [1], [0, 0, 1, 1], [], []>} : vector<64x32xbf16>, vector<32x64xbf16>, vector<64x64xf32> -> vector<64x64xf32>
      %260 = arith.addf %251, %259 : vector<64x64xf32>
      %c2_i32_264 = arith.constant 2 : i32
      %261 = arith.addi %187, %c2_i32_264 : i32
      %262 = arith.index_cast %261 : i32 to index
      %c9_265 = arith.constant 9 : index
      %c0_266 = arith.constant 0 : index
      %263 = vector.load %arg10[%262, %c9_265, %c0_266] : memref<10x73x32xf32, #tpu.memory_space<vmem>>, vector<1x64x32xf32>
      %264 = vector.shape_cast %263 : vector<1x64x32xf32> to vector<64x32xf32>
      %265 = arith.truncf %264 : vector<64x32xf32> to vector<64x32xbf16>
      %c2_267 = arith.constant 2 : index
      %c2_268 = arith.constant 2 : index
      %c0_269 = arith.constant 0 : index
      %c0_270 = arith.constant 0 : index
      %266 = vector.load %arg5[%c2_267, %c2_268, %c0_269, %c0_270] : memref<3x3x32x64xbf16, #tpu.memory_space<vmem>>, vector<1x1x32x64xbf16>
      %267 = vector.shape_cast %266 : vector<1x1x32x64xbf16> to vector<32x64xbf16>
      %cst_271 = arith.constant dense<0.000000e+00> : vector<64x64xf32>
      %268 = tpu.matmul %265, %267, %cst_271 {dimension_numbers = #tpu.dot_dimension_numbers<[1], [0], [0], [1], [0, 0, 1, 1], [], []>} : vector<64x32xbf16>, vector<32x64xbf16>, vector<64x64xf32> -> vector<64x64xf32>
      %269 = arith.addf %260, %268 : vector<64x64xf32>
      %270 = vector.broadcast %2 : vector<1x64xf32> to vector<64x64xf32>
      %271 = arith.mulf %269, %270 : vector<64x64xf32>
      %272 = vector.broadcast %3 : vector<1x64xf32> to vector<64x64xf32>
      %273 = arith.addf %271, %272 : vector<64x64xf32>
      %cst_272 = arith.constant 0.000000e+00 : f32
      %274 = vector.broadcast %cst_272 : f32 to vector<64x64xf32>
      %275 = arith.maximumf %273, %274 : vector<64x64xf32>
      %276 = arith.maximumf %185, %275 : vector<64x64xf32>
      %c0_273 = arith.constant 0 : index
      %c0_274 = arith.constant 0 : index
      %277 = vector.load %arg12[%c0_273, %c0_274] : memref<64x64xf32, #tpu.memory_space<vmem>>, vector<64x64xf32>
      tpu.vector_store %arg12[%c0_273, %c0_274], %276 {strides = array<i32>} : memref<64x64xf32, #tpu.memory_space<vmem>>, vector<64x64xf32>,
      %c0_275 = arith.constant 0 : index
      %c0_276 = arith.constant 0 : index
      %278 = tpu.strided_load %arg12[%c0_275, %c0_276] {strides = array<i32: 2, 1>} : memref<64x64xf32, #tpu.memory_space<vmem>>, vector<32x64xf32>
      %c1_277 = arith.constant 1 : index
      %c0_278 = arith.constant 0 : index
      %279 = tpu.strided_load %arg12[%c1_277, %c0_278] {strides = array<i32: 2, 1>} : memref<64x64xf32, #tpu.memory_space<vmem>>, vector<32x64xf32>
      %280 = arith.maximumf %278, %279 : vector<32x64xf32>
      %281 = arith.index_cast %96 : i32 to index
      %c0_279 = arith.constant 0 : index
      %c0_280 = arith.constant 0 : index
      %282 = vector.load %arg13[%281, %c0_279, %c0_280] : memref<4x32x64xf32, #tpu.memory_space<vmem>>, vector<1x32x64xf32>
      %283 = vector.shape_cast %282 : vector<1x32x64xf32> to vector<32x64xf32>
      %284 = vector.shape_cast %280 : vector<32x64xf32> to vector<1x32x64xf32>
      tpu.vector_store %arg13[%281, %c0_279, %c0_280], %284 {strides = array<i32>} : memref<4x32x64xf32, #tpu.memory_space<vmem>>, vector<1x32x64xf32>,
    }
    %c4_i32_113 = arith.constant 4 : i32
    %c0_114 = arith.constant 0 : index
    %c0_115 = arith.constant 0 : index
    %c0_116 = arith.constant 0 : index
    %90 = vector.load %arg13[%c0_114, %c0_115, %c0_116] : memref<4x32x64xf32, #tpu.memory_space<vmem>>, vector<4x32x64xf32>
    %91 = arith.truncf %90 : vector<4x32x64xf32> to vector<4x32x64xbf16>
    %c0_117 = arith.constant 0 : index
    %c0_118 = arith.constant 0 : index
    %c0_119 = arith.constant 0 : index
    %c0_120 = arith.constant 0 : index
    %92 = vector.load %arg8[%c0_117, %c0_118, %c0_119, %c0_120] : memref<1x4x32x64xbf16, #tpu.memory_space<vmem>>, vector<1x4x32x64xbf16>
    %93 = vector.shape_cast %92 : vector<1x4x32x64xbf16> to vector<4x32x64xbf16>
    %94 = vector.shape_cast %91 : vector<4x32x64xbf16> to vector<1x4x32x64xbf16>
    tpu.vector_store %arg8[%c0_117, %c0_118, %c0_119, %c0_120], %94 {strides = array<i32>} : memref<1x4x32x64xbf16, #tpu.memory_space<vmem>>, vector<1x4x32x64xbf16>,
    return
  }
  func.func @transform_0(%arg0: i32) -> (i32, i32, i32, i32) {
    %c0_i32 = arith.constant 0 : i32
    %c0_i32_0 = arith.constant 0 : i32
    %c0_i32_1 = arith.constant 0 : i32
    %c0_i32_2 = arith.constant 0 : i32
    return %arg0, %c0_i32, %c0_i32_0, %c0_i32_1 : i32, i32, i32, i32
  }
  func.func @transform_1(%arg0: i32) -> (i32, i32, i32, i32) {
    %c0_i32 = arith.constant 0 : i32
    %c0_i32_0 = arith.constant 0 : i32
    %c0_i32_1 = arith.constant 0 : i32
    %c0_i32_2 = arith.constant 0 : i32
    %c0_i32_3 = arith.constant 0 : i32
    return %c0_i32, %c0_i32_0, %c0_i32_1, %c0_i32_2 : i32, i32, i32, i32
  }
  func.func @transform_2(%arg0: i32) -> (i32, i32) {
    %c0_i32 = arith.constant 0 : i32
    %c0_i32_0 = arith.constant 0 : i32
    %c0_i32_1 = arith.constant 0 : i32
    return %c0_i32, %c0_i32_0 : i32, i32
  }
  func.func @transform_3(%arg0: i32) -> (i32, i32) {
    %c0_i32 = arith.constant 0 : i32
    %c0_i32_0 = arith.constant 0 : i32
    %c0_i32_1 = arith.constant 0 : i32
    return %c0_i32, %c0_i32_0 : i32, i32
  }
  func.func @transform_4(%arg0: i32) -> (i32, i32, i32, i32) {
    %c0_i32 = arith.constant 0 : i32
    %c0_i32_0 = arith.constant 0 : i32
    %c0_i32_1 = arith.constant 0 : i32
    %c0_i32_2 = arith.constant 0 : i32
    %c0_i32_3 = arith.constant 0 : i32
    return %c0_i32, %c0_i32_0, %c0_i32_1, %c0_i32_2 : i32, i32, i32, i32
  }
  func.func @transform_5(%arg0: i32) -> (i32, i32) {
    %c0_i32 = arith.constant 0 : i32
    %c0_i32_0 = arith.constant 0 : i32
    %c0_i32_1 = arith.constant 0 : i32
    return %c0_i32, %c0_i32_0 : i32, i32
  }
  func.func @transform_6(%arg0: i32) -> (i32, i32) {
    %c0_i32 = arith.constant 0 : i32
    %c0_i32_0 = arith.constant 0 : i32
    %c0_i32_1 = arith.constant 0 : i32
    return %c0_i32, %c0_i32_0 : i32, i32
  }
  func.func @transform_7(%arg0: i32) -> (i32, i32, i32, i32) {
    %c0_i32 = arith.constant 0 : i32
    %c0_i32_0 = arith.constant 0 : i32
    %c0_i32_1 = arith.constant 0 : i32
    %c0_i32_2 = arith.constant 0 : i32
    return %arg0, %c0_i32, %c0_i32_0, %c0_i32_1 : i32, i32, i32, i32
  }
}

module attributes {stable_mosaic.version = 11 : i64} {
  func.func @_mlp_kernel(%arg0: i32, %arg1: memref<2x2048xbf16, #tpu.memory_space<vmem>>, %arg2: memref<2048x128xbf16, #tpu.memory_space<vmem>>, %arg3: memref<1x128xf32, #tpu.memory_space<vmem>>, %arg4: memref<128x10xf32, #tpu.memory_space<vmem>>, %arg5: memref<1x10xf32, #tpu.memory_space<vmem>>, %arg6: memref<2x10xf32, #tpu.memory_space<vmem>>, %arg7: memref<2x128xf32, #tpu.memory_space<vmem>>) attributes {dimension_semantics = [#tpu.dimension_semantics<arbitrary>], iteration_bounds = array<i64: 4>, scalar_prefetch = 0 : i64, scratch_operands = 1 : i64, tpu.core_type = #tpu.core_type<tc>, window_params = [{transform_indices = @transform_0, window_bounds = array<i64: 2, 2048>}, {transform_indices = @transform_1, window_bounds = array<i64: 2048, 128>}, {pipeline_mode = #tpu.pipeline_mode<synchronous>, transform_indices = @transform_2, window_bounds = array<i64: 1, 128>}, {pipeline_mode = #tpu.pipeline_mode<synchronous>, transform_indices = @transform_3, window_bounds = array<i64: 128, 10>}, {pipeline_mode = #tpu.pipeline_mode<synchronous>, transform_indices = @transform_4, window_bounds = array<i64: 1, 10>}, {pipeline_mode = #tpu.pipeline_mode<synchronous>, transform_indices = @transform_5, window_bounds = array<i64: 2, 10>}]} {
    %c0_i32 = arith.constant 0 : i32
    %0 = arith.cmpi eq, %arg0, %c0_i32 : i32
    %1 = arith.extui %0 : i1 to i32
    %c0_i32_0 = arith.constant 0 : i32
    %2 = arith.cmpi ne, %1, %c0_i32_0 : i32
    scf.if %2 {
      %cst_9 = arith.constant 0.000000e+00 : f32
      %12 = vector.broadcast %cst_9 : f32 to vector<2x128xf32>
      %c0_10 = arith.constant 0 : index
      %c0_11 = arith.constant 0 : index
      %13 = vector.load %arg7[%c0_10, %c0_11] : memref<2x128xf32, #tpu.memory_space<vmem>>, vector<2x128xf32>
      tpu.vector_store %arg7[%c0_10, %c0_11], %12 {strides = array<i32>} : memref<2x128xf32, #tpu.memory_space<vmem>>, vector<2x128xf32>,
    } else {
    }
    %c0 = arith.constant 0 : index
    %c0_1 = arith.constant 0 : index
    %3 = vector.load %arg7[%c0, %c0_1] : memref<2x128xf32, #tpu.memory_space<vmem>>, vector<2x128xf32>
    %c0_2 = arith.constant 0 : index
    %c0_3 = arith.constant 0 : index
    %4 = vector.load %arg1[%c0_2, %c0_3] : memref<2x2048xbf16, #tpu.memory_space<vmem>>, vector<2x2048xbf16>
    %c0_4 = arith.constant 0 : index
    %c0_5 = arith.constant 0 : index
    %5 = vector.load %arg2[%c0_4, %c0_5] : memref<2048x128xbf16, #tpu.memory_space<vmem>>, vector<2048x128xbf16>
    %cst = arith.constant dense<0.000000e+00> : vector<2x128xf32>
    %6 = tpu.matmul %4, %5, %cst {dimension_numbers = #tpu.dot_dimension_numbers<[1], [0], [0], [1], [0, 0, 1, 1], [], []>} : vector<2x2048xbf16>, vector<2048x128xbf16>, vector<2x128xf32> -> vector<2x128xf32>
    %7 = arith.addf %3, %6 : vector<2x128xf32>
    %c0_6 = arith.constant 0 : index
    %c0_7 = arith.constant 0 : index
    %8 = vector.load %arg7[%c0_6, %c0_7] : memref<2x128xf32, #tpu.memory_space<vmem>>, vector<2x128xf32>
    tpu.vector_store %arg7[%c0_6, %c0_7], %7 {strides = array<i32>} : memref<2x128xf32, #tpu.memory_space<vmem>>, vector<2x128xf32>,
    %c3_i32 = arith.constant 3 : i32
    %9 = arith.cmpi eq, %arg0, %c3_i32 : i32
    %10 = arith.extui %9 : i1 to i32
    %c0_i32_8 = arith.constant 0 : i32
    %11 = arith.cmpi ne, %10, %c0_i32_8 : i32
    scf.if %11 {
      %c0_9 = arith.constant 0 : index
      %c0_10 = arith.constant 0 : index
      %12 = vector.load %arg7[%c0_9, %c0_10] : memref<2x128xf32, #tpu.memory_space<vmem>>, vector<2x128xf32>
      %c0_11 = arith.constant 0 : index
      %c0_12 = arith.constant 0 : index
      %13 = vector.load %arg3[%c0_11, %c0_12] : memref<1x128xf32, #tpu.memory_space<vmem>>, vector<1x128xf32>
      %14 = vector.broadcast %13 : vector<1x128xf32> to vector<2x128xf32>
      %15 = arith.addf %12, %14 : vector<2x128xf32>
      %cst_13 = arith.constant 0.000000e+00 : f32
      %16 = vector.broadcast %cst_13 : f32 to vector<2x128xf32>
      %17 = arith.maximumf %15, %16 : vector<2x128xf32>
      %c0_14 = arith.constant 0 : index
      %c0_15 = arith.constant 0 : index
      %18 = vector.load %arg4[%c0_14, %c0_15] : memref<128x10xf32, #tpu.memory_space<vmem>>, vector<128x10xf32>
      %cst_16 = arith.constant dense<0.000000e+00> : vector<2x10xf32>
      %19 = tpu.matmul %17, %18, %cst_16 {dimension_numbers = #tpu.dot_dimension_numbers<[1], [0], [0], [1], [0, 0, 1, 1], [], []>} : vector<2x128xf32>, vector<128x10xf32>, vector<2x10xf32> -> vector<2x10xf32>
      %c0_17 = arith.constant 0 : index
      %c0_18 = arith.constant 0 : index
      %20 = vector.load %arg5[%c0_17, %c0_18] : memref<1x10xf32, #tpu.memory_space<vmem>>, vector<1x10xf32>
      %21 = vector.broadcast %20 : vector<1x10xf32> to vector<2x10xf32>
      %22 = arith.addf %19, %21 : vector<2x10xf32>
      %c0_19 = arith.constant 0 : index
      %c0_20 = arith.constant 0 : index
      %23 = vector.load %arg6[%c0_19, %c0_20] : memref<2x10xf32, #tpu.memory_space<vmem>>, vector<2x10xf32>
      tpu.vector_store %arg6[%c0_19, %c0_20], %22 {strides = array<i32>} : memref<2x10xf32, #tpu.memory_space<vmem>>, vector<2x10xf32>,
    } else {
    }
    return
  }
  func.func @transform_0(%arg0: i32) -> (i32, i32) {
    %c0_i32 = arith.constant 0 : i32
    %c0_i32_0 = arith.constant 0 : i32
    return %c0_i32, %arg0 : i32, i32
  }
  func.func @transform_1(%arg0: i32) -> (i32, i32) {
    %c0_i32 = arith.constant 0 : i32
    %c0_i32_0 = arith.constant 0 : i32
    return %arg0, %c0_i32 : i32, i32
  }
  func.func @transform_2(%arg0: i32) -> (i32, i32) {
    %c0_i32 = arith.constant 0 : i32
    %c0_i32_0 = arith.constant 0 : i32
    %c0_i32_1 = arith.constant 0 : i32
    return %c0_i32, %c0_i32_0 : i32, i32
  }
  func.func @transform_3(%arg0: i32) -> (i32, i32) {
    %c0_i32 = arith.constant 0 : i32
    %c0_i32_0 = arith.constant 0 : i32
    %c0_i32_1 = arith.constant 0 : i32
    return %c0_i32, %c0_i32_0 : i32, i32
  }
  func.func @transform_4(%arg0: i32) -> (i32, i32) {
    %c0_i32 = arith.constant 0 : i32
    %c0_i32_0 = arith.constant 0 : i32
    %c0_i32_1 = arith.constant 0 : i32
    return %c0_i32, %c0_i32_0 : i32, i32
  }
  func.func @transform_5(%arg0: i32) -> (i32, i32) {
    %c0_i32 = arith.constant 0 : i32
    %c0_i32_0 = arith.constant 0 : i32
    %c0_i32_1 = arith.constant 0 : i32
    return %c0_i32, %c0_i32_0 : i32, i32
  }
}

</mosaic_0001>

<llo_original>
// kernel: audio_cnn_forward.3
$region0: #{audio_cnn_forward.3}
  #allocation0 [shape = 'u32[]', space=smem, size = 0x4, offset = 0x4, fixed_abs, tag = 'smem constant byte address 0x4 - core index']
  #allocation1 [shape = 'u32[144,128]{1,0:T(1,128)}', space=vmem, size = 0x12000, scoped, tag = 'internal scratch']
  #allocation2 [shape = 'f32[2,128]{1,0:T(2,128)}', space=vmem, size = 0x400, scoped, tag = 'scratch operand']
  %s0 = inlined_call_operand.vmem [shape: bf16[2,8192], index: 0, kind: input, shape index: {}]
  %s1 = inlined_call_operand.vmem [shape: bf16[8192,128], index: 1, kind: input, shape index: {}]
  %s2 = inlined_call_operand.vmem [shape: f32[1,128], index: 2, kind: input, shape index: {}]
  %s3 = inlined_call_operand.vmem [shape: f32[128,10], index: 3, kind: input, shape index: {}]
  %s4 = inlined_call_operand.vmem [shape: f32[1,10], index: 4, kind: input, shape index: {}]
  %s5 = inlined_call_operand.hbm [shape: f32[2,10], index: 5, kind: output, shape index: {}]
  %s6 = sld [smem:[#allocation0]]
  $region61: #{audio_cnn_forward.3} parent=0
    _
  %s8 = ssub.s32 1, %s6
  %s9 = scalar_select 0, %s8, %s6
  $region1: #{audio_cnn_forward.3} parent=0
    #allocation3 [shape = 'u8[1024]{0}', space=vmem, size = 0x400, scoped, tag = 'output window, operand 0, single buffered']
    #allocation4 [shape = 's32[2]{0}', space=sflag, size = 0x8, scoped, tag = 'scoped memory for audio_cnn_forward.3']
    %10 = vsyncpa [#allocation4], 0
    loop: start=0, step=1, limit=6
    $region2: #{audio_cnn_forward.3} parent=1 // loop_pre_header
      _
    $region3: #{audio_cnn_forward.3} parent=1 // loop_header
      %s12 = sphi 0, %s16
      %p13 = scmp.ge.s32.totalorder %s12, 6
      %s22 = sphi 0, %s24
      %s25 = sphi 0, %s22
      %s26 = sphi 0, %s25
      %s42 = sphi 0, %s26
      %s48 = sphi 0, %s50
      %s51 = sphi 0, %s48
      %s52 = sphi 0, %s51
      %s68 = sphi 0, %s52
      %s72 = sphi 0, %s72
      %s74 = sphi 0, %s72
      %s75 = sphi 0, %s74
      %s89 = sphi 0, %s75
      %s93 = sphi 0, %s93
      %s95 = sphi 0, %s93
      %s96 = sphi 0, %s95
      %s110 = sphi 0, %s96
      %s114 = sphi 0, %s114
      %s116 = sphi 0, %s114
      %s117 = sphi 0, %s116
      %s131 = sphi 0, %s117
      %s135 = sphi 0, %s135
      %s137 = sphi 0, %s135
      %s138 = sphi 0, %s137
      %s152 = sphi 0, %s138
    $region4: #{audio_cnn_forward.3} parent=1 // loop_header_branch
      %15 = sbr.rel (%p13) target = $region8
    $region5: #{audio_cnn_forward.3} parent=1 // loop_body
      %s17 = ssub.s32 %s12, 1
      %s18 = ssub.s32 %s12, 2
      %s19 = sadd.s32 %s12, 1
      %s20 = ssub.s32 %s12, %s19
      %p21 = scmp.eq.s32.totalorder %s20, 0
      %s23 = sadd.s32 %s22, 1
      %s24 = scalar_select %p21, %s22, %s23
      %p27 = pneg %p21
      %p28 = scmp.eq.s32.totalorder %s12, 3
      %p29 = por %p27, %p28
      %p30 = scmp.ne.s32.totalorder %s22, %s25
      %p31 = scmp.eq.s32.totalorder %s12, 0
      %p32 = por %p30, %p31
      %p33 = scmp.ne.s32.totalorder %s22, %s25
      %p34 = scmp.eq.s32.totalorder %s17, 3
      %p35 = por %p33, %p34
      %p36 = scmp.ne.s32.totalorder %s25, %s26
      %p37 = scmp.eq.s32.totalorder %s17, 0
      %p38 = por %p36, %p37
      %p39 = scmp.ne.s32.totalorder %s25, %s26
      %p40 = scmp.eq.s32.totalorder %s18, 3
      %p41 = por %p39, %p40
      %p43 = scmp.ne.s32.totalorder %s26, %s42
      %p44 = scmp.eq.s32.totalorder %s18, 0
      %p45 = por %p43, %p44
      %s46 = ssub.s32 %s12, %s19
      %p47 = scmp.eq.s32.totalorder %s46, 0
      %s49 = sadd.s32 %s48, 1
      %s50 = scalar_select %p47, %s48, %s49
      %p53 = pneg %p47
      %p54 = scmp.eq.s32.totalorder %s12, 3
      %p55 = por %p53, %p54
      %p56 = scmp.ne.s32.totalorder %s48, %s51
      %p57 = scmp.eq.s32.totalorder %s12, 0
      %p58 = por %p56, %p57
      %p59 = scmp.ne.s32.totalorder %s48, %s51
      %p60 = scmp.eq.s32.totalorder %s17, 3
      %p61 = por %p59, %p60
      %p62 = scmp.ne.s32.totalorder %s51, %s52
      %p63 = scmp.eq.s32.totalorder %s17, 0
      %p64 = por %p62, %p63
      %p65 = scmp.ne.s32.totalorder %s51, %s52
      %p66 = scmp.eq.s32.totalorder %s18, 3
      %p67 = por %p65, %p66
      %p69 = scmp.ne.s32.totalorder %s52, %s68
      %p70 = scmp.eq.s32.totalorder %s18, 0
      %p71 = por %p69, %p70
      %s73 = sadd.s32 %s72, 1
      %p76 = scmp.eq.s32.totalorder %s12, 3
      %p77 = scmp.ne.s32.totalorder %s72, %s74
      %p78 = scmp.eq.s32.totalorder %s12, 0
      %p79 = por %p77, %p78
      %p80 = scmp.ne.s32.totalorder %s72, %s74
      %p81 = scmp.eq.s32.totalorder %s17, 3
      %p82 = por %p80, %p81
      %p83 = scmp.ne.s32.totalorder %s74, %s75
      %p84 = scmp.eq.s32.totalorder %s17, 0
      %p85 = por %p83, %p84
      %p86 = scmp.ne.s32.totalorder %s74, %s75
      %p87 = scmp.eq.s32.totalorder %s18, 3
      %p88 = por %p86, %p87
      %p90 = scmp.ne.s32.totalorder %s75, %s89
      %p91 = scmp.eq.s32.totalorder %s18, 0
      %p92 = por %p90, %p91
      %s94 = sadd.s32 %s93, 1
      %p97 = scmp.eq.s32.totalorder %s12, 3
      %p98 = scmp.ne.s32.totalorder %s93, %s95
      %p99 = scmp.eq.s32.totalorder %s12, 0
      %p100 = por %p98, %p99
      %p101 = scmp.ne.s32.totalorder %s93, %s95
      %p102 = scmp.eq.s32.totalorder %s17, 3
      %p103 = por %p101, %p102
      %p104 = scmp.ne.s32.totalorder %s95, %s96
      %p105 = scmp.eq.s32.totalorder %s17, 0
      %p106 = por %p104, %p105
      %p107 = scmp.ne.s32.totalorder %s95, %s96
      %p108 = scmp.eq.s32.totalorder %s18, 3
      %p109 = por %p107, %p108
      %p111 = scmp.ne.s32.totalorder %s96, %s110
      %p112 = scmp.eq.s32.totalorder %s18, 0
      %p113 = por %p111, %p112
      %s115 = sadd.s32 %s114, 1
      %p118 = scmp.eq.s32.totalorder %s12, 3
      %p119 = scmp.ne.s32.totalorder %s114, %s116
      %p120 = scmp.eq.s32.totalorder %s12, 0
      %p121 = por %p119, %p120
      %p122 = scmp.ne.s32.totalorder %s114, %s116
      %p123 = scmp.eq.s32.totalorder %s17, 3
      %p124 = por %p122, %p123
      %p125 = scmp.ne.s32.totalorder %s116, %s117
      %p126 = scmp.eq.s32.totalorder %s17, 0
      %p127 = por %p125, %p126
      %p128 = scmp.ne.s32.totalorder %s116, %s117
      %p129 = scmp.eq.s32.totalorder %s18, 3
      %p130 = por %p128, %p129
      %p132 = scmp.ne.s32.totalorder %s117, %s131
      %p133 = scmp.eq.s32.totalorder %s18, 0
      %p134 = por %p132, %p133
      %s136 = sadd.s32 %s135, 1
      %p139 = scmp.eq.s32.totalorder %s12, 3
      %p140 = scmp.ne.s32.totalorder %s135, %s137
      %p141 = scmp.eq.s32.totalorder %s12, 0
      %p142 = por %p140, %p141
      %p143 = scmp.ne.s32.totalorder %s135, %s137
      %p144 = scmp.eq.s32.totalorder %s17, 3
      %p145 = por %p143, %p144
      %p146 = scmp.ne.s32.totalorder %s137, %s138
      %p147 = scmp.eq.s32.totalorder %s17, 0
      %p148 = por %p146, %p147
      %p149 = scmp.ne.s32.totalorder %s137, %s138
      %p150 = scmp.eq.s32.totalorder %s18, 3
      %p151 = por %p149, %p150
      %p153 = scmp.ne.s32.totalorder %s138, %s152
      %p154 = scmp.eq.s32.totalorder %s18, 0
      %p155 = por %p153, %p154
      %p156 = scmp.le.s32.totalorder 1, %s12
      %p157 = scmp.lt.s32.totalorder %s12, 5
      %p158 = pnand %p156, %p157
      %p159 = pneg %p158
      // Predicated region
      $region9: #{audio_cnn_forward.3} parent=5 // pred_check
        _
      $region10: #{audio_cnn_forward.3} parent=5 // pred_check_branch
        %161 = sbr.rel (%p158) target = $region12
      $region11: #{audio_cnn_forward.3} parent=5 // pred_region
        %s162 = ssub.s32 %s12, 1
        // Predicated region
        $region13: #{audio_cnn_forward.3} parent=11 // pred_check
          %p163 = pneg %p85
        $region14: #{audio_cnn_forward.3} parent=11 // pred_check_branch
          %165 = sbr.rel (%p163) target = $region16
        $region15: #{audio_cnn_forward.3} parent=11 // pred_region
          _
        $region16: #{audio_cnn_forward.3} parent=11 // pred_fallthru
          _
        // Predicated region
        $region17: #{audio_cnn_forward.3} parent=11 // pred_check
          %p166 = pneg %p106
        $region18: #{audio_cnn_forward.3} parent=11 // pred_check_branch
          %168 = sbr.rel (%p166) target = $region20
        $region19: #{audio_cnn_forward.3} parent=11 // pred_region
          _
        $region20: #{audio_cnn_forward.3} parent=11 // pred_fallthru
          _
        // Predicated region
        $region21: #{audio_cnn_forward.3} parent=11 // pred_check
          %p169 = pneg %p127
        $region22: #{audio_cnn_forward.3} parent=11 // pred_check_branch
          %171 = sbr.rel (%p169) target = $region24
        $region23: #{audio_cnn_forward.3} parent=11 // pred_region
          _
        $region24: #{audio_cnn_forward.3} parent=11 // pred_fallthru
          _
      $region12: #{audio_cnn_forward.3} parent=5 // pred_fallthru
        _
      %p172 = scmp.lt.s32.totalorder %s12, 4
      // Predicated region
      $region25: #{audio_cnn_forward.3} parent=5 // pred_check
        %p173 = pneg %p172
      $region26: #{audio_cnn_forward.3} parent=5 // pred_check_branch
        %175 = sbr.rel (%p173) target = $region28
      $region27: #{audio_cnn_forward.3} parent=5 // pred_region
        // Predicated region
        $region29: #{audio_cnn_forward.3} parent=27 // pred_check
          %p176 = pneg %p32
        $region30: #{audio_cnn_forward.3} parent=27 // pred_check_branch
          %178 = sbr.rel (%p176) target = $region32
        $region31: #{audio_cnn_forward.3} parent=27 // pred_region
          %s179 = smul.u32 16, %s12
          %p180 = scmp.lt.s32.totalorder %s179, 63
          %s181 = scalar_select %p180, %s179, 63
          %s182 = scalar_lea.vmem %s0, %s181
          %s183 = smul.u32 16, %s12
        $region32: #{audio_cnn_forward.3} parent=27 // pred_fallthru
          _
        // Predicated region
        $region33: #{audio_cnn_forward.3} parent=27 // pred_check
          %p184 = pneg %p58
        $region34: #{audio_cnn_forward.3} parent=27 // pred_check_branch
          %186 = sbr.rel (%p184) target = $region36
        $region35: #{audio_cnn_forward.3} parent=27 // pred_region
          %s187 = smul.u32 256, %s12
          %p188 = scmp.lt.s32.totalorder %s187, 1023
          %s189 = scalar_select %p188, %s187, 1023
          %s190 = smul.addr %s189, 4
          %s191 = scalar_lea.vmem %s1, %s190
          %s192 = smul.u32 256, %s12
        $region36: #{audio_cnn_forward.3} parent=27 // pred_fallthru
          _
      $region28: #{audio_cnn_forward.3} parent=5 // pred_fallthru
        _
      %p193 = scmp.le.s32.totalorder 1, %s12
      %p194 = scmp.lt.s32.totalorder %s12, 5
      %p195 = pnand %p193, %p194
      %p196 = pneg %p195
      // Predicated region
      $region37: #{audio_cnn_forward.3} parent=5 // pred_check
        _
      $region38: #{audio_cnn_forward.3} parent=5 // pred_check_branch
        %198 = sbr.rel (%p195) target = $region40
      $region39: #{audio_cnn_forward.3} parent=5 // pred_region
        %s199 = ssub.s32 %s12, 1
        %s200 = smul.u32 16, %s17
        %p201 = scmp.lt.s32.totalorder %s200, 63
        %s202 = scalar_select %p201, %s200, 63
        %s203 = scalar_lea.vmem %s0, %s202
        %p204 = pneg %p38
        %p205 = pneg %p35
        %s206 = smul.u32 256, %s17
        %p207 = scmp.lt.s32.totalorder %s206, 1023
        %s208 = scalar_select %p207, %s206, 1023
        %s209 = smul.addr %s208, 4
        %s210 = scalar_lea.vmem %s1, %s209
        %p211 = pneg %p64
        %p212 = pneg %p61
        %p213 = pneg %p85
        %p214 = pneg %p82
        %p215 = pneg %p106
        %p216 = pneg %p103
        %p217 = pneg %p127
        %p218 = pneg %p124
        %p219 = pneg %p148
        %p220 = pneg %p145
        %s221 = smul.u32 16, %s17
        %p222 = scmp.lt.s32.totalorder %s221, 63
        %s223 = scalar_select %p222, %s221, 63
        %s224 = scalar_lea.vmem %s0, %s223
        %s225 = smul.u32 16, %s17
        %s226 = smul.u32 256, %s17
        %p227 = scmp.lt.s32.totalorder %s226, 1023
        %s228 = scalar_select %p227, %s226, 1023
        %s229 = smul.addr %s228, 4
        %s230 = scalar_lea.vmem %s1, %s229
        %s231 = smul.u32 256, %s17
        %p233 = scmp.eq.s32.totalorder %s17, 0
        // Predicated region
        $region41: #{audio_cnn_forward.3} parent=39 // pred_check
          %p234 = pneg %p233
        $region42: #{audio_cnn_forward.3} parent=39 // pred_check_branch
          %236 = sbr.rel (%p234) target = $region44
        $region43: #{audio_cnn_forward.3} parent=39 // pred_region
          %237 = vst [vmem:[#allocation2] sm:$0x3] 0.0
        $region44: #{audio_cnn_forward.3} parent=39 // pred_fallthru
          _
        %v238 = vld [vmem:[#allocation2] sm:$0x3]
        %v239 = vld [vmem:[%s224] sm:$0xff]
        %v240 = vld [vmem:[%s224 + $0x8] sm:$0xff]
        %v241 = vld [vmem:[%s230] sm:$0xf]
        %v242 = vld [vmem:[%s230 + $0x4] sm:$0xf]
        %v243 = vld [vmem:[%s230 + $0x8] sm:$0xf]
        %v244 = vld [vmem:[%s230 + $0xc] sm:$0xf]
        %v245 = vld [vmem:[%s230 + $0x10] sm:$0xf]
        %v246 = vld [vmem:[%s230 + $0x14] sm:$0xf]
        %v247 = vld [vmem:[%s230 + $0x18] sm:$0xf]
        %v248 = vld [vmem:[%s230 + $0x1c] sm:$0xf]
        %v249 = vld [vmem:[%s230 + $0x20] sm:$0xf]
        %v250 = vld [vmem:[%s230 + $0x24] sm:$0xf]
        %v251 = vld [vmem:[%s230 + $0x28] sm:$0xf]
        %v252 = vld [vmem:[%s230 + $0x2c] sm:$0xf]
        %v253 = vld [vmem:[%s230 + $0x30] sm:$0xf]
        %v254 = vld [vmem:[%s230 + $0x34] sm:$0xf]
        %v255 = vld [vmem:[%s230 + $0x38] sm:$0xf]
        %v256 = vld [vmem:[%s230 + $0x3c] sm:$0xf]
        %v257 = vld [vmem:[%s230 + $0x40] sm:$0xf]
        %v258 = vld [vmem:[%s230 + $0x44] sm:$0xf]
        %v259 = vld [vmem:[%s230 + $0x48] sm:$0xf]
        %v260 = vld [vmem:[%s230 + $0x4c] sm:$0xf]
        %v261 = vld [vmem:[%s230 + $0x50] sm:$0xf]
        %v262 = vld [vmem:[%s230 + $0x54] sm:$0xf]
        %v263 = vld [vmem:[%s230 + $0x58] sm:$0xf]
        %v264 = vld [vmem:[%s230 + $0x5c] sm:$0xf]
        %v265 = vld [vmem:[%s230 + $0x60] sm:$0xf]
        %v266 = vld [vmem:[%s230 + $0x64] sm:$0xf]
        %v267 = vld [vmem:[%s230 + $0x68] sm:$0xf]
        %v268 = vld [vmem:[%s230 + $0x6c] sm:$0xf]
        %v269 = vld [vmem:[%s230 + $0x70] sm:$0xf]
        %v270 = vld [vmem:[%s230 + $0x74] sm:$0xf]
        %v271 = vld [vmem:[%s230 + $0x78] sm:$0xf]
        %v272 = vld [vmem:[%s230 + $0x7c] sm:$0xf]
        %v273 = vld [vmem:[%s230 + $0x80] sm:$0xf]
        %v274 = vld [vmem:[%s230 + $0x84] sm:$0xf]
        %v275 = vld [vmem:[%s230 + $0x88] sm:$0xf]
        %v276 = vld [vmem:[%s230 + $0x8c] sm:$0xf]
        %v277 = vld [vmem:[%s230 + $0x90] sm:$0xf]
        %v278 = vld [vmem:[%s230 + $0x94] sm:$0xf]
        %v279 = vld [vmem:[%s230 + $0x98] sm:$0xf]
        %v280 = vld [vmem:[%s230 + $0x9c] sm:$0xf]
        %v281 = vld [vmem:[%s230 + $0xa0] sm:$0xf]
        %v282 = vld [vmem:[%s230 + $0xa4] sm:$0xf]
        %v283 = vld [vmem:[%s230 + $0xa8] sm:$0xf]
        %v284 = vld [vmem:[%s230 + $0xac] sm:$0xf]
        %v285 = vld [vmem:[%s230 + $0xb0] sm:$0xf]
        %v286 = vld [vmem:[%s230 + $0xb4] sm:$0xf]
        %v287 = vld [vmem:[%s230 + $0xb8] sm:$0xf]
        %v288 = vld [vmem:[%s230 + $0xbc] sm:$0xf]
        %v289 = vld [vmem:[%s230 + $0xc0] sm:$0xf]
        %v290 = vld [vmem:[%s230 + $0xc4] sm:$0xf]
        %v291 = vld [vmem:[%s230 + $0xc8] sm:$0xf]
        %v292 = vld [vmem:[%s230 + $0xcc] sm:$0xf]
        %v293 = vld [vmem:[%s230 + $0xd0] sm:$0xf]
        %v294 = vld [vmem:[%s230 + $0xd4] sm:$0xf]
        %v295 = vld [vmem:[%s230 + $0xd8] sm:$0xf]
        %v296 = vld [vmem:[%s230 + $0xdc] sm:$0xf]
        %v297 = vld [vmem:[%s230 + $0xe0] sm:$0xf]
        %v298 = vld [vmem:[%s230 + $0xe4] sm:$0xf]
        %v299 = vld [vmem:[%s230 + $0xe8] sm:$0xf]
        %v300 = vld [vmem:[%s230 + $0xec] sm:$0xf]
        %v301 = vld [vmem:[%s230 + $0xf0] sm:$0xf]
        %v302 = vld [vmem:[%s230 + $0xf4] sm:$0xf]
        %v303 = vld [vmem:[%s230 + $0xf8] sm:$0xf]
        %v304 = vld [vmem:[%s230 + $0xfc] sm:$0xf]
        %v305 = vld [vmem:[%s230 + $0x100] sm:$0xf]
        %v306 = vld [vmem:[%s230 + $0x104] sm:$0xf]
        %v307 = vld [vmem:[%s230 + $0x108] sm:$0xf]
        %v308 = vld [vmem:[%s230 + $0x10c] sm:$0xf]
        %v309 = vld [vmem:[%s230 + $0x110] sm:$0xf]
        %v310 = vld [vmem:[%s230 + $0x114] sm:$0xf]
        %v311 = vld [vmem:[%s230 + $0x118] sm:$0xf]
        %v312 = vld [vmem:[%s230 + $0x11c] sm:$0xf]
        %v313 = vld [vmem:[%s230 + $0x120] sm:$0xf]
        %v314 = vld [vmem:[%s230 + $0x124] sm:$0xf]
        %v315 = vld [vmem:[%s230 + $0x128] sm:$0xf]
        %v316 = vld [vmem:[%s230 + $0x12c] sm:$0xf]
        %v317 = vld [vmem:[%s230 + $0x130] sm:$0xf]
        %v318 = vld [vmem:[%s230 + $0x134] sm:$0xf]
        %v319 = vld [vmem:[%s230 + $0x138] sm:$0xf]
        %v320 = vld [vmem:[%s230 + $0x13c] sm:$0xf]
        %v321 = vld [vmem:[%s230 + $0x140] sm:$0xf]
        %v322 = vld [vmem:[%s230 + $0x144] sm:$0xf]
        %v323 = vld [vmem:[%s230 + $0x148] sm:$0xf]
        %v324 = vld [vmem:[%s230 + $0x14c] sm:$0xf]
        %v325 = vld [vmem:[%s230 + $0x150] sm:$0xf]
        %v326 = vld [vmem:[%s230 + $0x154] sm:$0xf]
        %v327 = vld [vmem:[%s230 + $0x158] sm:$0xf]
        %v328 = vld [vmem:[%s230 + $0x15c] sm:$0xf]
        %v329 = vld [vmem:[%s230 + $0x160] sm:$0xf]
        %v330 = vld [vmem:[%s230 + $0x164] sm:$0xf]
        %v331 = vld [vmem:[%s230 + $0x168] sm:$0xf]
        %v332 = vld [vmem:[%s230 + $0x16c] sm:$0xf]
        %v333 = vld [vmem:[%s230 + $0x170] sm:$0xf]
        %v334 = vld [vmem:[%s230 + $0x174] sm:$0xf]
        %v335 = vld [vmem:[%s230 + $0x178] sm:$0xf]
        %v336 = vld [vmem:[%s230 + $0x17c] sm:$0xf]
        %v337 = vld [vmem:[%s230 + $0x180] sm:$0xf]
        %v338 = vld [vmem:[%s230 + $0x184] sm:$0xf]
        %v339 = vld [vmem:[%s230 + $0x188] sm:$0xf]
        %v340 = vld [vmem:[%s230 + $0x18c] sm:$0xf]
        %v341 = vld [vmem:[%s230 + $0x190] sm:$0xf]
        %v342 = vld [vmem:[%s230 + $0x194] sm:$0xf]
        %v343 = vld [vmem:[%s230 + $0x198] sm:$0xf]
        %v344 = vld [vmem:[%s230 + $0x19c] sm:$0xf]
        %v345 = vld [vmem:[%s230 + $0x1a0] sm:$0xf]
        %v346 = vld [vmem:[%s230 + $0x1a4] sm:$0xf]
        %v347 = vld [vmem:[%s230 + $0x1a8] sm:$0xf]
        %v348 = vld [vmem:[%s230 + $0x1ac] sm:$0xf]
        %v349 = vld [vmem:[%s230 + $0x1b0] sm:$0xf]
        %v350 = vld [vmem:[%s230 + $0x1b4] sm:$0xf]
        %v351 = vld [vmem:[%s230 + $0x1b8] sm:$0xf]
        %v352 = vld [vmem:[%s230 + $0x1bc] sm:$0xf]
        %v353 = vld [vmem:[%s230 + $0x1c0] sm:$0xf]
        %v354 = vld [vmem:[%s230 + $0x1c4] sm:$0xf]
        %v355 = vld [vmem:[%s230 + $0x1c8] sm:$0xf]
        %v356 = vld [vmem:[%s230 + $0x1cc] sm:$0xf]
        %v357 = vld [vmem:[%s230 + $0x1d0] sm:$0xf]
        %v358 = vld [vmem:[%s230 + $0x1d4] sm:$0xf]
        %v359 = vld [vmem:[%s230 + $0x1d8] sm:$0xf]
        %v360 = vld [vmem:[%s230 + $0x1dc] sm:$0xf]
        %v361 = vld [vmem:[%s230 + $0x1e0] sm:$0xf]
        %v362 = vld [vmem:[%s230 + $0x1e4] sm:$0xf]
        %v363 = vld [vmem:[%s230 + $0x1e8] sm:$0xf]
        %v364 = vld [vmem:[%s230 + $0x1ec] sm:$0xf]
        %v365 = vld [vmem:[%s230 + $0x1f0] sm:$0xf]
        %v366 = vld [vmem:[%s230 + $0x1f4] sm:$0xf]
        %v367 = vld [vmem:[%s230 + $0x1f8] sm:$0xf]
        %v368 = vld [vmem:[%s230 + $0x1fc] sm:$0xf]
        %v369 = vld [vmem:[%s230 + $0x200] sm:$0xf]
        %v370 = vld [vmem:[%s230 + $0x204] sm:$0xf]
        %v371 = vld [vmem:[%s230 + $0x208] sm:$0xf]
        %v372 = vld [vmem:[%s230 + $0x20c] sm:$0xf]
        %v373 = vld [vmem:[%s230 + $0x210] sm:$0xf]
        %v374 = vld [vmem:[%s230 + $0x214] sm:$0xf]
        %v375 = vld [vmem:[%s230 + $0x218] sm:$0xf]
        %v376 = vld [vmem:[%s230 + $0x21c] sm:$0xf]
        %v377 = vld [vmem:[%s230 + $0x220] sm:$0xf]
        %v378 = vld [vmem:[%s230 + $0x224] sm:$0xf]
        %v379 = vld [vmem:[%s230 + $0x228] sm:$0xf]
        %v380 = vld [vmem:[%s230 + $0x22c] sm:$0xf]
        %v381 = vld [vmem:[%s230 + $0x230] sm:$0xf]
        %v382 = vld [vmem:[%s230 + $0x234] sm:$0xf]
        %v383 = vld [vmem:[%s230 + $0x238] sm:$0xf]
        %v384 = vld [vmem:[%s230 + $0x23c] sm:$0xf]
        %v385 = vld [vmem:[%s230 + $0x240] sm:$0xf]
        %v386 = vld [vmem:[%s230 + $0x244] sm:$0xf]
        %v387 = vld [vmem:[%s230 + $0x248] sm:$0xf]
        %v388 = vld [vmem:[%s230 + $0x24c] sm:$0xf]
        %v389 = vld [vmem:[%s230 + $0x250] sm:$0xf]
        %v390 = vld [vmem:[%s230 + $0x254] sm:$0xf]
        %v391 = vld [vmem:[%s230 + $0x258] sm:$0xf]
        %v392 = vld [vmem:[%s230 + $0x25c] sm:$0xf]
        %v393 = vld [vmem:[%s230 + $0x260] sm:$0xf]
        %v394 = vld [vmem:[%s230 + $0x264] sm:$0xf]
        %v395 = vld [vmem:[%s230 + $0x268] sm:$0xf]
        %v396 = vld [vmem:[%s230 + $0x26c] sm:$0xf]
        %v397 = vld [vmem:[%s230 + $0x270] sm:$0xf]
        %v398 = vld [vmem:[%s230 + $0x274] sm:$0xf]
        %v399 = vld [vmem:[%s230 + $0x278] sm:$0xf]
        %v400 = vld [vmem:[%s230 + $0x27c] sm:$0xf]
        %v401 = vld [vmem:[%s230 + $0x280] sm:$0xf]
        %v402 = vld [vmem:[%s230 + $0x284] sm:$0xf]
        %v403 = vld [vmem:[%s230 + $0x288] sm:$0xf]
        %v404 = vld [vmem:[%s230 + $0x28c] sm:$0xf]
        %v405 = vld [vmem:[%s230 + $0x290] sm:$0xf]
        %v406 = vld [vmem:[%s230 + $0x294] sm:$0xf]
        %v407 = vld [vmem:[%s230 + $0x298] sm:$0xf]
        %v408 = vld [vmem:[%s230 + $0x29c] sm:$0xf]
        %v409 = vld [vmem:[%s230 + $0x2a0] sm:$0xf]
        %v410 = vld [vmem:[%s230 + $0x2a4] sm:$0xf]
        %v411 = vld [vmem:[%s230 + $0x2a8] sm:$0xf]
        %v412 = vld [vmem:[%s230 + $0x2ac] sm:$0xf]
        %v413 = vld [vmem:[%s230 + $0x2b0] sm:$0xf]
        %v414 = vld [vmem:[%s230 + $0x2b4] sm:$0xf]
        %v415 = vld [vmem:[%s230 + $0x2b8] sm:$0xf]
        %v416 = vld [vmem:[%s230 + $0x2bc] sm:$0xf]
        %v417 = vld [vmem:[%s230 + $0x2c0] sm:$0xf]
        %v418 = vld [vmem:[%s230 + $0x2c4] sm:$0xf]
        %v419 = vld [vmem:[%s230 + $0x2c8] sm:$0xf]
        %v420 = vld [vmem:[%s230 + $0x2cc] sm:$0xf]
        %v421 = vld [vmem:[%s230 + $0x2d0] sm:$0xf]
        %v422 = vld [vmem:[%s230 + $0x2d4] sm:$0xf]
        %v423 = vld [vmem:[%s230 + $0x2d8] sm:$0xf]
        %v424 = vld [vmem:[%s230 + $0x2dc] sm:$0xf]
        %v425 = vld [vmem:[%s230 + $0x2e0] sm:$0xf]
        %v426 = vld [vmem:[%s230 + $0x2e4] sm:$0xf]
        %v427 = vld [vmem:[%s230 + $0x2e8] sm:$0xf]
        %v428 = vld [vmem:[%s230 + $0x2ec] sm:$0xf]
        %v429 = vld [vmem:[%s230 + $0x2f0] sm:$0xf]
        %v430 = vld [vmem:[%s230 + $0x2f4] sm:$0xf]
        %v431 = vld [vmem:[%s230 + $0x2f8] sm:$0xf]
        %v432 = vld [vmem:[%s230 + $0x2fc] sm:$0xf]
        %v433 = vld [vmem:[%s230 + $0x300] sm:$0xf]
        %v434 = vld [vmem:[%s230 + $0x304] sm:$0xf]
        %v435 = vld [vmem:[%s230 + $0x308] sm:$0xf]
        %v436 = vld [vmem:[%s230 + $0x30c] sm:$0xf]
        %v437 = vld [vmem:[%s230 + $0x310] sm:$0xf]
        %v438 = vld [vmem:[%s230 + $0x314] sm:$0xf]
        %v439 = vld [vmem:[%s230 + $0x318] sm:$0xf]
        %v440 = vld [vmem:[%s230 + $0x31c] sm:$0xf]
        %v441 = vld [vmem:[%s230 + $0x320] sm:$0xf]
        %v442 = vld [vmem:[%s230 + $0x324] sm:$0xf]
        %v443 = vld [vmem:[%s230 + $0x328] sm:$0xf]
        %v444 = vld [vmem:[%s230 + $0x32c] sm:$0xf]
        %v445 = vld [vmem:[%s230 + $0x330] sm:$0xf]
        %v446 = vld [vmem:[%s230 + $0x334] sm:$0xf]
        %v447 = vld [vmem:[%s230 + $0x338] sm:$0xf]
        %v448 = vld [vmem:[%s230 + $0x33c] sm:$0xf]
        %v449 = vld [vmem:[%s230 + $0x340] sm:$0xf]
        %v450 = vld [vmem:[%s230 + $0x344] sm:$0xf]
        %v451 = vld [vmem:[%s230 + $0x348] sm:$0xf]
        %v452 = vld [vmem:[%s230 + $0x34c] sm:$0xf]
        %v453 = vld [vmem:[%s230 + $0x350] sm:$0xf]
        %v454 = vld [vmem:[%s230 + $0x354] sm:$0xf]
        %v455 = vld [vmem:[%s230 + $0x358] sm:$0xf]
        %v456 = vld [vmem:[%s230 + $0x35c] sm:$0xf]
        %v457 = vld [vmem:[%s230 + $0x360] sm:$0xf]
        %v458 = vld [vmem:[%s230 + $0x364] sm:$0xf]
        %v459 = vld [vmem:[%s230 + $0x368] sm:$0xf]
        %v460 = vld [vmem:[%s230 + $0x36c] sm:$0xf]
        %v461 = vld [vmem:[%s230 + $0x370] sm:$0xf]
        %v462 = vld [vmem:[%s230 + $0x374] sm:$0xf]
        %v463 = vld [vmem:[%s230 + $0x378] sm:$0xf]
        %v464 = vld [vmem:[%s230 + $0x37c] sm:$0xf]
        %v465 = vld [vmem:[%s230 + $0x380] sm:$0xf]
        %v466 = vld [vmem:[%s230 + $0x384] sm:$0xf]
        %v467 = vld [vmem:[%s230 + $0x388] sm:$0xf]
        %v468 = vld [vmem:[%s230 + $0x38c] sm:$0xf]
        %v469 = vld [vmem:[%s230 + $0x390] sm:$0xf]
        %v470 = vld [vmem:[%s230 + $0x394] sm:$0xf]
        %v471 = vld [vmem:[%s230 + $0x398] sm:$0xf]
        %v472 = vld [vmem:[%s230 + $0x39c] sm:$0xf]
        %v473 = vld [vmem:[%s230 + $0x3a0] sm:$0xf]
        %v474 = vld [vmem:[%s230 + $0x3a4] sm:$0xf]
        %v475 = vld [vmem:[%s230 + $0x3a8] sm:$0xf]
        %v476 = vld [vmem:[%s230 + $0x3ac] sm:$0xf]
        %v477 = vld [vmem:[%s230 + $0x3b0] sm:$0xf]
        %v478 = vld [vmem:[%s230 + $0x3b4] sm:$0xf]
        %v479 = vld [vmem:[%s230 + $0x3b8] sm:$0xf]
        %v480 = vld [vmem:[%s230 + $0x3bc] sm:$0xf]
        %v481 = vld [vmem:[%s230 + $0x3c0] sm:$0xf]
        %v482 = vld [vmem:[%s230 + $0x3c4] sm:$0xf]
        %v483 = vld [vmem:[%s230 + $0x3c8] sm:$0xf]
        %v484 = vld [vmem:[%s230 + $0x3cc] sm:$0xf]
        %v485 = vld [vmem:[%s230 + $0x3d0] sm:$0xf]
        %v486 = vld [vmem:[%s230 + $0x3d4] sm:$0xf]
        %v487 = vld [vmem:[%s230 + $0x3d8] sm:$0xf]
        %v488 = vld [vmem:[%s230 + $0x3dc] sm:$0xf]
        %v489 = vld [vmem:[%s230 + $0x3e0] sm:$0xf]
        %v490 = vld [vmem:[%s230 + $0x3e4] sm:$0xf]
        %v491 = vld [vmem:[%s230 + $0x3e8] sm:$0xf]
        %v492 = vld [vmem:[%s230 + $0x3ec] sm:$0xf]
        %v493 = vld [vmem:[%s230 + $0x3f0] sm:$0xf]
        %v494 = vld [vmem:[%s230 + $0x3f4] sm:$0xf]
        %v495 = vld [vmem:[%s230 + $0x3f8] sm:$0xf]
        %v496 = vld [vmem:[%s230 + $0x3fc] sm:$0xf]
        %v499 = vcombine.high %v239, %v239
        %v501 = vunpack.c.l.s4 1966171168
        %v502 = vunpack.c.0.s8 %v501
        %v503 = vlaneseq
        %v504 = vshrl.u32 %v503, 7
        %v505 = vsub.s32 %v502, %v504
        %v506 = vrot.slane %v239, %v505
        %v508 = vunpack.c.l.s4 1966171168
        %v509 = vunpack.c.0.s8 %v508
        %v510 = vlaneseq
        %v511 = vshrl.u32 %v510, 7
        %v512 = vsub.s32 %v509, %v511
        %v513 = vrot.slane %v499, %v512
        %v514 = vcombine.high %v506, %v506
        %v515 = vcombine.high %v513, %v513
        %v517 = vunpack.c.l.s4 1966171168
        %v518 = vunpack.c.0.s8 %v517
        %v519 = vlaneseq
        %v520 = vshrl.u32 %v519, 7
        %v521 = vsub.s32 %v518, %v520
        %v522 = vrot.slane %v506, %v521
        %v524 = vunpack.c.l.s4 1966171168
        %v525 = vunpack.c.0.s8 %v524
        %v526 = vlaneseq
        %v527 = vshrl.u32 %v526, 7
        %v528 = vsub.s32 %v525, %v527
        %v529 = vrot.slane %v513, %v528
        %v531 = vunpack.c.l.s4 1966171168
        %v532 = vunpack.c.0.s8 %v531
        %v533 = vlaneseq
        %v534 = vshrl.u32 %v533, 7
        %v535 = vsub.s32 %v532, %v534
        %v536 = vrot.slane %v514, %v535
        %v538 = vunpack.c.l.s4 1966171168
        %v539 = vunpack.c.0.s8 %v538
        %v540 = vlaneseq
        %v541 = vshrl.u32 %v540, 7
        %v542 = vsub.s32 %v539, %v541
        %v543 = vrot.slane %v515, %v542
        %v544 = vcombine.high %v522, %v522
        %v545 = vcombine.high %v529, %v529
        %v546 = vcombine.high %v536, %v536
        %v547 = vcombine.high %v543, %v543
        %v548 = vcombine.high %v240, %v240
        %v550 = vunpack.c.l.s4 1966171168
        %v551 = vunpack.c.0.s8 %v550
        %v552 = vlaneseq
        %v553 = vshrl.u32 %v552, 7
        %v554 = vsub.s32 %v551, %v553
        %v555 = vrot.slane %v240, %v554
        %v557 = vunpack.c.l.s4 1966171168
        %v558 = vunpack.c.0.s8 %v557
        %v559 = vlaneseq
        %v560 = vshrl.u32 %v559, 7
        %v561 = vsub.s32 %v558, %v560
        %v562 = vrot.slane %v548, %v561
        %v563 = vcombine.high %v555, %v555
        %v564 = vcombine.high %v562, %v562
        %v566 = vunpack.c.l.s4 1966171168
        %v567 = vunpack.c.0.s8 %v566
        %v568 = vlaneseq
        %v569 = vshrl.u32 %v568, 7
        %v570 = vsub.s32 %v567, %v569
        %v571 = vrot.slane %v555, %v570
        %v573 = vunpack.c.l.s4 1966171168
        %v574 = vunpack.c.0.s8 %v573
        %v575 = vlaneseq
        %v576 = vshrl.u32 %v575, 7
        %v577 = vsub.s32 %v574, %v576
        %v578 = vrot.slane %v562, %v577
        %v580 = vunpack.c.l.s4 1966171168
        %v581 = vunpack.c.0.s8 %v580
        %v582 = vlaneseq
        %v583 = vshrl.u32 %v582, 7
        %v584 = vsub.s32 %v581, %v583
        %v585 = vrot.slane %v563, %v584
        %v587 = vunpack.c.l.s4 1966171168
        %v588 = vunpack.c.0.s8 %v587
        %v589 = vlaneseq
        %v590 = vshrl.u32 %v589, 7
        %v591 = vsub.s32 %v588, %v590
        %v592 = vrot.slane %v564, %v591
        %v593 = vcombine.high %v571, %v571
        %v594 = vcombine.high %v578, %v578
        %v595 = vcombine.high %v585, %v585
        %v596 = vcombine.high %v592, %v592
        %v869 = vunpack.c.l.b16 %v241
        %v870 = vunpack.c.l.b16 %v242
        %v871 = vunpack.c.l.b16 %v243
        %v872 = vunpack.c.l.b16 %v244
        %v873 = vunpack.c.l.b16 %v245
        %v874 = vunpack.c.l.b16 %v246
        %v875 = vunpack.c.l.b16 %v247
        %v876 = vunpack.c.l.b16 %v248
        %v877 = vunpack.c.l.b16 %v249
        %v878 = vunpack.c.l.b16 %v250
        %v879 = vunpack.c.l.b16 %v251
        %v880 = vunpack.c.l.b16 %v252
        %v881 = vunpack.c.l.b16 %v253
        %v882 = vunpack.c.l.b16 %v254
        %v883 = vunpack.c.l.b16 %v255
        %v884 = vunpack.c.l.b16 %v256
        %v885 = vunpack.c.l.b16 %v257
        %v886 = vunpack.c.l.b16 %v258
        %v887 = vunpack.c.l.b16 %v259
        %v888 = vunpack.c.l.b16 %v260
        %v889 = vunpack.c.l.b16 %v261
        %v890 = vunpack.c.l.b16 %v262
        %v891 = vunpack.c.l.b16 %v263
        %v892 = vunpack.c.l.b16 %v264
        %v893 = vunpack.c.l.b16 %v265
        %v894 = vunpack.c.l.b16 %v266
        %v895 = vunpack.c.l.b16 %v267
        %v896 = vunpack.c.l.b16 %v268
        %v897 = vunpack.c.l.b16 %v269
        %v898 = vunpack.c.l.b16 %v270
        %v899 = vunpack.c.l.b16 %v271
        %v900 = vunpack.c.l.b16 %v272
        %v901 = vunpack.c.l.b16 %v273
        %v902 = vunpack.c.l.b16 %v274
        %v903 = vunpack.c.l.b16 %v275
        %v904 = vunpack.c.l.b16 %v276
        %v905 = vunpack.c.l.b16 %v277
        %v906 = vunpack.c.l.b16 %v278
        %v907 = vunpack.c.l.b16 %v279
        %v908 = vunpack.c.l.b16 %v280
        %v909 = vunpack.c.l.b16 %v281
        %v910 = vunpack.c.l.b16 %v282
        %v911 = vunpack.c.l.b16 %v283
        %v912 = vunpack.c.l.b16 %v284
        %v913 = vunpack.c.l.b16 %v285
        %v914 = vunpack.c.l.b16 %v286
        %v915 = vunpack.c.l.b16 %v287
        %v916 = vunpack.c.l.b16 %v288
        %v917 = vunpack.c.l.b16 %v289
        %v918 = vunpack.c.l.b16 %v290
        %v919 = vunpack.c.l.b16 %v291
        %v920 = vunpack.c.l.b16 %v292
        %v921 = vunpack.c.l.b16 %v293
        %v922 = vunpack.c.l.b16 %v294
        %v923 = vunpack.c.l.b16 %v295
        %v924 = vunpack.c.l.b16 %v296
        %v925 = vunpack.c.l.b16 %v297
        %v926 = vunpack.c.l.b16 %v298
        %v927 = vunpack.c.l.b16 %v299
        %v928 = vunpack.c.l.b16 %v300
        %v929 = vunpack.c.l.b16 %v301
        %v930 = vunpack.c.l.b16 %v302
        %v931 = vunpack.c.l.b16 %v303
        %v932 = vunpack.c.l.b16 %v304
        %v933 = vunpack.c.l.b16 %v305
        %v934 = vunpack.c.l.b16 %v306
        %v935 = vunpack.c.l.b16 %v307
        %v936 = vunpack.c.l.b16 %v308
        %v937 = vunpack.c.l.b16 %v309
        %v938 = vunpack.c.l.b16 %v310
        %v939 = vunpack.c.l.b16 %v311
        %v940 = vunpack.c.l.b16 %v312
        %v941 = vunpack.c.l.b16 %v313
        %v942 = vunpack.c.l.b16 %v314
        %v943 = vunpack.c.l.b16 %v315
        %v944 = vunpack.c.l.b16 %v316
        %v945 = vunpack.c.l.b16 %v317
        %v946 = vunpack.c.l.b16 %v318
        %v947 = vunpack.c.l.b16 %v319
        %v948 = vunpack.c.l.b16 %v320
        %v949 = vunpack.c.l.b16 %v321
        %v950 = vunpack.c.l.b16 %v322
        %v951 = vunpack.c.l.b16 %v323
        %v952 = vunpack.c.l.b16 %v324
        %v953 = vunpack.c.l.b16 %v325
        %v954 = vunpack.c.l.b16 %v326
        %v955 = vunpack.c.l.b16 %v327
        %v956 = vunpack.c.l.b16 %v328
        %v957 = vunpack.c.l.b16 %v329
        %v958 = vunpack.c.l.b16 %v330
        %v959 = vunpack.c.l.b16 %v331
        %v960 = vunpack.c.l.b16 %v332
        %v961 = vunpack.c.l.b16 %v333
        %v962 = vunpack.c.l.b16 %v334
        %v963 = vunpack.c.l.b16 %v335
        %v964 = vunpack.c.l.b16 %v336
        %v965 = vunpack.c.l.b16 %v337
        %v966 = vunpack.c.l.b16 %v338
        %v967 = vunpack.c.l.b16 %v339
        %v968 = vunpack.c.l.b16 %v340
        %v969 = vunpack.c.l.b16 %v341
        %v970 = vunpack.c.l.b16 %v342
        %v971 = vunpack.c.l.b16 %v343
        %v972 = vunpack.c.l.b16 %v344
        %v973 = vunpack.c.l.b16 %v345
        %v974 = vunpack.c.l.b16 %v346
        %v975 = vunpack.c.l.b16 %v347
        %v976 = vunpack.c.l.b16 %v348
        %v977 = vunpack.c.l.b16 %v349
        %v978 = vunpack.c.l.b16 %v350
        %v979 = vunpack.c.l.b16 %v351
        %v980 = vunpack.c.l.b16 %v352
        %v981 = vunpack.c.l.b16 %v353
        %v982 = vunpack.c.l.b16 %v354
        %v983 = vunpack.c.l.b16 %v355
        %v984 = vunpack.c.l.b16 %v356
        %v985 = vunpack.c.l.b16 %v357
        %v986 = vunpack.c.l.b16 %v358
        %v987 = vunpack.c.l.b16 %v359
        %v988 = vunpack.c.l.b16 %v360
        %v989 = vunpack.c.l.b16 %v361
        %v990 = vunpack.c.l.b16 %v362
        %v991 = vunpack.c.l.b16 %v363
        %v992 = vunpack.c.l.b16 %v364
        %v993 = vunpack.c.l.b16 %v365
        %v994 = vunpack.c.l.b16 %v366
        %v995 = vunpack.c.l.b16 %v367
        %v996 = vunpack.c.l.b16 %v368
        %v997 = vunpack.c.l.b16 %v369
        %v998 = vunpack.c.l.b16 %v370
        %v999 = vunpack.c.l.b16 %v371
        %v1000 = vunpack.c.l.b16 %v372
        %v1001 = vunpack.c.l.b16 %v373
        %v1002 = vunpack.c.l.b16 %v374
        %v1003 = vunpack.c.l.b16 %v375
        %v1004 = vunpack.c.l.b16 %v376
        %v1005 = vunpack.c.l.b16 %v377
        %v1006 = vunpack.c.l.b16 %v378
        %v1007 = vunpack.c.l.b16 %v379
        %v1008 = vunpack.c.l.b16 %v380
        %v1009 = vunpack.c.l.b16 %v381
        %v1010 = vunpack.c.l.b16 %v382
        %v1011 = vunpack.c.l.b16 %v383
        %v1012 = vunpack.c.l.b16 %v384
        %v1013 = vunpack.c.l.b16 %v385
        %v1014 = vunpack.c.l.b16 %v386
        %v1015 = vunpack.c.l.b16 %v387
        %v1016 = vunpack.c.l.b16 %v388
        %v1017 = vunpack.c.l.b16 %v389
        %v1018 = vunpack.c.l.b16 %v390
        %v1019 = vunpack.c.l.b16 %v391
        %v1020 = vunpack.c.l.b16 %v392
        %v1021 = vunpack.c.l.b16 %v393
        %v1022 = vunpack.c.l.b16 %v394
        %v1023 = vunpack.c.l.b16 %v395
        %v1024 = vunpack.c.l.b16 %v396
        %v1025 = vunpack.c.l.b16 %v397
        %v1026 = vunpack.c.l.b16 %v398
        %v1027 = vunpack.c.l.b16 %v399
        %v1028 = vunpack.c.l.b16 %v400
        %v1029 = vunpack.c.l.b16 %v401
        %v1030 = vunpack.c.l.b16 %v402
        %v1031 = vunpack.c.l.b16 %v403
        %v1032 = vunpack.c.l.b16 %v404
        %v1033 = vunpack.c.l.b16 %v405
        %v1034 = vunpack.c.l.b16 %v406
        %v1035 = vunpack.c.l.b16 %v407
        %v1036 = vunpack.c.l.b16 %v408
        %v1037 = vunpack.c.l.b16 %v409
        %v1038 = vunpack.c.l.b16 %v410
        %v1039 = vunpack.c.l.b16 %v411
        %v1040 = vunpack.c.l.b16 %v412
        %v1041 = vunpack.c.l.b16 %v413
        %v1042 = vunpack.c.l.b16 %v414
        %v1043 = vunpack.c.l.b16 %v415
        %v1044 = vunpack.c.l.b16 %v416
        %v1045 = vunpack.c.l.b16 %v417
        %v1046 = vunpack.c.l.b16 %v418
        %v1047 = vunpack.c.l.b16 %v419
        %v1048 = vunpack.c.l.b16 %v420
        %v1049 = vunpack.c.l.b16 %v421
        %v1050 = vunpack.c.l.b16 %v422
        %v1051 = vunpack.c.l.b16 %v423
        %v1052 = vunpack.c.l.b16 %v424
        %v1053 = vunpack.c.l.b16 %v425
        %v1054 = vunpack.c.l.b16 %v426
        %v1055 = vunpack.c.l.b16 %v427
        %v1056 = vunpack.c.l.b16 %v428
        %v1057 = vunpack.c.l.b16 %v429
        %v1058 = vunpack.c.l.b16 %v430
        %v1059 = vunpack.c.l.b16 %v431
        %v1060 = vunpack.c.l.b16 %v432
        %v1061 = vunpack.c.l.b16 %v433
        %v1062 = vunpack.c.l.b16 %v434
        %v1063 = vunpack.c.l.b16 %v435
        %v1064 = vunpack.c.l.b16 %v436
        %v1065 = vunpack.c.l.b16 %v437
        %v1066 = vunpack.c.l.b16 %v438
        %v1067 = vunpack.c.l.b16 %v439
        %v1068 = vunpack.c.l.b16 %v440
        %v1069 = vunpack.c.l.b16 %v441
        %v1070 = vunpack.c.l.b16 %v442
        %v1071 = vunpack.c.l.b16 %v443
        %v1072 = vunpack.c.l.b16 %v444
        %v1073 = vunpack.c.l.b16 %v445
        %v1074 = vunpack.c.l.b16 %v446
        %v1075 = vunpack.c.l.b16 %v447
        %v1076 = vunpack.c.l.b16 %v448
        %v1077 = vunpack.c.l.b16 %v449
        %v1078 = vunpack.c.l.b16 %v450
        %v1079 = vunpack.c.l.b16 %v451
        %v1080 = vunpack.c.l.b16 %v452
        %v1081 = vunpack.c.l.b16 %v453
        %v1082 = vunpack.c.l.b16 %v454
        %v1083 = vunpack.c.l.b16 %v455
        %v1084 = vunpack.c.l.b16 %v456
        %v1085 = vunpack.c.l.b16 %v457
        %v1086 = vunpack.c.l.b16 %v458
        %v1087 = vunpack.c.l.b16 %v459
        %v1088 = vunpack.c.l.b16 %v460
        %v1089 = vunpack.c.l.b16 %v461
        %v1090 = vunpack.c.l.b16 %v462
        %v1091 = vunpack.c.l.b16 %v463
        %v1092 = vunpack.c.l.b16 %v464
        %v1093 = vunpack.c.l.b16 %v465
        %v1094 = vunpack.c.l.b16 %v466
        %v1095 = vunpack.c.l.b16 %v467
        %v1096 = vunpack.c.l.b16 %v468
        %v1097 = vunpack.c.l.b16 %v469
        %v1098 = vunpack.c.l.b16 %v470
        %v1099 = vunpack.c.l.b16 %v471
        %v1100 = vunpack.c.l.b16 %v472
        %v1101 = vunpack.c.l.b16 %v473
        %v1102 = vunpack.c.l.b16 %v474
        %v1103 = vunpack.c.l.b16 %v475
        %v1104 = vunpack.c.l.b16 %v476
        %v1105 = vunpack.c.l.b16 %v477
        %v1106 = vunpack.c.l.b16 %v478
        %v1107 = vunpack.c.l.b16 %v479
        %v1108 = vunpack.c.l.b16 %v480
        %v1109 = vunpack.c.l.b16 %v481
        %v1110 = vunpack.c.l.b16 %v482
        %v1111 = vunpack.c.l.b16 %v483
        %v1112 = vunpack.c.l.b16 %v484
        %v1113 = vunpack.c.l.b16 %v485
        %v1114 = vunpack.c.l.b16 %v486
        %v1115 = vunpack.c.l.b16 %v487
        %v1116 = vunpack.c.l.b16 %v488
        %v1117 = vunpack.c.l.b16 %v489
        %v1118 = vunpack.c.l.b16 %v490
        %v1119 = vunpack.c.l.b16 %v491
        %v1120 = vunpack.c.l.b16 %v492
        %v1121 = vunpack.c.l.b16 %v493
        %v1122 = vunpack.c.l.b16 %v494
        %v1123 = vunpack.c.l.b16 %v495
        %v1124 = vunpack.c.l.b16 %v496
        %v1125 = vpack.c.b16 %v870, %v869
        %v1126 = vpack.c.b16 %v872, %v871
        %v1127 = vpack.c.b16 %v874, %v873
        %v1128 = vpack.c.b16 %v876, %v875
        %v1129 = vpack.c.b16 %v878, %v877
        %v1130 = vpack.c.b16 %v880, %v879
        %v1131 = vpack.c.b16 %v882, %v881
        %v1132 = vpack.c.b16 %v884, %v883
        %v1133 = vpack.c.b16 %v886, %v885
        %v1134 = vpack.c.b16 %v888, %v887
        %v1135 = vpack.c.b16 %v890, %v889
        %v1136 = vpack.c.b16 %v892, %v891
        %v1137 = vpack.c.b16 %v894, %v893
        %v1138 = vpack.c.b16 %v896, %v895
        %v1139 = vpack.c.b16 %v898, %v897
        %v1140 = vpack.c.b16 %v900, %v899
        %v1141 = vpack.c.b16 %v902, %v901
        %v1142 = vpack.c.b16 %v904, %v903
        %v1143 = vpack.c.b16 %v906, %v905
        %v1144 = vpack.c.b16 %v908, %v907
        %v1145 = vpack.c.b16 %v910, %v909
        %v1146 = vpack.c.b16 %v912, %v911
        %v1147 = vpack.c.b16 %v914, %v913
        %v1148 = vpack.c.b16 %v916, %v915
        %v1149 = vpack.c.b16 %v918, %v917
        %v1150 = vpack.c.b16 %v920, %v919
        %v1151 = vpack.c.b16 %v922, %v921
        %v1152 = vpack.c.b16 %v924, %v923
        %v1153 = vpack.c.b16 %v926, %v925
        %v1154 = vpack.c.b16 %v928, %v927
        %v1155 = vpack.c.b16 %v930, %v929
        %v1156 = vpack.c.b16 %v932, %v931
        %v1157 = vpack.c.b16 %v934, %v933
        %v1158 = vpack.c.b16 %v936, %v935
        %v1159 = vpack.c.b16 %v938, %v937
        %v1160 = vpack.c.b16 %v940, %v939
        %v1161 = vpack.c.b16 %v942, %v941
        %v1162 = vpack.c.b16 %v944, %v943
        %v1163 = vpack.c.b16 %v946, %v945
        %v1164 = vpack.c.b16 %v948, %v947
        %v1165 = vpack.c.b16 %v950, %v949
        %v1166 = vpack.c.b16 %v952, %v951
        %v1167 = vpack.c.b16 %v954, %v953
        %v1168 = vpack.c.b16 %v956, %v955
        %v1169 = vpack.c.b16 %v958, %v957
        %v1170 = vpack.c.b16 %v960, %v959
        %v1171 = vpack.c.b16 %v962, %v961
        %v1172 = vpack.c.b16 %v964, %v963
        %v1173 = vpack.c.b16 %v966, %v965
        %v1174 = vpack.c.b16 %v968, %v967
        %v1175 = vpack.c.b16 %v970, %v969
        %v1176 = vpack.c.b16 %v972, %v971
        %v1177 = vpack.c.b16 %v974, %v973
        %v1178 = vpack.c.b16 %v976, %v975
        %v1179 = vpack.c.b16 %v978, %v977
        %v1180 = vpack.c.b16 %v980, %v979
        %v1181 = vpack.c.b16 %v982, %v981
        %v1182 = vpack.c.b16 %v984, %v983
        %v1183 = vpack.c.b16 %v986, %v985
        %v1184 = vpack.c.b16 %v988, %v987
        %v1185 = vpack.c.b16 %v990, %v989
        %v1186 = vpack.c.b16 %v992, %v991
        %v1187 = vpack.c.b16 %v994, %v993
        %v1188 = vpack.c.b16 %v996, %v995
        %v1189 = vpack.c.b16 %v998, %v997
        %v1190 = vpack.c.b16 %v1000, %v999
        %v1191 = vpack.c.b16 %v1002, %v1001
        %v1192 = vpack.c.b16 %v1004, %v1003
        %v1193 = vpack.c.b16 %v1006, %v1005
        %v1194 = vpack.c.b16 %v1008, %v1007
        %v1195 = vpack.c.b16 %v1010, %v1009
        %v1196 = vpack.c.b16 %v1012, %v1011
        %v1197 = vpack.c.b16 %v1014, %v1013
        %v1198 = vpack.c.b16 %v1016, %v1015
        %v1199 = vpack.c.b16 %v1018, %v1017
        %v1200 = vpack.c.b16 %v1020, %v1019
        %v1201 = vpack.c.b16 %v1022, %v1021
        %v1202 = vpack.c.b16 %v1024, %v1023
        %v1203 = vpack.c.b16 %v1026, %v1025
        %v1204 = vpack.c.b16 %v1028, %v1027
        %v1205 = vpack.c.b16 %v1030, %v1029
        %v1206 = vpack.c.b16 %v1032, %v1031
        %v1207 = vpack.c.b16 %v1034, %v1033
        %v1208 = vpack.c.b16 %v1036, %v1035
        %v1209 = vpack.c.b16 %v1038, %v1037
        %v1210 = vpack.c.b16 %v1040, %v1039
        %v1211 = vpack.c.b16 %v1042, %v1041
        %v1212 = vpack.c.b16 %v1044, %v1043
        %v1213 = vpack.c.b16 %v1046, %v1045
        %v1214 = vpack.c.b16 %v1048, %v1047
        %v1215 = vpack.c.b16 %v1050, %v1049
        %v1216 = vpack.c.b16 %v1052, %v1051
        %v1217 = vpack.c.b16 %v1054, %v1053
        %v1218 = vpack.c.b16 %v1056, %v1055
        %v1219 = vpack.c.b16 %v1058, %v1057
        %v1220 = vpack.c.b16 %v1060, %v1059
        %v1221 = vpack.c.b16 %v1062, %v1061
        %v1222 = vpack.c.b16 %v1064, %v1063
        %v1223 = vpack.c.b16 %v1066, %v1065
        %v1224 = vpack.c.b16 %v1068, %v1067
        %v1225 = vpack.c.b16 %v1070, %v1069
        %v1226 = vpack.c.b16 %v1072, %v1071
        %v1227 = vpack.c.b16 %v1074, %v1073
        %v1228 = vpack.c.b16 %v1076, %v1075
        %v1229 = vpack.c.b16 %v1078, %v1077
        %v1230 = vpack.c.b16 %v1080, %v1079
        %v1231 = vpack.c.b16 %v1082, %v1081
        %v1232 = vpack.c.b16 %v1084, %v1083
        %v1233 = vpack.c.b16 %v1086, %v1085
        %v1234 = vpack.c.b16 %v1088, %v1087
        %v1235 = vpack.c.b16 %v1090, %v1089
        %v1236 = vpack.c.b16 %v1092, %v1091
        %v1237 = vpack.c.b16 %v1094, %v1093
        %v1238 = vpack.c.b16 %v1096, %v1095
        %v1239 = vpack.c.b16 %v1098, %v1097
        %v1240 = vpack.c.b16 %v1100, %v1099
        %v1241 = vpack.c.b16 %v1102, %v1101
        %v1242 = vpack.c.b16 %v1104, %v1103
        %v1243 = vpack.c.b16 %v1106, %v1105
        %v1244 = vpack.c.b16 %v1108, %v1107
        %v1245 = vpack.c.b16 %v1110, %v1109
        %v1246 = vpack.c.b16 %v1112, %v1111
        %v1247 = vpack.c.b16 %v1114, %v1113
        %v1248 = vpack.c.b16 %v1116, %v1115
        %v1249 = vpack.c.b16 %v1118, %v1117
        %v1250 = vpack.c.b16 %v1120, %v1119
        %v1251 = vpack.c.b16 %v1122, %v1121
        %v1252 = vpack.c.b16 %v1124, %v1123
        %1381 = vmatprep.subr.bf16.mxu0 0
        %1382 = vmatpush1.bf16.msra.mxu0 %v1125
        %1383 = vmatprep.subr.bf16.mxu0 0
        %1384 = vmatpush1.bf16.msra.mxu0 %v1126
        %1385 = vmatprep.subr.bf16.mxu0 0
        %1386 = vmatpush1.bf16.msra.mxu0 %v1127
        %1387 = vmatprep.subr.bf16.mxu0 0
        %1388 = vmatpush1.bf16.msra.mxu0 %v1128
        %1389 = vmatprep.subr.bf16.mxu0 0
        %1390 = vmatpush1.bf16.msra.mxu0 %v1129
        %1391 = vmatprep.subr.bf16.mxu0 0
        %1392 = vmatpush1.bf16.msra.mxu0 %v1130
        %1393 = vmatprep.subr.bf16.mxu0 0
        %1394 = vmatpush1.bf16.msra.mxu0 %v1131
        %1395 = vmatprep.subr.bf16.mxu0 0
        %1396 = vmatpush1.bf16.msra.mxu0 %v1132
        %1397 = vmatprep.subr.bf16.mxu0 0
        %1398 = vmatpush1.bf16.msra.mxu0 %v1133
        %1399 = vmatprep.subr.bf16.mxu0 0
        %1400 = vmatpush1.bf16.msra.mxu0 %v1134
        %1401 = vmatprep.subr.bf16.mxu0 0
        %1402 = vmatpush1.bf16.msra.mxu0 %v1135
        %1403 = vmatprep.subr.bf16.mxu0 0
        %1404 = vmatpush1.bf16.msra.mxu0 %v1136
        %1405 = vmatprep.subr.bf16.mxu0 0
        %1406 = vmatpush1.bf16.msra.mxu0 %v1137
        %1407 = vmatprep.subr.bf16.mxu0 0
        %1408 = vmatpush1.bf16.msra.mxu0 %v1138
        %1409 = vmatprep.subr.bf16.mxu0 0
        %1410 = vmatpush1.bf16.msra.mxu0 %v1139
        %1411 = vmatprep.subr.bf16.mxu0 0
        %1412 = vmatpush1.bf16.msra.mxu0 %v1140
        %1413 = vmatprep.mubr.bf16.mxu0 %v536
        %1414 = vmatmul.mubr.bf16.gmra.mrb[0].mxu0 %v522
        %v1415 = vpop.f32.mrb[0].mxu0
        %v1416 = vadd.f32 0.0, %v1415
        %v1417 = vpop.f32.mrb[0].mxu0
        %v1418 = vpop.f32.mrb[0].mxu0
        %v1419 = vpop.f32.mrb[0].mxu0
        %1420 = vdwg.mxu0
        %1421 = vmatprep.subr.bf16.mxu0 0
        %1422 = vmatpush1.bf16.msra.mxu0 %v1141
        %1423 = vmatprep.subr.bf16.mxu0 0
        %1424 = vmatpush1.bf16.msra.mxu0 %v1142
        %1425 = vmatprep.subr.bf16.mxu0 0
        %1426 = vmatpush1.bf16.msra.mxu0 %v1143
        %1427 = vmatprep.subr.bf16.mxu0 0
        %1428 = vmatpush1.bf16.msra.mxu0 %v1144
        %1429 = vmatprep.subr.bf16.mxu0 0
        %1430 = vmatpush1.bf16.msra.mxu0 %v1145
        %1431 = vmatprep.subr.bf16.mxu0 0
        %1432 = vmatpush1.bf16.msra.mxu0 %v1146
        %1433 = vmatprep.subr.bf16.mxu0 0
        %1434 = vmatpush1.bf16.msra.mxu0 %v1147
        %1435 = vmatprep.subr.bf16.mxu0 0
        %1436 = vmatpush1.bf16.msra.mxu0 %v1148
        %1437 = vmatprep.subr.bf16.mxu0 0
        %1438 = vmatpush1.bf16.msra.mxu0 %v1149
        %1439 = vmatprep.subr.bf16.mxu0 0
        %1440 = vmatpush1.bf16.msra.mxu0 %v1150
        %1441 = vmatprep.subr.bf16.mxu0 0
        %1442 = vmatpush1.bf16.msra.mxu0 %v1151
        %1443 = vmatprep.subr.bf16.mxu0 0
        %1444 = vmatpush1.bf16.msra.mxu0 %v1152
        %1445 = vmatprep.subr.bf16.mxu0 0
        %1446 = vmatpush1.bf16.msra.mxu0 %v1153
        %1447 = vmatprep.subr.bf16.mxu0 0
        %1448 = vmatpush1.bf16.msra.mxu0 %v1154
        %1449 = vmatprep.subr.bf16.mxu0 0
        %1450 = vmatpush1.bf16.msra.mxu0 %v1155
        %1451 = vmatprep.subr.bf16.mxu0 0
        %1452 = vmatpush1.bf16.msra.mxu0 %v1156
        %1453 = vmatprep.mubr.bf16.mxu0 %v546
        %1454 = vmatmul.mubr.bf16.gmra.mrb[0].mxu0 %v544
        %v1455 = vpop.f32.mrb[0].mxu0
        %v1456 = vadd.f32 %v1416, %v1455
        %v1457 = vpop.f32.mrb[0].mxu0
        %v1458 = vpop.f32.mrb[0].mxu0
        %v1459 = vpop.f32.mrb[0].mxu0
        %1460 = vdwg.mxu0
        %1461 = vmatprep.subr.bf16.mxu0 0
        %1462 = vmatpush1.bf16.msra.mxu0 %v1157
        %1463 = vmatprep.subr.bf16.mxu0 0
        %1464 = vmatpush1.bf16.msra.mxu0 %v1158
        %1465 = vmatprep.subr.bf16.mxu0 0
        %1466 = vmatpush1.bf16.msra.mxu0 %v1159
        %1467 = vmatprep.subr.bf16.mxu0 0
        %1468 = vmatpush1.bf16.msra.mxu0 %v1160
        %1469 = vmatprep.subr.bf16.mxu0 0
        %1470 = vmatpush1.bf16.msra.mxu0 %v1161
        %1471 = vmatprep.subr.bf16.mxu0 0
        %1472 = vmatpush1.bf16.msra.mxu0 %v1162
        %1473 = vmatprep.subr.bf16.mxu0 0
        %1474 = vmatpush1.bf16.msra.mxu0 %v1163
        %1475 = vmatprep.subr.bf16.mxu0 0
        %1476 = vmatpush1.bf16.msra.mxu0 %v1164
        %1477 = vmatprep.subr.bf16.mxu0 0
        %1478 = vmatpush1.bf16.msra.mxu0 %v1165
        %1479 = vmatprep.subr.bf16.mxu0 0
        %1480 = vmatpush1.bf16.msra.mxu0 %v1166
        %1481 = vmatprep.subr.bf16.mxu0 0
        %1482 = vmatpush1.bf16.msra.mxu0 %v1167
        %1483 = vmatprep.subr.bf16.mxu0 0
        %1484 = vmatpush1.bf16.msra.mxu0 %v1168
        %1485 = vmatprep.subr.bf16.mxu0 0
        %1486 = vmatpush1.bf16.msra.mxu0 %v1169
        %1487 = vmatprep.subr.bf16.mxu0 0
        %1488 = vmatpush1.bf16.msra.mxu0 %v1170
        %1489 = vmatprep.subr.bf16.mxu0 0
        %1490 = vmatpush1.bf16.msra.mxu0 %v1171
        %1491 = vmatprep.subr.bf16.mxu0 0
        %1492 = vmatpush1.bf16.msra.mxu0 %v1172
        %1493 = vmatprep.mubr.bf16.mxu0 %v543
        %1494 = vmatmul.mubr.bf16.gmra.mrb[0].mxu0 %v529
        %v1495 = vpop.f32.mrb[0].mxu0
        %v1496 = vadd.f32 %v1456, %v1495
        %v1497 = vpop.f32.mrb[0].mxu0
        %v1498 = vpop.f32.mrb[0].mxu0
        %v1499 = vpop.f32.mrb[0].mxu0
        %1500 = vdwg.mxu0
        %1501 = vmatprep.subr.bf16.mxu0 0
        %1502 = vmatpush1.bf16.msra.mxu0 %v1173
        %1503 = vmatprep.subr.bf16.mxu0 0
        %1504 = vmatpush1.bf16.msra.mxu0 %v1174
        %1505 = vmatprep.subr.bf16.mxu0 0
        %1506 = vmatpush1.bf16.msra.mxu0 %v1175
        %1507 = vmatprep.subr.bf16.mxu0 0
        %1508 = vmatpush1.bf16.msra.mxu0 %v1176
        %1509 = vmatprep.subr.bf16.mxu0 0
        %1510 = vmatpush1.bf16.msra.mxu0 %v1177
        %1511 = vmatprep.subr.bf16.mxu0 0
        %1512 = vmatpush1.bf16.msra.mxu0 %v1178
        %1513 = vmatprep.subr.bf16.mxu0 0
        %1514 = vmatpush1.bf16.msra.mxu0 %v1179
        %1515 = vmatprep.subr.bf16.mxu0 0
        %1516 = vmatpush1.bf16.msra.mxu0 %v1180
        %1517 = vmatprep.subr.bf16.mxu0 0
        %1518 = vmatpush1.bf16.msra.mxu0 %v1181
        %1519 = vmatprep.subr.bf16.mxu0 0
        %1520 = vmatpush1.bf16.msra.mxu0 %v1182
        %1521 = vmatprep.subr.bf16.mxu0 0
        %1522 = vmatpush1.bf16.msra.mxu0 %v1183
        %1523 = vmatprep.subr.bf16.mxu0 0
        %1524 = vmatpush1.bf16.msra.mxu0 %v1184
        %1525 = vmatprep.subr.bf16.mxu0 0
        %1526 = vmatpush1.bf16.msra.mxu0 %v1185
        %1527 = vmatprep.subr.bf16.mxu0 0
        %1528 = vmatpush1.bf16.msra.mxu0 %v1186
        %1529 = vmatprep.subr.bf16.mxu0 0
        %1530 = vmatpush1.bf16.msra.mxu0 %v1187
        %1531 = vmatprep.subr.bf16.mxu0 0
        %1532 = vmatpush1.bf16.msra.mxu0 %v1188
        %1533 = vmatprep.mubr.bf16.mxu0 %v547
        %1534 = vmatmul.mubr.bf16.gmra.mrb[0].mxu0 %v545
        %v1535 = vpop.f32.mrb[0].mxu0
        %v1536 = vadd.f32 %v1496, %v1535
        %v1537 = vpop.f32.mrb[0].mxu0
        %v1538 = vpop.f32.mrb[0].mxu0
        %v1539 = vpop.f32.mrb[0].mxu0
        %1540 = vdwg.mxu0
        %1541 = vmatprep.subr.bf16.mxu0 0
        %1542 = vmatpush1.bf16.msra.mxu0 %v1189
        %1543 = vmatprep.subr.bf16.mxu0 0
        %1544 = vmatpush1.bf16.msra.mxu0 %v1190
        %1545 = vmatprep.subr.bf16.mxu0 0
        %1546 = vmatpush1.bf16.msra.mxu0 %v1191
        %1547 = vmatprep.subr.bf16.mxu0 0
        %1548 = vmatpush1.bf16.msra.mxu0 %v1192
        %1549 = vmatprep.subr.bf16.mxu0 0
        %1550 = vmatpush1.bf16.msra.mxu0 %v1193
        %1551 = vmatprep.subr.bf16.mxu0 0
        %1552 = vmatpush1.bf16.msra.mxu0 %v1194
        %1553 = vmatprep.subr.bf16.mxu0 0
        %1554 = vmatpush1.bf16.msra.mxu0 %v1195
        %1555 = vmatprep.subr.bf16.mxu0 0
        %1556 = vmatpush1.bf16.msra.mxu0 %v1196
        %1557 = vmatprep.subr.bf16.mxu0 0
        %1558 = vmatpush1.bf16.msra.mxu0 %v1197
        %1559 = vmatprep.subr.bf16.mxu0 0
        %1560 = vmatpush1.bf16.msra.mxu0 %v1198
        %1561 = vmatprep.subr.bf16.mxu0 0
        %1562 = vmatpush1.bf16.msra.mxu0 %v1199
        %1563 = vmatprep.subr.bf16.mxu0 0
        %1564 = vmatpush1.bf16.msra.mxu0 %v1200
        %1565 = vmatprep.subr.bf16.mxu0 0
        %1566 = vmatpush1.bf16.msra.mxu0 %v1201
        %1567 = vmatprep.subr.bf16.mxu0 0
        %1568 = vmatpush1.bf16.msra.mxu0 %v1202
        %1569 = vmatprep.subr.bf16.mxu0 0
        %1570 = vmatpush1.bf16.msra.mxu0 %v1203
        %1571 = vmatprep.subr.bf16.mxu0 0
        %1572 = vmatpush1.bf16.msra.mxu0 %v1204
        %1573 = vmatprep.mubr.bf16.mxu0 %v585
        %1574 = vmatmul.mubr.bf16.gmra.mrb[0].mxu0 %v571
        %v1575 = vpop.f32.mrb[0].mxu0
        %v1576 = vadd.f32 %v1536, %v1575
        %v1577 = vpop.f32.mrb[0].mxu0
        %v1578 = vpop.f32.mrb[0].mxu0
        %v1579 = vpop.f32.mrb[0].mxu0
        %1580 = vdwg.mxu0
        %1581 = vmatprep.subr.bf16.mxu0 0
        %1582 = vmatpush1.bf16.msra.mxu0 %v1205
        %1583 = vmatprep.subr.bf16.mxu0 0
        %1584 = vmatpush1.bf16.msra.mxu0 %v1206
        %1585 = vmatprep.subr.bf16.mxu0 0
        %1586 = vmatpush1.bf16.msra.mxu0 %v1207
        %1587 = vmatprep.subr.bf16.mxu0 0
        %1588 = vmatpush1.bf16.msra.mxu0 %v1208
        %1589 = vmatprep.subr.bf16.mxu0 0
        %1590 = vmatpush1.bf16.msra.mxu0 %v1209
        %1591 = vmatprep.subr.bf16.mxu0 0
        %1592 = vmatpush1.bf16.msra.mxu0 %v1210
        %1593 = vmatprep.subr.bf16.mxu0 0
        %1594 = vmatpush1.bf16.msra.mxu0 %v1211
        %1595 = vmatprep.subr.bf16.mxu0 0
        %1596 = vmatpush1.bf16.msra.mxu0 %v1212
        %1597 = vmatprep.subr.bf16.mxu0 0
        %1598 = vmatpush1.bf16.msra.mxu0 %v1213
        %1599 = vmatprep.subr.bf16.mxu0 0
        %1600 = vmatpush1.bf16.msra.mxu0 %v1214
        %1601 = vmatprep.subr.bf16.mxu0 0
        %1602 = vmatpush1.bf16.msra.mxu0 %v1215
        %1603 = vmatprep.subr.bf16.mxu0 0
        %1604 = vmatpush1.bf16.msra.mxu0 %v1216
        %1605 = vmatprep.subr.bf16.mxu0 0
        %1606 = vmatpush1.bf16.msra.mxu0 %v1217
        %1607 = vmatprep.subr.bf16.mxu0 0
        %1608 = vmatpush1.bf16.msra.mxu0 %v1218
        %1609 = vmatprep.subr.bf16.mxu0 0
        %1610 = vmatpush1.bf16.msra.mxu0 %v1219
        %1611 = vmatprep.subr.bf16.mxu0 0
        %1612 = vmatpush1.bf16.msra.mxu0 %v1220
        %1613 = vmatprep.mubr.bf16.mxu0 %v595
        %1614 = vmatmul.mubr.bf16.gmra.mrb[0].mxu0 %v593
        %v1615 = vpop.f32.mrb[0].mxu0
        %v1616 = vadd.f32 %v1576, %v1615
        %v1617 = vpop.f32.mrb[0].mxu0
        %v1618 = vpop.f32.mrb[0].mxu0
        %v1619 = vpop.f32.mrb[0].mxu0
        %1620 = vdwg.mxu0
        %1621 = vmatprep.subr.bf16.mxu0 0
        %1622 = vmatpush1.bf16.msra.mxu0 %v1221
        %1623 = vmatprep.subr.bf16.mxu0 0
        %1624 = vmatpush1.bf16.msra.mxu0 %v1222
        %1625 = vmatprep.subr.bf16.mxu0 0
        %1626 = vmatpush1.bf16.msra.mxu0 %v1223
        %1627 = vmatprep.subr.bf16.mxu0 0
        %1628 = vmatpush1.bf16.msra.mxu0 %v1224
        %1629 = vmatprep.subr.bf16.mxu0 0
        %1630 = vmatpush1.bf16.msra.mxu0 %v1225
        %1631 = vmatprep.subr.bf16.mxu0 0
        %1632 = vmatpush1.bf16.msra.mxu0 %v1226
        %1633 = vmatprep.subr.bf16.mxu0 0
        %1634 = vmatpush1.bf16.msra.mxu0 %v1227
        %1635 = vmatprep.subr.bf16.mxu0 0
        %1636 = vmatpush1.bf16.msra.mxu0 %v1228
        %1637 = vmatprep.subr.bf16.mxu0 0
        %1638 = vmatpush1.bf16.msra.mxu0 %v1229
        %1639 = vmatprep.subr.bf16.mxu0 0
        %1640 = vmatpush1.bf16.msra.mxu0 %v1230
        %1641 = vmatprep.subr.bf16.mxu0 0
        %1642 = vmatpush1.bf16.msra.mxu0 %v1231
        %1643 = vmatprep.subr.bf16.mxu0 0
        %1644 = vmatpush1.bf16.msra.mxu0 %v1232
        %1645 = vmatprep.subr.bf16.mxu0 0
        %1646 = vmatpush1.bf16.msra.mxu0 %v1233
        %1647 = vmatprep.subr.bf16.mxu0 0
        %1648 = vmatpush1.bf16.msra.mxu0 %v1234
        %1649 = vmatprep.subr.bf16.mxu0 0
        %1650 = vmatpush1.bf16.msra.mxu0 %v1235
        %1651 = vmatprep.subr.bf16.mxu0 0
        %1652 = vmatpush1.bf16.msra.mxu0 %v1236
        %1653 = vmatprep.mubr.bf16.mxu0 %v592
        %1654 = vmatmul.mubr.bf16.gmra.mrb[0].mxu0 %v578
        %v1655 = vpop.f32.mrb[0].mxu0
        %v1656 = vadd.f32 %v1616, %v1655
        %v1657 = vpop.f32.mrb[0].mxu0
        %v1658 = vpop.f32.mrb[0].mxu0
        %v1659 = vpop.f32.mrb[0].mxu0
        %1660 = vdwg.mxu0
        %1661 = vmatprep.subr.bf16.mxu0 0
        %1662 = vmatpush1.bf16.msra.mxu0 %v1237
        %1663 = vmatprep.subr.bf16.mxu0 0
        %1664 = vmatpush1.bf16.msra.mxu0 %v1238
        %1665 = vmatprep.subr.bf16.mxu0 0
        %1666 = vmatpush1.bf16.msra.mxu0 %v1239
        %1667 = vmatprep.subr.bf16.mxu0 0
        %1668 = vmatpush1.bf16.msra.mxu0 %v1240
        %1669 = vmatprep.subr.bf16.mxu0 0
        %1670 = vmatpush1.bf16.msra.mxu0 %v1241
        %1671 = vmatprep.subr.bf16.mxu0 0
        %1672 = vmatpush1.bf16.msra.mxu0 %v1242
        %1673 = vmatprep.subr.bf16.mxu0 0
        %1674 = vmatpush1.bf16.msra.mxu0 %v1243
        %1675 = vmatprep.subr.bf16.mxu0 0
        %1676 = vmatpush1.bf16.msra.mxu0 %v1244
        %1677 = vmatprep.subr.bf16.mxu0 0
        %1678 = vmatpush1.bf16.msra.mxu0 %v1245
        %1679 = vmatprep.subr.bf16.mxu0 0
        %1680 = vmatpush1.bf16.msra.mxu0 %v1246
        %1681 = vmatprep.subr.bf16.mxu0 0
        %1682 = vmatpush1.bf16.msra.mxu0 %v1247
        %1683 = vmatprep.subr.bf16.mxu0 0
        %1684 = vmatpush1.bf16.msra.mxu0 %v1248
        %1685 = vmatprep.subr.bf16.mxu0 0
        %1686 = vmatpush1.bf16.msra.mxu0 %v1249
        %1687 = vmatprep.subr.bf16.mxu0 0
        %1688 = vmatpush1.bf16.msra.mxu0 %v1250
        %1689 = vmatprep.subr.bf16.mxu0 0
        %1690 = vmatpush1.bf16.msra.mxu0 %v1251
        %1691 = vmatprep.subr.bf16.mxu0 0
        %1692 = vmatpush1.bf16.msra.mxu0 %v1252
        %1693 = vmatprep.mubr.bf16.mxu0 %v596
        %1694 = vmatmul.mubr.bf16.gmra.mrb[0].mxu0 %v594
        %v1695 = vpop.f32.mrb[0].mxu0
        %v1696 = vadd.f32 %v1656, %v1695
        %v1697 = vpop.f32.mrb[0].mxu0
        %v1698 = vpop.f32.mrb[0].mxu0
        %v1699 = vpop.f32.mrb[0].mxu0
        %1700 = vdwg.mxu0
        %v1701 = vadd.f32 %v238, %v1696
        %1702 = vst [vmem:[#allocation2] sm:$0x3] %v1701
        %p1703 = scmp.eq.s32.totalorder %s17, 3
        // Predicated region
        $region45: #{audio_cnn_forward.3} parent=39 // pred_check
          %p1704 = pneg %p1703
        $region46: #{audio_cnn_forward.3} parent=39 // pred_check_branch
          %1706 = sbr.rel (%p1704) target = $region48
        $region47: #{audio_cnn_forward.3} parent=39 // pred_region
          %v1707 = vld [vmem:[#allocation2] sm:$0x3]
          %v1708 = vld [vmem:[%s2] sm:$0x1]
          %v1710 = vlaneseq
          %v1711 = vshrl.u32 %v1710, 7
          %v1712 = vsub.s32 0, %v1711
          %v1713 = vrot.slane %v1708, %v1712
          %v1715 = vadd.f32 %v1707, %v1713
          %v1716 = vmax.f32 %v1715, 0.0
          %v1717 = vld [vmem:[%s3] sm:$0xff]
          %v1718 = vld [vmem:[%s3 + $0x8] sm:$0xff]
          %v1719 = vld [vmem:[%s3 + $0x10] sm:$0xff]
          %v1720 = vld [vmem:[%s3 + $0x18] sm:$0xff]
          %v1721 = vld [vmem:[%s3 + $0x20] sm:$0xff]
          %v1722 = vld [vmem:[%s3 + $0x28] sm:$0xff]
          %v1723 = vld [vmem:[%s3 + $0x30] sm:$0xff]
          %v1724 = vld [vmem:[%s3 + $0x38] sm:$0xff]
          %v1725 = vld [vmem:[%s3 + $0x40] sm:$0xff]
          %v1726 = vld [vmem:[%s3 + $0x48] sm:$0xff]
          %v1727 = vld [vmem:[%s3 + $0x50] sm:$0xff]
          %v1728 = vld [vmem:[%s3 + $0x58] sm:$0xff]
          %v1729 = vld [vmem:[%s3 + $0x60] sm:$0xff]
          %v1730 = vld [vmem:[%s3 + $0x68] sm:$0xff]
          %v1731 = vld [vmem:[%s3 + $0x70] sm:$0xff]
          %v1732 = vld [vmem:[%s3 + $0x78] sm:$0xff]
          %v1733 = vld [vmem:[%s4] sm:$0x1]
          %v1735 = vlaneseq
          %v1736 = vshrl.u32 %v1735, 7
          %v1737 = vsub.s32 0, %v1736
          %v1738 = vrot.slane %v1733, %v1737
          %1740 = vmatprep.subr.mxu0 0.0
          %1741 = vmatpush1.msra.mxu0 %v1717
          %1742 = vmatprep.subr.mxu0 0.0
          %1743 = vmatpush1.msra.mxu0 %v1718
          %1744 = vmatprep.subr.mxu0 0.0
          %1745 = vmatpush1.msra.mxu0 %v1719
          %1746 = vmatprep.subr.mxu0 0.0
          %1747 = vmatpush1.msra.mxu0 %v1720
          %1748 = vmatprep.subr.mxu0 0.0
          %1749 = vmatpush1.msra.mxu0 %v1721
          %1750 = vmatprep.subr.mxu0 0.0
          %1751 = vmatpush1.msra.mxu0 %v1722
          %1752 = vmatprep.subr.mxu0 0.0
          %1753 = vmatpush1.msra.mxu0 %v1723
          %1754 = vmatprep.subr.mxu0 0.0
          %1755 = vmatpush1.msra.mxu0 %v1724
          %1756 = vmatprep.subr.mxu0 0.0
          %1757 = vmatpush1.msra.mxu0 %v1725
          %1758 = vmatprep.subr.mxu0 0.0
          %1759 = vmatpush1.msra.mxu0 %v1726
          %1760 = vmatprep.subr.mxu0 0.0
          %1761 = vmatpush1.msra.mxu0 %v1727
          %1762 = vmatprep.subr.mxu0 0.0
          %1763 = vmatpush1.msra.mxu0 %v1728
          %1764 = vmatprep.subr.mxu0 0.0
          %1765 = vmatpush1.msra.mxu0 %v1729
          %1766 = vmatprep.subr.mxu0 0.0
          %1767 = vmatpush1.msra.mxu0 %v1730
          %1768 = vmatprep.subr.mxu0 0.0
          %1769 = vmatpush1.msra.mxu0 %v1731
          %1770 = vmatprep.subr.mxu0 0.0
          %1771 = vmatpush1.msra.mxu0 %v1732
          %1772 = vmatprep.subr.mxu0 0.0
          %1773 = vmatpush1.msra.mxu0 0.0
          %1774 = vmatprep.subr.mxu0 0.0
          %1775 = vmatpush1.msra.mxu0 0.0
          %1776 = vmatprep.subr.mxu0 0.0
          %1777 = vmatpush1.msra.mxu0 0.0
          %1778 = vmatprep.subr.mxu0 0.0
          %1779 = vmatpush1.msra.mxu0 0.0
          %1780 = vmatprep.subr.mxu0 0.0
          %1781 = vmatpush1.msra.mxu0 0.0
          %1782 = vmatprep.subr.mxu0 0.0
          %1783 = vmatpush1.msra.mxu0 0.0
          %1784 = vmatprep.subr.mxu0 0.0
          %1785 = vmatpush1.msra.mxu0 0.0
          %1786 = vmatprep.subr.mxu0 0.0
          %1787 = vmatpush1.msra.mxu0 0.0
          %1788 = vmatprep.subr.mxu0 0.0
          %1789 = vmatpush1.msra.mxu0 0.0
          %1790 = vmatprep.subr.mxu0 0.0
          %1791 = vmatpush1.msra.mxu0 0.0
          %1792 = vmatprep.subr.mxu0 0.0
          %1793 = vmatpush1.msra.mxu0 0.0
          %1794 = vmatprep.subr.mxu0 0.0
          %1795 = vmatpush1.msra.mxu0 0.0
          %1796 = vmatprep.subr.mxu0 0.0
          %1797 = vmatpush1.msra.mxu0 0.0
          %1798 = vmatprep.subr.mxu0 0.0
          %1799 = vmatpush1.msra.mxu0 0.0
          %1800 = vmatprep.subr.mxu0 0.0
          %1801 = vmatpush1.msra.mxu0 0.0
          %1802 = vmatprep.subr.mxu0 0.0
          %1803 = vmatpush1.msra.mxu0 0.0
          %1804 = vmatprep.mubr.f32.mxu0 0.0
          %1805 = vmatmul.mubr.f32.gmra.mrb[0].mxu0 %v1716
          %v1806 = vpop.f32.mrb[0].mxu0
          %v1807 = vadd.f32 %v1738, %v1806
          %v1808 = vpop.f32.mrb[0].mxu0
          %1809 = vdwg.mxu0
          %vm1810 = vcmask 74752
          %1811 = vst.msk [vmem:[#allocation3] sm:$0x3] %vm1810, %v1807
        $region48: #{audio_cnn_forward.3} parent=39 // pred_fallthru
          _
        // Predicated region
        $region49: #{audio_cnn_forward.3} parent=39 // pred_check
          %p1812 = pneg %p145
        $region50: #{audio_cnn_forward.3} parent=39 // pred_check_branch
          %1814 = sbr.rel (%p1812) target = $region52
        $region51: #{audio_cnn_forward.3} parent=39 // pred_region
          %s1816 = ssub.s32 32, 32
          %1817 = vsyncadd [#allocation4], %s1816
          %s1819 = sshll.u32 [#allocation3], 4
          %s1820 = int_to_ptr.vmem [resolvable:$true] %s1819
          %1822 = dma.vmem_to_hbm [thread:$0]  %s1820, 32, %s5, [#allocation4]
        $region52: #{audio_cnn_forward.3} parent=39 // pred_fallthru
          _
        // Predicated region
        $region53: #{audio_cnn_forward.3} parent=39 // pred_check
          %p1823 = pneg %p145
        $region54: #{audio_cnn_forward.3} parent=39 // pred_check_branch
          %1825 = sbr.rel (%p1823) target = $region56
        $region55: #{audio_cnn_forward.3} parent=39 // pred_region
          %1826 = dma.done [#allocation4], 32
        $region56: #{audio_cnn_forward.3} parent=39 // pred_fallthru
          _
      $region40: #{audio_cnn_forward.3} parent=5 // pred_fallthru
        _
      %p1827 = scmp.le.s32.totalorder 2, %s12
      // Predicated region
      $region57: #{audio_cnn_forward.3} parent=5 // pred_check
        %p1828 = pneg %p1827
      $region58: #{audio_cnn_forward.3} parent=5 // pred_check_branch
        %1830 = sbr.rel (%p1828) target = $region60
      $region59: #{audio_cnn_forward.3} parent=5 // pred_region
        %s1831 = ssub.s32 %s12, 2
      $region60: #{audio_cnn_forward.3} parent=5 // pred_fallthru
        _
    $region6: #{audio_cnn_forward.3} parent=1 // loop_footer
      %s16 = sadd.s32 1, %s12
    $region7: #{audio_cnn_forward.3} parent=1 // loop_footer_branch
      %11 = sbr.rel target = $region3
    $region8: #{audio_cnn_forward.3} parent=1 // loop_exit
      _
    %1832 = vsyncpa [#allocation4], 1
    %s1833 = scalar_lea.sflag [#allocation4], 1
    %1834 = vsyncpa %s1833, 1

// kernel: audio_cnn_forward.2
$region0: #{audio_cnn_forward.2}
  #allocation0 [shape = 'u32[]', space=smem, size = 0x4, offset = 0x4, fixed_abs, tag = 'smem constant byte address 0x4 - core index']
  #allocation1 [shape = 'u32[144,128]{1,0:T(1,128)}', space=vmem, size = 0x12000, scoped, tag = 'internal scratch']
  #allocation2 [shape = 'f32[18,137,1]{2,1,0:T(8,128)}', space=vmem, size = 0x144000, scoped, tag = 'scratch operand']
  #allocation3 [shape = 'f32[10,73,32]{2,1,0:T(8,128)}', space=vmem, size = 0x64000, scoped, tag = 'scratch operand']
  #allocation4 [shape = 'f32[128,32]{1,0:T(8,128)}', space=vmem, size = 0x10000, scoped, tag = 'scratch operand']
  #allocation5 [shape = 'f32[64,64]{1,0:T(8,128)}', space=vmem, size = 0x8000, scoped, tag = 'scratch operand']
  #allocation6 [shape = 'f32[4,32,64]{2,1,0:T(8,128)}', space=vmem, size = 0x10000, scoped, tag = 'scratch operand']
  %s0 = inlined_call_operand.vmem [shape: f32[2,16,128,1], index: 0, kind: input, shape index: {}]
  %s1 = inlined_call_operand.vmem [shape: f32[3,3,1,32], index: 1, kind: input, shape index: {}]
  %s2 = inlined_call_operand.vmem [shape: f32[1,32], index: 2, kind: input, shape index: {}]
  %s3 = inlined_call_operand.vmem [shape: f32[1,32], index: 3, kind: input, shape index: {}]
  %s4 = inlined_call_operand.vmem [shape: bf16[3,3,32,64], index: 4, kind: input, shape index: {}]
  %s5 = inlined_call_operand.vmem [shape: f32[1,64], index: 5, kind: input, shape index: {}]
  %s6 = inlined_call_operand.vmem [shape: f32[1,64], index: 6, kind: input, shape index: {}]
  %s7 = inlined_call_operand.vmem [shape: bf16[2,4,32,64], index: 7, kind: output, shape index: {}]
  %s8 = sld [smem:[#allocation0]]
  $region75: #{audio_cnn_forward.2} parent=0
    _
  %s10 = ssub.s32 1, %s8
  %s11 = scalar_select 0, %s10, %s8
  loop: start=0, step=1, limit=4
  $region2: #{audio_cnn_forward.2} parent=0 // loop_pre_header
    _
  $region3: #{audio_cnn_forward.2} parent=0 // loop_header
    %s13 = sphi 0, %s17
    %p14 = scmp.ge.s32.totalorder %s13, 4
    %s23 = sphi 0, %s25
    %s26 = sphi 0, %s23
    %s27 = sphi 0, %s26
    %s43 = sphi 0, %s27
    %s47 = sphi 0, %s47
    %s49 = sphi 0, %s47
    %s50 = sphi 0, %s49
    %s64 = sphi 0, %s50
    %s68 = sphi 0, %s68
    %s70 = sphi 0, %s68
    %s71 = sphi 0, %s70
    %s85 = sphi 0, %s71
    %s89 = sphi 0, %s89
    %s91 = sphi 0, %s89
    %s92 = sphi 0, %s91
    %s106 = sphi 0, %s92
    %s110 = sphi 0, %s110
    %s112 = sphi 0, %s110
    %s113 = sphi 0, %s112
    %s127 = sphi 0, %s113
    %s131 = sphi 0, %s131
    %s133 = sphi 0, %s131
    %s134 = sphi 0, %s133
    %s148 = sphi 0, %s134
    %s152 = sphi 0, %s152
    %s154 = sphi 0, %s152
    %s155 = sphi 0, %s154
    %s169 = sphi 0, %s155
    %s175 = sphi 0, %s177
    %s178 = sphi 0, %s175
    %s179 = sphi 0, %s178
    %s195 = sphi 0, %s179
  $region4: #{audio_cnn_forward.2} parent=0 // loop_header_branch
    %16 = sbr.rel (%p14) target = $region8
  $region5: #{audio_cnn_forward.2} parent=0 // loop_body
    %s18 = ssub.s32 %s13, 1
    %s19 = ssub.s32 %s13, 2
    %s20 = sadd.s32 %s13, 1
    %s21 = ssub.s32 %s13, %s20
    %p22 = scmp.eq.s32.totalorder %s21, 0
    %s24 = sadd.s32 %s23, 1
    %s25 = scalar_select %p22, %s23, %s24
    %p28 = pneg %p22
    %p29 = scmp.eq.s32.totalorder %s13, 1
    %p30 = por %p28, %p29
    %p31 = scmp.ne.s32.totalorder %s23, %s26
    %p32 = scmp.eq.s32.totalorder %s13, 0
    %p33 = por %p31, %p32
    %p34 = scmp.ne.s32.totalorder %s23, %s26
    %p35 = scmp.eq.s32.totalorder %s18, 1
    %p36 = por %p34, %p35
    %p37 = scmp.ne.s32.totalorder %s26, %s27
    %p38 = scmp.eq.s32.totalorder %s18, 0
    %p39 = por %p37, %p38
    %p40 = scmp.ne.s32.totalorder %s26, %s27
    %p41 = scmp.eq.s32.totalorder %s19, 1
    %p42 = por %p40, %p41
    %p44 = scmp.ne.s32.totalorder %s27, %s43
    %p45 = scmp.eq.s32.totalorder %s19, 0
    %p46 = por %p44, %p45
    %s48 = sadd.s32 %s47, 1
    %p51 = scmp.eq.s32.totalorder %s13, 1
    %p52 = scmp.ne.s32.totalorder %s47, %s49
    %p53 = scmp.eq.s32.totalorder %s13, 0
    %p54 = por %p52, %p53
    %p55 = scmp.ne.s32.totalorder %s47, %s49
    %p56 = scmp.eq.s32.totalorder %s18, 1
    %p57 = por %p55, %p56
    %p58 = scmp.ne.s32.totalorder %s49, %s50
    %p59 = scmp.eq.s32.totalorder %s18, 0
    %p60 = por %p58, %p59
    %p61 = scmp.ne.s32.totalorder %s49, %s50
    %p62 = scmp.eq.s32.totalorder %s19, 1
    %p63 = por %p61, %p62
    %p65 = scmp.ne.s32.totalorder %s50, %s64
    %p66 = scmp.eq.s32.totalorder %s19, 0
    %p67 = por %p65, %p66
    %s69 = sadd.s32 %s68, 1
    %p72 = scmp.eq.s32.totalorder %s13, 1
    %p73 = scmp.ne.s32.totalorder %s68, %s70
    %p74 = scmp.eq.s32.totalorder %s13, 0
    %p75 = por %p73, %p74
    %p76 = scmp.ne.s32.totalorder %s68, %s70
    %p77 = scmp.eq.s32.totalorder %s18, 1
    %p78 = por %p76, %p77
    %p79 = scmp.ne.s32.totalorder %s70, %s71
    %p80 = scmp.eq.s32.totalorder %s18, 0
    %p81 = por %p79, %p80
    %p82 = scmp.ne.s32.totalorder %s70, %s71
    %p83 = scmp.eq.s32.totalorder %s19, 1
    %p84 = por %p82, %p83
    %p86 = scmp.ne.s32.totalorder %s71, %s85
    %p87 = scmp.eq.s32.totalorder %s19, 0
    %p88 = por %p86, %p87
    %s90 = sadd.s32 %s89, 1
    %p93 = scmp.eq.s32.totalorder %s13, 1
    %p94 = scmp.ne.s32.totalorder %s89, %s91
    %p95 = scmp.eq.s32.totalorder %s13, 0
    %p96 = por %p94, %p95
    %p97 = scmp.ne.s32.totalorder %s89, %s91
    %p98 = scmp.eq.s32.totalorder %s18, 1
    %p99 = por %p97, %p98
    %p100 = scmp.ne.s32.totalorder %s91, %s92
    %p101 = scmp.eq.s32.totalorder %s18, 0
    %p102 = por %p100, %p101
    %p103 = scmp.ne.s32.totalorder %s91, %s92
    %p104 = scmp.eq.s32.totalorder %s19, 1
    %p105 = por %p103, %p104
    %p107 = scmp.ne.s32.totalorder %s92, %s106
    %p108 = scmp.eq.s32.totalorder %s19, 0
    %p109 = por %p107, %p108
    %s111 = sadd.s32 %s110, 1
    %p114 = scmp.eq.s32.totalorder %s13, 1
    %p115 = scmp.ne.s32.totalorder %s110, %s112
    %p116 = scmp.eq.s32.totalorder %s13, 0
    %p117 = por %p115, %p116
    %p118 = scmp.ne.s32.totalorder %s110, %s112
    %p119 = scmp.eq.s32.totalorder %s18, 1
    %p120 = por %p118, %p119
    %p121 = scmp.ne.s32.totalorder %s112, %s113
    %p122 = scmp.eq.s32.totalorder %s18, 0
    %p123 = por %p121, %p122
    %p124 = scmp.ne.s32.totalorder %s112, %s113
    %p125 = scmp.eq.s32.totalorder %s19, 1
    %p126 = por %p124, %p125
    %p128 = scmp.ne.s32.totalorder %s113, %s127
    %p129 = scmp.eq.s32.totalorder %s19, 0
    %p130 = por %p128, %p129
    %s132 = sadd.s32 %s131, 1
    %p135 = scmp.eq.s32.totalorder %s13, 1
    %p136 = scmp.ne.s32.totalorder %s131, %s133
    %p137 = scmp.eq.s32.totalorder %s13, 0
    %p138 = por %p136, %p137
    %p139 = scmp.ne.s32.totalorder %s131, %s133
    %p140 = scmp.eq.s32.totalorder %s18, 1
    %p141 = por %p139, %p140
    %p142 = scmp.ne.s32.totalorder %s133, %s134
    %p143 = scmp.eq.s32.totalorder %s18, 0
    %p144 = por %p142, %p143
    %p145 = scmp.ne.s32.totalorder %s133, %s134
    %p146 = scmp.eq.s32.totalorder %s19, 1
    %p147 = por %p145, %p146
    %p149 = scmp.ne.s32.totalorder %s134, %s148
    %p150 = scmp.eq.s32.totalorder %s19, 0
    %p151 = por %p149, %p150
    %s153 = sadd.s32 %s152, 1
    %p156 = scmp.eq.s32.totalorder %s13, 1
    %p157 = scmp.ne.s32.totalorder %s152, %s154
    %p158 = scmp.eq.s32.totalorder %s13, 0
    %p159 = por %p157, %p158
    %p160 = scmp.ne.s32.totalorder %s152, %s154
    %p161 = scmp.eq.s32.totalorder %s18, 1
    %p162 = por %p160, %p161
    %p163 = scmp.ne.s32.totalorder %s154, %s155
    %p164 = scmp.eq.s32.totalorder %s18, 0
    %p165 = por %p163, %p164
    %p166 = scmp.ne.s32.totalorder %s154, %s155
    %p167 = scmp.eq.s32.totalorder %s19, 1
    %p168 = por %p166, %p167
    %p170 = scmp.ne.s32.totalorder %s155, %s169
    %p171 = scmp.eq.s32.totalorder %s19, 0
    %p172 = por %p170, %p171
    %s173 = ssub.s32 %s13, %s20
    %p174 = scmp.eq.s32.totalorder %s173, 0
    %s176 = sadd.s32 %s175, 1
    %s177 = scalar_select %p174, %s175, %s176
    %p180 = pneg %p174
    %p181 = scmp.eq.s32.totalorder %s13, 1
    %p182 = por %p180, %p181
    %p183 = scmp.ne.s32.totalorder %s175, %s178
    %p184 = scmp.eq.s32.totalorder %s13, 0
    %p185 = por %p183, %p184
    %p186 = scmp.ne.s32.totalorder %s175, %s178
    %p187 = scmp.eq.s32.totalorder %s18, 1
    %p188 = por %p186, %p187
    %p189 = scmp.ne.s32.totalorder %s178, %s179
    %p190 = scmp.eq.s32.totalorder %s18, 0
    %p191 = por %p189, %p190
    %p192 = scmp.ne.s32.totalorder %s178, %s179
    %p193 = scmp.eq.s32.totalorder %s19, 1
    %p194 = por %p192, %p193
    %p196 = scmp.ne.s32.totalorder %s179, %s195
    %p197 = scmp.eq.s32.totalorder %s19, 0
    %p198 = por %p196, %p197
    %p199 = scmp.le.s32.totalorder 1, %s13
    %p200 = scmp.lt.s32.totalorder %s13, 3
    %p201 = pnand %p199, %p200
    %p202 = pneg %p201
    // Predicated region
    $region9: #{audio_cnn_forward.2} parent=5 // pred_check
      _
    $region10: #{audio_cnn_forward.2} parent=5 // pred_check_branch
      %204 = sbr.rel (%p201) target = $region12
    $region11: #{audio_cnn_forward.2} parent=5 // pred_region
      %s205 = ssub.s32 %s13, 1
      // Predicated region
      $region13: #{audio_cnn_forward.2} parent=11 // pred_check
        %p206 = pneg %p60
      $region14: #{audio_cnn_forward.2} parent=11 // pred_check_branch
        %208 = sbr.rel (%p206) target = $region16
      $region15: #{audio_cnn_forward.2} parent=11 // pred_region
        _
      $region16: #{audio_cnn_forward.2} parent=11 // pred_fallthru
        _
      // Predicated region
      $region17: #{audio_cnn_forward.2} parent=11 // pred_check
        %p209 = pneg %p81
      $region18: #{audio_cnn_forward.2} parent=11 // pred_check_branch
        %211 = sbr.rel (%p209) target = $region20
      $region19: #{audio_cnn_forward.2} parent=11 // pred_region
        _
      $region20: #{audio_cnn_forward.2} parent=11 // pred_fallthru
        _
      // Predicated region
      $region21: #{audio_cnn_forward.2} parent=11 // pred_check
        %p212 = pneg %p102
      $region22: #{audio_cnn_forward.2} parent=11 // pred_check_branch
        %214 = sbr.rel (%p212) target = $region24
      $region23: #{audio_cnn_forward.2} parent=11 // pred_region
        _
      $region24: #{audio_cnn_forward.2} parent=11 // pred_fallthru
        _
      // Predicated region
      $region25: #{audio_cnn_forward.2} parent=11 // pred_check
        %p215 = pneg %p123
      $region26: #{audio_cnn_forward.2} parent=11 // pred_check_branch
        %217 = sbr.rel (%p215) target = $region28
      $region27: #{audio_cnn_forward.2} parent=11 // pred_region
        _
      $region28: #{audio_cnn_forward.2} parent=11 // pred_fallthru
        _
      // Predicated region
      $region29: #{audio_cnn_forward.2} parent=11 // pred_check
        %p218 = pneg %p144
      $region30: #{audio_cnn_forward.2} parent=11 // pred_check_branch
        %220 = sbr.rel (%p218) target = $region32
      $region31: #{audio_cnn_forward.2} parent=11 // pred_region
        _
      $region32: #{audio_cnn_forward.2} parent=11 // pred_fallthru
        _
      // Predicated region
      $region33: #{audio_cnn_forward.2} parent=11 // pred_check
        %p221 = pneg %p165
      $region34: #{audio_cnn_forward.2} parent=11 // pred_check_branch
        %223 = sbr.rel (%p221) target = $region36
      $region35: #{audio_cnn_forward.2} parent=11 // pred_region
        _
      $region36: #{audio_cnn_forward.2} parent=11 // pred_fallthru
        _
    $region12: #{audio_cnn_forward.2} parent=5 // pred_fallthru
      _
    %p224 = scmp.lt.s32.totalorder %s13, 2
    // Predicated region
    $region37: #{audio_cnn_forward.2} parent=5 // pred_check
      %p225 = pneg %p224
    $region38: #{audio_cnn_forward.2} parent=5 // pred_check_branch
      %227 = sbr.rel (%p225) target = $region40
    $region39: #{audio_cnn_forward.2} parent=5 // pred_region
      // Predicated region
      $region41: #{audio_cnn_forward.2} parent=39 // pred_check
        %p228 = pneg %p33
      $region42: #{audio_cnn_forward.2} parent=39 // pred_check_branch
        %230 = sbr.rel (%p228) target = $region44
      $region43: #{audio_cnn_forward.2} parent=39 // pred_region
        %p231 = scmp.lt.s32.totalorder %s13, 1
        %s232 = scalar_select %p231, %s13, 1
        %s233 = smul.addr %s232, 256
        %s234 = smul.addr %s233, 8
        %s235 = scalar_lea.vmem %s0, %s234
      $region44: #{audio_cnn_forward.2} parent=39 // pred_fallthru
        _
    $region40: #{audio_cnn_forward.2} parent=5 // pred_fallthru
      _
    %p236 = scmp.le.s32.totalorder 1, %s13
    %p237 = scmp.lt.s32.totalorder %s13, 3
    %p238 = pnand %p236, %p237
    %p239 = pneg %p238
    // Predicated region
    $region45: #{audio_cnn_forward.2} parent=5 // pred_check
      _
    $region46: #{audio_cnn_forward.2} parent=5 // pred_check_branch
      %241 = sbr.rel (%p238) target = $region48
    $region47: #{audio_cnn_forward.2} parent=5 // pred_region
      %s242 = ssub.s32 %s13, 1
      %p243 = scmp.lt.s32.totalorder %s18, 1
      %s244 = scalar_select %p243, %s18, 1
      %s245 = smul.addr %s244, 256
      %s246 = smul.addr %s245, 8
      %s247 = scalar_lea.vmem %s0, %s246
      %p248 = pneg %p39
      %p249 = pneg %p36
      %p250 = pneg %p60
      %p251 = pneg %p57
      %p252 = pneg %p81
      %p253 = pneg %p78
      %p254 = pneg %p102
      %p255 = pneg %p99
      %p256 = pneg %p123
      %p257 = pneg %p120
      %p258 = pneg %p144
      %p259 = pneg %p141
      %p260 = pneg %p165
      %p261 = pneg %p162
      %p262 = pneg %p191
      %p263 = pneg %p188
      %p264 = scmp.lt.s32.totalorder %s18, 1
      %s265 = scalar_select %p264, %s18, 1
      %s266 = smul.addr %s265, 16
      %s267 = smul.addr %s266, 4
      %s268 = scalar_lea.vmem %s7, %s267
      %p269 = scmp.lt.s32.totalorder %s18, 1
      %s270 = scalar_select %p269, %s18, 1
      %s271 = smul.addr %s270, 256
      %s272 = smul.addr %s271, 8
      %s273 = scalar_lea.vmem %s0, %s272
      %p274 = scmp.lt.s32.totalorder %s18, 1
      %s275 = scalar_select %p274, %s18, 1
      %s276 = smul.addr %s275, 16
      %s277 = smul.addr %s276, 4
      %s278 = scalar_lea.vmem %s7, %s277
      %v280 = vld [vmem:[%s2] sm:$0x1]
      %v281 = vld [vmem:[%s3] sm:$0x1]
      %v282 = vld [vmem:[%s5] sm:$0x1]
      %v283 = vld [vmem:[%s6] sm:$0x1]
      %vm284 = vcmask 7168
      %285 = vst.msk [vmem:[#allocation2] sm:$0xff] %vm284, 0.0
      %286 = vst.msk [vmem:[#allocation2 + $0x8] sm:$0xff] %vm284, 0.0
      %287 = vst.msk [vmem:[#allocation2 + $0x10] sm:$0xff] %vm284, 0.0
      %288 = vst.msk [vmem:[#allocation2 + $0x18] sm:$0xff] %vm284, 0.0
      %289 = vst.msk [vmem:[#allocation2 + $0x20] sm:$0xff] %vm284, 0.0
      %290 = vst.msk [vmem:[#allocation2 + $0x28] sm:$0xff] %vm284, 0.0
      %291 = vst.msk [vmem:[#allocation2 + $0x30] sm:$0xff] %vm284, 0.0
      %292 = vst.msk [vmem:[#allocation2 + $0x38] sm:$0xff] %vm284, 0.0
      %293 = vst.msk [vmem:[#allocation2 + $0x40] sm:$0xff] %vm284, 0.0
      %294 = vst.msk [vmem:[#allocation2 + $0x48] sm:$0xff] %vm284, 0.0
      %295 = vst.msk [vmem:[#allocation2 + $0x50] sm:$0xff] %vm284, 0.0
      %296 = vst.msk [vmem:[#allocation2 + $0x58] sm:$0xff] %vm284, 0.0
      %297 = vst.msk [vmem:[#allocation2 + $0x60] sm:$0xff] %vm284, 0.0
      %298 = vst.msk [vmem:[#allocation2 + $0x68] sm:$0xff] %vm284, 0.0
      %299 = vst.msk [vmem:[#allocation2 + $0x70] sm:$0xff] %vm284, 0.0
      %300 = vst.msk [vmem:[#allocation2 + $0x78] sm:$0xff] %vm284, 0.0
      %301 = vst.msk [vmem:[#allocation2 + $0x80] sm:$0xff] %vm284, 0.0
      %vm302 = vcmask 0
      %303 = vst.msk [vmem:[#allocation2 + $0x88] sm:$0x1] %vm302, 0.0
      %304 = vst.msk [vmem:[#allocation2 + $0x90] sm:$0xff] %vm284, 0.0
      %305 = vst.msk [vmem:[#allocation2 + $0x98] sm:$0xff] %vm284, 0.0
      %306 = vst.msk [vmem:[#allocation2 + $0xa0] sm:$0xff] %vm284, 0.0
      %307 = vst.msk [vmem:[#allocation2 + $0xa8] sm:$0xff] %vm284, 0.0
      %308 = vst.msk [vmem:[#allocation2 + $0xb0] sm:$0xff] %vm284, 0.0
      %309 = vst.msk [vmem:[#allocation2 + $0xb8] sm:$0xff] %vm284, 0.0
      %310 = vst.msk [vmem:[#allocation2 + $0xc0] sm:$0xff] %vm284, 0.0
      %311 = vst.msk [vmem:[#allocation2 + $0xc8] sm:$0xff] %vm284, 0.0
      %312 = vst.msk [vmem:[#allocation2 + $0xd0] sm:$0xff] %vm284, 0.0
      %313 = vst.msk [vmem:[#allocation2 + $0xd8] sm:$0xff] %vm284, 0.0
      %314 = vst.msk [vmem:[#allocation2 + $0xe0] sm:$0xff] %vm284, 0.0
      %315 = vst.msk [vmem:[#allocation2 + $0xe8] sm:$0xff] %vm284, 0.0
      %316 = vst.msk [vmem:[#allocation2 + $0xf0] sm:$0xff] %vm284, 0.0
      %317 = vst.msk [vmem:[#allocation2 + $0xf8] sm:$0xff] %vm284, 0.0
      %318 = vst.msk [vmem:[#allocation2 + $0x100] sm:$0xff] %vm284, 0.0
      %319 = vst.msk [vmem:[#allocation2 + $0x108] sm:$0xff] %vm284, 0.0
      %320 = vst.msk [vmem:[#allocation2 + $0x110] sm:$0xff] %vm284, 0.0
      %321 = vst.msk [vmem:[#allocation2 + $0x118] sm:$0x1] %vm302, 0.0
      %322 = vst.msk [vmem:[#allocation2 + $0x120] sm:$0xff] %vm284, 0.0
      %323 = vst.msk [vmem:[#allocation2 + $0x128] sm:$0xff] %vm284, 0.0
      %324 = vst.msk [vmem:[#allocation2 + $0x130] sm:$0xff] %vm284, 0.0
      %325 = vst.msk [vmem:[#allocation2 + $0x138] sm:$0xff] %vm284, 0.0
      %326 = vst.msk [vmem:[#allocation2 + $0x140] sm:$0xff] %vm284, 0.0
      %327 = vst.msk [vmem:[#allocation2 + $0x148] sm:$0xff] %vm284, 0.0
      %328 = vst.msk [vmem:[#allocation2 + $0x150] sm:$0xff] %vm284, 0.0
      %329 = vst.msk [vmem:[#allocation2 + $0x158] sm:$0xff] %vm284, 0.0
      %330 = vst.msk [vmem:[#allocation2 + $0x160] sm:$0xff] %vm284, 0.0
      %331 = vst.msk [vmem:[#allocation2 + $0x168] sm:$0xff] %vm284, 0.0
      %332 = vst.msk [vmem:[#allocation2 + $0x170] sm:$0xff] %vm284, 0.0
      %333 = vst.msk [vmem:[#allocation2 + $0x178] sm:$0xff] %vm284, 0.0
      %334 = vst.msk [vmem:[#allocation2 + $0x180] sm:$0xff] %vm284, 0.0
      %335 = vst.msk [vmem:[#allocation2 + $0x188] sm:$0xff] %vm284, 0.0
      %336 = vst.msk [vmem:[#allocation2 + $0x190] sm:$0xff] %vm284, 0.0
      %337 = vst.msk [vmem:[#allocation2 + $0x198] sm:$0xff] %vm284, 0.0
      %338 = vst.msk [vmem:[#allocation2 + $0x1a0] sm:$0xff] %vm284, 0.0
      %339 = vst.msk [vmem:[#allocation2 + $0x1a8] sm:$0x1] %vm302, 0.0
      %340 = vst.msk [vmem:[#allocation2 + $0x1b0] sm:$0xff] %vm284, 0.0
      %341 = vst.msk [vmem:[#allocation2 + $0x1b8] sm:$0xff] %vm284, 0.0
      %342 = vst.msk [vmem:[#allocation2 + $0x1c0] sm:$0xff] %vm284, 0.0
      %343 = vst.msk [vmem:[#allocation2 + $0x1c8] sm:$0xff] %vm284, 0.0
      %344 = vst.msk [vmem:[#allocation2 + $0x1d0] sm:$0xff] %vm284, 0.0
      %345 = vst.msk [vmem:[#allocation2 + $0x1d8] sm:$0xff] %vm284, 0.0
      %346 = vst.msk [vmem:[#allocation2 + $0x1e0] sm:$0xff] %vm284, 0.0
      %347 = vst.msk [vmem:[#allocation2 + $0x1e8] sm:$0xff] %vm284, 0.0
      %348 = vst.msk [vmem:[#allocation2 + $0x1f0] sm:$0xff] %vm284, 0.0
      %349 = vst.msk [vmem:[#allocation2 + $0x1f8] sm:$0xff] %vm284, 0.0
      %350 = vst.msk [vmem:[#allocation2 + $0x200] sm:$0xff] %vm284, 0.0
      %351 = vst.msk [vmem:[#allocation2 + $0x208] sm:$0xff] %vm284, 0.0
      %352 = vst.msk [vmem:[#allocation2 + $0x210] sm:$0xff] %vm284, 0.0
      %353 = vst.msk [vmem:[#allocation2 + $0x218] sm:$0xff] %vm284, 0.0
      %354 = vst.msk [vmem:[#allocation2 + $0x220] sm:$0xff] %vm284, 0.0
      %355 = vst.msk [vmem:[#allocation2 + $0x228] sm:$0xff] %vm284, 0.0
      %356 = vst.msk [vmem:[#allocation2 + $0x230] sm:$0xff] %vm284, 0.0
      %357 = vst.msk [vmem:[#allocation2 + $0x238] sm:$0x1] %vm302, 0.0
      %358 = vst.msk [vmem:[#allocation2 + $0x240] sm:$0xff] %vm284, 0.0
      %359 = vst.msk [vmem:[#allocation2 + $0x248] sm:$0xff] %vm284, 0.0
      %360 = vst.msk [vmem:[#allocation2 + $0x250] sm:$0xff] %vm284, 0.0
      %361 = vst.msk [vmem:[#allocation2 + $0x258] sm:$0xff] %vm284, 0.0
      %362 = vst.msk [vmem:[#allocation2 + $0x260] sm:$0xff] %vm284, 0.0
      %363 = vst.msk [vmem:[#allocation2 + $0x268] sm:$0xff] %vm284, 0.0
      %364 = vst.msk [vmem:[#allocation2 + $0x270] sm:$0xff] %vm284, 0.0
      %365 = vst.msk [vmem:[#allocation2 + $0x278] sm:$0xff] %vm284, 0.0
      %366 = vst.msk [vmem:[#allocation2 + $0x280] sm:$0xff] %vm284, 0.0
      %367 = vst.msk [vmem:[#allocation2 + $0x288] sm:$0xff] %vm284, 0.0
      %368 = vst.msk [vmem:[#allocation2 + $0x290] sm:$0xff] %vm284, 0.0
      %369 = vst.msk [vmem:[#allocation2 + $0x298] sm:$0xff] %vm284, 0.0
      %370 = vst.msk [vmem:[#allocation2 + $0x2a0] sm:$0xff] %vm284, 0.0
      %371 = vst.msk [vmem:[#allocation2 + $0x2a8] sm:$0xff] %vm284, 0.0
      %372 = vst.msk [vmem:[#allocation2 + $0x2b0] sm:$0xff] %vm284, 0.0
      %373 = vst.msk [vmem:[#allocation2 + $0x2b8] sm:$0xff] %vm284, 0.0
      %374 = vst.msk [vmem:[#allocation2 + $0x2c0] sm:$0xff] %vm284, 0.0
      %375 = vst.msk [vmem:[#allocation2 + $0x2c8] sm:$0x1] %vm302, 0.0
      %376 = vst.msk [vmem:[#allocation2 + $0x2d0] sm:$0xff] %vm284, 0.0
      %377 = vst.msk [vmem:[#allocation2 + $0x2d8] sm:$0xff] %vm284, 0.0
      %378 = vst.msk [vmem:[#allocation2 + $0x2e0] sm:$0xff] %vm284, 0.0
      %379 = vst.msk [vmem:[#allocation2 + $0x2e8] sm:$0xff] %vm284, 0.0
      %380 = vst.msk [vmem:[#allocation2 + $0x2f0] sm:$0xff] %vm284, 0.0
      %381 = vst.msk [vmem:[#allocation2 + $0x2f8] sm:$0xff] %vm284, 0.0
      %382 = vst.msk [vmem:[#allocation2 + $0x300] sm:$0xff] %vm284, 0.0
      %383 = vst.msk [vmem:[#allocation2 + $0x308] sm:$0xff] %vm284, 0.0
      %384 = vst.msk [vmem:[#allocation2 + $0x310] sm:$0xff] %vm284, 0.0
      %385 = vst.msk [vmem:[#allocation2 + $0x318] sm:$0xff] %vm284, 0.0
      %386 = vst.msk [vmem:[#allocation2 + $0x320] sm:$0xff] %vm284, 0.0
      %387 = vst.msk [vmem:[#allocation2 + $0x328] sm:$0xff] %vm284, 0.0
      %388 = vst.msk [vmem:[#allocation2 + $0x330] sm:$0xff] %vm284, 0.0
      %389 = vst.msk [vmem:[#allocation2 + $0x338] sm:$0xff] %vm284, 0.0
      %390 = vst.msk [vmem:[#allocation2 + $0x340] sm:$0xff] %vm284, 0.0
      %391 = vst.msk [vmem:[#allocation2 + $0x348] sm:$0xff] %vm284, 0.0
      %392 = vst.msk [vmem:[#allocation2 + $0x350] sm:$0xff] %vm284, 0.0
      %393 = vst.msk [vmem:[#allocation2 + $0x358] sm:$0x1] %vm302, 0.0
      %394 = vst.msk [vmem:[#allocation2 + $0x360] sm:$0xff] %vm284, 0.0
      %395 = vst.msk [vmem:[#allocation2 + $0x368] sm:$0xff] %vm284, 0.0
      %396 = vst.msk [vmem:[#allocation2 + $0x370] sm:$0xff] %vm284, 0.0
      %397 = vst.msk [vmem:[#allocation2 + $0x378] sm:$0xff] %vm284, 0.0
      %398 = vst.msk [vmem:[#allocation2 + $0x380] sm:$0xff] %vm284, 0.0
      %399 = vst.msk [vmem:[#allocation2 + $0x388] sm:$0xff] %vm284, 0.0
      %400 = vst.msk [vmem:[#allocation2 + $0x390] sm:$0xff] %vm284, 0.0
      %401 = vst.msk [vmem:[#allocation2 + $0x398] sm:$0xff] %vm284, 0.0
      %402 = vst.msk [vmem:[#allocation2 + $0x3a0] sm:$0xff] %vm284, 0.0
      %403 = vst.msk [vmem:[#allocation2 + $0x3a8] sm:$0xff] %vm284, 0.0
      %404 = vst.msk [vmem:[#allocation2 + $0x3b0] sm:$0xff] %vm284, 0.0
      %405 = vst.msk [vmem:[#allocation2 + $0x3b8] sm:$0xff] %vm284, 0.0
      %406 = vst.msk [vmem:[#allocation2 + $0x3c0] sm:$0xff] %vm284, 0.0
      %407 = vst.msk [vmem:[#allocation2 + $0x3c8] sm:$0xff] %vm284, 0.0
      %408 = vst.msk [vmem:[#allocation2 + $0x3d0] sm:$0xff] %vm284, 0.0
      %409 = vst.msk [vmem:[#allocation2 + $0x3d8] sm:$0xff] %vm284, 0.0
      %410 = vst.msk [vmem:[#allocation2 + $0x3e0] sm:$0xff] %vm284, 0.0
      %411 = vst.msk [vmem:[#allocation2 + $0x3e8] sm:$0x1] %vm302, 0.0
      %412 = vst.msk [vmem:[#allocation2 + $0x3f0] sm:$0xff] %vm284, 0.0
      %413 = vst.msk [vmem:[#allocation2 + $0x3f8] sm:$0xff] %vm284, 0.0
      %414 = vst.msk [vmem:[#allocation2 + $0x400] sm:$0xff] %vm284, 0.0
      %415 = vst.msk [vmem:[#allocation2 + $0x408] sm:$0xff] %vm284, 0.0
      %416 = vst.msk [vmem:[#allocation2 + $0x410] sm:$0xff] %vm284, 0.0
      %417 = vst.msk [vmem:[#allocation2 + $0x418] sm:$0xff] %vm284, 0.0
      %418 = vst.msk [vmem:[#allocation2 + $0x420] sm:$0xff] %vm284, 0.0
      %419 = vst.msk [vmem:[#allocation2 + $0x428] sm:$0xff] %vm284, 0.0
      %420 = vst.msk [vmem:[#allocation2 + $0x430] sm:$0xff] %vm284, 0.0
      %421 = vst.msk [vmem:[#allocation2 + $0x438] sm:$0xff] %vm284, 0.0
      %422 = vst.msk [vmem:[#allocation2 + $0x440] sm:$0xff] %vm284, 0.0
      %423 = vst.msk [vmem:[#allocation2 + $0x448] sm:$0xff] %vm284, 0.0
      %424 = vst.msk [vmem:[#allocation2 + $0x450] sm:$0xff] %vm284, 0.0
      %425 = vst.msk [vmem:[#allocation2 + $0x458] sm:$0xff] %vm284, 0.0
      %426 = vst.msk [vmem:[#allocation2 + $0x460] sm:$0xff] %vm284, 0.0
      %427 = vst.msk [vmem:[#allocation2 + $0x468] sm:$0xff] %vm284, 0.0
      %428 = vst.msk [vmem:[#allocation2 + $0x470] sm:$0xff] %vm284, 0.0
      %429 = vst.msk [vmem:[#allocation2 + $0x478] sm:$0x1] %vm302, 0.0
      %430 = vst.msk [vmem:[#allocation2 + $0x480] sm:$0xff] %vm284, 0.0
      %431 = vst.msk [vmem:[#allocation2 + $0x488] sm:$0xff] %vm284, 0.0
      %432 = vst.msk [vmem:[#allocation2 + $0x490] sm:$0xff] %vm284, 0.0
      %433 = vst.msk [vmem:[#allocation2 + $0x498] sm:$0xff] %vm284, 0.0
      %434 = vst.msk [vmem:[#allocation2 + $0x4a0] sm:$0xff] %vm284, 0.0
      %435 = vst.msk [vmem:[#allocation2 + $0x4a8] sm:$0xff] %vm284, 0.0
      %436 = vst.msk [vmem:[#allocation2 + $0x4b0] sm:$0xff] %vm284, 0.0
      %437 = vst.msk [vmem:[#allocation2 + $0x4b8] sm:$0xff] %vm284, 0.0
      %438 = vst.msk [vmem:[#allocation2 + $0x4c0] sm:$0xff] %vm284, 0.0
      %439 = vst.msk [vmem:[#allocation2 + $0x4c8] sm:$0xff] %vm284, 0.0
      %440 = vst.msk [vmem:[#allocation2 + $0x4d0] sm:$0xff] %vm284, 0.0
      %441 = vst.msk [vmem:[#allocation2 + $0x4d8] sm:$0xff] %vm284, 0.0
      %442 = vst.msk [vmem:[#allocation2 + $0x4e0] sm:$0xff] %vm284, 0.0
      %443 = vst.msk [vmem:[#allocation2 + $0x4e8] sm:$0xff] %vm284, 0.0
      %444 = vst.msk [vmem:[#allocation2 + $0x4f0] sm:$0xff] %vm284, 0.0
      %445 = vst.msk [vmem:[#allocation2 + $0x4f8] sm:$0xff] %vm284, 0.0
      %446 = vst.msk [vmem:[#allocation2 + $0x500] sm:$0xff] %vm284, 0.0
      %447 = vst.msk [vmem:[#allocation2 + $0x508] sm:$0x1] %vm302, 0.0
      %448 = vst.msk [vmem:[#allocation2 + $0x510] sm:$0xff] %vm284, 0.0
      %449 = vst.msk [vmem:[#allocation2 + $0x518] sm:$0xff] %vm284, 0.0
      %450 = vst.msk [vmem:[#allocation2 + $0x520] sm:$0xff] %vm284, 0.0
      %451 = vst.msk [vmem:[#allocation2 + $0x528] sm:$0xff] %vm284, 0.0
      %452 = vst.msk [vmem:[#allocation2 + $0x530] sm:$0xff] %vm284, 0.0
      %453 = vst.msk [vmem:[#allocation2 + $0x538] sm:$0xff] %vm284, 0.0
      %454 = vst.msk [vmem:[#allocation2 + $0x540] sm:$0xff] %vm284, 0.0
      %455 = vst.msk [vmem:[#allocation2 + $0x548] sm:$0xff] %vm284, 0.0
      %456 = vst.msk [vmem:[#allocation2 + $0x550] sm:$0xff] %vm284, 0.0
      %457 = vst.msk [vmem:[#allocation2 + $0x558] sm:$0xff] %vm284, 0.0
      %458 = vst.msk [vmem:[#allocation2 + $0x560] sm:$0xff] %vm284, 0.0
      %459 = vst.msk [vmem:[#allocation2 + $0x568] sm:$0xff] %vm284, 0.0
      %460 = vst.msk [vmem:[#allocation2 + $0x570] sm:$0xff] %vm284, 0.0
      %461 = vst.msk [vmem:[#allocation2 + $0x578] sm:$0xff] %vm284, 0.0
      %462 = vst.msk [vmem:[#allocation2 + $0x580] sm:$0xff] %vm284, 0.0
      %463 = vst.msk [vmem:[#allocation2 + $0x588] sm:$0xff] %vm284, 0.0
      %464 = vst.msk [vmem:[#allocation2 + $0x590] sm:$0xff] %vm284, 0.0
      %465 = vst.msk [vmem:[#allocation2 + $0x598] sm:$0x1] %vm302, 0.0
      %466 = vst.msk [vmem:[#allocation2 + $0x5a0] sm:$0xff] %vm284, 0.0
      %467 = vst.msk [vmem:[#allocation2 + $0x5a8] sm:$0xff] %vm284, 0.0
      %468 = vst.msk [vmem:[#allocation2 + $0x5b0] sm:$0xff] %vm284, 0.0
      %469 = vst.msk [vmem:[#allocation2 + $0x5b8] sm:$0xff] %vm284, 0.0
      %470 = vst.msk [vmem:[#allocation2 + $0x5c0] sm:$0xff] %vm284, 0.0
      %471 = vst.msk [vmem:[#allocation2 + $0x5c8] sm:$0xff] %vm284, 0.0
      %472 = vst.msk [vmem:[#allocation2 + $0x5d0] sm:$0xff] %vm284, 0.0
      %473 = vst.msk [vmem:[#allocation2 + $0x5d8] sm:$0xff] %vm284, 0.0
      %474 = vst.msk [vmem:[#allocation2 + $0x5e0] sm:$0xff] %vm284, 0.0
      %475 = vst.msk [vmem:[#allocation2 + $0x5e8] sm:$0xff] %vm284, 0.0
      %476 = vst.msk [vmem:[#allocation2 + $0x5f0] sm:$0xff] %vm284, 0.0
      %477 = vst.msk [vmem:[#allocation2 + $0x5f8] sm:$0xff] %vm284, 0.0
      %478 = vst.msk [vmem:[#allocation2 + $0x600] sm:$0xff] %vm284, 0.0
      %479 = vst.msk [vmem:[#allocation2 + $0x608] sm:$0xff] %vm284, 0.0
      %480 = vst.msk [vmem:[#allocation2 + $0x610] sm:$0xff] %vm284, 0.0
      %481 = vst.msk [vmem:[#allocation2 + $0x618] sm:$0xff] %vm284, 0.0
      %482 = vst.msk [vmem:[#allocation2 + $0x620] sm:$0xff] %vm284, 0.0
      %483 = vst.msk [vmem:[#allocation2 + $0x628] sm:$0x1] %vm302, 0.0
      %484 = vst.msk [vmem:[#allocation2 + $0x630] sm:$0xff] %vm284, 0.0
      %485 = vst.msk [vmem:[#allocation2 + $0x638] sm:$0xff] %vm284, 0.0
      %486 = vst.msk [vmem:[#allocation2 + $0x640] sm:$0xff] %vm284, 0.0
      %487 = vst.msk [vmem:[#allocation2 + $0x648] sm:$0xff] %vm284, 0.0
      %488 = vst.msk [vmem:[#allocation2 + $0x650] sm:$0xff] %vm284, 0.0
      %489 = vst.msk [vmem:[#allocation2 + $0x658] sm:$0xff] %vm284, 0.0
      %490 = vst.msk [vmem:[#allocation2 + $0x660] sm:$0xff] %vm284, 0.0
      %491 = vst.msk [vmem:[#allocation2 + $0x668] sm:$0xff] %vm284, 0.0
      %492 = vst.msk [vmem:[#allocation2 + $0x670] sm:$0xff] %vm284, 0.0
      %493 = vst.msk [vmem:[#allocation2 + $0x678] sm:$0xff] %vm284, 0.0
      %494 = vst.msk [vmem:[#allocation2 + $0x680] sm:$0xff] %vm284, 0.0
      %495 = vst.msk [vmem:[#allocation2 + $0x688] sm:$0xff] %vm284, 0.0
      %496 = vst.msk [vmem:[#allocation2 + $0x690] sm:$0xff] %vm284, 0.0
      %497 = vst.msk [vmem:[#allocation2 + $0x698] sm:$0xff] %vm284, 0.0
      %498 = vst.msk [vmem:[#allocation2 + $0x6a0] sm:$0xff] %vm284, 0.0
      %499 = vst.msk [vmem:[#allocation2 + $0x6a8] sm:$0xff] %vm284, 0.0
      %500 = vst.msk [vmem:[#allocation2 + $0x6b0] sm:$0xff] %vm284, 0.0
      %501 = vst.msk [vmem:[#allocation2 + $0x6b8] sm:$0x1] %vm302, 0.0
      %502 = vst.msk [vmem:[#allocation2 + $0x6c0] sm:$0xff] %vm284, 0.0
      %503 = vst.msk [vmem:[#allocation2 + $0x6c8] sm:$0xff] %vm284, 0.0
      %504 = vst.msk [vmem:[#allocation2 + $0x6d0] sm:$0xff] %vm284, 0.0
      %505 = vst.msk [vmem:[#allocation2 + $0x6d8] sm:$0xff] %vm284, 0.0
      %506 = vst.msk [vmem:[#allocation2 + $0x6e0] sm:$0xff] %vm284, 0.0
      %507 = vst.msk [vmem:[#allocation2 + $0x6e8] sm:$0xff] %vm284, 0.0
      %508 = vst.msk [vmem:[#allocation2 + $0x6f0] sm:$0xff] %vm284, 0.0
      %509 = vst.msk [vmem:[#allocation2 + $0x6f8] sm:$0xff] %vm284, 0.0
      %510 = vst.msk [vmem:[#allocation2 + $0x700] sm:$0xff] %vm284, 0.0
      %511 = vst.msk [vmem:[#allocation2 + $0x708] sm:$0xff] %vm284, 0.0
      %512 = vst.msk [vmem:[#allocation2 + $0x710] sm:$0xff] %vm284, 0.0
      %513 = vst.msk [vmem:[#allocation2 + $0x718] sm:$0xff] %vm284, 0.0
      %514 = vst.msk [vmem:[#allocation2 + $0x720] sm:$0xff] %vm284, 0.0
      %515 = vst.msk [vmem:[#allocation2 + $0x728] sm:$0xff] %vm284, 0.0
      %516 = vst.msk [vmem:[#allocation2 + $0x730] sm:$0xff] %vm284, 0.0
      %517 = vst.msk [vmem:[#allocation2 + $0x738] sm:$0xff] %vm284, 0.0
      %518 = vst.msk [vmem:[#allocation2 + $0x740] sm:$0xff] %vm284, 0.0
      %519 = vst.msk [vmem:[#allocation2 + $0x748] sm:$0x1] %vm302, 0.0
      %520 = vst.msk [vmem:[#allocation2 + $0x750] sm:$0xff] %vm284, 0.0
      %521 = vst.msk [vmem:[#allocation2 + $0x758] sm:$0xff] %vm284, 0.0
      %522 = vst.msk [vmem:[#allocation2 + $0x760] sm:$0xff] %vm284, 0.0
      %523 = vst.msk [vmem:[#allocation2 + $0x768] sm:$0xff] %vm284, 0.0
      %524 = vst.msk [vmem:[#allocation2 + $0x770] sm:$0xff] %vm284, 0.0
      %525 = vst.msk [vmem:[#allocation2 + $0x778] sm:$0xff] %vm284, 0.0
      %526 = vst.msk [vmem:[#allocation2 + $0x780] sm:$0xff] %vm284, 0.0
      %527 = vst.msk [vmem:[#allocation2 + $0x788] sm:$0xff] %vm284, 0.0
      %528 = vst.msk [vmem:[#allocation2 + $0x790] sm:$0xff] %vm284, 0.0
      %529 = vst.msk [vmem:[#allocation2 + $0x798] sm:$0xff] %vm284, 0.0
      %530 = vst.msk [vmem:[#allocation2 + $0x7a0] sm:$0xff] %vm284, 0.0
      %531 = vst.msk [vmem:[#allocation2 + $0x7a8] sm:$0xff] %vm284, 0.0
      %532 = vst.msk [vmem:[#allocation2 + $0x7b0] sm:$0xff] %vm284, 0.0
      %533 = vst.msk [vmem:[#allocation2 + $0x7b8] sm:$0xff] %vm284, 0.0
      %534 = vst.msk [vmem:[#allocation2 + $0x7c0] sm:$0xff] %vm284, 0.0
      %535 = vst.msk [vmem:[#allocation2 + $0x7c8] sm:$0xff] %vm284, 0.0
      %536 = vst.msk [vmem:[#allocation2 + $0x7d0] sm:$0xff] %vm284, 0.0
      %537 = vst.msk [vmem:[#allocation2 + $0x7d8] sm:$0x1] %vm302, 0.0
      %538 = vst.msk [vmem:[#allocation2 + $0x7e0] sm:$0xff] %vm284, 0.0
      %539 = vst.msk [vmem:[#allocation2 + $0x7e8] sm:$0xff] %vm284, 0.0
      %540 = vst.msk [vmem:[#allocation2 + $0x7f0] sm:$0xff] %vm284, 0.0
      %541 = vst.msk [vmem:[#allocation2 + $0x7f8] sm:$0xff] %vm284, 0.0
      %542 = vst.msk [vmem:[#allocation2 + $0x800] sm:$0xff] %vm284, 0.0
      %543 = vst.msk [vmem:[#allocation2 + $0x808] sm:$0xff] %vm284, 0.0
      %544 = vst.msk [vmem:[#allocation2 + $0x810] sm:$0xff] %vm284, 0.0
      %545 = vst.msk [vmem:[#allocation2 + $0x818] sm:$0xff] %vm284, 0.0
      %546 = vst.msk [vmem:[#allocation2 + $0x820] sm:$0xff] %vm284, 0.0
      %547 = vst.msk [vmem:[#allocation2 + $0x828] sm:$0xff] %vm284, 0.0
      %548 = vst.msk [vmem:[#allocation2 + $0x830] sm:$0xff] %vm284, 0.0
      %549 = vst.msk [vmem:[#allocation2 + $0x838] sm:$0xff] %vm284, 0.0
      %550 = vst.msk [vmem:[#allocation2 + $0x840] sm:$0xff] %vm284, 0.0
      %551 = vst.msk [vmem:[#allocation2 + $0x848] sm:$0xff] %vm284, 0.0
      %552 = vst.msk [vmem:[#allocation2 + $0x850] sm:$0xff] %vm284, 0.0
      %553 = vst.msk [vmem:[#allocation2 + $0x858] sm:$0xff] %vm284, 0.0
      %554 = vst.msk [vmem:[#allocation2 + $0x860] sm:$0xff] %vm284, 0.0
      %555 = vst.msk [vmem:[#allocation2 + $0x868] sm:$0x1] %vm302, 0.0
      %556 = vst.msk [vmem:[#allocation2 + $0x870] sm:$0xff] %vm284, 0.0
      %557 = vst.msk [vmem:[#allocation2 + $0x878] sm:$0xff] %vm284, 0.0
      %558 = vst.msk [vmem:[#allocation2 + $0x880] sm:$0xff] %vm284, 0.0
      %559 = vst.msk [vmem:[#allocation2 + $0x888] sm:$0xff] %vm284, 0.0
      %560 = vst.msk [vmem:[#allocation2 + $0x890] sm:$0xff] %vm284, 0.0
      %561 = vst.msk [vmem:[#allocation2 + $0x898] sm:$0xff] %vm284, 0.0
      %562 = vst.msk [vmem:[#allocation2 + $0x8a0] sm:$0xff] %vm284, 0.0
      %563 = vst.msk [vmem:[#allocation2 + $0x8a8] sm:$0xff] %vm284, 0.0
      %564 = vst.msk [vmem:[#allocation2 + $0x8b0] sm:$0xff] %vm284, 0.0
      %565 = vst.msk [vmem:[#allocation2 + $0x8b8] sm:$0xff] %vm284, 0.0
      %566 = vst.msk [vmem:[#allocation2 + $0x8c0] sm:$0xff] %vm284, 0.0
      %567 = vst.msk [vmem:[#allocation2 + $0x8c8] sm:$0xff] %vm284, 0.0
      %568 = vst.msk [vmem:[#allocation2 + $0x8d0] sm:$0xff] %vm284, 0.0
      %569 = vst.msk [vmem:[#allocation2 + $0x8d8] sm:$0xff] %vm284, 0.0
      %570 = vst.msk [vmem:[#allocation2 + $0x8e0] sm:$0xff] %vm284, 0.0
      %571 = vst.msk [vmem:[#allocation2 + $0x8e8] sm:$0xff] %vm284, 0.0
      %572 = vst.msk [vmem:[#allocation2 + $0x8f0] sm:$0xff] %vm284, 0.0
      %573 = vst.msk [vmem:[#allocation2 + $0x8f8] sm:$0x1] %vm302, 0.0
      %574 = vst.msk [vmem:[#allocation2 + $0x900] sm:$0xff] %vm284, 0.0
      %575 = vst.msk [vmem:[#allocation2 + $0x908] sm:$0xff] %vm284, 0.0
      %576 = vst.msk [vmem:[#allocation2 + $0x910] sm:$0xff] %vm284, 0.0
      %577 = vst.msk [vmem:[#allocation2 + $0x918] sm:$0xff] %vm284, 0.0
      %578 = vst.msk [vmem:[#allocation2 + $0x920] sm:$0xff] %vm284, 0.0
      %579 = vst.msk [vmem:[#allocation2 + $0x928] sm:$0xff] %vm284, 0.0
      %580 = vst.msk [vmem:[#allocation2 + $0x930] sm:$0xff] %vm284, 0.0
      %581 = vst.msk [vmem:[#allocation2 + $0x938] sm:$0xff] %vm284, 0.0
      %582 = vst.msk [vmem:[#allocation2 + $0x940] sm:$0xff] %vm284, 0.0
      %583 = vst.msk [vmem:[#allocation2 + $0x948] sm:$0xff] %vm284, 0.0
      %584 = vst.msk [vmem:[#allocation2 + $0x950] sm:$0xff] %vm284, 0.0
      %585 = vst.msk [vmem:[#allocation2 + $0x958] sm:$0xff] %vm284, 0.0
      %586 = vst.msk [vmem:[#allocation2 + $0x960] sm:$0xff] %vm284, 0.0
      %587 = vst.msk [vmem:[#allocation2 + $0x968] sm:$0xff] %vm284, 0.0
      %588 = vst.msk [vmem:[#allocation2 + $0x970] sm:$0xff] %vm284, 0.0
      %589 = vst.msk [vmem:[#allocation2 + $0x978] sm:$0xff] %vm284, 0.0
      %590 = vst.msk [vmem:[#allocation2 + $0x980] sm:$0xff] %vm284, 0.0
      %591 = vst.msk [vmem:[#allocation2 + $0x988] sm:$0x1] %vm302, 0.0
      %592 = vst.msk [vmem:[#allocation2 + $0x990] sm:$0xff] %vm284, 0.0
      %593 = vst.msk [vmem:[#allocation2 + $0x998] sm:$0xff] %vm284, 0.0
      %594 = vst.msk [vmem:[#allocation2 + $0x9a0] sm:$0xff] %vm284, 0.0
      %595 = vst.msk [vmem:[#allocation2 + $0x9a8] sm:$0xff] %vm284, 0.0
      %596 = vst.msk [vmem:[#allocation2 + $0x9b0] sm:$0xff] %vm284, 0.0
      %597 = vst.msk [vmem:[#allocation2 + $0x9b8] sm:$0xff] %vm284, 0.0
      %598 = vst.msk [vmem:[#allocation2 + $0x9c0] sm:$0xff] %vm284, 0.0
      %599 = vst.msk [vmem:[#allocation2 + $0x9c8] sm:$0xff] %vm284, 0.0
      %600 = vst.msk [vmem:[#allocation2 + $0x9d0] sm:$0xff] %vm284, 0.0
      %601 = vst.msk [vmem:[#allocation2 + $0x9d8] sm:$0xff] %vm284, 0.0
      %602 = vst.msk [vmem:[#allocation2 + $0x9e0] sm:$0xff] %vm284, 0.0
      %603 = vst.msk [vmem:[#allocation2 + $0x9e8] sm:$0xff] %vm284, 0.0
      %604 = vst.msk [vmem:[#allocation2 + $0x9f0] sm:$0xff] %vm284, 0.0
      %605 = vst.msk [vmem:[#allocation2 + $0x9f8] sm:$0xff] %vm284, 0.0
      %606 = vst.msk [vmem:[#allocation2 + $0xa00] sm:$0xff] %vm284, 0.0
      %607 = vst.msk [vmem:[#allocation2 + $0xa08] sm:$0xff] %vm284, 0.0
      %608 = vst.msk [vmem:[#allocation2 + $0xa10] sm:$0xff] %vm284, 0.0
      %609 = vst.msk [vmem:[#allocation2 + $0xa18] sm:$0x1] %vm302, 0.0
      %vm610 = vcmask 261120
      %611 = vst.msk [vmem:[#allocation3] sm:$0xff] %vm610, 0.0
      %612 = vst.msk [vmem:[#allocation3 + $0x8] sm:$0xff] %vm610, 0.0
      %613 = vst.msk [vmem:[#allocation3 + $0x10] sm:$0xff] %vm610, 0.0
      %614 = vst.msk [vmem:[#allocation3 + $0x18] sm:$0xff] %vm610, 0.0
      %615 = vst.msk [vmem:[#allocation3 + $0x20] sm:$0xff] %vm610, 0.0
      %616 = vst.msk [vmem:[#allocation3 + $0x28] sm:$0xff] %vm610, 0.0
      %617 = vst.msk [vmem:[#allocation3 + $0x30] sm:$0xff] %vm610, 0.0
      %618 = vst.msk [vmem:[#allocation3 + $0x38] sm:$0xff] %vm610, 0.0
      %619 = vst.msk [vmem:[#allocation3 + $0x40] sm:$0xff] %vm610, 0.0
      %vm620 = vcmask 253952
      %621 = vst.msk [vmem:[#allocation3 + $0x48] sm:$0x1] %vm620, 0.0
      %622 = vst.msk [vmem:[#allocation3 + $0x50] sm:$0xff] %vm610, 0.0
      %623 = vst.msk [vmem:[#allocation3 + $0x58] sm:$0xff] %vm610, 0.0
      %624 = vst.msk [vmem:[#allocation3 + $0x60] sm:$0xff] %vm610, 0.0
      %625 = vst.msk [vmem:[#allocation3 + $0x68] sm:$0xff] %vm610, 0.0
      %626 = vst.msk [vmem:[#allocation3 + $0x70] sm:$0xff] %vm610, 0.0
      %627 = vst.msk [vmem:[#allocation3 + $0x78] sm:$0xff] %vm610, 0.0
      %628 = vst.msk [vmem:[#allocation3 + $0x80] sm:$0xff] %vm610, 0.0
      %629 = vst.msk [vmem:[#allocation3 + $0x88] sm:$0xff] %vm610, 0.0
      %630 = vst.msk [vmem:[#allocation3 + $0x90] sm:$0xff] %vm610, 0.0
      %631 = vst.msk [vmem:[#allocation3 + $0x98] sm:$0x1] %vm620, 0.0
      %632 = vst.msk [vmem:[#allocation3 + $0xa0] sm:$0xff] %vm610, 0.0
      %633 = vst.msk [vmem:[#allocation3 + $0xa8] sm:$0xff] %vm610, 0.0
      %634 = vst.msk [vmem:[#allocation3 + $0xb0] sm:$0xff] %vm610, 0.0
      %635 = vst.msk [vmem:[#allocation3 + $0xb8] sm:$0xff] %vm610, 0.0
      %636 = vst.msk [vmem:[#allocation3 + $0xc0] sm:$0xff] %vm610, 0.0
      %637 = vst.msk [vmem:[#allocation3 + $0xc8] sm:$0xff] %vm610, 0.0
      %638 = vst.msk [vmem:[#allocation3 + $0xd0] sm:$0xff] %vm610, 0.0
      %639 = vst.msk [vmem:[#allocation3 + $0xd8] sm:$0xff] %vm610, 0.0
      %640 = vst.msk [vmem:[#allocation3 + $0xe0] sm:$0xff] %vm610, 0.0
      %641 = vst.msk [vmem:[#allocation3 + $0xe8] sm:$0x1] %vm620, 0.0
      %642 = vst.msk [vmem:[#allocation3 + $0xf0] sm:$0xff] %vm610, 0.0
      %643 = vst.msk [vmem:[#allocation3 + $0xf8] sm:$0xff] %vm610, 0.0
      %644 = vst.msk [vmem:[#allocation3 + $0x100] sm:$0xff] %vm610, 0.0
      %645 = vst.msk [vmem:[#allocation3 + $0x108] sm:$0xff] %vm610, 0.0
      %646 = vst.msk [vmem:[#allocation3 + $0x110] sm:$0xff] %vm610, 0.0
      %647 = vst.msk [vmem:[#allocation3 + $0x118] sm:$0xff] %vm610, 0.0
      %648 = vst.msk [vmem:[#allocation3 + $0x120] sm:$0xff] %vm610, 0.0
      %649 = vst.msk [vmem:[#allocation3 + $0x128] sm:$0xff] %vm610, 0.0
      %650 = vst.msk [vmem:[#allocation3 + $0x130] sm:$0xff] %vm610, 0.0
      %651 = vst.msk [vmem:[#allocation3 + $0x138] sm:$0x1] %vm620, 0.0
      %652 = vst.msk [vmem:[#allocation3 + $0x140] sm:$0xff] %vm610, 0.0
      %653 = vst.msk [vmem:[#allocation3 + $0x148] sm:$0xff] %vm610, 0.0
      %654 = vst.msk [vmem:[#allocation3 + $0x150] sm:$0xff] %vm610, 0.0
      %655 = vst.msk [vmem:[#allocation3 + $0x158] sm:$0xff] %vm610, 0.0
      %656 = vst.msk [vmem:[#allocation3 + $0x160] sm:$0xff] %vm610, 0.0
      %657 = vst.msk [vmem:[#allocation3 + $0x168] sm:$0xff] %vm610, 0.0
      %658 = vst.msk [vmem:[#allocation3 + $0x170] sm:$0xff] %vm610, 0.0
      %659 = vst.msk [vmem:[#allocation3 + $0x178] sm:$0xff] %vm610, 0.0
      %660 = vst.msk [vmem:[#allocation3 + $0x180] sm:$0xff] %vm610, 0.0
      %661 = vst.msk [vmem:[#allocation3 + $0x188] sm:$0x1] %vm620, 0.0
      %662 = vst.msk [vmem:[#allocation3 + $0x190] sm:$0xff] %vm610, 0.0
      %663 = vst.msk [vmem:[#allocation3 + $0x198] sm:$0xff] %vm610, 0.0
      %664 = vst.msk [vmem:[#allocation3 + $0x1a0] sm:$0xff] %vm610, 0.0
      %665 = vst.msk [vmem:[#allocation3 + $0x1a8] sm:$0xff] %vm610, 0.0
      %666 = vst.msk [vmem:[#allocation3 + $0x1b0] sm:$0xff] %vm610, 0.0
      %667 = vst.msk [vmem:[#allocation3 + $0x1b8] sm:$0xff] %vm610, 0.0
      %668 = vst.msk [vmem:[#allocation3 + $0x1c0] sm:$0xff] %vm610, 0.0
      %669 = vst.msk [vmem:[#allocation3 + $0x1c8] sm:$0xff] %vm610, 0.0
      %670 = vst.msk [vmem:[#allocation3 + $0x1d0] sm:$0xff] %vm610, 0.0
      %671 = vst.msk [vmem:[#allocation3 + $0x1d8] sm:$0x1] %vm620, 0.0
      %672 = vst.msk [vmem:[#allocation3 + $0x1e0] sm:$0xff] %vm610, 0.0
      %673 = vst.msk [vmem:[#allocation3 + $0x1e8] sm:$0xff] %vm610, 0.0
      %674 = vst.msk [vmem:[#allocation3 + $0x1f0] sm:$0xff] %vm610, 0.0
      %675 = vst.msk [vmem:[#allocation3 + $0x1f8] sm:$0xff] %vm610, 0.0
      %676 = vst.msk [vmem:[#allocation3 + $0x200] sm:$0xff] %vm610, 0.0
      %677 = vst.msk [vmem:[#allocation3 + $0x208] sm:$0xff] %vm610, 0.0
      %678 = vst.msk [vmem:[#allocation3 + $0x210] sm:$0xff] %vm610, 0.0
      %679 = vst.msk [vmem:[#allocation3 + $0x218] sm:$0xff] %vm610, 0.0
      %680 = vst.msk [vmem:[#allocation3 + $0x220] sm:$0xff] %vm610, 0.0
      %681 = vst.msk [vmem:[#allocation3 + $0x228] sm:$0x1] %vm620, 0.0
      %682 = vst.msk [vmem:[#allocation3 + $0x230] sm:$0xff] %vm610, 0.0
      %683 = vst.msk [vmem:[#allocation3 + $0x238] sm:$0xff] %vm610, 0.0
      %684 = vst.msk [vmem:[#allocation3 + $0x240] sm:$0xff] %vm610, 0.0
      %685 = vst.msk [vmem:[#allocation3 + $0x248] sm:$0xff] %vm610, 0.0
      %686 = vst.msk [vmem:[#allocation3 + $0x250] sm:$0xff] %vm610, 0.0
      %687 = vst.msk [vmem:[#allocation3 + $0x258] sm:$0xff] %vm610, 0.0
      %688 = vst.msk [vmem:[#allocation3 + $0x260] sm:$0xff] %vm610, 0.0
      %689 = vst.msk [vmem:[#allocation3 + $0x268] sm:$0xff] %vm610, 0.0
      %690 = vst.msk [vmem:[#allocation3 + $0x270] sm:$0xff] %vm610, 0.0
      %691 = vst.msk [vmem:[#allocation3 + $0x278] sm:$0x1] %vm620, 0.0
      %692 = vst.msk [vmem:[#allocation3 + $0x280] sm:$0xff] %vm610, 0.0
      %693 = vst.msk [vmem:[#allocation3 + $0x288] sm:$0xff] %vm610, 0.0
      %694 = vst.msk [vmem:[#allocation3 + $0x290] sm:$0xff] %vm610, 0.0
      %695 = vst.msk [vmem:[#allocation3 + $0x298] sm:$0xff] %vm610, 0.0
      %696 = vst.msk [vmem:[#allocation3 + $0x2a0] sm:$0xff] %vm610, 0.0
      %697 = vst.msk [vmem:[#allocation3 + $0x2a8] sm:$0xff] %vm610, 0.0
      %698 = vst.msk [vmem:[#allocation3 + $0x2b0] sm:$0xff] %vm610, 0.0
      %699 = vst.msk [vmem:[#allocation3 + $0x2b8] sm:$0xff] %vm610, 0.0
      %700 = vst.msk [vmem:[#allocation3 + $0x2c0] sm:$0xff] %vm610, 0.0
      %701 = vst.msk [vmem:[#allocation3 + $0x2c8] sm:$0x1] %vm620, 0.0
      %702 = vst.msk [vmem:[#allocation3 + $0x2d0] sm:$0xff] %vm610, 0.0
      %703 = vst.msk [vmem:[#allocation3 + $0x2d8] sm:$0xff] %vm610, 0.0
      %704 = vst.msk [vmem:[#allocation3 + $0x2e0] sm:$0xff] %vm610, 0.0
      %705 = vst.msk [vmem:[#allocation3 + $0x2e8] sm:$0xff] %vm610, 0.0
      %706 = vst.msk [vmem:[#allocation3 + $0x2f0] sm:$0xff] %vm610, 0.0
      %707 = vst.msk [vmem:[#allocation3 + $0x2f8] sm:$0xff] %vm610, 0.0
      %708 = vst.msk [vmem:[#allocation3 + $0x300] sm:$0xff] %vm610, 0.0
      %709 = vst.msk [vmem:[#allocation3 + $0x308] sm:$0xff] %vm610, 0.0
      %710 = vst.msk [vmem:[#allocation3 + $0x310] sm:$0xff] %vm610, 0.0
      %711 = vst.msk [vmem:[#allocation3 + $0x318] sm:$0x1] %vm620, 0.0
      %v712 = vld [vmem:[%s273] sm:$0xff]
      %v713 = vld [vmem:[%s273 + $0x8] sm:$0xff]
      %v714 = vld [vmem:[%s273 + $0x10] sm:$0xff]
      %v715 = vld [vmem:[%s273 + $0x18] sm:$0xff]
      %v716 = vld [vmem:[%s273 + $0x20] sm:$0xff]
      %v717 = vld [vmem:[%s273 + $0x28] sm:$0xff]
      %v718 = vld [vmem:[%s273 + $0x30] sm:$0xff]
      %v719 = vld [vmem:[%s273 + $0x38] sm:$0xff]
      %v720 = vld [vmem:[%s273 + $0x40] sm:$0xff]
      %v721 = vld [vmem:[%s273 + $0x48] sm:$0xff]
      %v722 = vld [vmem:[%s273 + $0x50] sm:$0xff]
      %v723 = vld [vmem:[%s273 + $0x58] sm:$0xff]
      %v724 = vld [vmem:[%s273 + $0x60] sm:$0xff]
      %v725 = vld [vmem:[%s273 + $0x68] sm:$0xff]
      %v726 = vld [vmem:[%s273 + $0x70] sm:$0xff]
      %v727 = vld [vmem:[%s273 + $0x78] sm:$0xff]
      %s728 = scalar_lea.vmem [#allocation2], 144
      %729 = vst.msk [vmem:[%s728 + $0x8] sm:$0xff] %vm284, %v712
      %730 = vst.msk [vmem:[%s728 + $0x10] sm:$0xff] %vm284, %v713
      %731 = vst.msk [vmem:[%s728 + $0x18] sm:$0xff] %vm284, %v714
      %732 = vst.msk [vmem:[%s728 + $0x20] sm:$0xff] %vm284, %v715
      %733 = vst.msk [vmem:[%s728 + $0x28] sm:$0xff] %vm284, %v716
      %734 = vst.msk [vmem:[%s728 + $0x30] sm:$0xff] %vm284, %v717
      %735 = vst.msk [vmem:[%s728 + $0x38] sm:$0xff] %vm284, %v718
      %736 = vst.msk [vmem:[%s728 + $0x40] sm:$0xff] %vm284, %v719
      %737 = vst.msk [vmem:[%s728 + $0x48] sm:$0xff] %vm284, %v720
      %738 = vst.msk [vmem:[%s728 + $0x50] sm:$0xff] %vm284, %v721
      %739 = vst.msk [vmem:[%s728 + $0x58] sm:$0xff] %vm284, %v722
      %740 = vst.msk [vmem:[%s728 + $0x60] sm:$0xff] %vm284, %v723
      %741 = vst.msk [vmem:[%s728 + $0x68] sm:$0xff] %vm284, %v724
      %742 = vst.msk [vmem:[%s728 + $0x70] sm:$0xff] %vm284, %v725
      %743 = vst.msk [vmem:[%s728 + $0x78] sm:$0xff] %vm284, %v726
      %744 = vst.msk [vmem:[%s728 + $0x80] sm:$0xff] %vm284, %v727
      %s745 = scalar_lea.vmem %s273, 128
      %v746 = vld [vmem:[%s745] sm:$0xff]
      %v747 = vld [vmem:[%s745 + $0x8] sm:$0xff]
      %v748 = vld [vmem:[%s745 + $0x10] sm:$0xff]
      %v749 = vld [vmem:[%s745 + $0x18] sm:$0xff]
      %v750 = vld [vmem:[%s745 + $0x20] sm:$0xff]
      %v751 = vld [vmem:[%s745 + $0x28] sm:$0xff]
      %v752 = vld [vmem:[%s745 + $0x30] sm:$0xff]
      %v753 = vld [vmem:[%s745 + $0x38] sm:$0xff]
      %v754 = vld [vmem:[%s745 + $0x40] sm:$0xff]
      %v755 = vld [vmem:[%s745 + $0x48] sm:$0xff]
      %v756 = vld [vmem:[%s745 + $0x50] sm:$0xff]
      %v757 = vld [vmem:[%s745 + $0x58] sm:$0xff]
      %v758 = vld [vmem:[%s745 + $0x60] sm:$0xff]
      %v759 = vld [vmem:[%s745 + $0x68] sm:$0xff]
      %v760 = vld [vmem:[%s745 + $0x70] sm:$0xff]
      %v761 = vld [vmem:[%s745 + $0x78] sm:$0xff]
      %s762 = scalar_lea.vmem [#allocation2], 288
      %763 = vst.msk [vmem:[%s762 + $0x8] sm:$0xff] %vm284, %v746
      %764 = vst.msk [vmem:[%s762 + $0x10] sm:$0xff] %vm284, %v747
      %765 = vst.msk [vmem:[%s762 + $0x18] sm:$0xff] %vm284, %v748
      %766 = vst.msk [vmem:[%s762 + $0x20] sm:$0xff] %vm284, %v749
      %767 = vst.msk [vmem:[%s762 + $0x28] sm:$0xff] %vm284, %v750
      %768 = vst.msk [vmem:[%s762 + $0x30] sm:$0xff] %vm284, %v751
      %769 = vst.msk [vmem:[%s762 + $0x38] sm:$0xff] %vm284, %v752
      %770 = vst.msk [vmem:[%s762 + $0x40] sm:$0xff] %vm284, %v753
      %771 = vst.msk [vmem:[%s762 + $0x48] sm:$0xff] %vm284, %v754
      %772 = vst.msk [vmem:[%s762 + $0x50] sm:$0xff] %vm284, %v755
      %773 = vst.msk [vmem:[%s762 + $0x58] sm:$0xff] %vm284, %v756
      %774 = vst.msk [vmem:[%s762 + $0x60] sm:$0xff] %vm284, %v757
      %775 = vst.msk [vmem:[%s762 + $0x68] sm:$0xff] %vm284, %v758
      %776 = vst.msk [vmem:[%s762 + $0x70] sm:$0xff] %vm284, %v759
      %777 = vst.msk [vmem:[%s762 + $0x78] sm:$0xff] %vm284, %v760
      %778 = vst.msk [vmem:[%s762 + $0x80] sm:$0xff] %vm284, %v761
      %s779 = scalar_lea.vmem %s273, 256
      %v780 = vld [vmem:[%s779] sm:$0xff]
      %v781 = vld [vmem:[%s779 + $0x8] sm:$0xff]
      %v782 = vld [vmem:[%s779 + $0x10] sm:$0xff]
      %v783 = vld [vmem:[%s779 + $0x18] sm:$0xff]
      %v784 = vld [vmem:[%s779 + $0x20] sm:$0xff]
      %v785 = vld [vmem:[%s779 + $0x28] sm:$0xff]
      %v786 = vld [vmem:[%s779 + $0x30] sm:$0xff]
      %v787 = vld [vmem:[%s779 + $0x38] sm:$0xff]
      %v788 = vld [vmem:[%s779 + $0x40] sm:$0xff]
      %v789 = vld [vmem:[%s779 + $0x48] sm:$0xff]
      %v790 = vld [vmem:[%s779 + $0x50] sm:$0xff]
      %v791 = vld [vmem:[%s779 + $0x58] sm:$0xff]
      %v792 = vld [vmem:[%s779 + $0x60] sm:$0xff]
      %v793 = vld [vmem:[%s779 + $0x68] sm:$0xff]
      %v794 = vld [vmem:[%s779 + $0x70] sm:$0xff]
      %v795 = vld [vmem:[%s779 + $0x78] sm:$0xff]
      %s796 = scalar_lea.vmem [#allocation2], 432
      %797 = vst.msk [vmem:[%s796 + $0x8] sm:$0xff] %vm284, %v780
      %798 = vst.msk [vmem:[%s796 + $0x10] sm:$0xff] %vm284, %v781
      %799 = vst.msk [vmem:[%s796 + $0x18] sm:$0xff] %vm284, %v782
      %800 = vst.msk [vmem:[%s796 + $0x20] sm:$0xff] %vm284, %v783
      %801 = vst.msk [vmem:[%s796 + $0x28] sm:$0xff] %vm284, %v784
      %802 = vst.msk [vmem:[%s796 + $0x30] sm:$0xff] %vm284, %v785
      %803 = vst.msk [vmem:[%s796 + $0x38] sm:$0xff] %vm284, %v786
      %804 = vst.msk [vmem:[%s796 + $0x40] sm:$0xff] %vm284, %v787
      %805 = vst.msk [vmem:[%s796 + $0x48] sm:$0xff] %vm284, %v788
      %806 = vst.msk [vmem:[%s796 + $0x50] sm:$0xff] %vm284, %v789
      %807 = vst.msk [vmem:[%s796 + $0x58] sm:$0xff] %vm284, %v790
      %808 = vst.msk [vmem:[%s796 + $0x60] sm:$0xff] %vm284, %v791
      %809 = vst.msk [vmem:[%s796 + $0x68] sm:$0xff] %vm284, %v792
      %810 = vst.msk [vmem:[%s796 + $0x70] sm:$0xff] %vm284, %v793
      %811 = vst.msk [vmem:[%s796 + $0x78] sm:$0xff] %vm284, %v794
      %812 = vst.msk [vmem:[%s796 + $0x80] sm:$0xff] %vm284, %v795
      %s813 = scalar_lea.vmem %s273, 384
      %v814 = vld [vmem:[%s813] sm:$0xff]
      %v815 = vld [vmem:[%s813 + $0x8] sm:$0xff]
      %v816 = vld [vmem:[%s813 + $0x10] sm:$0xff]
      %v817 = vld [vmem:[%s813 + $0x18] sm:$0xff]
      %v818 = vld [vmem:[%s813 + $0x20] sm:$0xff]
      %v819 = vld [vmem:[%s813 + $0x28] sm:$0xff]
      %v820 = vld [vmem:[%s813 + $0x30] sm:$0xff]
      %v821 = vld [vmem:[%s813 + $0x38] sm:$0xff]
      %v822 = vld [vmem:[%s813 + $0x40] sm:$0xff]
      %v823 = vld [vmem:[%s813 + $0x48] sm:$0xff]
      %v824 = vld [vmem:[%s813 + $0x50] sm:$0xff]
      %v825 = vld [vmem:[%s813 + $0x58] sm:$0xff]
      %v826 = vld [vmem:[%s813 + $0x60] sm:$0xff]
      %v827 = vld [vmem:[%s813 + $0x68] sm:$0xff]
      %v828 = vld [vmem:[%s813 + $0x70] sm:$0xff]
      %v829 = vld [vmem:[%s813 + $0x78] sm:$0xff]
      %s830 = scalar_lea.vmem [#allocation2], 576
      %831 = vst.msk [vmem:[%s830 + $0x8] sm:$0xff] %vm284, %v814
      %832 = vst.msk [vmem:[%s830 + $0x10] sm:$0xff] %vm284, %v815
      %833 = vst.msk [vmem:[%s830 + $0x18] sm:$0xff] %vm284, %v816
      %834 = vst.msk [vmem:[%s830 + $0x20] sm:$0xff] %vm284, %v817
      %835 = vst.msk [vmem:[%s830 + $0x28] sm:$0xff] %vm284, %v818
      %836 = vst.msk [vmem:[%s830 + $0x30] sm:$0xff] %vm284, %v819
      %837 = vst.msk [vmem:[%s830 + $0x38] sm:$0xff] %vm284, %v820
      %838 = vst.msk [vmem:[%s830 + $0x40] sm:$0xff] %vm284, %v821
      %839 = vst.msk [vmem:[%s830 + $0x48] sm:$0xff] %vm284, %v822
      %840 = vst.msk [vmem:[%s830 + $0x50] sm:$0xff] %vm284, %v823
      %841 = vst.msk [vmem:[%s830 + $0x58] sm:$0xff] %vm284, %v824
      %842 = vst.msk [vmem:[%s830 + $0x60] sm:$0xff] %vm284, %v825
      %843 = vst.msk [vmem:[%s830 + $0x68] sm:$0xff] %vm284, %v826
      %844 = vst.msk [vmem:[%s830 + $0x70] sm:$0xff] %vm284, %v827
      %845 = vst.msk [vmem:[%s830 + $0x78] sm:$0xff] %vm284, %v828
      %846 = vst.msk [vmem:[%s830 + $0x80] sm:$0xff] %vm284, %v829
      %s847 = scalar_lea.vmem %s273, 512
      %v848 = vld [vmem:[%s847] sm:$0xff]
      %v849 = vld [vmem:[%s847 + $0x8] sm:$0xff]
      %v850 = vld [vmem:[%s847 + $0x10] sm:$0xff]
      %v851 = vld [vmem:[%s847 + $0x18] sm:$0xff]
      %v852 = vld [vmem:[%s847 + $0x20] sm:$0xff]
      %v853 = vld [vmem:[%s847 + $0x28] sm:$0xff]
      %v854 = vld [vmem:[%s847 + $0x30] sm:$0xff]
      %v855 = vld [vmem:[%s847 + $0x38] sm:$0xff]
      %v856 = vld [vmem:[%s847 + $0x40] sm:$0xff]
      %v857 = vld [vmem:[%s847 + $0x48] sm:$0xff]
      %v858 = vld [vmem:[%s847 + $0x50] sm:$0xff]
      %v859 = vld [vmem:[%s847 + $0x58] sm:$0xff]
      %v860 = vld [vmem:[%s847 + $0x60] sm:$0xff]
      %v861 = vld [vmem:[%s847 + $0x68] sm:$0xff]
      %v862 = vld [vmem:[%s847 + $0x70] sm:$0xff]
      %v863 = vld [vmem:[%s847 + $0x78] sm:$0xff]
      %s864 = scalar_lea.vmem [#allocation2], 720
      %865 = vst.msk [vmem:[%s864 + $0x8] sm:$0xff] %vm284, %v848
      %866 = vst.msk [vmem:[%s864 + $0x10] sm:$0xff] %vm284, %v849
      %867 = vst.msk [vmem:[%s864 + $0x18] sm:$0xff] %vm284, %v850
      %868 = vst.msk [vmem:[%s864 + $0x20] sm:$0xff] %vm284, %v851
      %869 = vst.msk [vmem:[%s864 + $0x28] sm:$0xff] %vm284, %v852
      %870 = vst.msk [vmem:[%s864 + $0x30] sm:$0xff] %vm284, %v853
      %871 = vst.msk [vmem:[%s864 + $0x38] sm:$0xff] %vm284, %v854
      %872 = vst.msk [vmem:[%s864 + $0x40] sm:$0xff] %vm284, %v855
      %873 = vst.msk [vmem:[%s864 + $0x48] sm:$0xff] %vm284, %v856
      %874 = vst.msk [vmem:[%s864 + $0x50] sm:$0xff] %vm284, %v857
      %875 = vst.msk [vmem:[%s864 + $0x58] sm:$0xff] %vm284, %v858
      %876 = vst.msk [vmem:[%s864 + $0x60] sm:$0xff] %vm284, %v859
      %877 = vst.msk [vmem:[%s864 + $0x68] sm:$0xff] %vm284, %v860
      %878 = vst.msk [vmem:[%s864 + $0x70] sm:$0xff] %vm284, %v861
      %879 = vst.msk [vmem:[%s864 + $0x78] sm:$0xff] %vm284, %v862
      %880 = vst.msk [vmem:[%s864 + $0x80] sm:$0xff] %vm284, %v863
      %s881 = scalar_lea.vmem %s273, 640
      %v882 = vld [vmem:[%s881] sm:$0xff]
      %v883 = vld [vmem:[%s881 + $0x8] sm:$0xff]
      %v884 = vld [vmem:[%s881 + $0x10] sm:$0xff]
      %v885 = vld [vmem:[%s881 + $0x18] sm:$0xff]
      %v886 = vld [vmem:[%s881 + $0x20] sm:$0xff]
      %v887 = vld [vmem:[%s881 + $0x28] sm:$0xff]
      %v888 = vld [vmem:[%s881 + $0x30] sm:$0xff]
      %v889 = vld [vmem:[%s881 + $0x38] sm:$0xff]
      %v890 = vld [vmem:[%s881 + $0x40] sm:$0xff]
      %v891 = vld [vmem:[%s881 + $0x48] sm:$0xff]
      %v892 = vld [vmem:[%s881 + $0x50] sm:$0xff]
      %v893 = vld [vmem:[%s881 + $0x58] sm:$0xff]
      %v894 = vld [vmem:[%s881 + $0x60] sm:$0xff]
      %v895 = vld [vmem:[%s881 + $0x68] sm:$0xff]
      %v896 = vld [vmem:[%s881 + $0x70] sm:$0xff]
      %v897 = vld [vmem:[%s881 + $0x78] sm:$0xff]
      %s898 = scalar_lea.vmem [#allocation2], 864
      %899 = vst.msk [vmem:[%s898 + $0x8] sm:$0xff] %vm284, %v882
      %900 = vst.msk [vmem:[%s898 + $0x10] sm:$0xff] %vm284, %v883
      %901 = vst.msk [vmem:[%s898 + $0x18] sm:$0xff] %vm284, %v884
      %902 = vst.msk [vmem:[%s898 + $0x20] sm:$0xff] %vm284, %v885
      %903 = vst.msk [vmem:[%s898 + $0x28] sm:$0xff] %vm284, %v886
      %904 = vst.msk [vmem:[%s898 + $0x30] sm:$0xff] %vm284, %v887
      %905 = vst.msk [vmem:[%s898 + $0x38] sm:$0xff] %vm284, %v888
      %906 = vst.msk [vmem:[%s898 + $0x40] sm:$0xff] %vm284, %v889
      %907 = vst.msk [vmem:[%s898 + $0x48] sm:$0xff] %vm284, %v890
      %908 = vst.msk [vmem:[%s898 + $0x50] sm:$0xff] %vm284, %v891
      %909 = vst.msk [vmem:[%s898 + $0x58] sm:$0xff] %vm284, %v892
      %910 = vst.msk [vmem:[%s898 + $0x60] sm:$0xff] %vm284, %v893
      %911 = vst.msk [vmem:[%s898 + $0x68] sm:$0xff] %vm284, %v894
      %912 = vst.msk [vmem:[%s898 + $0x70] sm:$0xff] %vm284, %v895
      %913 = vst.msk [vmem:[%s898 + $0x78] sm:$0xff] %vm284, %v896
      %914 = vst.msk [vmem:[%s898 + $0x80] sm:$0xff] %vm284, %v897
      %s915 = scalar_lea.vmem %s273, 768
      %v916 = vld [vmem:[%s915] sm:$0xff]
      %v917 = vld [vmem:[%s915 + $0x8] sm:$0xff]
      %v918 = vld [vmem:[%s915 + $0x10] sm:$0xff]
      %v919 = vld [vmem:[%s915 + $0x18] sm:$0xff]
      %v920 = vld [vmem:[%s915 + $0x20] sm:$0xff]
      %v921 = vld [vmem:[%s915 + $0x28] sm:$0xff]
      %v922 = vld [vmem:[%s915 + $0x30] sm:$0xff]
      %v923 = vld [vmem:[%s915 + $0x38] sm:$0xff]
      %v924 = vld [vmem:[%s915 + $0x40] sm:$0xff]
      %v925 = vld [vmem:[%s915 + $0x48] sm:$0xff]
      %v926 = vld [vmem:[%s915 + $0x50] sm:$0xff]
      %v927 = vld [vmem:[%s915 + $0x58] sm:$0xff]
      %v928 = vld [vmem:[%s915 + $0x60] sm:$0xff]
      %v929 = vld [vmem:[%s915 + $0x68] sm:$0xff]
      %v930 = vld [vmem:[%s915 + $0x70] sm:$0xff]
      %v931 = vld [vmem:[%s915 + $0x78] sm:$0xff]
      %s932 = scalar_lea.vmem [#allocation2], 1008
      %933 = vst.msk [vmem:[%s932 + $0x8] sm:$0xff] %vm284, %v916
      %934 = vst.msk [vmem:[%s932 + $0x10] sm:$0xff] %vm284, %v917
      %935 = vst.msk [vmem:[%s932 + $0x18] sm:$0xff] %vm284, %v918
      %936 = vst.msk [vmem:[%s932 + $0x20] sm:$0xff] %vm284, %v919
      %937 = vst.msk [vmem:[%s932 + $0x28] sm:$0xff] %vm284, %v920
      %938 = vst.msk [vmem:[%s932 + $0x30] sm:$0xff] %vm284, %v921
      %939 = vst.msk [vmem:[%s932 + $0x38] sm:$0xff] %vm284, %v922
      %940 = vst.msk [vmem:[%s932 + $0x40] sm:$0xff] %vm284, %v923
      %941 = vst.msk [vmem:[%s932 + $0x48] sm:$0xff] %vm284, %v924
      %942 = vst.msk [vmem:[%s932 + $0x50] sm:$0xff] %vm284, %v925
      %943 = vst.msk [vmem:[%s932 + $0x58] sm:$0xff] %vm284, %v926
      %944 = vst.msk [vmem:[%s932 + $0x60] sm:$0xff] %vm284, %v927
      %945 = vst.msk [vmem:[%s932 + $0x68] sm:$0xff] %vm284, %v928
      %946 = vst.msk [vmem:[%s932 + $0x70] sm:$0xff] %vm284, %v929
      %947 = vst.msk [vmem:[%s932 + $0x78] sm:$0xff] %vm284, %v930
      %948 = vst.msk [vmem:[%s932 + $0x80] sm:$0xff] %vm284, %v931
      %s949 = scalar_lea.vmem %s273, 896
      %v950 = vld [vmem:[%s949] sm:$0xff]
      %v951 = vld [vmem:[%s949 + $0x8] sm:$0xff]
      %v952 = vld [vmem:[%s949 + $0x10] sm:$0xff]
      %v953 = vld [vmem:[%s949 + $0x18] sm:$0xff]
      %v954 = vld [vmem:[%s949 + $0x20] sm:$0xff]
      %v955 = vld [vmem:[%s949 + $0x28] sm:$0xff]
      %v956 = vld [vmem:[%s949 + $0x30] sm:$0xff]
      %v957 = vld [vmem:[%s949 + $0x38] sm:$0xff]
      %v958 = vld [vmem:[%s949 + $0x40] sm:$0xff]
      %v959 = vld [vmem:[%s949 + $0x48] sm:$0xff]
      %v960 = vld [vmem:[%s949 + $0x50] sm:$0xff]
      %v961 = vld [vmem:[%s949 + $0x58] sm:$0xff]
      %v962 = vld [vmem:[%s949 + $0x60] sm:$0xff]
      %v963 = vld [vmem:[%s949 + $0x68] sm:$0xff]
      %v964 = vld [vmem:[%s949 + $0x70] sm:$0xff]
      %v965 = vld [vmem:[%s949 + $0x78] sm:$0xff]
      %s966 = scalar_lea.vmem [#allocation2], 1152
      %967 = vst.msk [vmem:[%s966 + $0x8] sm:$0xff] %vm284, %v950
      %968 = vst.msk [vmem:[%s966 + $0x10] sm:$0xff] %vm284, %v951
      %969 = vst.msk [vmem:[%s966 + $0x18] sm:$0xff] %vm284, %v952
      %970 = vst.msk [vmem:[%s966 + $0x20] sm:$0xff] %vm284, %v953
      %971 = vst.msk [vmem:[%s966 + $0x28] sm:$0xff] %vm284, %v954
      %972 = vst.msk [vmem:[%s966 + $0x30] sm:$0xff] %vm284, %v955
      %973 = vst.msk [vmem:[%s966 + $0x38] sm:$0xff] %vm284, %v956
      %974 = vst.msk [vmem:[%s966 + $0x40] sm:$0xff] %vm284, %v957
      %975 = vst.msk [vmem:[%s966 + $0x48] sm:$0xff] %vm284, %v958
      %976 = vst.msk [vmem:[%s966 + $0x50] sm:$0xff] %vm284, %v959
      %977 = vst.msk [vmem:[%s966 + $0x58] sm:$0xff] %vm284, %v960
      %978 = vst.msk [vmem:[%s966 + $0x60] sm:$0xff] %vm284, %v961
      %979 = vst.msk [vmem:[%s966 + $0x68] sm:$0xff] %vm284, %v962
      %980 = vst.msk [vmem:[%s966 + $0x70] sm:$0xff] %vm284, %v963
      %981 = vst.msk [vmem:[%s966 + $0x78] sm:$0xff] %vm284, %v964
      %982 = vst.msk [vmem:[%s966 + $0x80] sm:$0xff] %vm284, %v965
      %s983 = scalar_lea.vmem %s273, 1024
      %v984 = vld [vmem:[%s983] sm:$0xff]
      %v985 = vld [vmem:[%s983 + $0x8] sm:$0xff]
      %v986 = vld [vmem:[%s983 + $0x10] sm:$0xff]
      %v987 = vld [vmem:[%s983 + $0x18] sm:$0xff]
      %v988 = vld [vmem:[%s983 + $0x20] sm:$0xff]
      %v989 = vld [vmem:[%s983 + $0x28] sm:$0xff]
      %v990 = vld [vmem:[%s983 + $0x30] sm:$0xff]
      %v991 = vld [vmem:[%s983 + $0x38] sm:$0xff]
      %v992 = vld [vmem:[%s983 + $0x40] sm:$0xff]
      %v993 = vld [vmem:[%s983 + $0x48] sm:$0xff]
      %v994 = vld [vmem:[%s983 + $0x50] sm:$0xff]
      %v995 = vld [vmem:[%s983 + $0x58] sm:$0xff]
      %v996 = vld [vmem:[%s983 + $0x60] sm:$0xff]
      %v997 = vld [vmem:[%s983 + $0x68] sm:$0xff]
      %v998 = vld [vmem:[%s983 + $0x70] sm:$0xff]
      %v999 = vld [vmem:[%s983 + $0x78] sm:$0xff]
      %s1000 = scalar_lea.vmem [#allocation2], 1296
      %1001 = vst.msk [vmem:[%s1000 + $0x8] sm:$0xff] %vm284, %v984
      %1002 = vst.msk [vmem:[%s1000 + $0x10] sm:$0xff] %vm284, %v985
      %1003 = vst.msk [vmem:[%s1000 + $0x18] sm:$0xff] %vm284, %v986
      %1004 = vst.msk [vmem:[%s1000 + $0x20] sm:$0xff] %vm284, %v987
      %1005 = vst.msk [vmem:[%s1000 + $0x28] sm:$0xff] %vm284, %v988
      %1006 = vst.msk [vmem:[%s1000 + $0x30] sm:$0xff] %vm284, %v989
      %1007 = vst.msk [vmem:[%s1000 + $0x38] sm:$0xff] %vm284, %v990
      %1008 = vst.msk [vmem:[%s1000 + $0x40] sm:$0xff] %vm284, %v991
      %1009 = vst.msk [vmem:[%s1000 + $0x48] sm:$0xff] %vm284, %v992
      %1010 = vst.msk [vmem:[%s1000 + $0x50] sm:$0xff] %vm284, %v993
      %1011 = vst.msk [vmem:[%s1000 + $0x58] sm:$0xff] %vm284, %v994
      %1012 = vst.msk [vmem:[%s1000 + $0x60] sm:$0xff] %vm284, %v995
      %1013 = vst.msk [vmem:[%s1000 + $0x68] sm:$0xff] %vm284, %v996
      %1014 = vst.msk [vmem:[%s1000 + $0x70] sm:$0xff] %vm284, %v997
      %1015 = vst.msk [vmem:[%s1000 + $0x78] sm:$0xff] %vm284, %v998
      %1016 = vst.msk [vmem:[%s1000 + $0x80] sm:$0xff] %vm284, %v999
      %s1017 = scalar_lea.vmem %s273, 1152
      %v1018 = vld [vmem:[%s1017] sm:$0xff]
      %v1019 = vld [vmem:[%s1017 + $0x8] sm:$0xff]
      %v1020 = vld [vmem:[%s1017 + $0x10] sm:$0xff]
      %v1021 = vld [vmem:[%s1017 + $0x18] sm:$0xff]
      %v1022 = vld [vmem:[%s1017 + $0x20] sm:$0xff]
      %v1023 = vld [vmem:[%s1017 + $0x28] sm:$0xff]
      %v1024 = vld [vmem:[%s1017 + $0x30] sm:$0xff]
      %v1025 = vld [vmem:[%s1017 + $0x38] sm:$0xff]
      %v1026 = vld [vmem:[%s1017 + $0x40] sm:$0xff]
      %v1027 = vld [vmem:[%s1017 + $0x48] sm:$0xff]
      %v1028 = vld [vmem:[%s1017 + $0x50] sm:$0xff]
      %v1029 = vld [vmem:[%s1017 + $0x58] sm:$0xff]
      %v1030 = vld [vmem:[%s1017 + $0x60] sm:$0xff]
      %v1031 = vld [vmem:[%s1017 + $0x68] sm:$0xff]
      %v1032 = vld [vmem:[%s1017 + $0x70] sm:$0xff]
      %v1033 = vld [vmem:[%s1017 + $0x78] sm:$0xff]
      %s1034 = scalar_lea.vmem [#allocation2], 1440
      %1035 = vst.msk [vmem:[%s1034 + $0x8] sm:$0xff] %vm284, %v1018
      %1036 = vst.msk [vmem:[%s1034 + $0x10] sm:$0xff] %vm284, %v1019
      %1037 = vst.msk [vmem:[%s1034 + $0x18] sm:$0xff] %vm284, %v1020
      %1038 = vst.msk [vmem:[%s1034 + $0x20] sm:$0xff] %vm284, %v1021
      %1039 = vst.msk [vmem:[%s1034 + $0x28] sm:$0xff] %vm284, %v1022
      %1040 = vst.msk [vmem:[%s1034 + $0x30] sm:$0xff] %vm284, %v1023
      %1041 = vst.msk [vmem:[%s1034 + $0x38] sm:$0xff] %vm284, %v1024
      %1042 = vst.msk [vmem:[%s1034 + $0x40] sm:$0xff] %vm284, %v1025
      %1043 = vst.msk [vmem:[%s1034 + $0x48] sm:$0xff] %vm284, %v1026
      %1044 = vst.msk [vmem:[%s1034 + $0x50] sm:$0xff] %vm284, %v1027
      %1045 = vst.msk [vmem:[%s1034 + $0x58] sm:$0xff] %vm284, %v1028
      %1046 = vst.msk [vmem:[%s1034 + $0x60] sm:$0xff] %vm284, %v1029
      %1047 = vst.msk [vmem:[%s1034 + $0x68] sm:$0xff] %vm284, %v1030
      %1048 = vst.msk [vmem:[%s1034 + $0x70] sm:$0xff] %vm284, %v1031
      %1049 = vst.msk [vmem:[%s1034 + $0x78] sm:$0xff] %vm284, %v1032
      %1050 = vst.msk [vmem:[%s1034 + $0x80] sm:$0xff] %vm284, %v1033
      %s1051 = scalar_lea.vmem %s273, 1280
      %v1052 = vld [vmem:[%s1051] sm:$0xff]
      %v1053 = vld [vmem:[%s1051 + $0x8] sm:$0xff]
      %v1054 = vld [vmem:[%s1051 + $0x10] sm:$0xff]
      %v1055 = vld [vmem:[%s1051 + $0x18] sm:$0xff]
      %v1056 = vld [vmem:[%s1051 + $0x20] sm:$0xff]
      %v1057 = vld [vmem:[%s1051 + $0x28] sm:$0xff]
      %v1058 = vld [vmem:[%s1051 + $0x30] sm:$0xff]
      %v1059 = vld [vmem:[%s1051 + $0x38] sm:$0xff]
      %v1060 = vld [vmem:[%s1051 + $0x40] sm:$0xff]
      %v1061 = vld [vmem:[%s1051 + $0x48] sm:$0xff]
      %v1062 = vld [vmem:[%s1051 + $0x50] sm:$0xff]
      %v1063 = vld [vmem:[%s1051 + $0x58] sm:$0xff]
      %v1064 = vld [vmem:[%s1051 + $0x60] sm:$0xff]
      %v1065 = vld [vmem:[%s1051 + $0x68] sm:$0xff]
      %v1066 = vld [vmem:[%s1051 + $0x70] sm:$0xff]
      %v1067 = vld [vmem:[%s1051 + $0x78] sm:$0xff]
      %s1068 = scalar_lea.vmem [#allocation2], 1584
      %1069 = vst.msk [vmem:[%s1068 + $0x8] sm:$0xff] %vm284, %v1052
      %1070 = vst.msk [vmem:[%s1068 + $0x10] sm:$0xff] %vm284, %v1053
      %1071 = vst.msk [vmem:[%s1068 + $0x18] sm:$0xff] %vm284, %v1054
      %1072 = vst.msk [vmem:[%s1068 + $0x20] sm:$0xff] %vm284, %v1055
      %1073 = vst.msk [vmem:[%s1068 + $0x28] sm:$0xff] %vm284, %v1056
      %1074 = vst.msk [vmem:[%s1068 + $0x30] sm:$0xff] %vm284, %v1057
      %1075 = vst.msk [vmem:[%s1068 + $0x38] sm:$0xff] %vm284, %v1058
      %1076 = vst.msk [vmem:[%s1068 + $0x40] sm:$0xff] %vm284, %v1059
      %1077 = vst.msk [vmem:[%s1068 + $0x48] sm:$0xff] %vm284, %v1060
      %1078 = vst.msk [vmem:[%s1068 + $0x50] sm:$0xff] %vm284, %v1061
      %1079 = vst.msk [vmem:[%s1068 + $0x58] sm:$0xff] %vm284, %v1062
      %1080 = vst.msk [vmem:[%s1068 + $0x60] sm:$0xff] %vm284, %v1063
      %1081 = vst.msk [vmem:[%s1068 + $0x68] sm:$0xff] %vm284, %v1064
      %1082 = vst.msk [vmem:[%s1068 + $0x70] sm:$0xff] %vm284, %v1065
      %1083 = vst.msk [vmem:[%s1068 + $0x78] sm:$0xff] %vm284, %v1066
      %1084 = vst.msk [vmem:[%s1068 + $0x80] sm:$0xff] %vm284, %v1067
      %s1085 = scalar_lea.vmem %s273, 1408
      %v1086 = vld [vmem:[%s1085] sm:$0xff]
      %v1087 = vld [vmem:[%s1085 + $0x8] sm:$0xff]
      %v1088 = vld [vmem:[%s1085 + $0x10] sm:$0xff]
      %v1089 = vld [vmem:[%s1085 + $0x18] sm:$0xff]
      %v1090 = vld [vmem:[%s1085 + $0x20] sm:$0xff]
      %v1091 = vld [vmem:[%s1085 + $0x28] sm:$0xff]
      %v1092 = vld [vmem:[%s1085 + $0x30] sm:$0xff]
      %v1093 = vld [vmem:[%s1085 + $0x38] sm:$0xff]
      %v1094 = vld [vmem:[%s1085 + $0x40] sm:$0xff]
      %v1095 = vld [vmem:[%s1085 + $0x48] sm:$0xff]
      %v1096 = vld [vmem:[%s1085 + $0x50] sm:$0xff]
      %v1097 = vld [vmem:[%s1085 + $0x58] sm:$0xff]
      %v1098 = vld [vmem:[%s1085 + $0x60] sm:$0xff]
      %v1099 = vld [vmem:[%s1085 + $0x68] sm:$0xff]
      %v1100 = vld [vmem:[%s1085 + $0x70] sm:$0xff]
      %v1101 = vld [vmem:[%s1085 + $0x78] sm:$0xff]
      %s1102 = scalar_lea.vmem [#allocation2], 1728
      %1103 = vst.msk [vmem:[%s1102 + $0x8] sm:$0xff] %vm284, %v1086
      %1104 = vst.msk [vmem:[%s1102 + $0x10] sm:$0xff] %vm284, %v1087
      %1105 = vst.msk [vmem:[%s1102 + $0x18] sm:$0xff] %vm284, %v1088
      %1106 = vst.msk [vmem:[%s1102 + $0x20] sm:$0xff] %vm284, %v1089
      %1107 = vst.msk [vmem:[%s1102 + $0x28] sm:$0xff] %vm284, %v1090
      %1108 = vst.msk [vmem:[%s1102 + $0x30] sm:$0xff] %vm284, %v1091
      %1109 = vst.msk [vmem:[%s1102 + $0x38] sm:$0xff] %vm284, %v1092
      %1110 = vst.msk [vmem:[%s1102 + $0x40] sm:$0xff] %vm284, %v1093
      %1111 = vst.msk [vmem:[%s1102 + $0x48] sm:$0xff] %vm284, %v1094
      %1112 = vst.msk [vmem:[%s1102 + $0x50] sm:$0xff] %vm284, %v1095
      %1113 = vst.msk [vmem:[%s1102 + $0x58] sm:$0xff] %vm284, %v1096
      %1114 = vst.msk [vmem:[%s1102 + $0x60] sm:$0xff] %vm284, %v1097
      %1115 = vst.msk [vmem:[%s1102 + $0x68] sm:$0xff] %vm284, %v1098
      %1116 = vst.msk [vmem:[%s1102 + $0x70] sm:$0xff] %vm284, %v1099
      %1117 = vst.msk [vmem:[%s1102 + $0x78] sm:$0xff] %vm284, %v1100
      %1118 = vst.msk [vmem:[%s1102 + $0x80] sm:$0xff] %vm284, %v1101
      %s1119 = scalar_lea.vmem %s273, 1536
      %v1120 = vld [vmem:[%s1119] sm:$0xff]
      %v1121 = vld [vmem:[%s1119 + $0x8] sm:$0xff]
      %v1122 = vld [vmem:[%s1119 + $0x10] sm:$0xff]
      %v1123 = vld [vmem:[%s1119 + $0x18] sm:$0xff]
      %v1124 = vld [vmem:[%s1119 + $0x20] sm:$0xff]
      %v1125 = vld [vmem:[%s1119 + $0x28] sm:$0xff]
      %v1126 = vld [vmem:[%s1119 + $0x30] sm:$0xff]
      %v1127 = vld [vmem:[%s1119 + $0x38] sm:$0xff]
      %v1128 = vld [vmem:[%s1119 + $0x40] sm:$0xff]
      %v1129 = vld [vmem:[%s1119 + $0x48] sm:$0xff]
      %v1130 = vld [vmem:[%s1119 + $0x50] sm:$0xff]
      %v1131 = vld [vmem:[%s1119 + $0x58] sm:$0xff]
      %v1132 = vld [vmem:[%s1119 + $0x60] sm:$0xff]
      %v1133 = vld [vmem:[%s1119 + $0x68] sm:$0xff]
      %v1134 = vld [vmem:[%s1119 + $0x70] sm:$0xff]
      %v1135 = vld [vmem:[%s1119 + $0x78] sm:$0xff]
      %s1136 = scalar_lea.vmem [#allocation2], 1872
      %1137 = vst.msk [vmem:[%s1136 + $0x8] sm:$0xff] %vm284, %v1120
      %1138 = vst.msk [vmem:[%s1136 + $0x10] sm:$0xff] %vm284, %v1121
      %1139 = vst.msk [vmem:[%s1136 + $0x18] sm:$0xff] %vm284, %v1122
      %1140 = vst.msk [vmem:[%s1136 + $0x20] sm:$0xff] %vm284, %v1123
      %1141 = vst.msk [vmem:[%s1136 + $0x28] sm:$0xff] %vm284, %v1124
      %1142 = vst.msk [vmem:[%s1136 + $0x30] sm:$0xff] %vm284, %v1125
      %1143 = vst.msk [vmem:[%s1136 + $0x38] sm:$0xff] %vm284, %v1126
      %1144 = vst.msk [vmem:[%s1136 + $0x40] sm:$0xff] %vm284, %v1127
      %1145 = vst.msk [vmem:[%s1136 + $0x48] sm:$0xff] %vm284, %v1128
      %1146 = vst.msk [vmem:[%s1136 + $0x50] sm:$0xff] %vm284, %v1129
      %1147 = vst.msk [vmem:[%s1136 + $0x58] sm:$0xff] %vm284, %v1130
      %1148 = vst.msk [vmem:[%s1136 + $0x60] sm:$0xff] %vm284, %v1131
      %1149 = vst.msk [vmem:[%s1136 + $0x68] sm:$0xff] %vm284, %v1132
      %1150 = vst.msk [vmem:[%s1136 + $0x70] sm:$0xff] %vm284, %v1133
      %1151 = vst.msk [vmem:[%s1136 + $0x78] sm:$0xff] %vm284, %v1134
      %1152 = vst.msk [vmem:[%s1136 + $0x80] sm:$0xff] %vm284, %v1135
      %s1153 = scalar_lea.vmem %s273, 1664
      %v1154 = vld [vmem:[%s1153] sm:$0xff]
      %v1155 = vld [vmem:[%s1153 + $0x8] sm:$0xff]
      %v1156 = vld [vmem:[%s1153 + $0x10] sm:$0xff]
      %v1157 = vld [vmem:[%s1153 + $0x18] sm:$0xff]
      %v1158 = vld [vmem:[%s1153 + $0x20] sm:$0xff]
      %v1159 = vld [vmem:[%s1153 + $0x28] sm:$0xff]
      %v1160 = vld [vmem:[%s1153 + $0x30] sm:$0xff]
      %v1161 = vld [vmem:[%s1153 + $0x38] sm:$0xff]
      %v1162 = vld [vmem:[%s1153 + $0x40] sm:$0xff]
      %v1163 = vld [vmem:[%s1153 + $0x48] sm:$0xff]
      %v1164 = vld [vmem:[%s1153 + $0x50] sm:$0xff]
      %v1165 = vld [vmem:[%s1153 + $0x58] sm:$0xff]
      %v1166 = vld [vmem:[%s1153 + $0x60] sm:$0xff]
      %v1167 = vld [vmem:[%s1153 + $0x68] sm:$0xff]
      %v1168 = vld [vmem:[%s1153 + $0x70] sm:$0xff]
      %v1169 = vld [vmem:[%s1153 + $0x78] sm:$0xff]
      %s1170 = scalar_lea.vmem [#allocation2], 2016
      %1171 = vst.msk [vmem:[%s1170 + $0x8] sm:$0xff] %vm284, %v1154
      %1172 = vst.msk [vmem:[%s1170 + $0x10] sm:$0xff] %vm284, %v1155
      %1173 = vst.msk [vmem:[%s1170 + $0x18] sm:$0xff] %vm284, %v1156
      %1174 = vst.msk [vmem:[%s1170 + $0x20] sm:$0xff] %vm284, %v1157
      %1175 = vst.msk [vmem:[%s1170 + $0x28] sm:$0xff] %vm284, %v1158
      %1176 = vst.msk [vmem:[%s1170 + $0x30] sm:$0xff] %vm284, %v1159
      %1177 = vst.msk [vmem:[%s1170 + $0x38] sm:$0xff] %vm284, %v1160
      %1178 = vst.msk [vmem:[%s1170 + $0x40] sm:$0xff] %vm284, %v1161
      %1179 = vst.msk [vmem:[%s1170 + $0x48] sm:$0xff] %vm284, %v1162
      %1180 = vst.msk [vmem:[%s1170 + $0x50] sm:$0xff] %vm284, %v1163
      %1181 = vst.msk [vmem:[%s1170 + $0x58] sm:$0xff] %vm284, %v1164
      %1182 = vst.msk [vmem:[%s1170 + $0x60] sm:$0xff] %vm284, %v1165
      %1183 = vst.msk [vmem:[%s1170 + $0x68] sm:$0xff] %vm284, %v1166
      %1184 = vst.msk [vmem:[%s1170 + $0x70] sm:$0xff] %vm284, %v1167
      %1185 = vst.msk [vmem:[%s1170 + $0x78] sm:$0xff] %vm284, %v1168
      %1186 = vst.msk [vmem:[%s1170 + $0x80] sm:$0xff] %vm284, %v1169
      %s1187 = scalar_lea.vmem %s273, 1792
      %v1188 = vld [vmem:[%s1187] sm:$0xff]
      %v1189 = vld [vmem:[%s1187 + $0x8] sm:$0xff]
      %v1190 = vld [vmem:[%s1187 + $0x10] sm:$0xff]
      %v1191 = vld [vmem:[%s1187 + $0x18] sm:$0xff]
      %v1192 = vld [vmem:[%s1187 + $0x20] sm:$0xff]
      %v1193 = vld [vmem:[%s1187 + $0x28] sm:$0xff]
      %v1194 = vld [vmem:[%s1187 + $0x30] sm:$0xff]
      %v1195 = vld [vmem:[%s1187 + $0x38] sm:$0xff]
      %v1196 = vld [vmem:[%s1187 + $0x40] sm:$0xff]
      %v1197 = vld [vmem:[%s1187 + $0x48] sm:$0xff]
      %v1198 = vld [vmem:[%s1187 + $0x50] sm:$0xff]
      %v1199 = vld [vmem:[%s1187 + $0x58] sm:$0xff]
      %v1200 = vld [vmem:[%s1187 + $0x60] sm:$0xff]
      %v1201 = vld [vmem:[%s1187 + $0x68] sm:$0xff]
      %v1202 = vld [vmem:[%s1187 + $0x70] sm:$0xff]
      %v1203 = vld [vmem:[%s1187 + $0x78] sm:$0xff]
      %s1204 = scalar_lea.vmem [#allocation2], 2160
      %1205 = vst.msk [vmem:[%s1204 + $0x8] sm:$0xff] %vm284, %v1188
      %1206 = vst.msk [vmem:[%s1204 + $0x10] sm:$0xff] %vm284, %v1189
      %1207 = vst.msk [vmem:[%s1204 + $0x18] sm:$0xff] %vm284, %v1190
      %1208 = vst.msk [vmem:[%s1204 + $0x20] sm:$0xff] %vm284, %v1191
      %1209 = vst.msk [vmem:[%s1204 + $0x28] sm:$0xff] %vm284, %v1192
      %1210 = vst.msk [vmem:[%s1204 + $0x30] sm:$0xff] %vm284, %v1193
      %1211 = vst.msk [vmem:[%s1204 + $0x38] sm:$0xff] %vm284, %v1194
      %1212 = vst.msk [vmem:[%s1204 + $0x40] sm:$0xff] %vm284, %v1195
      %1213 = vst.msk [vmem:[%s1204 + $0x48] sm:$0xff] %vm284, %v1196
      %1214 = vst.msk [vmem:[%s1204 + $0x50] sm:$0xff] %vm284, %v1197
      %1215 = vst.msk [vmem:[%s1204 + $0x58] sm:$0xff] %vm284, %v1198
      %1216 = vst.msk [vmem:[%s1204 + $0x60] sm:$0xff] %vm284, %v1199
      %1217 = vst.msk [vmem:[%s1204 + $0x68] sm:$0xff] %vm284, %v1200
      %1218 = vst.msk [vmem:[%s1204 + $0x70] sm:$0xff] %vm284, %v1201
      %1219 = vst.msk [vmem:[%s1204 + $0x78] sm:$0xff] %vm284, %v1202
      %1220 = vst.msk [vmem:[%s1204 + $0x80] sm:$0xff] %vm284, %v1203
      %s1221 = scalar_lea.vmem %s273, 1920
      %v1222 = vld [vmem:[%s1221] sm:$0xff]
      %v1223 = vld [vmem:[%s1221 + $0x8] sm:$0xff]
      %v1224 = vld [vmem:[%s1221 + $0x10] sm:$0xff]
      %v1225 = vld [vmem:[%s1221 + $0x18] sm:$0xff]
      %v1226 = vld [vmem:[%s1221 + $0x20] sm:$0xff]
      %v1227 = vld [vmem:[%s1221 + $0x28] sm:$0xff]
      %v1228 = vld [vmem:[%s1221 + $0x30] sm:$0xff]
      %v1229 = vld [vmem:[%s1221 + $0x38] sm:$0xff]
      %v1230 = vld [vmem:[%s1221 + $0x40] sm:$0xff]
      %v1231 = vld [vmem:[%s1221 + $0x48] sm:$0xff]
      %v1232 = vld [vmem:[%s1221 + $0x50] sm:$0xff]
      %v1233 = vld [vmem:[%s1221 + $0x58] sm:$0xff]
      %v1234 = vld [vmem:[%s1221 + $0x60] sm:$0xff]
      %v1235 = vld [vmem:[%s1221 + $0x68] sm:$0xff]
      %v1236 = vld [vmem:[%s1221 + $0x70] sm:$0xff]
      %v1237 = vld [vmem:[%s1221 + $0x78] sm:$0xff]
      %s1238 = scalar_lea.vmem [#allocation2], 2304
      %1239 = vst.msk [vmem:[%s1238 + $0x8] sm:$0xff] %vm284, %v1222
      %1240 = vst.msk [vmem:[%s1238 + $0x10] sm:$0xff] %vm284, %v1223
      %1241 = vst.msk [vmem:[%s1238 + $0x18] sm:$0xff] %vm284, %v1224
      %1242 = vst.msk [vmem:[%s1238 + $0x20] sm:$0xff] %vm284, %v1225
      %1243 = vst.msk [vmem:[%s1238 + $0x28] sm:$0xff] %vm284, %v1226
      %1244 = vst.msk [vmem:[%s1238 + $0x30] sm:$0xff] %vm284, %v1227
      %1245 = vst.msk [vmem:[%s1238 + $0x38] sm:$0xff] %vm284, %v1228
      %1246 = vst.msk [vmem:[%s1238 + $0x40] sm:$0xff] %vm284, %v1229
      %1247 = vst.msk [vmem:[%s1238 + $0x48] sm:$0xff] %vm284, %v1230
      %1248 = vst.msk [vmem:[%s1238 + $0x50] sm:$0xff] %vm284, %v1231
      %1249 = vst.msk [vmem:[%s1238 + $0x58] sm:$0xff] %vm284, %v1232
      %1250 = vst.msk [vmem:[%s1238 + $0x60] sm:$0xff] %vm284, %v1233
      %1251 = vst.msk [vmem:[%s1238 + $0x68] sm:$0xff] %vm284, %v1234
      %1252 = vst.msk [vmem:[%s1238 + $0x70] sm:$0xff] %vm284, %v1235
      %1253 = vst.msk [vmem:[%s1238 + $0x78] sm:$0xff] %vm284, %v1236
      %1254 = vst.msk [vmem:[%s1238 + $0x80] sm:$0xff] %vm284, %v1237
      loop: start=0, step=1, limit=8
      $region49: #{audio_cnn_forward.2} parent=47 // loop_pre_header
        _
      $region50: #{audio_cnn_forward.2} parent=47 // loop_header
        %s1256 = sphi 0, %s1260
        %p1257 = scmp.ge.s32.totalorder %s1256, 8
      $region51: #{audio_cnn_forward.2} parent=47 // loop_header_branch
        %1259 = sbr.rel (%p1257) target = $region55
      $region52: #{audio_cnn_forward.2} parent=47 // loop_body
        %s1261 = smul.u32 %s1256, 2
        %s1262 = smul.u32 %s1261, 144
        %s1263 = scalar_lea.vmem [#allocation2], %s1262
        %v1264 = vld [vmem:[%s1263 + $0x7] sm:$0xff]
        %v1265 = vld [vmem:[%s1263 + $0xf] sm:$0xff]
        %v1266 = vld [vmem:[%s1263 + $0x17] sm:$0xff]
        %v1267 = vld [vmem:[%s1263 + $0x1f] sm:$0xff]
        %v1268 = vld [vmem:[%s1263 + $0x27] sm:$0xff]
        %v1269 = vld [vmem:[%s1263 + $0x2f] sm:$0xff]
        %v1270 = vld [vmem:[%s1263 + $0x37] sm:$0xff]
        %v1271 = vld [vmem:[%s1263 + $0x3f] sm:$0xff]
        %v1272 = vld [vmem:[%s1263 + $0x47] sm:$0xff]
        %v1273 = vld [vmem:[%s1263 + $0x4f] sm:$0xff]
        %v1274 = vld [vmem:[%s1263 + $0x57] sm:$0xff]
        %v1275 = vld [vmem:[%s1263 + $0x5f] sm:$0xff]
        %v1276 = vld [vmem:[%s1263 + $0x67] sm:$0xff]
        %v1277 = vld [vmem:[%s1263 + $0x6f] sm:$0xff]
        %v1278 = vld [vmem:[%s1263 + $0x77] sm:$0xff]
        %v1279 = vld [vmem:[%s1263 + $0x7f] sm:$0xff]
        %v1280 = vld [vmem:[%s1] sm:$0x1]
        %1282 = vset.pattern.permute.xlu0 0
        %1283 = vperm.xlu0 %1282, %v1264
        %v1284 = vpop.permute.xlu0 %1283
        %1287 = vset.pattern.permute.xlu0 0
        %1288 = vperm.xlu0 %1287, %v1265
        %v1289 = vpop.permute.xlu0 %1288
        %1292 = vset.pattern.permute.xlu0 0
        %1293 = vperm.xlu0 %1292, %v1266
        %v1294 = vpop.permute.xlu0 %1293
        %1297 = vset.pattern.permute.xlu0 0
        %1298 = vperm.xlu0 %1297, %v1267
        %v1299 = vpop.permute.xlu0 %1298
        %1302 = vset.pattern.permute.xlu0 0
        %1303 = vperm.xlu0 %1302, %v1268
        %v1304 = vpop.permute.xlu0 %1303
        %1307 = vset.pattern.permute.xlu0 0
        %1308 = vperm.xlu0 %1307, %v1269
        %v1309 = vpop.permute.xlu0 %1308
        %1312 = vset.pattern.permute.xlu0 0
        %1313 = vperm.xlu0 %1312, %v1270
        %v1314 = vpop.permute.xlu0 %1313
        %1317 = vset.pattern.permute.xlu0 0
        %1318 = vperm.xlu0 %1317, %v1271
        %v1319 = vpop.permute.xlu0 %1318
        %1322 = vset.pattern.permute.xlu0 0
        %1323 = vperm.xlu0 %1322, %v1272
        %v1324 = vpop.permute.xlu0 %1323
        %1327 = vset.pattern.permute.xlu0 0
        %1328 = vperm.xlu0 %1327, %v1273
        %v1329 = vpop.permute.xlu0 %1328
        %1332 = vset.pattern.permute.xlu0 0
        %1333 = vperm.xlu0 %1332, %v1274
        %v1334 = vpop.permute.xlu0 %1333
        %1337 = vset.pattern.permute.xlu0 0
        %1338 = vperm.xlu0 %1337, %v1275
        %v1339 = vpop.permute.xlu0 %1338
        %1342 = vset.pattern.permute.xlu0 0
        %1343 = vperm.xlu0 %1342, %v1276
        %v1344 = vpop.permute.xlu0 %1343
        %1347 = vset.pattern.permute.xlu0 0
        %1348 = vperm.xlu0 %1347, %v1277
        %v1349 = vpop.permute.xlu0 %1348
        %1352 = vset.pattern.permute.xlu0 0
        %1353 = vperm.xlu0 %1352, %v1278
        %v1354 = vpop.permute.xlu0 %1353
        %1357 = vset.pattern.permute.xlu0 0
        %1358 = vperm.xlu0 %1357, %v1279
        %v1359 = vpop.permute.xlu0 %1358
        %v1362 = vlaneseq
        %v1363 = vshrl.u32 %v1362, 7
        %v1364 = vsub.s32 0, %v1363
        %v1365 = vrot.slane %v1280, %v1364
        %v1367 = vmul.f32 %v1284, %v1365
        %v1368 = vmul.f32 %v1289, %v1365
        %v1369 = vmul.f32 %v1294, %v1365
        %v1370 = vmul.f32 %v1299, %v1365
        %v1371 = vmul.f32 %v1304, %v1365
        %v1372 = vmul.f32 %v1309, %v1365
        %v1373 = vmul.f32 %v1314, %v1365
        %v1374 = vmul.f32 %v1319, %v1365
        %v1375 = vmul.f32 %v1324, %v1365
        %v1376 = vmul.f32 %v1329, %v1365
        %v1377 = vmul.f32 %v1334, %v1365
        %v1378 = vmul.f32 %v1339, %v1365
        %v1379 = vmul.f32 %v1344, %v1365
        %v1380 = vmul.f32 %v1349, %v1365
        %v1381 = vmul.f32 %v1354, %v1365
        %v1382 = vmul.f32 %v1359, %v1365
        %v1383 = vadd.f32 %v1367, 0.0
        %v1384 = vadd.f32 %v1368, 0.0
        %v1385 = vadd.f32 %v1369, 0.0
        %v1386 = vadd.f32 %v1370, 0.0
        %v1387 = vadd.f32 %v1371, 0.0
        %v1388 = vadd.f32 %v1372, 0.0
        %v1389 = vadd.f32 %v1373, 0.0
        %v1390 = vadd.f32 %v1374, 0.0
        %v1391 = vadd.f32 %v1375, 0.0
        %v1392 = vadd.f32 %v1376, 0.0
        %v1393 = vadd.f32 %v1377, 0.0
        %v1394 = vadd.f32 %v1378, 0.0
        %v1395 = vadd.f32 %v1379, 0.0
        %v1396 = vadd.f32 %v1380, 0.0
        %v1397 = vadd.f32 %v1381, 0.0
        %v1398 = vadd.f32 %v1382, 0.0
        %v1399 = vld [vmem:[%s1263 + $0x8] sm:$0xff]
        %v1400 = vld [vmem:[%s1263 + $0x10] sm:$0xff]
        %v1401 = vld [vmem:[%s1263 + $0x18] sm:$0xff]
        %v1402 = vld [vmem:[%s1263 + $0x20] sm:$0xff]
        %v1403 = vld [vmem:[%s1263 + $0x28] sm:$0xff]
        %v1404 = vld [vmem:[%s1263 + $0x30] sm:$0xff]
        %v1405 = vld [vmem:[%s1263 + $0x38] sm:$0xff]
        %v1406 = vld [vmem:[%s1263 + $0x40] sm:$0xff]
        %v1407 = vld [vmem:[%s1263 + $0x48] sm:$0xff]
        %v1408 = vld [vmem:[%s1263 + $0x50] sm:$0xff]
        %v1409 = vld [vmem:[%s1263 + $0x58] sm:$0xff]
        %v1410 = vld [vmem:[%s1263 + $0x60] sm:$0xff]
        %v1411 = vld [vmem:[%s1263 + $0x68] sm:$0xff]
        %v1412 = vld [vmem:[%s1263 + $0x70] sm:$0xff]
        %v1413 = vld [vmem:[%s1263 + $0x78] sm:$0xff]
        %v1414 = vld [vmem:[%s1263 + $0x80] sm:$0xff]
        %s1415 = scalar_lea.vmem %s1, 1
        %v1416 = vld [vmem:[%s1415] sm:$0x1]
        %1418 = vset.pattern.permute.xlu0 0
        %1419 = vperm.xlu0 %1418, %v1399
        %v1420 = vpop.permute.xlu0 %1419
        %1423 = vset.pattern.permute.xlu0 0
        %1424 = vperm.xlu0 %1423, %v1400
        %v1425 = vpop.permute.xlu0 %1424
        %1428 = vset.pattern.permute.xlu0 0
        %1429 = vperm.xlu0 %1428, %v1401
        %v1430 = vpop.permute.xlu0 %1429
        %1433 = vset.pattern.permute.xlu0 0
        %1434 = vperm.xlu0 %1433, %v1402
        %v1435 = vpop.permute.xlu0 %1434
        %1438 = vset.pattern.permute.xlu0 0
        %1439 = vperm.xlu0 %1438, %v1403
        %v1440 = vpop.permute.xlu0 %1439
        %1443 = vset.pattern.permute.xlu0 0
        %1444 = vperm.xlu0 %1443, %v1404
        %v1445 = vpop.permute.xlu0 %1444
        %1448 = vset.pattern.permute.xlu0 0
        %1449 = vperm.xlu0 %1448, %v1405
        %v1450 = vpop.permute.xlu0 %1449
        %1453 = vset.pattern.permute.xlu0 0
        %1454 = vperm.xlu0 %1453, %v1406
        %v1455 = vpop.permute.xlu0 %1454
        %1458 = vset.pattern.permute.xlu0 0
        %1459 = vperm.xlu0 %1458, %v1407
        %v1460 = vpop.permute.xlu0 %1459
        %1463 = vset.pattern.permute.xlu0 0
        %1464 = vperm.xlu0 %1463, %v1408
        %v1465 = vpop.permute.xlu0 %1464
        %1468 = vset.pattern.permute.xlu0 0
        %1469 = vperm.xlu0 %1468, %v1409
        %v1470 = vpop.permute.xlu0 %1469
        %1473 = vset.pattern.permute.xlu0 0
        %1474 = vperm.xlu0 %1473, %v1410
        %v1475 = vpop.permute.xlu0 %1474
        %1478 = vset.pattern.permute.xlu0 0
        %1479 = vperm.xlu0 %1478, %v1411
        %v1480 = vpop.permute.xlu0 %1479
        %1483 = vset.pattern.permute.xlu0 0
        %1484 = vperm.xlu0 %1483, %v1412
        %v1485 = vpop.permute.xlu0 %1484
        %1488 = vset.pattern.permute.xlu0 0
        %1489 = vperm.xlu0 %1488, %v1413
        %v1490 = vpop.permute.xlu0 %1489
        %1493 = vset.pattern.permute.xlu0 0
        %1494 = vperm.xlu0 %1493, %v1414
        %v1495 = vpop.permute.xlu0 %1494
        %v1498 = vlaneseq
        %v1499 = vshrl.u32 %v1498, 7
        %v1500 = vsub.s32 0, %v1499
        %v1501 = vrot.slane %v1416, %v1500
        %v1503 = vmul.f32 %v1420, %v1501
        %v1504 = vmul.f32 %v1425, %v1501
        %v1505 = vmul.f32 %v1430, %v1501
        %v1506 = vmul.f32 %v1435, %v1501
        %v1507 = vmul.f32 %v1440, %v1501
        %v1508 = vmul.f32 %v1445, %v1501
        %v1509 = vmul.f32 %v1450, %v1501
        %v1510 = vmul.f32 %v1455, %v1501
        %v1511 = vmul.f32 %v1460, %v1501
        %v1512 = vmul.f32 %v1465, %v1501
        %v1513 = vmul.f32 %v1470, %v1501
        %v1514 = vmul.f32 %v1475, %v1501
        %v1515 = vmul.f32 %v1480, %v1501
        %v1516 = vmul.f32 %v1485, %v1501
        %v1517 = vmul.f32 %v1490, %v1501
        %v1518 = vmul.f32 %v1495, %v1501
        %v1519 = vadd.f32 %v1383, %v1503
        %v1520 = vadd.f32 %v1384, %v1504
        %v1521 = vadd.f32 %v1385, %v1505
        %v1522 = vadd.f32 %v1386, %v1506
        %v1523 = vadd.f32 %v1387, %v1507
        %v1524 = vadd.f32 %v1388, %v1508
        %v1525 = vadd.f32 %v1389, %v1509
        %v1526 = vadd.f32 %v1390, %v1510
        %v1527 = vadd.f32 %v1391, %v1511
        %v1528 = vadd.f32 %v1392, %v1512
        %v1529 = vadd.f32 %v1393, %v1513
        %v1530 = vadd.f32 %v1394, %v1514
        %v1531 = vadd.f32 %v1395, %v1515
        %v1532 = vadd.f32 %v1396, %v1516
        %v1533 = vadd.f32 %v1397, %v1517
        %v1534 = vadd.f32 %v1398, %v1518
        %v1535 = vld [vmem:[%s1263 + $0x9] sm:$0xff]
        %v1536 = vld [vmem:[%s1263 + $0x11] sm:$0xff]
        %v1537 = vld [vmem:[%s1263 + $0x19] sm:$0xff]
        %v1538 = vld [vmem:[%s1263 + $0x21] sm:$0xff]
        %v1539 = vld [vmem:[%s1263 + $0x29] sm:$0xff]
        %v1540 = vld [vmem:[%s1263 + $0x31] sm:$0xff]
        %v1541 = vld [vmem:[%s1263 + $0x39] sm:$0xff]
        %v1542 = vld [vmem:[%s1263 + $0x41] sm:$0xff]
        %v1543 = vld [vmem:[%s1263 + $0x49] sm:$0xff]
        %v1544 = vld [vmem:[%s1263 + $0x51] sm:$0xff]
        %v1545 = vld [vmem:[%s1263 + $0x59] sm:$0xff]
        %v1546 = vld [vmem:[%s1263 + $0x61] sm:$0xff]
        %v1547 = vld [vmem:[%s1263 + $0x69] sm:$0xff]
        %v1548 = vld [vmem:[%s1263 + $0x71] sm:$0xff]
        %v1549 = vld [vmem:[%s1263 + $0x79] sm:$0xff]
        %v1550 = vld [vmem:[%s1263 + $0x81] sm:$0xff]
        %s1551 = scalar_lea.vmem %s1, 2
        %v1552 = vld [vmem:[%s1551] sm:$0x1]
        %1554 = vset.pattern.permute.xlu0 0
        %1555 = vperm.xlu0 %1554, %v1535
        %v1556 = vpop.permute.xlu0 %1555
        %1559 = vset.pattern.permute.xlu0 0
        %1560 = vperm.xlu0 %1559, %v1536
        %v1561 = vpop.permute.xlu0 %1560
        %1564 = vset.pattern.permute.xlu0 0
        %1565 = vperm.xlu0 %1564, %v1537
        %v1566 = vpop.permute.xlu0 %1565
        %1569 = vset.pattern.permute.xlu0 0
        %1570 = vperm.xlu0 %1569, %v1538
        %v1571 = vpop.permute.xlu0 %1570
        %1574 = vset.pattern.permute.xlu0 0
        %1575 = vperm.xlu0 %1574, %v1539
        %v1576 = vpop.permute.xlu0 %1575
        %1579 = vset.pattern.permute.xlu0 0
        %1580 = vperm.xlu0 %1579, %v1540
        %v1581 = vpop.permute.xlu0 %1580
        %1584 = vset.pattern.permute.xlu0 0
        %1585 = vperm.xlu0 %1584, %v1541
        %v1586 = vpop.permute.xlu0 %1585
        %1589 = vset.pattern.permute.xlu0 0
        %1590 = vperm.xlu0 %1589, %v1542
        %v1591 = vpop.permute.xlu0 %1590
        %1594 = vset.pattern.permute.xlu0 0
        %1595 = vperm.xlu0 %1594, %v1543
        %v1596 = vpop.permute.xlu0 %1595
        %1599 = vset.pattern.permute.xlu0 0
        %1600 = vperm.xlu0 %1599, %v1544
        %v1601 = vpop.permute.xlu0 %1600
        %1604 = vset.pattern.permute.xlu0 0
        %1605 = vperm.xlu0 %1604, %v1545
        %v1606 = vpop.permute.xlu0 %1605
        %1609 = vset.pattern.permute.xlu0 0
        %1610 = vperm.xlu0 %1609, %v1546
        %v1611 = vpop.permute.xlu0 %1610
        %1614 = vset.pattern.permute.xlu0 0
        %1615 = vperm.xlu0 %1614, %v1547
        %v1616 = vpop.permute.xlu0 %1615
        %1619 = vset.pattern.permute.xlu0 0
        %1620 = vperm.xlu0 %1619, %v1548
        %v1621 = vpop.permute.xlu0 %1620
        %1624 = vset.pattern.permute.xlu0 0
        %1625 = vperm.xlu0 %1624, %v1549
        %v1626 = vpop.permute.xlu0 %1625
        %1629 = vset.pattern.permute.xlu0 0
        %1630 = vperm.xlu0 %1629, %v1550
        %v1631 = vpop.permute.xlu0 %1630
        %v1634 = vlaneseq
        %v1635 = vshrl.u32 %v1634, 7
        %v1636 = vsub.s32 0, %v1635
        %v1637 = vrot.slane %v1552, %v1636
        %v1639 = vmul.f32 %v1556, %v1637
        %v1640 = vmul.f32 %v1561, %v1637
        %v1641 = vmul.f32 %v1566, %v1637
        %v1642 = vmul.f32 %v1571, %v1637
        %v1643 = vmul.f32 %v1576, %v1637
        %v1644 = vmul.f32 %v1581, %v1637
        %v1645 = vmul.f32 %v1586, %v1637
        %v1646 = vmul.f32 %v1591, %v1637
        %v1647 = vmul.f32 %v1596, %v1637
        %v1648 = vmul.f32 %v1601, %v1637
        %v1649 = vmul.f32 %v1606, %v1637
        %v1650 = vmul.f32 %v1611, %v1637
        %v1651 = vmul.f32 %v1616, %v1637
        %v1652 = vmul.f32 %v1621, %v1637
        %v1653 = vmul.f32 %v1626, %v1637
        %v1654 = vmul.f32 %v1631, %v1637
        %v1655 = vadd.f32 %v1519, %v1639
        %v1656 = vadd.f32 %v1520, %v1640
        %v1657 = vadd.f32 %v1521, %v1641
        %v1658 = vadd.f32 %v1522, %v1642
        %v1659 = vadd.f32 %v1523, %v1643
        %v1660 = vadd.f32 %v1524, %v1644
        %v1661 = vadd.f32 %v1525, %v1645
        %v1662 = vadd.f32 %v1526, %v1646
        %v1663 = vadd.f32 %v1527, %v1647
        %v1664 = vadd.f32 %v1528, %v1648
        %v1665 = vadd.f32 %v1529, %v1649
        %v1666 = vadd.f32 %v1530, %v1650
        %v1667 = vadd.f32 %v1531, %v1651
        %v1668 = vadd.f32 %v1532, %v1652
        %v1669 = vadd.f32 %v1533, %v1653
        %v1670 = vadd.f32 %v1534, %v1654
        %s1671 = sadd.s32 %s1261, 1
        %s1672 = smul.u32 %s1671, 144
        %s1673 = scalar_lea.vmem [#allocation2], %s1672
        %v1674 = vld [vmem:[%s1673 + $0x7] sm:$0xff]
        %v1675 = vld [vmem:[%s1673 + $0xf] sm:$0xff]
        %v1676 = vld [vmem:[%s1673 + $0x17] sm:$0xff]
        %v1677 = vld [vmem:[%s1673 + $0x1f] sm:$0xff]
        %v1678 = vld [vmem:[%s1673 + $0x27] sm:$0xff]
        %v1679 = vld [vmem:[%s1673 + $0x2f] sm:$0xff]
        %v1680 = vld [vmem:[%s1673 + $0x37] sm:$0xff]
        %v1681 = vld [vmem:[%s1673 + $0x3f] sm:$0xff]
        %v1682 = vld [vmem:[%s1673 + $0x47] sm:$0xff]
        %v1683 = vld [vmem:[%s1673 + $0x4f] sm:$0xff]
        %v1684 = vld [vmem:[%s1673 + $0x57] sm:$0xff]
        %v1685 = vld [vmem:[%s1673 + $0x5f] sm:$0xff]
        %v1686 = vld [vmem:[%s1673 + $0x67] sm:$0xff]
        %v1687 = vld [vmem:[%s1673 + $0x6f] sm:$0xff]
        %v1688 = vld [vmem:[%s1673 + $0x77] sm:$0xff]
        %v1689 = vld [vmem:[%s1673 + $0x7f] sm:$0xff]
        %s1690 = scalar_lea.vmem %s1, 3
        %v1691 = vld [vmem:[%s1690] sm:$0x1]
        %1693 = vset.pattern.permute.xlu0 0
        %1694 = vperm.xlu0 %1693, %v1674
        %v1695 = vpop.permute.xlu0 %1694
        %1698 = vset.pattern.permute.xlu0 0
        %1699 = vperm.xlu0 %1698, %v1675
        %v1700 = vpop.permute.xlu0 %1699
        %1703 = vset.pattern.permute.xlu0 0
        %1704 = vperm.xlu0 %1703, %v1676
        %v1705 = vpop.permute.xlu0 %1704
        %1708 = vset.pattern.permute.xlu0 0
        %1709 = vperm.xlu0 %1708, %v1677
        %v1710 = vpop.permute.xlu0 %1709
        %1713 = vset.pattern.permute.xlu0 0
        %1714 = vperm.xlu0 %1713, %v1678
        %v1715 = vpop.permute.xlu0 %1714
        %1718 = vset.pattern.permute.xlu0 0
        %1719 = vperm.xlu0 %1718, %v1679
        %v1720 = vpop.permute.xlu0 %1719
        %1723 = vset.pattern.permute.xlu0 0
        %1724 = vperm.xlu0 %1723, %v1680
        %v1725 = vpop.permute.xlu0 %1724
        %1728 = vset.pattern.permute.xlu0 0
        %1729 = vperm.xlu0 %1728, %v1681
        %v1730 = vpop.permute.xlu0 %1729
        %1733 = vset.pattern.permute.xlu0 0
        %1734 = vperm.xlu0 %1733, %v1682
        %v1735 = vpop.permute.xlu0 %1734
        %1738 = vset.pattern.permute.xlu0 0
        %1739 = vperm.xlu0 %1738, %v1683
        %v1740 = vpop.permute.xlu0 %1739
        %1743 = vset.pattern.permute.xlu0 0
        %1744 = vperm.xlu0 %1743, %v1684
        %v1745 = vpop.permute.xlu0 %1744
        %1748 = vset.pattern.permute.xlu0 0
        %1749 = vperm.xlu0 %1748, %v1685
        %v1750 = vpop.permute.xlu0 %1749
        %1753 = vset.pattern.permute.xlu0 0
        %1754 = vperm.xlu0 %1753, %v1686
        %v1755 = vpop.permute.xlu0 %1754
        %1758 = vset.pattern.permute.xlu0 0
        %1759 = vperm.xlu0 %1758, %v1687
        %v1760 = vpop.permute.xlu0 %1759
        %1763 = vset.pattern.permute.xlu0 0
        %1764 = vperm.xlu0 %1763, %v1688
        %v1765 = vpop.permute.xlu0 %1764
        %1768 = vset.pattern.permute.xlu0 0
        %1769 = vperm.xlu0 %1768, %v1689
        %v1770 = vpop.permute.xlu0 %1769
        %v1773 = vlaneseq
        %v1774 = vshrl.u32 %v1773, 7
        %v1775 = vsub.s32 0, %v1774
        %v1776 = vrot.slane %v1691, %v1775
        %v1778 = vmul.f32 %v1695, %v1776
        %v1779 = vmul.f32 %v1700, %v1776
        %v1780 = vmul.f32 %v1705, %v1776
        %v1781 = vmul.f32 %v1710, %v1776
        %v1782 = vmul.f32 %v1715, %v1776
        %v1783 = vmul.f32 %v1720, %v1776
        %v1784 = vmul.f32 %v1725, %v1776
        %v1785 = vmul.f32 %v1730, %v1776
        %v1786 = vmul.f32 %v1735, %v1776
        %v1787 = vmul.f32 %v1740, %v1776
        %v1788 = vmul.f32 %v1745, %v1776
        %v1789 = vmul.f32 %v1750, %v1776
        %v1790 = vmul.f32 %v1755, %v1776
        %v1791 = vmul.f32 %v1760, %v1776
        %v1792 = vmul.f32 %v1765, %v1776
        %v1793 = vmul.f32 %v1770, %v1776
        %v1794 = vadd.f32 %v1655, %v1778
        %v1795 = vadd.f32 %v1656, %v1779
        %v1796 = vadd.f32 %v1657, %v1780
        %v1797 = vadd.f32 %v1658, %v1781
        %v1798 = vadd.f32 %v1659, %v1782
        %v1799 = vadd.f32 %v1660, %v1783
        %v1800 = vadd.f32 %v1661, %v1784
        %v1801 = vadd.f32 %v1662, %v1785
        %v1802 = vadd.f32 %v1663, %v1786
        %v1803 = vadd.f32 %v1664, %v1787
        %v1804 = vadd.f32 %v1665, %v1788
        %v1805 = vadd.f32 %v1666, %v1789
        %v1806 = vadd.f32 %v1667, %v1790
        %v1807 = vadd.f32 %v1668, %v1791
        %v1808 = vadd.f32 %v1669, %v1792
        %v1809 = vadd.f32 %v1670, %v1793
        %v1810 = vld [vmem:[%s1673 + $0x8] sm:$0xff]
        %v1811 = vld [vmem:[%s1673 + $0x10] sm:$0xff]
        %v1812 = vld [vmem:[%s1673 + $0x18] sm:$0xff]
        %v1813 = vld [vmem:[%s1673 + $0x20] sm:$0xff]
        %v1814 = vld [vmem:[%s1673 + $0x28] sm:$0xff]
        %v1815 = vld [vmem:[%s1673 + $0x30] sm:$0xff]
        %v1816 = vld [vmem:[%s1673 + $0x38] sm:$0xff]
        %v1817 = vld [vmem:[%s1673 + $0x40] sm:$0xff]
        %v1818 = vld [vmem:[%s1673 + $0x48] sm:$0xff]
        %v1819 = vld [vmem:[%s1673 + $0x50] sm:$0xff]
        %v1820 = vld [vmem:[%s1673 + $0x58] sm:$0xff]
        %v1821 = vld [vmem:[%s1673 + $0x60] sm:$0xff]
        %v1822 = vld [vmem:[%s1673 + $0x68] sm:$0xff]
        %v1823 = vld [vmem:[%s1673 + $0x70] sm:$0xff]
        %v1824 = vld [vmem:[%s1673 + $0x78] sm:$0xff]
        %v1825 = vld [vmem:[%s1673 + $0x80] sm:$0xff]
        %s1826 = scalar_lea.vmem %s1, 4
        %v1827 = vld [vmem:[%s1826] sm:$0x1]
        %1829 = vset.pattern.permute.xlu0 0
        %1830 = vperm.xlu0 %1829, %v1810
        %v1831 = vpop.permute.xlu0 %1830
        %1834 = vset.pattern.permute.xlu0 0
        %1835 = vperm.xlu0 %1834, %v1811
        %v1836 = vpop.permute.xlu0 %1835
        %1839 = vset.pattern.permute.xlu0 0
        %1840 = vperm.xlu0 %1839, %v1812
        %v1841 = vpop.permute.xlu0 %1840
        %1844 = vset.pattern.permute.xlu0 0
        %1845 = vperm.xlu0 %1844, %v1813
        %v1846 = vpop.permute.xlu0 %1845
        %1849 = vset.pattern.permute.xlu0 0
        %1850 = vperm.xlu0 %1849, %v1814
        %v1851 = vpop.permute.xlu0 %1850
        %1854 = vset.pattern.permute.xlu0 0
        %1855 = vperm.xlu0 %1854, %v1815
        %v1856 = vpop.permute.xlu0 %1855
        %1859 = vset.pattern.permute.xlu0 0
        %1860 = vperm.xlu0 %1859, %v1816
        %v1861 = vpop.permute.xlu0 %1860
        %1864 = vset.pattern.permute.xlu0 0
        %1865 = vperm.xlu0 %1864, %v1817
        %v1866 = vpop.permute.xlu0 %1865
        %1869 = vset.pattern.permute.xlu0 0
        %1870 = vperm.xlu0 %1869, %v1818
        %v1871 = vpop.permute.xlu0 %1870
        %1874 = vset.pattern.permute.xlu0 0
        %1875 = vperm.xlu0 %1874, %v1819
        %v1876 = vpop.permute.xlu0 %1875
        %1879 = vset.pattern.permute.xlu0 0
        %1880 = vperm.xlu0 %1879, %v1820
        %v1881 = vpop.permute.xlu0 %1880
        %1884 = vset.pattern.permute.xlu0 0
        %1885 = vperm.xlu0 %1884, %v1821
        %v1886 = vpop.permute.xlu0 %1885
        %1889 = vset.pattern.permute.xlu0 0
        %1890 = vperm.xlu0 %1889, %v1822
        %v1891 = vpop.permute.xlu0 %1890
        %1894 = vset.pattern.permute.xlu0 0
        %1895 = vperm.xlu0 %1894, %v1823
        %v1896 = vpop.permute.xlu0 %1895
        %1899 = vset.pattern.permute.xlu0 0
        %1900 = vperm.xlu0 %1899, %v1824
        %v1901 = vpop.permute.xlu0 %1900
        %1904 = vset.pattern.permute.xlu0 0
        %1905 = vperm.xlu0 %1904, %v1825
        %v1906 = vpop.permute.xlu0 %1905
        %v1909 = vlaneseq
        %v1910 = vshrl.u32 %v1909, 7
        %v1911 = vsub.s32 0, %v1910
        %v1912 = vrot.slane %v1827, %v1911
        %v1914 = vmul.f32 %v1831, %v1912
        %v1915 = vmul.f32 %v1836, %v1912
        %v1916 = vmul.f32 %v1841, %v1912
        %v1917 = vmul.f32 %v1846, %v1912
        %v1918 = vmul.f32 %v1851, %v1912
        %v1919 = vmul.f32 %v1856, %v1912
        %v1920 = vmul.f32 %v1861, %v1912
        %v1921 = vmul.f32 %v1866, %v1912
        %v1922 = vmul.f32 %v1871, %v1912
        %v1923 = vmul.f32 %v1876, %v1912
        %v1924 = vmul.f32 %v1881, %v1912
        %v1925 = vmul.f32 %v1886, %v1912
        %v1926 = vmul.f32 %v1891, %v1912
        %v1927 = vmul.f32 %v1896, %v1912
        %v1928 = vmul.f32 %v1901, %v1912
        %v1929 = vmul.f32 %v1906, %v1912
        %v1930 = vadd.f32 %v1794, %v1914
        %v1931 = vadd.f32 %v1795, %v1915
        %v1932 = vadd.f32 %v1796, %v1916
        %v1933 = vadd.f32 %v1797, %v1917
        %v1934 = vadd.f32 %v1798, %v1918
        %v1935 = vadd.f32 %v1799, %v1919
        %v1936 = vadd.f32 %v1800, %v1920
        %v1937 = vadd.f32 %v1801, %v1921
        %v1938 = vadd.f32 %v1802, %v1922
        %v1939 = vadd.f32 %v1803, %v1923
        %v1940 = vadd.f32 %v1804, %v1924
        %v1941 = vadd.f32 %v1805, %v1925
        %v1942 = vadd.f32 %v1806, %v1926
        %v1943 = vadd.f32 %v1807, %v1927
        %v1944 = vadd.f32 %v1808, %v1928
        %v1945 = vadd.f32 %v1809, %v1929
        %v1946 = vld [vmem:[%s1673 + $0x9] sm:$0xff]
        %v1947 = vld [vmem:[%s1673 + $0x11] sm:$0xff]
        %v1948 = vld [vmem:[%s1673 + $0x19] sm:$0xff]
        %v1949 = vld [vmem:[%s1673 + $0x21] sm:$0xff]
        %v1950 = vld [vmem:[%s1673 + $0x29] sm:$0xff]
        %v1951 = vld [vmem:[%s1673 + $0x31] sm:$0xff]
        %v1952 = vld [vmem:[%s1673 + $0x39] sm:$0xff]
        %v1953 = vld [vmem:[%s1673 + $0x41] sm:$0xff]
        %v1954 = vld [vmem:[%s1673 + $0x49] sm:$0xff]
        %v1955 = vld [vmem:[%s1673 + $0x51] sm:$0xff]
        %v1956 = vld [vmem:[%s1673 + $0x59] sm:$0xff]
        %v1957 = vld [vmem:[%s1673 + $0x61] sm:$0xff]
        %v1958 = vld [vmem:[%s1673 + $0x69] sm:$0xff]
        %v1959 = vld [vmem:[%s1673 + $0x71] sm:$0xff]
        %v1960 = vld [vmem:[%s1673 + $0x79] sm:$0xff]
        %v1961 = vld [vmem:[%s1673 + $0x81] sm:$0xff]
        %s1962 = scalar_lea.vmem %s1, 5
        %v1963 = vld [vmem:[%s1962] sm:$0x1]
        %1965 = vset.pattern.permute.xlu0 0
        %1966 = vperm.xlu0 %1965, %v1946
        %v1967 = vpop.permute.xlu0 %1966
        %1970 = vset.pattern.permute.xlu0 0
        %1971 = vperm.xlu0 %1970, %v1947
        %v1972 = vpop.permute.xlu0 %1971
        %1975 = vset.pattern.permute.xlu0 0
        %1976 = vperm.xlu0 %1975, %v1948
        %v1977 = vpop.permute.xlu0 %1976
        %1980 = vset.pattern.permute.xlu0 0
        %1981 = vperm.xlu0 %1980, %v1949
        %v1982 = vpop.permute.xlu0 %1981
        %1985 = vset.pattern.permute.xlu0 0
        %1986 = vperm.xlu0 %1985, %v1950
        %v1987 = vpop.permute.xlu0 %1986
        %1990 = vset.pattern.permute.xlu0 0
        %1991 = vperm.xlu0 %1990, %v1951
        %v1992 = vpop.permute.xlu0 %1991
        %1995 = vset.pattern.permute.xlu0 0
        %1996 = vperm.xlu0 %1995, %v1952
        %v1997 = vpop.permute.xlu0 %1996
        %2000 = vset.pattern.permute.xlu0 0
        %2001 = vperm.xlu0 %2000, %v1953
        %v2002 = vpop.permute.xlu0 %2001
        %2005 = vset.pattern.permute.xlu0 0
        %2006 = vperm.xlu0 %2005, %v1954
        %v2007 = vpop.permute.xlu0 %2006
        %2010 = vset.pattern.permute.xlu0 0
        %2011 = vperm.xlu0 %2010, %v1955
        %v2012 = vpop.permute.xlu0 %2011
        %2015 = vset.pattern.permute.xlu0 0
        %2016 = vperm.xlu0 %2015, %v1956
        %v2017 = vpop.permute.xlu0 %2016
        %2020 = vset.pattern.permute.xlu0 0
        %2021 = vperm.xlu0 %2020, %v1957
        %v2022 = vpop.permute.xlu0 %2021
        %2025 = vset.pattern.permute.xlu0 0
        %2026 = vperm.xlu0 %2025, %v1958
        %v2027 = vpop.permute.xlu0 %2026
        %2030 = vset.pattern.permute.xlu0 0
        %2031 = vperm.xlu0 %2030, %v1959
        %v2032 = vpop.permute.xlu0 %2031
        %2035 = vset.pattern.permute.xlu0 0
        %2036 = vperm.xlu0 %2035, %v1960
        %v2037 = vpop.permute.xlu0 %2036
        %2040 = vset.pattern.permute.xlu0 0
        %2041 = vperm.xlu0 %2040, %v1961
        %v2042 = vpop.permute.xlu0 %2041
        %v2045 = vlaneseq
        %v2046 = vshrl.u32 %v2045, 7
        %v2047 = vsub.s32 0, %v2046
        %v2048 = vrot.slane %v1963, %v2047
        %v2050 = vmul.f32 %v1967, %v2048
        %v2051 = vmul.f32 %v1972, %v2048
        %v2052 = vmul.f32 %v1977, %v2048
        %v2053 = vmul.f32 %v1982, %v2048
        %v2054 = vmul.f32 %v1987, %v2048
        %v2055 = vmul.f32 %v1992, %v2048
        %v2056 = vmul.f32 %v1997, %v2048
        %v2057 = vmul.f32 %v2002, %v2048
        %v2058 = vmul.f32 %v2007, %v2048
        %v2059 = vmul.f32 %v2012, %v2048
        %v2060 = vmul.f32 %v2017, %v2048
        %v2061 = vmul.f32 %v2022, %v2048
        %v2062 = vmul.f32 %v2027, %v2048
        %v2063 = vmul.f32 %v2032, %v2048
        %v2064 = vmul.f32 %v2037, %v2048
        %v2065 = vmul.f32 %v2042, %v2048
        %v2066 = vadd.f32 %v1930, %v2050
        %v2067 = vadd.f32 %v1931, %v2051
        %v2068 = vadd.f32 %v1932, %v2052
        %v2069 = vadd.f32 %v1933, %v2053
        %v2070 = vadd.f32 %v1934, %v2054
        %v2071 = vadd.f32 %v1935, %v2055
        %v2072 = vadd.f32 %v1936, %v2056
        %v2073 = vadd.f32 %v1937, %v2057
        %v2074 = vadd.f32 %v1938, %v2058
        %v2075 = vadd.f32 %v1939, %v2059
        %v2076 = vadd.f32 %v1940, %v2060
        %v2077 = vadd.f32 %v1941, %v2061
        %v2078 = vadd.f32 %v1942, %v2062
        %v2079 = vadd.f32 %v1943, %v2063
        %v2080 = vadd.f32 %v1944, %v2064
        %v2081 = vadd.f32 %v1945, %v2065
        %s2082 = sadd.s32 %s1261, 2
        %s2083 = smul.u32 %s2082, 144
        %s2084 = scalar_lea.vmem [#allocation2], %s2083
        %v2085 = vld [vmem:[%s2084 + $0x7] sm:$0xff]
        %v2086 = vld [vmem:[%s2084 + $0xf] sm:$0xff]
        %v2087 = vld [vmem:[%s2084 + $0x17] sm:$0xff]
        %v2088 = vld [vmem:[%s2084 + $0x1f] sm:$0xff]
        %v2089 = vld [vmem:[%s2084 + $0x27] sm:$0xff]
        %v2090 = vld [vmem:[%s2084 + $0x2f] sm:$0xff]
        %v2091 = vld [vmem:[%s2084 + $0x37] sm:$0xff]
        %v2092 = vld [vmem:[%s2084 + $0x3f] sm:$0xff]
        %v2093 = vld [vmem:[%s2084 + $0x47] sm:$0xff]
        %v2094 = vld [vmem:[%s2084 + $0x4f] sm:$0xff]
        %v2095 = vld [vmem:[%s2084 + $0x57] sm:$0xff]
        %v2096 = vld [vmem:[%s2084 + $0x5f] sm:$0xff]
        %v2097 = vld [vmem:[%s2084 + $0x67] sm:$0xff]
        %v2098 = vld [vmem:[%s2084 + $0x6f] sm:$0xff]
        %v2099 = vld [vmem:[%s2084 + $0x77] sm:$0xff]
        %v2100 = vld [vmem:[%s2084 + $0x7f] sm:$0xff]
        %s2101 = scalar_lea.vmem %s1, 6
        %v2102 = vld [vmem:[%s2101] sm:$0x1]
        %2104 = vset.pattern.permute.xlu0 0
        %2105 = vperm.xlu0 %2104, %v2085
        %v2106 = vpop.permute.xlu0 %2105
        %2109 = vset.pattern.permute.xlu0 0
        %2110 = vperm.xlu0 %2109, %v2086
        %v2111 = vpop.permute.xlu0 %2110
        %2114 = vset.pattern.permute.xlu0 0
        %2115 = vperm.xlu0 %2114, %v2087
        %v2116 = vpop.permute.xlu0 %2115
        %2119 = vset.pattern.permute.xlu0 0
        %2120 = vperm.xlu0 %2119, %v2088
        %v2121 = vpop.permute.xlu0 %2120
        %2124 = vset.pattern.permute.xlu0 0
        %2125 = vperm.xlu0 %2124, %v2089
        %v2126 = vpop.permute.xlu0 %2125
        %2129 = vset.pattern.permute.xlu0 0
        %2130 = vperm.xlu0 %2129, %v2090
        %v2131 = vpop.permute.xlu0 %2130
        %2134 = vset.pattern.permute.xlu0 0
        %2135 = vperm.xlu0 %2134, %v2091
        %v2136 = vpop.permute.xlu0 %2135
        %2139 = vset.pattern.permute.xlu0 0
        %2140 = vperm.xlu0 %2139, %v2092
        %v2141 = vpop.permute.xlu0 %2140
        %2144 = vset.pattern.permute.xlu0 0
        %2145 = vperm.xlu0 %2144, %v2093
        %v2146 = vpop.permute.xlu0 %2145
        %2149 = vset.pattern.permute.xlu0 0
        %2150 = vperm.xlu0 %2149, %v2094
        %v2151 = vpop.permute.xlu0 %2150
        %2154 = vset.pattern.permute.xlu0 0
        %2155 = vperm.xlu0 %2154, %v2095
        %v2156 = vpop.permute.xlu0 %2155
        %2159 = vset.pattern.permute.xlu0 0
        %2160 = vperm.xlu0 %2159, %v2096
        %v2161 = vpop.permute.xlu0 %2160
        %2164 = vset.pattern.permute.xlu0 0
        %2165 = vperm.xlu0 %2164, %v2097
        %v2166 = vpop.permute.xlu0 %2165
        %2169 = vset.pattern.permute.xlu0 0
        %2170 = vperm.xlu0 %2169, %v2098
        %v2171 = vpop.permute.xlu0 %2170
        %2174 = vset.pattern.permute.xlu0 0
        %2175 = vperm.xlu0 %2174, %v2099
        %v2176 = vpop.permute.xlu0 %2175
        %2179 = vset.pattern.permute.xlu0 0
        %2180 = vperm.xlu0 %2179, %v2100
        %v2181 = vpop.permute.xlu0 %2180
        %v2184 = vlaneseq
        %v2185 = vshrl.u32 %v2184, 7
        %v2186 = vsub.s32 0, %v2185
        %v2187 = vrot.slane %v2102, %v2186
        %v2189 = vmul.f32 %v2106, %v2187
        %v2190 = vmul.f32 %v2111, %v2187
        %v2191 = vmul.f32 %v2116, %v2187
        %v2192 = vmul.f32 %v2121, %v2187
        %v2193 = vmul.f32 %v2126, %v2187
        %v2194 = vmul.f32 %v2131, %v2187
        %v2195 = vmul.f32 %v2136, %v2187
        %v2196 = vmul.f32 %v2141, %v2187
        %v2197 = vmul.f32 %v2146, %v2187
        %v2198 = vmul.f32 %v2151, %v2187
        %v2199 = vmul.f32 %v2156, %v2187
        %v2200 = vmul.f32 %v2161, %v2187
        %v2201 = vmul.f32 %v2166, %v2187
        %v2202 = vmul.f32 %v2171, %v2187
        %v2203 = vmul.f32 %v2176, %v2187
        %v2204 = vmul.f32 %v2181, %v2187
        %v2205 = vadd.f32 %v2066, %v2189
        %v2206 = vadd.f32 %v2067, %v2190
        %v2207 = vadd.f32 %v2068, %v2191
        %v2208 = vadd.f32 %v2069, %v2192
        %v2209 = vadd.f32 %v2070, %v2193
        %v2210 = vadd.f32 %v2071, %v2194
        %v2211 = vadd.f32 %v2072, %v2195
        %v2212 = vadd.f32 %v2073, %v2196
        %v2213 = vadd.f32 %v2074, %v2197
        %v2214 = vadd.f32 %v2075, %v2198
        %v2215 = vadd.f32 %v2076, %v2199
        %v2216 = vadd.f32 %v2077, %v2200
        %v2217 = vadd.f32 %v2078, %v2201
        %v2218 = vadd.f32 %v2079, %v2202
        %v2219 = vadd.f32 %v2080, %v2203
        %v2220 = vadd.f32 %v2081, %v2204
        %v2221 = vld [vmem:[%s2084 + $0x8] sm:$0xff]
        %v2222 = vld [vmem:[%s2084 + $0x10] sm:$0xff]
        %v2223 = vld [vmem:[%s2084 + $0x18] sm:$0xff]
        %v2224 = vld [vmem:[%s2084 + $0x20] sm:$0xff]
        %v2225 = vld [vmem:[%s2084 + $0x28] sm:$0xff]
        %v2226 = vld [vmem:[%s2084 + $0x30] sm:$0xff]
        %v2227 = vld [vmem:[%s2084 + $0x38] sm:$0xff]
        %v2228 = vld [vmem:[%s2084 + $0x40] sm:$0xff]
        %v2229 = vld [vmem:[%s2084 + $0x48] sm:$0xff]
        %v2230 = vld [vmem:[%s2084 + $0x50] sm:$0xff]
        %v2231 = vld [vmem:[%s2084 + $0x58] sm:$0xff]
        %v2232 = vld [vmem:[%s2084 + $0x60] sm:$0xff]
        %v2233 = vld [vmem:[%s2084 + $0x68] sm:$0xff]
        %v2234 = vld [vmem:[%s2084 + $0x70] sm:$0xff]
        %v2235 = vld [vmem:[%s2084 + $0x78] sm:$0xff]
        %v2236 = vld [vmem:[%s2084 + $0x80] sm:$0xff]
        %s2237 = scalar_lea.vmem %s1, 7
        %v2238 = vld [vmem:[%s2237] sm:$0x1]
        %2240 = vset.pattern.permute.xlu0 0
        %2241 = vperm.xlu0 %2240, %v2221
        %v2242 = vpop.permute.xlu0 %2241
        %2245 = vset.pattern.permute.xlu0 0
        %2246 = vperm.xlu0 %2245, %v2222
        %v2247 = vpop.permute.xlu0 %2246
        %2250 = vset.pattern.permute.xlu0 0
        %2251 = vperm.xlu0 %2250, %v2223
        %v2252 = vpop.permute.xlu0 %2251
        %2255 = vset.pattern.permute.xlu0 0
        %2256 = vperm.xlu0 %2255, %v2224
        %v2257 = vpop.permute.xlu0 %2256
        %2260 = vset.pattern.permute.xlu0 0
        %2261 = vperm.xlu0 %2260, %v2225
        %v2262 = vpop.permute.xlu0 %2261
        %2265 = vset.pattern.permute.xlu0 0
        %2266 = vperm.xlu0 %2265, %v2226
        %v2267 = vpop.permute.xlu0 %2266
        %2270 = vset.pattern.permute.xlu0 0
        %2271 = vperm.xlu0 %2270, %v2227
        %v2272 = vpop.permute.xlu0 %2271
        %2275 = vset.pattern.permute.xlu0 0
        %2276 = vperm.xlu0 %2275, %v2228
        %v2277 = vpop.permute.xlu0 %2276
        %2280 = vset.pattern.permute.xlu0 0
        %2281 = vperm.xlu0 %2280, %v2229
        %v2282 = vpop.permute.xlu0 %2281
        %2285 = vset.pattern.permute.xlu0 0
        %2286 = vperm.xlu0 %2285, %v2230
        %v2287 = vpop.permute.xlu0 %2286
        %2290 = vset.pattern.permute.xlu0 0
        %2291 = vperm.xlu0 %2290, %v2231
        %v2292 = vpop.permute.xlu0 %2291
        %2295 = vset.pattern.permute.xlu0 0
        %2296 = vperm.xlu0 %2295, %v2232
        %v2297 = vpop.permute.xlu0 %2296
        %2300 = vset.pattern.permute.xlu0 0
        %2301 = vperm.xlu0 %2300, %v2233
        %v2302 = vpop.permute.xlu0 %2301
        %2305 = vset.pattern.permute.xlu0 0
        %2306 = vperm.xlu0 %2305, %v2234
        %v2307 = vpop.permute.xlu0 %2306
        %2310 = vset.pattern.permute.xlu0 0
        %2311 = vperm.xlu0 %2310, %v2235
        %v2312 = vpop.permute.xlu0 %2311
        %2315 = vset.pattern.permute.xlu0 0
        %2316 = vperm.xlu0 %2315, %v2236
        %v2317 = vpop.permute.xlu0 %2316
        %v2320 = vlaneseq
        %v2321 = vshrl.u32 %v2320, 7
        %v2322 = vsub.s32 0, %v2321
        %v2323 = vrot.slane %v2238, %v2322
        %v2325 = vmul.f32 %v2242, %v2323
        %v2326 = vmul.f32 %v2247, %v2323
        %v2327 = vmul.f32 %v2252, %v2323
        %v2328 = vmul.f32 %v2257, %v2323
        %v2329 = vmul.f32 %v2262, %v2323
        %v2330 = vmul.f32 %v2267, %v2323
        %v2331 = vmul.f32 %v2272, %v2323
        %v2332 = vmul.f32 %v2277, %v2323
        %v2333 = vmul.f32 %v2282, %v2323
        %v2334 = vmul.f32 %v2287, %v2323
        %v2335 = vmul.f32 %v2292, %v2323
        %v2336 = vmul.f32 %v2297, %v2323
        %v2337 = vmul.f32 %v2302, %v2323
        %v2338 = vmul.f32 %v2307, %v2323
        %v2339 = vmul.f32 %v2312, %v2323
        %v2340 = vmul.f32 %v2317, %v2323
        %v2341 = vadd.f32 %v2205, %v2325
        %v2342 = vadd.f32 %v2206, %v2326
        %v2343 = vadd.f32 %v2207, %v2327
        %v2344 = vadd.f32 %v2208, %v2328
        %v2345 = vadd.f32 %v2209, %v2329
        %v2346 = vadd.f32 %v2210, %v2330
        %v2347 = vadd.f32 %v2211, %v2331
        %v2348 = vadd.f32 %v2212, %v2332
        %v2349 = vadd.f32 %v2213, %v2333
        %v2350 = vadd.f32 %v2214, %v2334
        %v2351 = vadd.f32 %v2215, %v2335
        %v2352 = vadd.f32 %v2216, %v2336
        %v2353 = vadd.f32 %v2217, %v2337
        %v2354 = vadd.f32 %v2218, %v2338
        %v2355 = vadd.f32 %v2219, %v2339
        %v2356 = vadd.f32 %v2220, %v2340
        %v2357 = vld [vmem:[%s2084 + $0x9] sm:$0xff]
        %v2358 = vld [vmem:[%s2084 + $0x11] sm:$0xff]
        %v2359 = vld [vmem:[%s2084 + $0x19] sm:$0xff]
        %v2360 = vld [vmem:[%s2084 + $0x21] sm:$0xff]
        %v2361 = vld [vmem:[%s2084 + $0x29] sm:$0xff]
        %v2362 = vld [vmem:[%s2084 + $0x31] sm:$0xff]
        %v2363 = vld [vmem:[%s2084 + $0x39] sm:$0xff]
        %v2364 = vld [vmem:[%s2084 + $0x41] sm:$0xff]
        %v2365 = vld [vmem:[%s2084 + $0x49] sm:$0xff]
        %v2366 = vld [vmem:[%s2084 + $0x51] sm:$0xff]
        %v2367 = vld [vmem:[%s2084 + $0x59] sm:$0xff]
        %v2368 = vld [vmem:[%s2084 + $0x61] sm:$0xff]
        %v2369 = vld [vmem:[%s2084 + $0x69] sm:$0xff]
        %v2370 = vld [vmem:[%s2084 + $0x71] sm:$0xff]
        %v2371 = vld [vmem:[%s2084 + $0x79] sm:$0xff]
        %v2372 = vld [vmem:[%s2084 + $0x81] sm:$0xff]
        %s2373 = scalar_lea.vmem %s1, 8
        %v2374 = vld [vmem:[%s2373] sm:$0x1]
        %2376 = vset.pattern.permute.xlu0 0
        %2377 = vperm.xlu0 %2376, %v2357
        %v2378 = vpop.permute.xlu0 %2377
        %2381 = vset.pattern.permute.xlu0 0
        %2382 = vperm.xlu0 %2381, %v2358
        %v2383 = vpop.permute.xlu0 %2382
        %2386 = vset.pattern.permute.xlu0 0
        %2387 = vperm.xlu0 %2386, %v2359
        %v2388 = vpop.permute.xlu0 %2387
        %2391 = vset.pattern.permute.xlu0 0
        %2392 = vperm.xlu0 %2391, %v2360
        %v2393 = vpop.permute.xlu0 %2392
        %2396 = vset.pattern.permute.xlu0 0
        %2397 = vperm.xlu0 %2396, %v2361
        %v2398 = vpop.permute.xlu0 %2397
        %2401 = vset.pattern.permute.xlu0 0
        %2402 = vperm.xlu0 %2401, %v2362
        %v2403 = vpop.permute.xlu0 %2402
        %2406 = vset.pattern.permute.xlu0 0
        %2407 = vperm.xlu0 %2406, %v2363
        %v2408 = vpop.permute.xlu0 %2407
        %2411 = vset.pattern.permute.xlu0 0
        %2412 = vperm.xlu0 %2411, %v2364
        %v2413 = vpop.permute.xlu0 %2412
        %2416 = vset.pattern.permute.xlu0 0
        %2417 = vperm.xlu0 %2416, %v2365
        %v2418 = vpop.permute.xlu0 %2417
        %2421 = vset.pattern.permute.xlu0 0
        %2422 = vperm.xlu0 %2421, %v2366
        %v2423 = vpop.permute.xlu0 %2422
        %2426 = vset.pattern.permute.xlu0 0
        %2427 = vperm.xlu0 %2426, %v2367
        %v2428 = vpop.permute.xlu0 %2427
        %2431 = vset.pattern.permute.xlu0 0
        %2432 = vperm.xlu0 %2431, %v2368
        %v2433 = vpop.permute.xlu0 %2432
        %2436 = vset.pattern.permute.xlu0 0
        %2437 = vperm.xlu0 %2436, %v2369
        %v2438 = vpop.permute.xlu0 %2437
        %2441 = vset.pattern.permute.xlu0 0
        %2442 = vperm.xlu0 %2441, %v2370
        %v2443 = vpop.permute.xlu0 %2442
        %2446 = vset.pattern.permute.xlu0 0
        %2447 = vperm.xlu0 %2446, %v2371
        %v2448 = vpop.permute.xlu0 %2447
        %2451 = vset.pattern.permute.xlu0 0
        %2452 = vperm.xlu0 %2451, %v2372
        %v2453 = vpop.permute.xlu0 %2452
        %v2456 = vlaneseq
        %v2457 = vshrl.u32 %v2456, 7
        %v2458 = vsub.s32 0, %v2457
        %v2459 = vrot.slane %v2374, %v2458
        %v2461 = vmul.f32 %v2378, %v2459
        %v2462 = vmul.f32 %v2383, %v2459
        %v2463 = vmul.f32 %v2388, %v2459
        %v2464 = vmul.f32 %v2393, %v2459
        %v2465 = vmul.f32 %v2398, %v2459
        %v2466 = vmul.f32 %v2403, %v2459
        %v2467 = vmul.f32 %v2408, %v2459
        %v2468 = vmul.f32 %v2413, %v2459
        %v2469 = vmul.f32 %v2418, %v2459
        %v2470 = vmul.f32 %v2423, %v2459
        %v2471 = vmul.f32 %v2428, %v2459
        %v2472 = vmul.f32 %v2433, %v2459
        %v2473 = vmul.f32 %v2438, %v2459
        %v2474 = vmul.f32 %v2443, %v2459
        %v2475 = vmul.f32 %v2448, %v2459
        %v2476 = vmul.f32 %v2453, %v2459
        %v2477 = vadd.f32 %v2341, %v2461
        %v2478 = vadd.f32 %v2342, %v2462
        %v2479 = vadd.f32 %v2343, %v2463
        %v2480 = vadd.f32 %v2344, %v2464
        %v2481 = vadd.f32 %v2345, %v2465
        %v2482 = vadd.f32 %v2346, %v2466
        %v2483 = vadd.f32 %v2347, %v2467
        %v2484 = vadd.f32 %v2348, %v2468
        %v2485 = vadd.f32 %v2349, %v2469
        %v2486 = vadd.f32 %v2350, %v2470
        %v2487 = vadd.f32 %v2351, %v2471
        %v2488 = vadd.f32 %v2352, %v2472
        %v2489 = vadd.f32 %v2353, %v2473
        %v2490 = vadd.f32 %v2354, %v2474
        %v2491 = vadd.f32 %v2355, %v2475
        %v2492 = vadd.f32 %v2356, %v2476
        %v2494 = vlaneseq
        %v2495 = vshrl.u32 %v2494, 7
        %v2496 = vsub.s32 0, %v2495
        %v2497 = vrot.slane %v280, %v2496
        %v2499 = vmul.f32 %v2477, %v2497
        %v2500 = vmul.f32 %v2478, %v2497
        %v2501 = vmul.f32 %v2479, %v2497
        %v2502 = vmul.f32 %v2480, %v2497
        %v2503 = vmul.f32 %v2481, %v2497
        %v2504 = vmul.f32 %v2482, %v2497
        %v2505 = vmul.f32 %v2483, %v2497
        %v2506 = vmul.f32 %v2484, %v2497
        %v2507 = vmul.f32 %v2485, %v2497
        %v2508 = vmul.f32 %v2486, %v2497
        %v2509 = vmul.f32 %v2487, %v2497
        %v2510 = vmul.f32 %v2488, %v2497
        %v2511 = vmul.f32 %v2489, %v2497
        %v2512 = vmul.f32 %v2490, %v2497
        %v2513 = vmul.f32 %v2491, %v2497
        %v2514 = vmul.f32 %v2492, %v2497
        %v2516 = vlaneseq
        %v2517 = vshrl.u32 %v2516, 7
        %v2518 = vsub.s32 0, %v2517
        %v2519 = vrot.slane %v281, %v2518
        %v2521 = vadd.f32 %v2499, %v2519
        %v2522 = vadd.f32 %v2500, %v2519
        %v2523 = vadd.f32 %v2501, %v2519
        %v2524 = vadd.f32 %v2502, %v2519
        %v2525 = vadd.f32 %v2503, %v2519
        %v2526 = vadd.f32 %v2504, %v2519
        %v2527 = vadd.f32 %v2505, %v2519
        %v2528 = vadd.f32 %v2506, %v2519
        %v2529 = vadd.f32 %v2507, %v2519
        %v2530 = vadd.f32 %v2508, %v2519
        %v2531 = vadd.f32 %v2509, %v2519
        %v2532 = vadd.f32 %v2510, %v2519
        %v2533 = vadd.f32 %v2511, %v2519
        %v2534 = vadd.f32 %v2512, %v2519
        %v2535 = vadd.f32 %v2513, %v2519
        %v2536 = vadd.f32 %v2514, %v2519
        %v2537 = vmax.f32 %v2521, 0.0
        %v2538 = vmax.f32 %v2522, 0.0
        %v2539 = vmax.f32 %v2523, 0.0
        %v2540 = vmax.f32 %v2524, 0.0
        %v2541 = vmax.f32 %v2525, 0.0
        %v2542 = vmax.f32 %v2526, 0.0
        %v2543 = vmax.f32 %v2527, 0.0
        %v2544 = vmax.f32 %v2528, 0.0
        %v2545 = vmax.f32 %v2529, 0.0
        %v2546 = vmax.f32 %v2530, 0.0
        %v2547 = vmax.f32 %v2531, 0.0
        %v2548 = vmax.f32 %v2532, 0.0
        %v2549 = vmax.f32 %v2533, 0.0
        %v2550 = vmax.f32 %v2534, 0.0
        %v2551 = vmax.f32 %v2535, 0.0
        %v2552 = vmax.f32 %v2536, 0.0
        %v2553 = vmul.f32 %v1695, %v1365
        %v2554 = vmul.f32 %v1700, %v1365
        %v2555 = vmul.f32 %v1705, %v1365
        %v2556 = vmul.f32 %v1710, %v1365
        %v2557 = vmul.f32 %v1715, %v1365
        %v2558 = vmul.f32 %v1720, %v1365
        %v2559 = vmul.f32 %v1725, %v1365
        %v2560 = vmul.f32 %v1730, %v1365
        %v2561 = vmul.f32 %v1735, %v1365
        %v2562 = vmul.f32 %v1740, %v1365
        %v2563 = vmul.f32 %v1745, %v1365
        %v2564 = vmul.f32 %v1750, %v1365
        %v2565 = vmul.f32 %v1755, %v1365
        %v2566 = vmul.f32 %v1760, %v1365
        %v2567 = vmul.f32 %v1765, %v1365
        %v2568 = vmul.f32 %v1770, %v1365
        %v2569 = vadd.f32 %v2553, 0.0
        %v2570 = vadd.f32 %v2554, 0.0
        %v2571 = vadd.f32 %v2555, 0.0
        %v2572 = vadd.f32 %v2556, 0.0
        %v2573 = vadd.f32 %v2557, 0.0
        %v2574 = vadd.f32 %v2558, 0.0
        %v2575 = vadd.f32 %v2559, 0.0
        %v2576 = vadd.f32 %v2560, 0.0
        %v2577 = vadd.f32 %v2561, 0.0
        %v2578 = vadd.f32 %v2562, 0.0
        %v2579 = vadd.f32 %v2563, 0.0
        %v2580 = vadd.f32 %v2564, 0.0
        %v2581 = vadd.f32 %v2565, 0.0
        %v2582 = vadd.f32 %v2566, 0.0
        %v2583 = vadd.f32 %v2567, 0.0
        %v2584 = vadd.f32 %v2568, 0.0
        %v2585 = vmul.f32 %v1831, %v1501
        %v2586 = vmul.f32 %v1836, %v1501
        %v2587 = vmul.f32 %v1841, %v1501
        %v2588 = vmul.f32 %v1846, %v1501
        %v2589 = vmul.f32 %v1851, %v1501
        %v2590 = vmul.f32 %v1856, %v1501
        %v2591 = vmul.f32 %v1861, %v1501
        %v2592 = vmul.f32 %v1866, %v1501
        %v2593 = vmul.f32 %v1871, %v1501
        %v2594 = vmul.f32 %v1876, %v1501
        %v2595 = vmul.f32 %v1881, %v1501
        %v2596 = vmul.f32 %v1886, %v1501
        %v2597 = vmul.f32 %v1891, %v1501
        %v2598 = vmul.f32 %v1896, %v1501
        %v2599 = vmul.f32 %v1901, %v1501
        %v2600 = vmul.f32 %v1906, %v1501
        %v2601 = vadd.f32 %v2569, %v2585
        %v2602 = vadd.f32 %v2570, %v2586
        %v2603 = vadd.f32 %v2571, %v2587
        %v2604 = vadd.f32 %v2572, %v2588
        %v2605 = vadd.f32 %v2573, %v2589
        %v2606 = vadd.f32 %v2574, %v2590
        %v2607 = vadd.f32 %v2575, %v2591
        %v2608 = vadd.f32 %v2576, %v2592
        %v2609 = vadd.f32 %v2577, %v2593
        %v2610 = vadd.f32 %v2578, %v2594
        %v2611 = vadd.f32 %v2579, %v2595
        %v2612 = vadd.f32 %v2580, %v2596
        %v2613 = vadd.f32 %v2581, %v2597
        %v2614 = vadd.f32 %v2582, %v2598
        %v2615 = vadd.f32 %v2583, %v2599
        %v2616 = vadd.f32 %v2584, %v2600
        %v2617 = vmul.f32 %v1967, %v1637
        %v2618 = vmul.f32 %v1972, %v1637
        %v2619 = vmul.f32 %v1977, %v1637
        %v2620 = vmul.f32 %v1982, %v1637
        %v2621 = vmul.f32 %v1987, %v1637
        %v2622 = vmul.f32 %v1992, %v1637
        %v2623 = vmul.f32 %v1997, %v1637
        %v2624 = vmul.f32 %v2002, %v1637
        %v2625 = vmul.f32 %v2007, %v1637
        %v2626 = vmul.f32 %v2012, %v1637
        %v2627 = vmul.f32 %v2017, %v1637
        %v2628 = vmul.f32 %v2022, %v1637
        %v2629 = vmul.f32 %v2027, %v1637
        %v2630 = vmul.f32 %v2032, %v1637
        %v2631 = vmul.f32 %v2037, %v1637
        %v2632 = vmul.f32 %v2042, %v1637
        %v2633 = vadd.f32 %v2601, %v2617
        %v2634 = vadd.f32 %v2602, %v2618
        %v2635 = vadd.f32 %v2603, %v2619
        %v2636 = vadd.f32 %v2604, %v2620
        %v2637 = vadd.f32 %v2605, %v2621
        %v2638 = vadd.f32 %v2606, %v2622
        %v2639 = vadd.f32 %v2607, %v2623
        %v2640 = vadd.f32 %v2608, %v2624
        %v2641 = vadd.f32 %v2609, %v2625
        %v2642 = vadd.f32 %v2610, %v2626
        %v2643 = vadd.f32 %v2611, %v2627
        %v2644 = vadd.f32 %v2612, %v2628
        %v2645 = vadd.f32 %v2613, %v2629
        %v2646 = vadd.f32 %v2614, %v2630
        %v2647 = vadd.f32 %v2615, %v2631
        %v2648 = vadd.f32 %v2616, %v2632
        %v2649 = vmul.f32 %v2106, %v1776
        %v2650 = vmul.f32 %v2111, %v1776
        %v2651 = vmul.f32 %v2116, %v1776
        %v2652 = vmul.f32 %v2121, %v1776
        %v2653 = vmul.f32 %v2126, %v1776
        %v2654 = vmul.f32 %v2131, %v1776
        %v2655 = vmul.f32 %v2136, %v1776
        %v2656 = vmul.f32 %v2141, %v1776
        %v2657 = vmul.f32 %v2146, %v1776
        %v2658 = vmul.f32 %v2151, %v1776
        %v2659 = vmul.f32 %v2156, %v1776
        %v2660 = vmul.f32 %v2161, %v1776
        %v2661 = vmul.f32 %v2166, %v1776
        %v2662 = vmul.f32 %v2171, %v1776
        %v2663 = vmul.f32 %v2176, %v1776
        %v2664 = vmul.f32 %v2181, %v1776
        %v2665 = vadd.f32 %v2633, %v2649
        %v2666 = vadd.f32 %v2634, %v2650
        %v2667 = vadd.f32 %v2635, %v2651
        %v2668 = vadd.f32 %v2636, %v2652
        %v2669 = vadd.f32 %v2637, %v2653
        %v2670 = vadd.f32 %v2638, %v2654
        %v2671 = vadd.f32 %v2639, %v2655
        %v2672 = vadd.f32 %v2640, %v2656
        %v2673 = vadd.f32 %v2641, %v2657
        %v2674 = vadd.f32 %v2642, %v2658
        %v2675 = vadd.f32 %v2643, %v2659
        %v2676 = vadd.f32 %v2644, %v2660
        %v2677 = vadd.f32 %v2645, %v2661
        %v2678 = vadd.f32 %v2646, %v2662
        %v2679 = vadd.f32 %v2647, %v2663
        %v2680 = vadd.f32 %v2648, %v2664
        %v2681 = vmul.f32 %v2242, %v1912
        %v2682 = vmul.f32 %v2247, %v1912
        %v2683 = vmul.f32 %v2252, %v1912
        %v2684 = vmul.f32 %v2257, %v1912
        %v2685 = vmul.f32 %v2262, %v1912
        %v2686 = vmul.f32 %v2267, %v1912
        %v2687 = vmul.f32 %v2272, %v1912
        %v2688 = vmul.f32 %v2277, %v1912
        %v2689 = vmul.f32 %v2282, %v1912
        %v2690 = vmul.f32 %v2287, %v1912
        %v2691 = vmul.f32 %v2292, %v1912
        %v2692 = vmul.f32 %v2297, %v1912
        %v2693 = vmul.f32 %v2302, %v1912
        %v2694 = vmul.f32 %v2307, %v1912
        %v2695 = vmul.f32 %v2312, %v1912
        %v2696 = vmul.f32 %v2317, %v1912
        %v2697 = vadd.f32 %v2665, %v2681
        %v2698 = vadd.f32 %v2666, %v2682
        %v2699 = vadd.f32 %v2667, %v2683
        %v2700 = vadd.f32 %v2668, %v2684
        %v2701 = vadd.f32 %v2669, %v2685
        %v2702 = vadd.f32 %v2670, %v2686
        %v2703 = vadd.f32 %v2671, %v2687
        %v2704 = vadd.f32 %v2672, %v2688
        %v2705 = vadd.f32 %v2673, %v2689
        %v2706 = vadd.f32 %v2674, %v2690
        %v2707 = vadd.f32 %v2675, %v2691
        %v2708 = vadd.f32 %v2676, %v2692
        %v2709 = vadd.f32 %v2677, %v2693
        %v2710 = vadd.f32 %v2678, %v2694
        %v2711 = vadd.f32 %v2679, %v2695
        %v2712 = vadd.f32 %v2680, %v2696
        %v2713 = vmul.f32 %v2378, %v2048
        %v2714 = vmul.f32 %v2383, %v2048
        %v2715 = vmul.f32 %v2388, %v2048
        %v2716 = vmul.f32 %v2393, %v2048
        %v2717 = vmul.f32 %v2398, %v2048
        %v2718 = vmul.f32 %v2403, %v2048
        %v2719 = vmul.f32 %v2408, %v2048
        %v2720 = vmul.f32 %v2413, %v2048
        %v2721 = vmul.f32 %v2418, %v2048
        %v2722 = vmul.f32 %v2423, %v2048
        %v2723 = vmul.f32 %v2428, %v2048
        %v2724 = vmul.f32 %v2433, %v2048
        %v2725 = vmul.f32 %v2438, %v2048
        %v2726 = vmul.f32 %v2443, %v2048
        %v2727 = vmul.f32 %v2448, %v2048
        %v2728 = vmul.f32 %v2453, %v2048
        %v2729 = vadd.f32 %v2697, %v2713
        %v2730 = vadd.f32 %v2698, %v2714
        %v2731 = vadd.f32 %v2699, %v2715
        %v2732 = vadd.f32 %v2700, %v2716
        %v2733 = vadd.f32 %v2701, %v2717
        %v2734 = vadd.f32 %v2702, %v2718
        %v2735 = vadd.f32 %v2703, %v2719
        %v2736 = vadd.f32 %v2704, %v2720
        %v2737 = vadd.f32 %v2705, %v2721
        %v2738 = vadd.f32 %v2706, %v2722
        %v2739 = vadd.f32 %v2707, %v2723
        %v2740 = vadd.f32 %v2708, %v2724
        %v2741 = vadd.f32 %v2709, %v2725
        %v2742 = vadd.f32 %v2710, %v2726
        %v2743 = vadd.f32 %v2711, %v2727
        %v2744 = vadd.f32 %v2712, %v2728
        %s2745 = sadd.s32 %s1261, 3
        %s2746 = smul.u32 %s2745, 144
        %s2747 = scalar_lea.vmem [#allocation2], %s2746
        %v2748 = vld [vmem:[%s2747 + $0x7] sm:$0xff]
        %v2749 = vld [vmem:[%s2747 + $0xf] sm:$0xff]
        %v2750 = vld [vmem:[%s2747 + $0x17] sm:$0xff]
        %v2751 = vld [vmem:[%s2747 + $0x1f] sm:$0xff]
        %v2752 = vld [vmem:[%s2747 + $0x27] sm:$0xff]
        %v2753 = vld [vmem:[%s2747 + $0x2f] sm:$0xff]
        %v2754 = vld [vmem:[%s2747 + $0x37] sm:$0xff]
        %v2755 = vld [vmem:[%s2747 + $0x3f] sm:$0xff]
        %v2756 = vld [vmem:[%s2747 + $0x47] sm:$0xff]
        %v2757 = vld [vmem:[%s2747 + $0x4f] sm:$0xff]
        %v2758 = vld [vmem:[%s2747 + $0x57] sm:$0xff]
        %v2759 = vld [vmem:[%s2747 + $0x5f] sm:$0xff]
        %v2760 = vld [vmem:[%s2747 + $0x67] sm:$0xff]
        %v2761 = vld [vmem:[%s2747 + $0x6f] sm:$0xff]
        %v2762 = vld [vmem:[%s2747 + $0x77] sm:$0xff]
        %v2763 = vld [vmem:[%s2747 + $0x7f] sm:$0xff]
        %2765 = vset.pattern.permute.xlu0 0
        %2766 = vperm.xlu0 %2765, %v2748
        %v2767 = vpop.permute.xlu0 %2766
        %2770 = vset.pattern.permute.xlu0 0
        %2771 = vperm.xlu0 %2770, %v2749
        %v2772 = vpop.permute.xlu0 %2771
        %2775 = vset.pattern.permute.xlu0 0
        %2776 = vperm.xlu0 %2775, %v2750
        %v2777 = vpop.permute.xlu0 %2776
        %2780 = vset.pattern.permute.xlu0 0
        %2781 = vperm.xlu0 %2780, %v2751
        %v2782 = vpop.permute.xlu0 %2781
        %2785 = vset.pattern.permute.xlu0 0
        %2786 = vperm.xlu0 %2785, %v2752
        %v2787 = vpop.permute.xlu0 %2786
        %2790 = vset.pattern.permute.xlu0 0
        %2791 = vperm.xlu0 %2790, %v2753
        %v2792 = vpop.permute.xlu0 %2791
        %2795 = vset.pattern.permute.xlu0 0
        %2796 = vperm.xlu0 %2795, %v2754
        %v2797 = vpop.permute.xlu0 %2796
        %2800 = vset.pattern.permute.xlu0 0
        %2801 = vperm.xlu0 %2800, %v2755
        %v2802 = vpop.permute.xlu0 %2801
        %2805 = vset.pattern.permute.xlu0 0
        %2806 = vperm.xlu0 %2805, %v2756
        %v2807 = vpop.permute.xlu0 %2806
        %2810 = vset.pattern.permute.xlu0 0
        %2811 = vperm.xlu0 %2810, %v2757
        %v2812 = vpop.permute.xlu0 %2811
        %2815 = vset.pattern.permute.xlu0 0
        %2816 = vperm.xlu0 %2815, %v2758
        %v2817 = vpop.permute.xlu0 %2816
        %2820 = vset.pattern.permute.xlu0 0
        %2821 = vperm.xlu0 %2820, %v2759
        %v2822 = vpop.permute.xlu0 %2821
        %2825 = vset.pattern.permute.xlu0 0
        %2826 = vperm.xlu0 %2825, %v2760
        %v2827 = vpop.permute.xlu0 %2826
        %2830 = vset.pattern.permute.xlu0 0
        %2831 = vperm.xlu0 %2830, %v2761
        %v2832 = vpop.permute.xlu0 %2831
        %2835 = vset.pattern.permute.xlu0 0
        %2836 = vperm.xlu0 %2835, %v2762
        %v2837 = vpop.permute.xlu0 %2836
        %2840 = vset.pattern.permute.xlu0 0
        %2841 = vperm.xlu0 %2840, %v2763
        %v2842 = vpop.permute.xlu0 %2841
        %v2844 = vmul.f32 %v2767, %v2187
        %v2845 = vmul.f32 %v2772, %v2187
        %v2846 = vmul.f32 %v2777, %v2187
        %v2847 = vmul.f32 %v2782, %v2187
        %v2848 = vmul.f32 %v2787, %v2187
        %v2849 = vmul.f32 %v2792, %v2187
        %v2850 = vmul.f32 %v2797, %v2187
        %v2851 = vmul.f32 %v2802, %v2187
        %v2852 = vmul.f32 %v2807, %v2187
        %v2853 = vmul.f32 %v2812, %v2187
        %v2854 = vmul.f32 %v2817, %v2187
        %v2855 = vmul.f32 %v2822, %v2187
        %v2856 = vmul.f32 %v2827, %v2187
        %v2857 = vmul.f32 %v2832, %v2187
        %v2858 = vmul.f32 %v2837, %v2187
        %v2859 = vmul.f32 %v2842, %v2187
        %v2860 = vadd.f32 %v2729, %v2844
        %v2861 = vadd.f32 %v2730, %v2845
        %v2862 = vadd.f32 %v2731, %v2846
        %v2863 = vadd.f32 %v2732, %v2847
        %v2864 = vadd.f32 %v2733, %v2848
        %v2865 = vadd.f32 %v2734, %v2849
        %v2866 = vadd.f32 %v2735, %v2850
        %v2867 = vadd.f32 %v2736, %v2851
        %v2868 = vadd.f32 %v2737, %v2852
        %v2869 = vadd.f32 %v2738, %v2853
        %v2870 = vadd.f32 %v2739, %v2854
        %v2871 = vadd.f32 %v2740, %v2855
        %v2872 = vadd.f32 %v2741, %v2856
        %v2873 = vadd.f32 %v2742, %v2857
        %v2874 = vadd.f32 %v2743, %v2858
        %v2875 = vadd.f32 %v2744, %v2859
        %v2876 = vld [vmem:[%s2747 + $0x8] sm:$0xff]
        %v2877 = vld [vmem:[%s2747 + $0x10] sm:$0xff]
        %v2878 = vld [vmem:[%s2747 + $0x18] sm:$0xff]
        %v2879 = vld [vmem:[%s2747 + $0x20] sm:$0xff]
        %v2880 = vld [vmem:[%s2747 + $0x28] sm:$0xff]
        %v2881 = vld [vmem:[%s2747 + $0x30] sm:$0xff]
        %v2882 = vld [vmem:[%s2747 + $0x38] sm:$0xff]
        %v2883 = vld [vmem:[%s2747 + $0x40] sm:$0xff]
        %v2884 = vld [vmem:[%s2747 + $0x48] sm:$0xff]
        %v2885 = vld [vmem:[%s2747 + $0x50] sm:$0xff]
        %v2886 = vld [vmem:[%s2747 + $0x58] sm:$0xff]
        %v2887 = vld [vmem:[%s2747 + $0x60] sm:$0xff]
        %v2888 = vld [vmem:[%s2747 + $0x68] sm:$0xff]
        %v2889 = vld [vmem:[%s2747 + $0x70] sm:$0xff]
        %v2890 = vld [vmem:[%s2747 + $0x78] sm:$0xff]
        %v2891 = vld [vmem:[%s2747 + $0x80] sm:$0xff]
        %2893 = vset.pattern.permute.xlu0 0
        %2894 = vperm.xlu0 %2893, %v2876
        %v2895 = vpop.permute.xlu0 %2894
        %2898 = vset.pattern.permute.xlu0 0
        %2899 = vperm.xlu0 %2898, %v2877
        %v2900 = vpop.permute.xlu0 %2899
        %2903 = vset.pattern.permute.xlu0 0
        %2904 = vperm.xlu0 %2903, %v2878
        %v2905 = vpop.permute.xlu0 %2904
        %2908 = vset.pattern.permute.xlu0 0
        %2909 = vperm.xlu0 %2908, %v2879
        %v2910 = vpop.permute.xlu0 %2909
        %2913 = vset.pattern.permute.xlu0 0
        %2914 = vperm.xlu0 %2913, %v2880
        %v2915 = vpop.permute.xlu0 %2914
        %2918 = vset.pattern.permute.xlu0 0
        %2919 = vperm.xlu0 %2918, %v2881
        %v2920 = vpop.permute.xlu0 %2919
        %2923 = vset.pattern.permute.xlu0 0
        %2924 = vperm.xlu0 %2923, %v2882
        %v2925 = vpop.permute.xlu0 %2924
        %2928 = vset.pattern.permute.xlu0 0
        %2929 = vperm.xlu0 %2928, %v2883
        %v2930 = vpop.permute.xlu0 %2929
        %2933 = vset.pattern.permute.xlu0 0
        %2934 = vperm.xlu0 %2933, %v2884
        %v2935 = vpop.permute.xlu0 %2934
        %2938 = vset.pattern.permute.xlu0 0
        %2939 = vperm.xlu0 %2938, %v2885
        %v2940 = vpop.permute.xlu0 %2939
        %2943 = vset.pattern.permute.xlu0 0
        %2944 = vperm.xlu0 %2943, %v2886
        %v2945 = vpop.permute.xlu0 %2944
        %2948 = vset.pattern.permute.xlu0 0
        %2949 = vperm.xlu0 %2948, %v2887
        %v2950 = vpop.permute.xlu0 %2949
        %2953 = vset.pattern.permute.xlu0 0
        %2954 = vperm.xlu0 %2953, %v2888
        %v2955 = vpop.permute.xlu0 %2954
        %2958 = vset.pattern.permute.xlu0 0
        %2959 = vperm.xlu0 %2958, %v2889
        %v2960 = vpop.permute.xlu0 %2959
        %2963 = vset.pattern.permute.xlu0 0
        %2964 = vperm.xlu0 %2963, %v2890
        %v2965 = vpop.permute.xlu0 %2964
        %2968 = vset.pattern.permute.xlu0 0
        %2969 = vperm.xlu0 %2968, %v2891
        %v2970 = vpop.permute.xlu0 %2969
        %v2972 = vmul.f32 %v2895, %v2323
        %v2973 = vmul.f32 %v2900, %v2323
        %v2974 = vmul.f32 %v2905, %v2323
        %v2975 = vmul.f32 %v2910, %v2323
        %v2976 = vmul.f32 %v2915, %v2323
        %v2977 = vmul.f32 %v2920, %v2323
        %v2978 = vmul.f32 %v2925, %v2323
        %v2979 = vmul.f32 %v2930, %v2323
        %v2980 = vmul.f32 %v2935, %v2323
        %v2981 = vmul.f32 %v2940, %v2323
        %v2982 = vmul.f32 %v2945, %v2323
        %v2983 = vmul.f32 %v2950, %v2323
        %v2984 = vmul.f32 %v2955, %v2323
        %v2985 = vmul.f32 %v2960, %v2323
        %v2986 = vmul.f32 %v2965, %v2323
        %v2987 = vmul.f32 %v2970, %v2323
        %v2988 = vadd.f32 %v2860, %v2972
        %v2989 = vadd.f32 %v2861, %v2973
        %v2990 = vadd.f32 %v2862, %v2974
        %v2991 = vadd.f32 %v2863, %v2975
        %v2992 = vadd.f32 %v2864, %v2976
        %v2993 = vadd.f32 %v2865, %v2977
        %v2994 = vadd.f32 %v2866, %v2978
        %v2995 = vadd.f32 %v2867, %v2979
        %v2996 = vadd.f32 %v2868, %v2980
        %v2997 = vadd.f32 %v2869, %v2981
        %v2998 = vadd.f32 %v2870, %v2982
        %v2999 = vadd.f32 %v2871, %v2983
        %v3000 = vadd.f32 %v2872, %v2984
        %v3001 = vadd.f32 %v2873, %v2985
        %v3002 = vadd.f32 %v2874, %v2986
        %v3003 = vadd.f32 %v2875, %v2987
        %v3004 = vld [vmem:[%s2747 + $0x9] sm:$0xff]
        %v3005 = vld [vmem:[%s2747 + $0x11] sm:$0xff]
        %v3006 = vld [vmem:[%s2747 + $0x19] sm:$0xff]
        %v3007 = vld [vmem:[%s2747 + $0x21] sm:$0xff]
        %v3008 = vld [vmem:[%s2747 + $0x29] sm:$0xff]
        %v3009 = vld [vmem:[%s2747 + $0x31] sm:$0xff]
        %v3010 = vld [vmem:[%s2747 + $0x39] sm:$0xff]
        %v3011 = vld [vmem:[%s2747 + $0x41] sm:$0xff]
        %v3012 = vld [vmem:[%s2747 + $0x49] sm:$0xff]
        %v3013 = vld [vmem:[%s2747 + $0x51] sm:$0xff]
        %v3014 = vld [vmem:[%s2747 + $0x59] sm:$0xff]
        %v3015 = vld [vmem:[%s2747 + $0x61] sm:$0xff]
        %v3016 = vld [vmem:[%s2747 + $0x69] sm:$0xff]
        %v3017 = vld [vmem:[%s2747 + $0x71] sm:$0xff]
        %v3018 = vld [vmem:[%s2747 + $0x79] sm:$0xff]
        %v3019 = vld [vmem:[%s2747 + $0x81] sm:$0xff]
        %3021 = vset.pattern.permute.xlu0 0
        %3022 = vperm.xlu0 %3021, %v3004
        %v3023 = vpop.permute.xlu0 %3022
        %3026 = vset.pattern.permute.xlu0 0
        %3027 = vperm.xlu0 %3026, %v3005
        %v3028 = vpop.permute.xlu0 %3027
        %3031 = vset.pattern.permute.xlu0 0
        %3032 = vperm.xlu0 %3031, %v3006
        %v3033 = vpop.permute.xlu0 %3032
        %3036 = vset.pattern.permute.xlu0 0
        %3037 = vperm.xlu0 %3036, %v3007
        %v3038 = vpop.permute.xlu0 %3037
        %3041 = vset.pattern.permute.xlu0 0
        %3042 = vperm.xlu0 %3041, %v3008
        %v3043 = vpop.permute.xlu0 %3042
        %3046 = vset.pattern.permute.xlu0 0
        %3047 = vperm.xlu0 %3046, %v3009
        %v3048 = vpop.permute.xlu0 %3047
        %3051 = vset.pattern.permute.xlu0 0
        %3052 = vperm.xlu0 %3051, %v3010
        %v3053 = vpop.permute.xlu0 %3052
        %3056 = vset.pattern.permute.xlu0 0
        %3057 = vperm.xlu0 %3056, %v3011
        %v3058 = vpop.permute.xlu0 %3057
        %3061 = vset.pattern.permute.xlu0 0
        %3062 = vperm.xlu0 %3061, %v3012
        %v3063 = vpop.permute.xlu0 %3062
        %3066 = vset.pattern.permute.xlu0 0
        %3067 = vperm.xlu0 %3066, %v3013
        %v3068 = vpop.permute.xlu0 %3067
        %3071 = vset.pattern.permute.xlu0 0
        %3072 = vperm.xlu0 %3071, %v3014
        %v3073 = vpop.permute.xlu0 %3072
        %3076 = vset.pattern.permute.xlu0 0
        %3077 = vperm.xlu0 %3076, %v3015
        %v3078 = vpop.permute.xlu0 %3077
        %3081 = vset.pattern.permute.xlu0 0
        %3082 = vperm.xlu0 %3081, %v3016
        %v3083 = vpop.permute.xlu0 %3082
        %3086 = vset.pattern.permute.xlu0 0
        %3087 = vperm.xlu0 %3086, %v3017
        %v3088 = vpop.permute.xlu0 %3087
        %3091 = vset.pattern.permute.xlu0 0
        %3092 = vperm.xlu0 %3091, %v3018
        %v3093 = vpop.permute.xlu0 %3092
        %3096 = vset.pattern.permute.xlu0 0
        %3097 = vperm.xlu0 %3096, %v3019
        %v3098 = vpop.permute.xlu0 %3097
        %v3100 = vmul.f32 %v3023, %v2459
        %v3101 = vmul.f32 %v3028, %v2459
        %v3102 = vmul.f32 %v3033, %v2459
        %v3103 = vmul.f32 %v3038, %v2459
        %v3104 = vmul.f32 %v3043, %v2459
        %v3105 = vmul.f32 %v3048, %v2459
        %v3106 = vmul.f32 %v3053, %v2459
        %v3107 = vmul.f32 %v3058, %v2459
        %v3108 = vmul.f32 %v3063, %v2459
        %v3109 = vmul.f32 %v3068, %v2459
        %v3110 = vmul.f32 %v3073, %v2459
        %v3111 = vmul.f32 %v3078, %v2459
        %v3112 = vmul.f32 %v3083, %v2459
        %v3113 = vmul.f32 %v3088, %v2459
        %v3114 = vmul.f32 %v3093, %v2459
        %v3115 = vmul.f32 %v3098, %v2459
        %v3116 = vadd.f32 %v2988, %v3100
        %v3117 = vadd.f32 %v2989, %v3101
        %v3118 = vadd.f32 %v2990, %v3102
        %v3119 = vadd.f32 %v2991, %v3103
        %v3120 = vadd.f32 %v2992, %v3104
        %v3121 = vadd.f32 %v2993, %v3105
        %v3122 = vadd.f32 %v2994, %v3106
        %v3123 = vadd.f32 %v2995, %v3107
        %v3124 = vadd.f32 %v2996, %v3108
        %v3125 = vadd.f32 %v2997, %v3109
        %v3126 = vadd.f32 %v2998, %v3110
        %v3127 = vadd.f32 %v2999, %v3111
        %v3128 = vadd.f32 %v3000, %v3112
        %v3129 = vadd.f32 %v3001, %v3113
        %v3130 = vadd.f32 %v3002, %v3114
        %v3131 = vadd.f32 %v3003, %v3115
        %v3132 = vmul.f32 %v3116, %v2497
        %v3133 = vmul.f32 %v3117, %v2497
        %v3134 = vmul.f32 %v3118, %v2497
        %v3135 = vmul.f32 %v3119, %v2497
        %v3136 = vmul.f32 %v3120, %v2497
        %v3137 = vmul.f32 %v3121, %v2497
        %v3138 = vmul.f32 %v3122, %v2497
        %v3139 = vmul.f32 %v3123, %v2497
        %v3140 = vmul.f32 %v3124, %v2497
        %v3141 = vmul.f32 %v3125, %v2497
        %v3142 = vmul.f32 %v3126, %v2497
        %v3143 = vmul.f32 %v3127, %v2497
        %v3144 = vmul.f32 %v3128, %v2497
        %v3145 = vmul.f32 %v3129, %v2497
        %v3146 = vmul.f32 %v3130, %v2497
        %v3147 = vmul.f32 %v3131, %v2497
        %v3148 = vadd.f32 %v3132, %v2519
        %v3149 = vadd.f32 %v3133, %v2519
        %v3150 = vadd.f32 %v3134, %v2519
        %v3151 = vadd.f32 %v3135, %v2519
        %v3152 = vadd.f32 %v3136, %v2519
        %v3153 = vadd.f32 %v3137, %v2519
        %v3154 = vadd.f32 %v3138, %v2519
        %v3155 = vadd.f32 %v3139, %v2519
        %v3156 = vadd.f32 %v3140, %v2519
        %v3157 = vadd.f32 %v3141, %v2519
        %v3158 = vadd.f32 %v3142, %v2519
        %v3159 = vadd.f32 %v3143, %v2519
        %v3160 = vadd.f32 %v3144, %v2519
        %v3161 = vadd.f32 %v3145, %v2519
        %v3162 = vadd.f32 %v3146, %v2519
        %v3163 = vadd.f32 %v3147, %v2519
        %v3164 = vmax.f32 %v3148, 0.0
        %v3165 = vmax.f32 %v3149, 0.0
        %v3166 = vmax.f32 %v3150, 0.0
        %v3167 = vmax.f32 %v3151, 0.0
        %v3168 = vmax.f32 %v3152, 0.0
        %v3169 = vmax.f32 %v3153, 0.0
        %v3170 = vmax.f32 %v3154, 0.0
        %v3171 = vmax.f32 %v3155, 0.0
        %v3172 = vmax.f32 %v3156, 0.0
        %v3173 = vmax.f32 %v3157, 0.0
        %v3174 = vmax.f32 %v3158, 0.0
        %v3175 = vmax.f32 %v3159, 0.0
        %v3176 = vmax.f32 %v3160, 0.0
        %v3177 = vmax.f32 %v3161, 0.0
        %v3178 = vmax.f32 %v3162, 0.0
        %v3179 = vmax.f32 %v3163, 0.0
        %v3180 = vmax.f32 %v2537, %v3164
        %v3181 = vmax.f32 %v2538, %v3165
        %v3182 = vmax.f32 %v2539, %v3166
        %v3183 = vmax.f32 %v2540, %v3167
        %v3184 = vmax.f32 %v2541, %v3168
        %v3185 = vmax.f32 %v2542, %v3169
        %v3186 = vmax.f32 %v2543, %v3170
        %v3187 = vmax.f32 %v2544, %v3171
        %v3188 = vmax.f32 %v2545, %v3172
        %v3189 = vmax.f32 %v2546, %v3173
        %v3190 = vmax.f32 %v2547, %v3174
        %v3191 = vmax.f32 %v2548, %v3175
        %v3192 = vmax.f32 %v2549, %v3176
        %v3193 = vmax.f32 %v2550, %v3177
        %v3194 = vmax.f32 %v2551, %v3178
        %v3195 = vmax.f32 %v2552, %v3179
        %3196 = vst.msk [vmem:[#allocation4] sm:$0xff] %vm610, %v3180
        %3197 = vst.msk [vmem:[#allocation4 + $0x8] sm:$0xff] %vm610, %v3181
        %3198 = vst.msk [vmem:[#allocation4 + $0x10] sm:$0xff] %vm610, %v3182
        %3199 = vst.msk [vmem:[#allocation4 + $0x18] sm:$0xff] %vm610, %v3183
        %3200 = vst.msk [vmem:[#allocation4 + $0x20] sm:$0xff] %vm610, %v3184
        %3201 = vst.msk [vmem:[#allocation4 + $0x28] sm:$0xff] %vm610, %v3185
        %3202 = vst.msk [vmem:[#allocation4 + $0x30] sm:$0xff] %vm610, %v3186
        %3203 = vst.msk [vmem:[#allocation4 + $0x38] sm:$0xff] %vm610, %v3187
        %3204 = vst.msk [vmem:[#allocation4 + $0x40] sm:$0xff] %vm610, %v3188
        %3205 = vst.msk [vmem:[#allocation4 + $0x48] sm:$0xff] %vm610, %v3189
        %3206 = vst.msk [vmem:[#allocation4 + $0x50] sm:$0xff] %vm610, %v3190
        %3207 = vst.msk [vmem:[#allocation4 + $0x58] sm:$0xff] %vm610, %v3191
        %3208 = vst.msk [vmem:[#allocation4 + $0x60] sm:$0xff] %vm610, %v3192
        %3209 = vst.msk [vmem:[#allocation4 + $0x68] sm:$0xff] %vm610, %v3193
        %3210 = vst.msk [vmem:[#allocation4 + $0x70] sm:$0xff] %vm610, %v3194
        %3211 = vst.msk [vmem:[#allocation4 + $0x78] sm:$0xff] %vm610, %v3195
        %v3212 = vld [vmem:[#allocation4] ss:$2 sm:$0xff]
        %s3213 = scalar_lea.vmem [#allocation4], 16
        %v3214 = vld [vmem:[%s3213] ss:$2 sm:$0xff]
        %s3215 = scalar_lea.vmem [#allocation4], 32
        %v3216 = vld [vmem:[%s3215] ss:$2 sm:$0xff]
        %s3217 = scalar_lea.vmem [#allocation4], 48
        %v3218 = vld [vmem:[%s3217] ss:$2 sm:$0xff]
        %s3219 = scalar_lea.vmem [#allocation4], 64
        %v3220 = vld [vmem:[%s3219] ss:$2 sm:$0xff]
        %s3221 = scalar_lea.vmem [#allocation4], 80
        %v3222 = vld [vmem:[%s3221] ss:$2 sm:$0xff]
        %s3223 = scalar_lea.vmem [#allocation4], 96
        %v3224 = vld [vmem:[%s3223] ss:$2 sm:$0xff]
        %s3225 = scalar_lea.vmem [#allocation4], 112
        %v3226 = vld [vmem:[%s3225] ss:$2 sm:$0xff]
        %s3227 = scalar_lea.vmem [#allocation4], 1
        %v3228 = vld [vmem:[%s3227] ss:$2 sm:$0xff]
        %s3229 = scalar_lea.vmem [#allocation4], 17
        %v3230 = vld [vmem:[%s3229] ss:$2 sm:$0xff]
        %s3231 = scalar_lea.vmem [#allocation4], 33
        %v3232 = vld [vmem:[%s3231] ss:$2 sm:$0xff]
        %s3233 = scalar_lea.vmem [#allocation4], 49
        %v3234 = vld [vmem:[%s3233] ss:$2 sm:$0xff]
        %s3235 = scalar_lea.vmem [#allocation4], 65
        %v3236 = vld [vmem:[%s3235] ss:$2 sm:$0xff]
        %s3237 = scalar_lea.vmem [#allocation4], 81
        %v3238 = vld [vmem:[%s3237] ss:$2 sm:$0xff]
        %s3239 = scalar_lea.vmem [#allocation4], 97
        %v3240 = vld [vmem:[%s3239] ss:$2 sm:$0xff]
        %s3241 = scalar_lea.vmem [#allocation4], 113
        %v3242 = vld [vmem:[%s3241] ss:$2 sm:$0xff]
        %v3243 = vmax.f32 %v3212, %v3228
        %v3244 = vmax.f32 %v3214, %v3230
        %v3245 = vmax.f32 %v3216, %v3232
        %v3246 = vmax.f32 %v3218, %v3234
        %v3247 = vmax.f32 %v3220, %v3236
        %v3248 = vmax.f32 %v3222, %v3238
        %v3249 = vmax.f32 %v3224, %v3240
        %v3250 = vmax.f32 %v3226, %v3242
        %s3251 = sadd.s32 %s1256, 1
        %s3252 = smul.u32 %s3251, 80
        %s3253 = scalar_lea.vmem [#allocation3], %s3252
        %3254 = vst.msk [vmem:[%s3253 + $0x8] sm:$0xff] %vm610, %v3243
        %3255 = vst.msk [vmem:[%s3253 + $0x10] sm:$0xff] %vm610, %v3244
        %3256 = vst.msk [vmem:[%s3253 + $0x18] sm:$0xff] %vm610, %v3245
        %3257 = vst.msk [vmem:[%s3253 + $0x20] sm:$0xff] %vm610, %v3246
        %3258 = vst.msk [vmem:[%s3253 + $0x28] sm:$0xff] %vm610, %v3247
        %3259 = vst.msk [vmem:[%s3253 + $0x30] sm:$0xff] %vm610, %v3248
        %3260 = vst.msk [vmem:[%s3253 + $0x38] sm:$0xff] %vm610, %v3249
        %3261 = vst.msk [vmem:[%s3253 + $0x40] sm:$0xff] %vm610, %v3250
      $region53: #{audio_cnn_forward.2} parent=47 // loop_footer
        %s1260 = sadd.s32 1, %s1256
      $region54: #{audio_cnn_forward.2} parent=47 // loop_footer_branch
        %1255 = sbr.rel target = $region50
      $region55: #{audio_cnn_forward.2} parent=47 // loop_exit
        _
      loop: start=0, step=1, limit=4
      $region56: #{audio_cnn_forward.2} parent=47 // loop_pre_header
        _
      $region57: #{audio_cnn_forward.2} parent=47 // loop_header
        %s3263 = sphi 0, %s3267
        %p3264 = scmp.ge.s32.totalorder %s3263, 4
      $region58: #{audio_cnn_forward.2} parent=47 // loop_header_branch
        %3266 = sbr.rel (%p3264) target = $region62
      $region59: #{audio_cnn_forward.2} parent=47 // loop_body
        %s3268 = smul.u32 %s3263, 2
        %s3269 = smul.u32 %s3268, 80
        %s3270 = scalar_lea.vmem [#allocation3], %s3269
        %v3271 = vld [vmem:[%s3270 + $0x7] sm:$0xff]
        %v3272 = vld [vmem:[%s3270 + $0xf] sm:$0xff]
        %v3273 = vld [vmem:[%s3270 + $0x17] sm:$0xff]
        %v3274 = vld [vmem:[%s3270 + $0x1f] sm:$0xff]
        %v3275 = vld [vmem:[%s3270 + $0x27] sm:$0xff]
        %v3276 = vld [vmem:[%s3270 + $0x2f] sm:$0xff]
        %v3277 = vld [vmem:[%s3270 + $0x37] sm:$0xff]
        %v3278 = vld [vmem:[%s3270 + $0x3f] sm:$0xff]
        %v3279 = vpack.c.bf16 %v3272, %v3271
        %v3280 = vpack.c.bf16 %v3274, %v3273
        %v3281 = vpack.c.bf16 %v3276, %v3275
        %v3282 = vpack.c.bf16 %v3278, %v3277
        %v3283 = vld [vmem:[%s4] sm:$0xf]
        %v3284 = vld [vmem:[%s4 + $0x4] sm:$0xf]
        %v3285 = vld [vmem:[%s4 + $0x8] sm:$0xf]
        %v3286 = vld [vmem:[%s4 + $0xc] sm:$0xf]
        %v3287 = vld [vmem:[%s3270 + $0x8] sm:$0xff]
        %v3288 = vld [vmem:[%s3270 + $0x10] sm:$0xff]
        %v3289 = vld [vmem:[%s3270 + $0x18] sm:$0xff]
        %v3290 = vld [vmem:[%s3270 + $0x20] sm:$0xff]
        %v3291 = vld [vmem:[%s3270 + $0x28] sm:$0xff]
        %v3292 = vld [vmem:[%s3270 + $0x30] sm:$0xff]
        %v3293 = vld [vmem:[%s3270 + $0x38] sm:$0xff]
        %v3294 = vld [vmem:[%s3270 + $0x40] sm:$0xff]
        %v3295 = vpack.c.bf16 %v3288, %v3287
        %v3296 = vpack.c.bf16 %v3290, %v3289
        %v3297 = vpack.c.bf16 %v3292, %v3291
        %v3298 = vpack.c.bf16 %v3294, %v3293
        %s3299 = scalar_lea.vmem %s4, 16
        %v3300 = vld [vmem:[%s3299] sm:$0xf]
        %v3301 = vld [vmem:[%s3299 + $0x4] sm:$0xf]
        %v3302 = vld [vmem:[%s3299 + $0x8] sm:$0xf]
        %v3303 = vld [vmem:[%s3299 + $0xc] sm:$0xf]
        %v3308 = vunpack.c.l.b16 %v3300
        %v3309 = vunpack.c.l.b16 %v3301
        %v3310 = vunpack.c.l.b16 %v3302
        %v3311 = vunpack.c.l.b16 %v3303
        %v3312 = vpack.c.b16 %v3309, %v3308
        %v3313 = vpack.c.b16 %v3311, %v3310
        %v3317 = vsel %vm610, %v3295, 0
        %v3320 = vsel %vm610, %v3296, 0
        %v3323 = vsel %vm610, %v3297, 0
        %v3326 = vsel %vm610, %v3298, 0
        %3328 = vmatprep.subr.bf16.mxu0 0
        %3329 = vmatpush1.bf16.msra.mxu0 %v3312
        %3330 = vmatprep.subr.bf16.mxu0 0
        %3331 = vmatpush1.bf16.msra.mxu0 %v3313
        %3332 = vmatprep.subr.bf16.mxu0 0
        %3333 = vmatpush1.bf16.msra.mxu0 0
        %3334 = vmatprep.subr.bf16.mxu0 0
        %3335 = vmatpush1.bf16.msra.mxu0 0
        %3336 = vmatprep.subr.bf16.mxu0 0
        %3337 = vmatpush1.bf16.msra.mxu0 0
        %3338 = vmatprep.subr.bf16.mxu0 0
        %3339 = vmatpush1.bf16.msra.mxu0 0
        %3340 = vmatprep.subr.bf16.mxu0 0
        %3341 = vmatpush1.bf16.msra.mxu0 0
        %3342 = vmatprep.subr.bf16.mxu0 0
        %3343 = vmatpush1.bf16.msra.mxu0 0
        %3344 = vmatprep.subr.bf16.mxu0 0
        %3345 = vmatpush1.bf16.msra.mxu0 0
        %3346 = vmatprep.subr.bf16.mxu0 0
        %3347 = vmatpush1.bf16.msra.mxu0 0
        %3348 = vmatprep.subr.bf16.mxu0 0
        %3349 = vmatpush1.bf16.msra.mxu0 0
        %3350 = vmatprep.subr.bf16.mxu0 0
        %3351 = vmatpush1.bf16.msra.mxu0 0
        %3352 = vmatprep.subr.bf16.mxu0 0
        %3353 = vmatpush1.bf16.msra.mxu0 0
        %3354 = vmatprep.subr.bf16.mxu0 0
        %3355 = vmatpush1.bf16.msra.mxu0 0
        %3356 = vmatprep.subr.bf16.mxu0 0
        %3357 = vmatpush1.bf16.msra.mxu0 0
        %3358 = vmatprep.subr.bf16.mxu0 0
        %3359 = vmatpush1.bf16.msra.mxu0 0
        %3360 = vmatprep.mubr.bf16.mxu0 0
        %3361 = vmatmul.mubr.bf16.gmra.mrb[0].mxu0 %v3317
        %v3362 = vpop.f32.mrb[0].mxu0
        %v3363 = vadd.f32 0.0, %v3362
        %v3364 = vpop.f32.mrb[0].mxu0
        %v3365 = vpop.f32.mrb[0].mxu0
        %v3366 = vadd.f32 0.0, %v3365
        %v3367 = vpop.f32.mrb[0].mxu0
        %3368 = vmatprep.mubr.bf16.mxu0 0
        %3369 = vmatmul.mubr.bf16.gmra.mrb[0].mxu0 %v3320
        %v3370 = vpop.f32.mrb[0].mxu0
        %v3371 = vadd.f32 0.0, %v3370
        %v3372 = vpop.f32.mrb[0].mxu0
        %v3373 = vpop.f32.mrb[0].mxu0
        %v3374 = vadd.f32 0.0, %v3373
        %v3375 = vpop.f32.mrb[0].mxu0
        %3376 = vmatprep.mubr.bf16.mxu0 0
        %3377 = vmatmul.mubr.bf16.gmra.mrb[0].mxu0 %v3323
        %v3378 = vpop.f32.mrb[0].mxu0
        %v3379 = vadd.f32 0.0, %v3378
        %v3380 = vpop.f32.mrb[0].mxu0
        %v3381 = vpop.f32.mrb[0].mxu0
        %v3382 = vadd.f32 0.0, %v3381
        %v3383 = vpop.f32.mrb[0].mxu0
        %3384 = vmatprep.mubr.bf16.mxu0 0
        %3385 = vmatmul.mubr.bf16.gmra.mrb[0].mxu0 %v3326
        %v3386 = vpop.f32.mrb[0].mxu0
        %v3387 = vadd.f32 0.0, %v3386
        %v3388 = vpop.f32.mrb[0].mxu0
        %v3389 = vpop.f32.mrb[0].mxu0
        %v3390 = vadd.f32 0.0, %v3389
        %v3391 = vpop.f32.mrb[0].mxu0
        %3392 = vdwg.mxu0
        %v3397 = vunpack.c.l.b16 %v3283
        %v3398 = vunpack.c.l.b16 %v3284
        %v3399 = vunpack.c.l.b16 %v3285
        %v3400 = vunpack.c.l.b16 %v3286
        %v3401 = vpack.c.b16 %v3398, %v3397
        %v3402 = vpack.c.b16 %v3400, %v3399
        %v3406 = vsel %vm610, %v3279, 0
        %v3409 = vsel %vm610, %v3280, 0
        %v3412 = vsel %vm610, %v3281, 0
        %v3415 = vsel %vm610, %v3282, 0
        %3417 = vmatprep.subr.bf16.mxu0 0
        %3418 = vmatpush1.bf16.msra.mxu0 %v3401
        %3419 = vmatprep.subr.bf16.mxu0 0
        %3420 = vmatpush1.bf16.msra.mxu0 %v3402
        %3421 = vmatprep.subr.bf16.mxu0 0
        %3422 = vmatpush1.bf16.msra.mxu0 0
        %3423 = vmatprep.subr.bf16.mxu0 0
        %3424 = vmatpush1.bf16.msra.mxu0 0
        %3425 = vmatprep.subr.bf16.mxu0 0
        %3426 = vmatpush1.bf16.msra.mxu0 0
        %3427 = vmatprep.subr.bf16.mxu0 0
        %3428 = vmatpush1.bf16.msra.mxu0 0
        %3429 = vmatprep.subr.bf16.mxu0 0
        %3430 = vmatpush1.bf16.msra.mxu0 0
        %3431 = vmatprep.subr.bf16.mxu0 0
        %3432 = vmatpush1.bf16.msra.mxu0 0
        %3433 = vmatprep.subr.bf16.mxu0 0
        %3434 = vmatpush1.bf16.msra.mxu0 0
        %3435 = vmatprep.subr.bf16.mxu0 0
        %3436 = vmatpush1.bf16.msra.mxu0 0
        %3437 = vmatprep.subr.bf16.mxu0 0
        %3438 = vmatpush1.bf16.msra.mxu0 0
        %3439 = vmatprep.subr.bf16.mxu0 0
        %3440 = vmatpush1.bf16.msra.mxu0 0
        %3441 = vmatprep.subr.bf16.mxu0 0
        %3442 = vmatpush1.bf16.msra.mxu0 0
        %3443 = vmatprep.subr.bf16.mxu0 0
        %3444 = vmatpush1.bf16.msra.mxu0 0
        %3445 = vmatprep.subr.bf16.mxu0 0
        %3446 = vmatpush1.bf16.msra.mxu0 0
        %3447 = vmatprep.subr.bf16.mxu0 0
        %3448 = vmatpush1.bf16.msra.mxu0 0
        %3449 = vmatprep.mubr.bf16.mxu0 0
        %3450 = vmatmul.mubr.bf16.gmra.mrb[0].mxu0 %v3406
        %v3451 = vpop.f32.mrb[0].mxu0
        %v3452 = vadd.f32 %v3363, %v3451
        %v3453 = vpop.f32.mrb[0].mxu0
        %v3454 = vpop.f32.mrb[0].mxu0
        %v3455 = vadd.f32 %v3366, %v3454
        %v3456 = vpop.f32.mrb[0].mxu0
        %3457 = vmatprep.mubr.bf16.mxu0 0
        %3458 = vmatmul.mubr.bf16.gmra.mrb[0].mxu0 %v3409
        %v3459 = vpop.f32.mrb[0].mxu0
        %v3460 = vadd.f32 %v3371, %v3459
        %v3461 = vpop.f32.mrb[0].mxu0
        %v3462 = vpop.f32.mrb[0].mxu0
        %v3463 = vadd.f32 %v3374, %v3462
        %v3464 = vpop.f32.mrb[0].mxu0
        %3465 = vmatprep.mubr.bf16.mxu0 0
        %3466 = vmatmul.mubr.bf16.gmra.mrb[0].mxu0 %v3412
        %v3467 = vpop.f32.mrb[0].mxu0
        %v3468 = vadd.f32 %v3379, %v3467
        %v3469 = vpop.f32.mrb[0].mxu0
        %v3470 = vpop.f32.mrb[0].mxu0
        %v3471 = vadd.f32 %v3382, %v3470
        %v3472 = vpop.f32.mrb[0].mxu0
        %3473 = vmatprep.mubr.bf16.mxu0 0
        %3474 = vmatmul.mubr.bf16.gmra.mrb[0].mxu0 %v3415
        %v3475 = vpop.f32.mrb[0].mxu0
        %v3476 = vadd.f32 %v3387, %v3475
        %v3477 = vpop.f32.mrb[0].mxu0
        %v3478 = vpop.f32.mrb[0].mxu0
        %v3479 = vadd.f32 %v3390, %v3478
        %v3480 = vpop.f32.mrb[0].mxu0
        %3481 = vdwg.mxu0
        %v3482 = vld [vmem:[%s3270 + $0x9] sm:$0xff]
        %v3483 = vld [vmem:[%s3270 + $0x11] sm:$0xff]
        %v3484 = vld [vmem:[%s3270 + $0x19] sm:$0xff]
        %v3485 = vld [vmem:[%s3270 + $0x21] sm:$0xff]
        %v3486 = vld [vmem:[%s3270 + $0x29] sm:$0xff]
        %v3487 = vld [vmem:[%s3270 + $0x31] sm:$0xff]
        %v3488 = vld [vmem:[%s3270 + $0x39] sm:$0xff]
        %v3489 = vld [vmem:[%s3270 + $0x41] sm:$0xff]
        %v3490 = vpack.c.bf16 %v3483, %v3482
        %v3491 = vpack.c.bf16 %v3485, %v3484
        %v3492 = vpack.c.bf16 %v3487, %v3486
        %v3493 = vpack.c.bf16 %v3489, %v3488
        %s3494 = scalar_lea.vmem %s4, 32
        %v3495 = vld [vmem:[%s3494] sm:$0xf]
        %v3496 = vld [vmem:[%s3494 + $0x4] sm:$0xf]
        %v3497 = vld [vmem:[%s3494 + $0x8] sm:$0xf]
        %v3498 = vld [vmem:[%s3494 + $0xc] sm:$0xf]
        %v3503 = vunpack.c.l.b16 %v3495
        %v3504 = vunpack.c.l.b16 %v3496
        %v3505 = vunpack.c.l.b16 %v3497
        %v3506 = vunpack.c.l.b16 %v3498
        %v3507 = vpack.c.b16 %v3504, %v3503
        %v3508 = vpack.c.b16 %v3506, %v3505
        %v3512 = vsel %vm610, %v3490, 0
        %v3515 = vsel %vm610, %v3491, 0
        %v3518 = vsel %vm610, %v3492, 0
        %v3521 = vsel %vm610, %v3493, 0
        %3523 = vmatprep.subr.bf16.mxu0 0
        %3524 = vmatpush1.bf16.msra.mxu0 %v3507
        %3525 = vmatprep.subr.bf16.mxu0 0
        %3526 = vmatpush1.bf16.msra.mxu0 %v3508
        %3527 = vmatprep.subr.bf16.mxu0 0
        %3528 = vmatpush1.bf16.msra.mxu0 0
        %3529 = vmatprep.subr.bf16.mxu0 0
        %3530 = vmatpush1.bf16.msra.mxu0 0
        %3531 = vmatprep.subr.bf16.mxu0 0
        %3532 = vmatpush1.bf16.msra.mxu0 0
        %3533 = vmatprep.subr.bf16.mxu0 0
        %3534 = vmatpush1.bf16.msra.mxu0 0
        %3535 = vmatprep.subr.bf16.mxu0 0
        %3536 = vmatpush1.bf16.msra.mxu0 0
        %3537 = vmatprep.subr.bf16.mxu0 0
        %3538 = vmatpush1.bf16.msra.mxu0 0
        %3539 = vmatprep.subr.bf16.mxu0 0
        %3540 = vmatpush1.bf16.msra.mxu0 0
        %3541 = vmatprep.subr.bf16.mxu0 0
        %3542 = vmatpush1.bf16.msra.mxu0 0
        %3543 = vmatprep.subr.bf16.mxu0 0
        %3544 = vmatpush1.bf16.msra.mxu0 0
        %3545 = vmatprep.subr.bf16.mxu0 0
        %3546 = vmatpush1.bf16.msra.mxu0 0
        %3547 = vmatprep.subr.bf16.mxu0 0
        %3548 = vmatpush1.bf16.msra.mxu0 0
        %3549 = vmatprep.subr.bf16.mxu0 0
        %3550 = vmatpush1.bf16.msra.mxu0 0
        %3551 = vmatprep.subr.bf16.mxu0 0
        %3552 = vmatpush1.bf16.msra.mxu0 0
        %3553 = vmatprep.subr.bf16.mxu0 0
        %3554 = vmatpush1.bf16.msra.mxu0 0
        %3555 = vmatprep.mubr.bf16.mxu0 0
        %3556 = vmatmul.mubr.bf16.gmra.mrb[0].mxu0 %v3512
        %v3557 = vpop.f32.mrb[0].mxu0
        %v3558 = vadd.f32 0.0, %v3557
        %v3559 = vpop.f32.mrb[0].mxu0
        %v3560 = vpop.f32.mrb[0].mxu0
        %v3561 = vadd.f32 0.0, %v3560
        %v3562 = vpop.f32.mrb[0].mxu0
        %3563 = vmatprep.mubr.bf16.mxu0 0
        %3564 = vmatmul.mubr.bf16.gmra.mrb[0].mxu0 %v3515
        %v3565 = vpop.f32.mrb[0].mxu0
        %v3566 = vadd.f32 0.0, %v3565
        %v3567 = vpop.f32.mrb[0].mxu0
        %v3568 = vpop.f32.mrb[0].mxu0
        %v3569 = vadd.f32 0.0, %v3568
        %v3570 = vpop.f32.mrb[0].mxu0
        %3571 = vmatprep.mubr.bf16.mxu0 0
        %3572 = vmatmul.mubr.bf16.gmra.mrb[0].mxu0 %v3518
        %v3573 = vpop.f32.mrb[0].mxu0
        %v3574 = vadd.f32 0.0, %v3573
        %v3575 = vpop.f32.mrb[0].mxu0
        %v3576 = vpop.f32.mrb[0].mxu0
        %v3577 = vadd.f32 0.0, %v3576
        %v3578 = vpop.f32.mrb[0].mxu0
        %3579 = vmatprep.mubr.bf16.mxu0 0
        %3580 = vmatmul.mubr.bf16.gmra.mrb[0].mxu0 %v3521
        %v3581 = vpop.f32.mrb[0].mxu0
        %v3582 = vadd.f32 0.0, %v3581
        %v3583 = vpop.f32.mrb[0].mxu0
        %v3584 = vpop.f32.mrb[0].mxu0
        %v3585 = vadd.f32 0.0, %v3584
        %v3586 = vpop.f32.mrb[0].mxu0
        %3587 = vdwg.mxu0
        %v3588 = vadd.f32 %v3452, %v3558
        %v3589 = vadd.f32 %v3455, %v3561
        %v3590 = vadd.f32 %v3460, %v3566
        %v3591 = vadd.f32 %v3463, %v3569
        %v3592 = vadd.f32 %v3468, %v3574
        %v3593 = vadd.f32 %v3471, %v3577
        %v3594 = vadd.f32 %v3476, %v3582
        %v3595 = vadd.f32 %v3479, %v3585
        %s3596 = sadd.s32 %s3268, 1
        %s3597 = smul.u32 %s3596, 80
        %s3598 = scalar_lea.vmem [#allocation3], %s3597
        %v3599 = vld [vmem:[%s3598 + $0x7] sm:$0xff]
        %v3600 = vld [vmem:[%s3598 + $0xf] sm:$0xff]
        %v3601 = vld [vmem:[%s3598 + $0x17] sm:$0xff]
        %v3602 = vld [vmem:[%s3598 + $0x1f] sm:$0xff]
        %v3603 = vld [vmem:[%s3598 + $0x27] sm:$0xff]
        %v3604 = vld [vmem:[%s3598 + $0x2f] sm:$0xff]
        %v3605 = vld [vmem:[%s3598 + $0x37] sm:$0xff]
        %v3606 = vld [vmem:[%s3598 + $0x3f] sm:$0xff]
        %v3607 = vpack.c.bf16 %v3600, %v3599
        %v3608 = vpack.c.bf16 %v3602, %v3601
        %v3609 = vpack.c.bf16 %v3604, %v3603
        %v3610 = vpack.c.bf16 %v3606, %v3605
        %s3611 = scalar_lea.vmem %s4, 48
        %v3612 = vld [vmem:[%s3611] sm:$0xf]
        %v3613 = vld [vmem:[%s3611 + $0x4] sm:$0xf]
        %v3614 = vld [vmem:[%s3611 + $0x8] sm:$0xf]
        %v3615 = vld [vmem:[%s3611 + $0xc] sm:$0xf]
        %v3620 = vunpack.c.l.b16 %v3612
        %v3621 = vunpack.c.l.b16 %v3613
        %v3622 = vunpack.c.l.b16 %v3614
        %v3623 = vunpack.c.l.b16 %v3615
        %v3624 = vpack.c.b16 %v3621, %v3620
        %v3625 = vpack.c.b16 %v3623, %v3622
        %v3629 = vsel %vm610, %v3607, 0
        %v3632 = vsel %vm610, %v3608, 0
        %v3635 = vsel %vm610, %v3609, 0
        %v3638 = vsel %vm610, %v3610, 0
        %3640 = vmatprep.subr.bf16.mxu0 0
        %3641 = vmatpush1.bf16.msra.mxu0 %v3624
        %3642 = vmatprep.subr.bf16.mxu0 0
        %3643 = vmatpush1.bf16.msra.mxu0 %v3625
        %3644 = vmatprep.subr.bf16.mxu0 0
        %3645 = vmatpush1.bf16.msra.mxu0 0
        %3646 = vmatprep.subr.bf16.mxu0 0
        %3647 = vmatpush1.bf16.msra.mxu0 0
        %3648 = vmatprep.subr.bf16.mxu0 0
        %3649 = vmatpush1.bf16.msra.mxu0 0
        %3650 = vmatprep.subr.bf16.mxu0 0
        %3651 = vmatpush1.bf16.msra.mxu0 0
        %3652 = vmatprep.subr.bf16.mxu0 0
        %3653 = vmatpush1.bf16.msra.mxu0 0
        %3654 = vmatprep.subr.bf16.mxu0 0
        %3655 = vmatpush1.bf16.msra.mxu0 0
        %3656 = vmatprep.subr.bf16.mxu0 0
        %3657 = vmatpush1.bf16.msra.mxu0 0
        %3658 = vmatprep.subr.bf16.mxu0 0
        %3659 = vmatpush1.bf16.msra.mxu0 0
        %3660 = vmatprep.subr.bf16.mxu0 0
        %3661 = vmatpush1.bf16.msra.mxu0 0
        %3662 = vmatprep.subr.bf16.mxu0 0
        %3663 = vmatpush1.bf16.msra.mxu0 0
        %3664 = vmatprep.subr.bf16.mxu0 0
        %3665 = vmatpush1.bf16.msra.mxu0 0
        %3666 = vmatprep.subr.bf16.mxu0 0
        %3667 = vmatpush1.bf16.msra.mxu0 0
        %3668 = vmatprep.subr.bf16.mxu0 0
        %3669 = vmatpush1.bf16.msra.mxu0 0
        %3670 = vmatprep.subr.bf16.mxu0 0
        %3671 = vmatpush1.bf16.msra.mxu0 0
        %3672 = vmatprep.mubr.bf16.mxu0 0
        %3673 = vmatmul.mubr.bf16.gmra.mrb[0].mxu0 %v3629
        %v3674 = vpop.f32.mrb[0].mxu0
        %v3675 = vadd.f32 0.0, %v3674
        %v3676 = vpop.f32.mrb[0].mxu0
        %v3677 = vpop.f32.mrb[0].mxu0
        %v3678 = vadd.f32 0.0, %v3677
        %v3679 = vpop.f32.mrb[0].mxu0
        %3680 = vmatprep.mubr.bf16.mxu0 0
        %3681 = vmatmul.mubr.bf16.gmra.mrb[0].mxu0 %v3632
        %v3682 = vpop.f32.mrb[0].mxu0
        %v3683 = vadd.f32 0.0, %v3682
        %v3684 = vpop.f32.mrb[0].mxu0
        %v3685 = vpop.f32.mrb[0].mxu0
        %v3686 = vadd.f32 0.0, %v3685
        %v3687 = vpop.f32.mrb[0].mxu0
        %3688 = vmatprep.mubr.bf16.mxu0 0
        %3689 = vmatmul.mubr.bf16.gmra.mrb[0].mxu0 %v3635
        %v3690 = vpop.f32.mrb[0].mxu0
        %v3691 = vadd.f32 0.0, %v3690
        %v3692 = vpop.f32.mrb[0].mxu0
        %v3693 = vpop.f32.mrb[0].mxu0
        %v3694 = vadd.f32 0.0, %v3693
        %v3695 = vpop.f32.mrb[0].mxu0
        %3696 = vmatprep.mubr.bf16.mxu0 0
        %3697 = vmatmul.mubr.bf16.gmra.mrb[0].mxu0 %v3638
        %v3698 = vpop.f32.mrb[0].mxu0
        %v3699 = vadd.f32 0.0, %v3698
        %v3700 = vpop.f32.mrb[0].mxu0
        %v3701 = vpop.f32.mrb[0].mxu0
        %v3702 = vadd.f32 0.0, %v3701
        %v3703 = vpop.f32.mrb[0].mxu0
        %3704 = vdwg.mxu0
        %v3705 = vadd.f32 %v3588, %v3675
        %v3706 = vadd.f32 %v3589, %v3678
        %v3707 = vadd.f32 %v3590, %v3683
        %v3708 = vadd.f32 %v3591, %v3686
        %v3709 = vadd.f32 %v3592, %v3691
        %v3710 = vadd.f32 %v3593, %v3694
        %v3711 = vadd.f32 %v3594, %v3699
        %v3712 = vadd.f32 %v3595, %v3702
        %v3713 = vld [vmem:[%s3598 + $0x8] sm:$0xff]
        %v3714 = vld [vmem:[%s3598 + $0x10] sm:$0xff]
        %v3715 = vld [vmem:[%s3598 + $0x18] sm:$0xff]
        %v3716 = vld [vmem:[%s3598 + $0x20] sm:$0xff]
        %v3717 = vld [vmem:[%s3598 + $0x28] sm:$0xff]
        %v3718 = vld [vmem:[%s3598 + $0x30] sm:$0xff]
        %v3719 = vld [vmem:[%s3598 + $0x38] sm:$0xff]
        %v3720 = vld [vmem:[%s3598 + $0x40] sm:$0xff]
        %v3721 = vpack.c.bf16 %v3714, %v3713
        %v3722 = vpack.c.bf16 %v3716, %v3715
        %v3723 = vpack.c.bf16 %v3718, %v3717
        %v3724 = vpack.c.bf16 %v3720, %v3719
        %s3725 = scalar_lea.vmem %s4, 64
        %v3726 = vld [vmem:[%s3725] sm:$0xf]
        %v3727 = vld [vmem:[%s3725 + $0x4] sm:$0xf]
        %v3728 = vld [vmem:[%s3725 + $0x8] sm:$0xf]
        %v3729 = vld [vmem:[%s3725 + $0xc] sm:$0xf]
        %v3734 = vunpack.c.l.b16 %v3726
        %v3735 = vunpack.c.l.b16 %v3727
        %v3736 = vunpack.c.l.b16 %v3728
        %v3737 = vunpack.c.l.b16 %v3729
        %v3738 = vpack.c.b16 %v3735, %v3734
        %v3739 = vpack.c.b16 %v3737, %v3736
        %v3743 = vsel %vm610, %v3721, 0
        %v3746 = vsel %vm610, %v3722, 0
        %v3749 = vsel %vm610, %v3723, 0
        %v3752 = vsel %vm610, %v3724, 0
        %3754 = vmatprep.subr.bf16.mxu0 0
        %3755 = vmatpush1.bf16.msra.mxu0 %v3738
        %3756 = vmatprep.subr.bf16.mxu0 0
        %3757 = vmatpush1.bf16.msra.mxu0 %v3739
        %3758 = vmatprep.subr.bf16.mxu0 0
        %3759 = vmatpush1.bf16.msra.mxu0 0
        %3760 = vmatprep.subr.bf16.mxu0 0
        %3761 = vmatpush1.bf16.msra.mxu0 0
        %3762 = vmatprep.subr.bf16.mxu0 0
        %3763 = vmatpush1.bf16.msra.mxu0 0
        %3764 = vmatprep.subr.bf16.mxu0 0
        %3765 = vmatpush1.bf16.msra.mxu0 0
        %3766 = vmatprep.subr.bf16.mxu0 0
        %3767 = vmatpush1.bf16.msra.mxu0 0
        %3768 = vmatprep.subr.bf16.mxu0 0
        %3769 = vmatpush1.bf16.msra.mxu0 0
        %3770 = vmatprep.subr.bf16.mxu0 0
        %3771 = vmatpush1.bf16.msra.mxu0 0
        %3772 = vmatprep.subr.bf16.mxu0 0
        %3773 = vmatpush1.bf16.msra.mxu0 0
        %3774 = vmatprep.subr.bf16.mxu0 0
        %3775 = vmatpush1.bf16.msra.mxu0 0
        %3776 = vmatprep.subr.bf16.mxu0 0
        %3777 = vmatpush1.bf16.msra.mxu0 0
        %3778 = vmatprep.subr.bf16.mxu0 0
        %3779 = vmatpush1.bf16.msra.mxu0 0
        %3780 = vmatprep.subr.bf16.mxu0 0
        %3781 = vmatpush1.bf16.msra.mxu0 0
        %3782 = vmatprep.subr.bf16.mxu0 0
        %3783 = vmatpush1.bf16.msra.mxu0 0
        %3784 = vmatprep.subr.bf16.mxu0 0
        %3785 = vmatpush1.bf16.msra.mxu0 0
        %3786 = vmatprep.mubr.bf16.mxu0 0
        %3787 = vmatmul.mubr.bf16.gmra.mrb[0].mxu0 %v3743
        %v3788 = vpop.f32.mrb[0].mxu0
        %v3789 = vadd.f32 0.0, %v3788
        %v3790 = vpop.f32.mrb[0].mxu0
        %v3791 = vpop.f32.mrb[0].mxu0
        %v3792 = vadd.f32 0.0, %v3791
        %v3793 = vpop.f32.mrb[0].mxu0
        %3794 = vmatprep.mubr.bf16.mxu0 0
        %3795 = vmatmul.mubr.bf16.gmra.mrb[0].mxu0 %v3746
        %v3796 = vpop.f32.mrb[0].mxu0
        %v3797 = vadd.f32 0.0, %v3796
        %v3798 = vpop.f32.mrb[0].mxu0
        %v3799 = vpop.f32.mrb[0].mxu0
        %v3800 = vadd.f32 0.0, %v3799
        %v3801 = vpop.f32.mrb[0].mxu0
        %3802 = vmatprep.mubr.bf16.mxu0 0
        %3803 = vmatmul.mubr.bf16.gmra.mrb[0].mxu0 %v3749
        %v3804 = vpop.f32.mrb[0].mxu0
        %v3805 = vadd.f32 0.0, %v3804
        %v3806 = vpop.f32.mrb[0].mxu0
        %v3807 = vpop.f32.mrb[0].mxu0
        %v3808 = vadd.f32 0.0, %v3807
        %v3809 = vpop.f32.mrb[0].mxu0
        %3810 = vmatprep.mubr.bf16.mxu0 0
        %3811 = vmatmul.mubr.bf16.gmra.mrb[0].mxu0 %v3752
        %v3812 = vpop.f32.mrb[0].mxu0
        %v3813 = vadd.f32 0.0, %v3812
        %v3814 = vpop.f32.mrb[0].mxu0
        %v3815 = vpop.f32.mrb[0].mxu0
        %v3816 = vadd.f32 0.0, %v3815
        %v3817 = vpop.f32.mrb[0].mxu0
        %3818 = vdwg.mxu0
        %v3819 = vadd.f32 %v3705, %v3789
        %v3820 = vadd.f32 %v3706, %v3792
        %v3821 = vadd.f32 %v3707, %v3797
        %v3822 = vadd.f32 %v3708, %v3800
        %v3823 = vadd.f32 %v3709, %v3805
        %v3824 = vadd.f32 %v3710, %v3808
        %v3825 = vadd.f32 %v3711, %v3813
        %v3826 = vadd.f32 %v3712, %v3816
        %v3827 = vld [vmem:[%s3598 + $0x9] sm:$0xff]
        %v3828 = vld [vmem:[%s3598 + $0x11] sm:$0xff]
        %v3829 = vld [vmem:[%s3598 + $0x19] sm:$0xff]
        %v3830 = vld [vmem:[%s3598 + $0x21] sm:$0xff]
        %v3831 = vld [vmem:[%s3598 + $0x29] sm:$0xff]
        %v3832 = vld [vmem:[%s3598 + $0x31] sm:$0xff]
        %v3833 = vld [vmem:[%s3598 + $0x39] sm:$0xff]
        %v3834 = vld [vmem:[%s3598 + $0x41] sm:$0xff]
        %v3835 = vpack.c.bf16 %v3828, %v3827
        %v3836 = vpack.c.bf16 %v3830, %v3829
        %v3837 = vpack.c.bf16 %v3832, %v3831
        %v3838 = vpack.c.bf16 %v3834, %v3833
        %s3839 = scalar_lea.vmem %s4, 80
        %v3840 = vld [vmem:[%s3839] sm:$0xf]
        %v3841 = vld [vmem:[%s3839 + $0x4] sm:$0xf]
        %v3842 = vld [vmem:[%s3839 + $0x8] sm:$0xf]
        %v3843 = vld [vmem:[%s3839 + $0xc] sm:$0xf]
        %v3848 = vunpack.c.l.b16 %v3840
        %v3849 = vunpack.c.l.b16 %v3841
        %v3850 = vunpack.c.l.b16 %v3842
        %v3851 = vunpack.c.l.b16 %v3843
        %v3852 = vpack.c.b16 %v3849, %v3848
        %v3853 = vpack.c.b16 %v3851, %v3850
        %v3857 = vsel %vm610, %v3835, 0
        %v3860 = vsel %vm610, %v3836, 0
        %v3863 = vsel %vm610, %v3837, 0
        %v3866 = vsel %vm610, %v3838, 0
        %3868 = vmatprep.subr.bf16.mxu0 0
        %3869 = vmatpush1.bf16.msra.mxu0 %v3852
        %3870 = vmatprep.subr.bf16.mxu0 0
        %3871 = vmatpush1.bf16.msra.mxu0 %v3853
        %3872 = vmatprep.subr.bf16.mxu0 0
        %3873 = vmatpush1.bf16.msra.mxu0 0
        %3874 = vmatprep.subr.bf16.mxu0 0
        %3875 = vmatpush1.bf16.msra.mxu0 0
        %3876 = vmatprep.subr.bf16.mxu0 0
        %3877 = vmatpush1.bf16.msra.mxu0 0
        %3878 = vmatprep.subr.bf16.mxu0 0
        %3879 = vmatpush1.bf16.msra.mxu0 0
        %3880 = vmatprep.subr.bf16.mxu0 0
        %3881 = vmatpush1.bf16.msra.mxu0 0
        %3882 = vmatprep.subr.bf16.mxu0 0
        %3883 = vmatpush1.bf16.msra.mxu0 0
        %3884 = vmatprep.subr.bf16.mxu0 0
        %3885 = vmatpush1.bf16.msra.mxu0 0
        %3886 = vmatprep.subr.bf16.mxu0 0
        %3887 = vmatpush1.bf16.msra.mxu0 0
        %3888 = vmatprep.subr.bf16.mxu0 0
        %3889 = vmatpush1.bf16.msra.mxu0 0
        %3890 = vmatprep.subr.bf16.mxu0 0
        %3891 = vmatpush1.bf16.msra.mxu0 0
        %3892 = vmatprep.subr.bf16.mxu0 0
        %3893 = vmatpush1.bf16.msra.mxu0 0
        %3894 = vmatprep.subr.bf16.mxu0 0
        %3895 = vmatpush1.bf16.msra.mxu0 0
        %3896 = vmatprep.subr.bf16.mxu0 0
        %3897 = vmatpush1.bf16.msra.mxu0 0
        %3898 = vmatprep.subr.bf16.mxu0 0
        %3899 = vmatpush1.bf16.msra.mxu0 0
        %3900 = vmatprep.mubr.bf16.mxu0 0
        %3901 = vmatmul.mubr.bf16.gmra.mrb[0].mxu0 %v3857
        %v3902 = vpop.f32.mrb[0].mxu0
        %v3903 = vadd.f32 0.0, %v3902
        %v3904 = vpop.f32.mrb[0].mxu0
        %v3905 = vpop.f32.mrb[0].mxu0
        %v3906 = vadd.f32 0.0, %v3905
        %v3907 = vpop.f32.mrb[0].mxu0
        %3908 = vmatprep.mubr.bf16.mxu0 0
        %3909 = vmatmul.mubr.bf16.gmra.mrb[0].mxu0 %v3860
        %v3910 = vpop.f32.mrb[0].mxu0
        %v3911 = vadd.f32 0.0, %v3910
        %v3912 = vpop.f32.mrb[0].mxu0
        %v3913 = vpop.f32.mrb[0].mxu0
        %v3914 = vadd.f32 0.0, %v3913
        %v3915 = vpop.f32.mrb[0].mxu0
        %3916 = vmatprep.mubr.bf16.mxu0 0
        %3917 = vmatmul.mubr.bf16.gmra.mrb[0].mxu0 %v3863
        %v3918 = vpop.f32.mrb[0].mxu0
        %v3919 = vadd.f32 0.0, %v3918
        %v3920 = vpop.f32.mrb[0].mxu0
        %v3921 = vpop.f32.mrb[0].mxu0
        %v3922 = vadd.f32 0.0, %v3921
        %v3923 = vpop.f32.mrb[0].mxu0
        %3924 = vmatprep.mubr.bf16.mxu0 0
        %3925 = vmatmul.mubr.bf16.gmra.mrb[0].mxu0 %v3866
        %v3926 = vpop.f32.mrb[0].mxu0
        %v3927 = vadd.f32 0.0, %v3926
        %v3928 = vpop.f32.mrb[0].mxu0
        %v3929 = vpop.f32.mrb[0].mxu0
        %v3930 = vadd.f32 0.0, %v3929
        %v3931 = vpop.f32.mrb[0].mxu0
        %3932 = vdwg.mxu0
        %v3933 = vadd.f32 %v3819, %v3903
        %v3934 = vadd.f32 %v3820, %v3906
        %v3935 = vadd.f32 %v3821, %v3911
        %v3936 = vadd.f32 %v3822, %v3914
        %v3937 = vadd.f32 %v3823, %v3919
        %v3938 = vadd.f32 %v3824, %v3922
        %v3939 = vadd.f32 %v3825, %v3927
        %v3940 = vadd.f32 %v3826, %v3930
        %s3941 = sadd.s32 %s3268, 2
        %s3942 = smul.u32 %s3941, 80
        %s3943 = scalar_lea.vmem [#allocation3], %s3942
        %v3944 = vld [vmem:[%s3943 + $0x7] sm:$0xff]
        %v3945 = vld [vmem:[%s3943 + $0xf] sm:$0xff]
        %v3946 = vld [vmem:[%s3943 + $0x17] sm:$0xff]
        %v3947 = vld [vmem:[%s3943 + $0x1f] sm:$0xff]
        %v3948 = vld [vmem:[%s3943 + $0x27] sm:$0xff]
        %v3949 = vld [vmem:[%s3943 + $0x2f] sm:$0xff]
        %v3950 = vld [vmem:[%s3943 + $0x37] sm:$0xff]
        %v3951 = vld [vmem:[%s3943 + $0x3f] sm:$0xff]
        %v3952 = vpack.c.bf16 %v3945, %v3944
        %v3953 = vpack.c.bf16 %v3947, %v3946
        %v3954 = vpack.c.bf16 %v3949, %v3948
        %v3955 = vpack.c.bf16 %v3951, %v3950
        %s3956 = scalar_lea.vmem %s4, 96
        %v3957 = vld [vmem:[%s3956] sm:$0xf]
        %v3958 = vld [vmem:[%s3956 + $0x4] sm:$0xf]
        %v3959 = vld [vmem:[%s3956 + $0x8] sm:$0xf]
        %v3960 = vld [vmem:[%s3956 + $0xc] sm:$0xf]
        %v3965 = vunpack.c.l.b16 %v3957
        %v3966 = vunpack.c.l.b16 %v3958
        %v3967 = vunpack.c.l.b16 %v3959
        %v3968 = vunpack.c.l.b16 %v3960
        %v3969 = vpack.c.b16 %v3966, %v3965
        %v3970 = vpack.c.b16 %v3968, %v3967
        %v3974 = vsel %vm610, %v3952, 0
        %v3977 = vsel %vm610, %v3953, 0
        %v3980 = vsel %vm610, %v3954, 0
        %v3983 = vsel %vm610, %v3955, 0
        %3985 = vmatprep.subr.bf16.mxu0 0
        %3986 = vmatpush1.bf16.msra.mxu0 %v3969
        %3987 = vmatprep.subr.bf16.mxu0 0
        %3988 = vmatpush1.bf16.msra.mxu0 %v3970
        %3989 = vmatprep.subr.bf16.mxu0 0
        %3990 = vmatpush1.bf16.msra.mxu0 0
        %3991 = vmatprep.subr.bf16.mxu0 0
        %3992 = vmatpush1.bf16.msra.mxu0 0
        %3993 = vmatprep.subr.bf16.mxu0 0
        %3994 = vmatpush1.bf16.msra.mxu0 0
        %3995 = vmatprep.subr.bf16.mxu0 0
        %3996 = vmatpush1.bf16.msra.mxu0 0
        %3997 = vmatprep.subr.bf16.mxu0 0
        %3998 = vmatpush1.bf16.msra.mxu0 0
        %3999 = vmatprep.subr.bf16.mxu0 0
        %4000 = vmatpush1.bf16.msra.mxu0 0
        %4001 = vmatprep.subr.bf16.mxu0 0
        %4002 = vmatpush1.bf16.msra.mxu0 0
        %4003 = vmatprep.subr.bf16.mxu0 0
        %4004 = vmatpush1.bf16.msra.mxu0 0
        %4005 = vmatprep.subr.bf16.mxu0 0
        %4006 = vmatpush1.bf16.msra.mxu0 0
        %4007 = vmatprep.subr.bf16.mxu0 0
        %4008 = vmatpush1.bf16.msra.mxu0 0
        %4009 = vmatprep.subr.bf16.mxu0 0
        %4010 = vmatpush1.bf16.msra.mxu0 0
        %4011 = vmatprep.subr.bf16.mxu0 0
        %4012 = vmatpush1.bf16.msra.mxu0 0
        %4013 = vmatprep.subr.bf16.mxu0 0
        %4014 = vmatpush1.bf16.msra.mxu0 0
        %4015 = vmatprep.subr.bf16.mxu0 0
        %4016 = vmatpush1.bf16.msra.mxu0 0
        %4017 = vmatprep.mubr.bf16.mxu0 0
        %4018 = vmatmul.mubr.bf16.gmra.mrb[0].mxu0 %v3974
        %v4019 = vpop.f32.mrb[0].mxu0
        %v4020 = vadd.f32 0.0, %v4019
        %v4021 = vpop.f32.mrb[0].mxu0
        %v4022 = vpop.f32.mrb[0].mxu0
        %v4023 = vadd.f32 0.0, %v4022
        %v4024 = vpop.f32.mrb[0].mxu0
        %4025 = vmatprep.mubr.bf16.mxu0 0
        %4026 = vmatmul.mubr.bf16.gmra.mrb[0].mxu0 %v3977
        %v4027 = vpop.f32.mrb[0].mxu0
        %v4028 = vadd.f32 0.0, %v4027
        %v4029 = vpop.f32.mrb[0].mxu0
        %v4030 = vpop.f32.mrb[0].mxu0
        %v4031 = vadd.f32 0.0, %v4030
        %v4032 = vpop.f32.mrb[0].mxu0
        %4033 = vmatprep.mubr.bf16.mxu0 0
        %4034 = vmatmul.mubr.bf16.gmra.mrb[0].mxu0 %v3980
        %v4035 = vpop.f32.mrb[0].mxu0
        %v4036 = vadd.f32 0.0, %v4035
        %v4037 = vpop.f32.mrb[0].mxu0
        %v4038 = vpop.f32.mrb[0].mxu0
        %v4039 = vadd.f32 0.0, %v4038
        %v4040 = vpop.f32.mrb[0].mxu0
        %4041 = vmatprep.mubr.bf16.mxu0 0
        %4042 = vmatmul.mubr.bf16.gmra.mrb[0].mxu0 %v3983
        %v4043 = vpop.f32.mrb[0].mxu0
        %v4044 = vadd.f32 0.0, %v4043
        %v4045 = vpop.f32.mrb[0].mxu0
        %v4046 = vpop.f32.mrb[0].mxu0
        %v4047 = vadd.f32 0.0, %v4046
        %v4048 = vpop.f32.mrb[0].mxu0
        %4049 = vdwg.mxu0
        %v4050 = vadd.f32 %v3933, %v4020
        %v4051 = vadd.f32 %v3934, %v4023
        %v4052 = vadd.f32 %v3935, %v4028
        %v4053 = vadd.f32 %v3936, %v4031
        %v4054 = vadd.f32 %v3937, %v4036
        %v4055 = vadd.f32 %v3938, %v4039
        %v4056 = vadd.f32 %v3939, %v4044
        %v4057 = vadd.f32 %v3940, %v4047
        %v4058 = vld [vmem:[%s3943 + $0x8] sm:$0xff]
        %v4059 = vld [vmem:[%s3943 + $0x10] sm:$0xff]
        %v4060 = vld [vmem:[%s3943 + $0x18] sm:$0xff]
        %v4061 = vld [vmem:[%s3943 + $0x20] sm:$0xff]
        %v4062 = vld [vmem:[%s3943 + $0x28] sm:$0xff]
        %v4063 = vld [vmem:[%s3943 + $0x30] sm:$0xff]
        %v4064 = vld [vmem:[%s3943 + $0x38] sm:$0xff]
        %v4065 = vld [vmem:[%s3943 + $0x40] sm:$0xff]
        %v4066 = vpack.c.bf16 %v4059, %v4058
        %v4067 = vpack.c.bf16 %v4061, %v4060
        %v4068 = vpack.c.bf16 %v4063, %v4062
        %v4069 = vpack.c.bf16 %v4065, %v4064
        %s4070 = scalar_lea.vmem %s4, 112
        %v4071 = vld [vmem:[%s4070] sm:$0xf]
        %v4072 = vld [vmem:[%s4070 + $0x4] sm:$0xf]
        %v4073 = vld [vmem:[%s4070 + $0x8] sm:$0xf]
        %v4074 = vld [vmem:[%s4070 + $0xc] sm:$0xf]
        %v4079 = vunpack.c.l.b16 %v4071
        %v4080 = vunpack.c.l.b16 %v4072
        %v4081 = vunpack.c.l.b16 %v4073
        %v4082 = vunpack.c.l.b16 %v4074
        %v4083 = vpack.c.b16 %v4080, %v4079
        %v4084 = vpack.c.b16 %v4082, %v4081
        %v4088 = vsel %vm610, %v4066, 0
        %v4091 = vsel %vm610, %v4067, 0
        %v4094 = vsel %vm610, %v4068, 0
        %v4097 = vsel %vm610, %v4069, 0
        %4099 = vmatprep.subr.bf16.mxu0 0
        %4100 = vmatpush1.bf16.msra.mxu0 %v4083
        %4101 = vmatprep.subr.bf16.mxu0 0
        %4102 = vmatpush1.bf16.msra.mxu0 %v4084
        %4103 = vmatprep.subr.bf16.mxu0 0
        %4104 = vmatpush1.bf16.msra.mxu0 0
        %4105 = vmatprep.subr.bf16.mxu0 0
        %4106 = vmatpush1.bf16.msra.mxu0 0
        %4107 = vmatprep.subr.bf16.mxu0 0
        %4108 = vmatpush1.bf16.msra.mxu0 0
        %4109 = vmatprep.subr.bf16.mxu0 0
        %4110 = vmatpush1.bf16.msra.mxu0 0
        %4111 = vmatprep.subr.bf16.mxu0 0
        %4112 = vmatpush1.bf16.msra.mxu0 0
        %4113 = vmatprep.subr.bf16.mxu0 0
        %4114 = vmatpush1.bf16.msra.mxu0 0
        %4115 = vmatprep.subr.bf16.mxu0 0
        %4116 = vmatpush1.bf16.msra.mxu0 0
        %4117 = vmatprep.subr.bf16.mxu0 0
        %4118 = vmatpush1.bf16.msra.mxu0 0
        %4119 = vmatprep.subr.bf16.mxu0 0
        %4120 = vmatpush1.bf16.msra.mxu0 0
        %4121 = vmatprep.subr.bf16.mxu0 0
        %4122 = vmatpush1.bf16.msra.mxu0 0
        %4123 = vmatprep.subr.bf16.mxu0 0
        %4124 = vmatpush1.bf16.msra.mxu0 0
        %4125 = vmatprep.subr.bf16.mxu0 0
        %4126 = vmatpush1.bf16.msra.mxu0 0
        %4127 = vmatprep.subr.bf16.mxu0 0
        %4128 = vmatpush1.bf16.msra.mxu0 0
        %4129 = vmatprep.subr.bf16.mxu0 0
        %4130 = vmatpush1.bf16.msra.mxu0 0
        %4131 = vmatprep.mubr.bf16.mxu0 0
        %4132 = vmatmul.mubr.bf16.gmra.mrb[0].mxu0 %v4088
        %v4133 = vpop.f32.mrb[0].mxu0
        %v4134 = vadd.f32 0.0, %v4133
        %v4135 = vpop.f32.mrb[0].mxu0
        %v4136 = vpop.f32.mrb[0].mxu0
        %v4137 = vadd.f32 0.0, %v4136
        %v4138 = vpop.f32.mrb[0].mxu0
        %4139 = vmatprep.mubr.bf16.mxu0 0
        %4140 = vmatmul.mubr.bf16.gmra.mrb[0].mxu0 %v4091
        %v4141 = vpop.f32.mrb[0].mxu0
        %v4142 = vadd.f32 0.0, %v4141
        %v4143 = vpop.f32.mrb[0].mxu0
        %v4144 = vpop.f32.mrb[0].mxu0
        %v4145 = vadd.f32 0.0, %v4144
        %v4146 = vpop.f32.mrb[0].mxu0
        %4147 = vmatprep.mubr.bf16.mxu0 0
        %4148 = vmatmul.mubr.bf16.gmra.mrb[0].mxu0 %v4094
        %v4149 = vpop.f32.mrb[0].mxu0
        %v4150 = vadd.f32 0.0, %v4149
        %v4151 = vpop.f32.mrb[0].mxu0
        %v4152 = vpop.f32.mrb[0].mxu0
        %v4153 = vadd.f32 0.0, %v4152
        %v4154 = vpop.f32.mrb[0].mxu0
        %4155 = vmatprep.mubr.bf16.mxu0 0
        %4156 = vmatmul.mubr.bf16.gmra.mrb[0].mxu0 %v4097
        %v4157 = vpop.f32.mrb[0].mxu0
        %v4158 = vadd.f32 0.0, %v4157
        %v4159 = vpop.f32.mrb[0].mxu0
        %v4160 = vpop.f32.mrb[0].mxu0
        %v4161 = vadd.f32 0.0, %v4160
        %v4162 = vpop.f32.mrb[0].mxu0
        %4163 = vdwg.mxu0
        %v4164 = vadd.f32 %v4050, %v4134
        %v4165 = vadd.f32 %v4051, %v4137
        %v4166 = vadd.f32 %v4052, %v4142
        %v4167 = vadd.f32 %v4053, %v4145
        %v4168 = vadd.f32 %v4054, %v4150
        %v4169 = vadd.f32 %v4055, %v4153
        %v4170 = vadd.f32 %v4056, %v4158
        %v4171 = vadd.f32 %v4057, %v4161
        %v4172 = vld [vmem:[%s3943 + $0x9] sm:$0xff]
        %v4173 = vld [vmem:[%s3943 + $0x11] sm:$0xff]
        %v4174 = vld [vmem:[%s3943 + $0x19] sm:$0xff]
        %v4175 = vld [vmem:[%s3943 + $0x21] sm:$0xff]
        %v4176 = vld [vmem:[%s3943 + $0x29] sm:$0xff]
        %v4177 = vld [vmem:[%s3943 + $0x31] sm:$0xff]
        %v4178 = vld [vmem:[%s3943 + $0x39] sm:$0xff]
        %v4179 = vld [vmem:[%s3943 + $0x41] sm:$0xff]
        %v4180 = vpack.c.bf16 %v4173, %v4172
        %v4181 = vpack.c.bf16 %v4175, %v4174
        %v4182 = vpack.c.bf16 %v4177, %v4176
        %v4183 = vpack.c.bf16 %v4179, %v4178
        %s4184 = scalar_lea.vmem %s4, 128
        %v4185 = vld [vmem:[%s4184] sm:$0xf]
        %v4186 = vld [vmem:[%s4184 + $0x4] sm:$0xf]
        %v4187 = vld [vmem:[%s4184 + $0x8] sm:$0xf]
        %v4188 = vld [vmem:[%s4184 + $0xc] sm:$0xf]
        %v4193 = vunpack.c.l.b16 %v4185
        %v4194 = vunpack.c.l.b16 %v4186
        %v4195 = vunpack.c.l.b16 %v4187
        %v4196 = vunpack.c.l.b16 %v4188
        %v4197 = vpack.c.b16 %v4194, %v4193
        %v4198 = vpack.c.b16 %v4196, %v4195
        %v4202 = vsel %vm610, %v4180, 0
        %v4205 = vsel %vm610, %v4181, 0
        %v4208 = vsel %vm610, %v4182, 0
        %v4211 = vsel %vm610, %v4183, 0
        %4213 = vmatprep.subr.bf16.mxu0 0
        %4214 = vmatpush1.bf16.msra.mxu0 %v4197
        %4215 = vmatprep.subr.bf16.mxu0 0
        %4216 = vmatpush1.bf16.msra.mxu0 %v4198
        %4217 = vmatprep.subr.bf16.mxu0 0
        %4218 = vmatpush1.bf16.msra.mxu0 0
        %4219 = vmatprep.subr.bf16.mxu0 0
        %4220 = vmatpush1.bf16.msra.mxu0 0
        %4221 = vmatprep.subr.bf16.mxu0 0
        %4222 = vmatpush1.bf16.msra.mxu0 0
        %4223 = vmatprep.subr.bf16.mxu0 0
        %4224 = vmatpush1.bf16.msra.mxu0 0
        %4225 = vmatprep.subr.bf16.mxu0 0
        %4226 = vmatpush1.bf16.msra.mxu0 0
        %4227 = vmatprep.subr.bf16.mxu0 0
        %4228 = vmatpush1.bf16.msra.mxu0 0
        %4229 = vmatprep.subr.bf16.mxu0 0
        %4230 = vmatpush1.bf16.msra.mxu0 0
        %4231 = vmatprep.subr.bf16.mxu0 0
        %4232 = vmatpush1.bf16.msra.mxu0 0
        %4233 = vmatprep.subr.bf16.mxu0 0
        %4234 = vmatpush1.bf16.msra.mxu0 0
        %4235 = vmatprep.subr.bf16.mxu0 0
        %4236 = vmatpush1.bf16.msra.mxu0 0
        %4237 = vmatprep.subr.bf16.mxu0 0
        %4238 = vmatpush1.bf16.msra.mxu0 0
        %4239 = vmatprep.subr.bf16.mxu0 0
        %4240 = vmatpush1.bf16.msra.mxu0 0
        %4241 = vmatprep.subr.bf16.mxu0 0
        %4242 = vmatpush1.bf16.msra.mxu0 0
        %4243 = vmatprep.subr.bf16.mxu0 0
        %4244 = vmatpush1.bf16.msra.mxu0 0
        %4245 = vmatprep.mubr.bf16.mxu0 0
        %4246 = vmatmul.mubr.bf16.gmra.mrb[0].mxu0 %v4202
        %v4247 = vpop.f32.mrb[0].mxu0
        %v4248 = vadd.f32 0.0, %v4247
        %v4249 = vpop.f32.mrb[0].mxu0
        %v4250 = vpop.f32.mrb[0].mxu0
        %v4251 = vadd.f32 0.0, %v4250
        %v4252 = vpop.f32.mrb[0].mxu0
        %4253 = vmatprep.mubr.bf16.mxu0 0
        %4254 = vmatmul.mubr.bf16.gmra.mrb[0].mxu0 %v4205
        %v4255 = vpop.f32.mrb[0].mxu0
        %v4256 = vadd.f32 0.0, %v4255
        %v4257 = vpop.f32.mrb[0].mxu0
        %v4258 = vpop.f32.mrb[0].mxu0
        %v4259 = vadd.f32 0.0, %v4258
        %v4260 = vpop.f32.mrb[0].mxu0
        %4261 = vmatprep.mubr.bf16.mxu0 0
        %4262 = vmatmul.mubr.bf16.gmra.mrb[0].mxu0 %v4208
        %v4263 = vpop.f32.mrb[0].mxu0
        %v4264 = vadd.f32 0.0, %v4263
        %v4265 = vpop.f32.mrb[0].mxu0
        %v4266 = vpop.f32.mrb[0].mxu0
        %v4267 = vadd.f32 0.0, %v4266
        %v4268 = vpop.f32.mrb[0].mxu0
        %4269 = vmatprep.mubr.bf16.mxu0 0
        %4270 = vmatmul.mubr.bf16.gmra.mrb[0].mxu0 %v4211
        %v4271 = vpop.f32.mrb[0].mxu0
        %v4272 = vadd.f32 0.0, %v4271
        %v4273 = vpop.f32.mrb[0].mxu0
        %v4274 = vpop.f32.mrb[0].mxu0
        %v4275 = vadd.f32 0.0, %v4274
        %v4276 = vpop.f32.mrb[0].mxu0
        %4277 = vdwg.mxu0
        %v4278 = vadd.f32 %v4164, %v4248
        %v4279 = vadd.f32 %v4165, %v4251
        %v4280 = vadd.f32 %v4166, %v4256
        %v4281 = vadd.f32 %v4167, %v4259
        %v4282 = vadd.f32 %v4168, %v4264
        %v4283 = vadd.f32 %v4169, %v4267
        %v4284 = vadd.f32 %v4170, %v4272
        %v4285 = vadd.f32 %v4171, %v4275
        %v4287 = vlaneseq
        %v4288 = vshrl.u32 %v4287, 7
        %v4289 = vsub.s32 0, %v4288
        %v4290 = vrot.slane %v282, %v4289
        %v4292 = vmul.f32 %v4278, %v4290
        %v4293 = vmul.f32 %v4279, %v4290
        %v4294 = vmul.f32 %v4280, %v4290
        %v4295 = vmul.f32 %v4281, %v4290
        %v4296 = vmul.f32 %v4282, %v4290
        %v4297 = vmul.f32 %v4283, %v4290
        %v4298 = vmul.f32 %v4284, %v4290
        %v4299 = vmul.f32 %v4285, %v4290
        %v4301 = vlaneseq
        %v4302 = vshrl.u32 %v4301, 7
        %v4303 = vsub.s32 0, %v4302
        %v4304 = vrot.slane %v283, %v4303
        %v4306 = vadd.f32 %v4292, %v4304
        %v4307 = vadd.f32 %v4293, %v4304
        %v4308 = vadd.f32 %v4294, %v4304
        %v4309 = vadd.f32 %v4295, %v4304
        %v4310 = vadd.f32 %v4296, %v4304
        %v4311 = vadd.f32 %v4297, %v4304
        %v4312 = vadd.f32 %v4298, %v4304
        %v4313 = vadd.f32 %v4299, %v4304
        %v4314 = vmax.f32 %v4306, 0.0
        %v4315 = vmax.f32 %v4307, 0.0
        %v4316 = vmax.f32 %v4308, 0.0
        %v4317 = vmax.f32 %v4309, 0.0
        %v4318 = vmax.f32 %v4310, 0.0
        %v4319 = vmax.f32 %v4311, 0.0
        %v4320 = vmax.f32 %v4312, 0.0
        %v4321 = vmax.f32 %v4313, 0.0
        %4322 = vmatprep.subr.bf16.mxu0 0
        %4323 = vmatpush1.bf16.msra.mxu0 %v3312
        %4324 = vmatprep.subr.bf16.mxu0 0
        %4325 = vmatpush1.bf16.msra.mxu0 %v3313
        %4326 = vmatprep.subr.bf16.mxu0 0
        %4327 = vmatpush1.bf16.msra.mxu0 0
        %4328 = vmatprep.subr.bf16.mxu0 0
        %4329 = vmatpush1.bf16.msra.mxu0 0
        %4330 = vmatprep.subr.bf16.mxu0 0
        %4331 = vmatpush1.bf16.msra.mxu0 0
        %4332 = vmatprep.subr.bf16.mxu0 0
        %4333 = vmatpush1.bf16.msra.mxu0 0
        %4334 = vmatprep.subr.bf16.mxu0 0
        %4335 = vmatpush1.bf16.msra.mxu0 0
        %4336 = vmatprep.subr.bf16.mxu0 0
        %4337 = vmatpush1.bf16.msra.mxu0 0
        %4338 = vmatprep.subr.bf16.mxu0 0
        %4339 = vmatpush1.bf16.msra.mxu0 0
        %4340 = vmatprep.subr.bf16.mxu0 0
        %4341 = vmatpush1.bf16.msra.mxu0 0
        %4342 = vmatprep.subr.bf16.mxu0 0
        %4343 = vmatpush1.bf16.msra.mxu0 0
        %4344 = vmatprep.subr.bf16.mxu0 0
        %4345 = vmatpush1.bf16.msra.mxu0 0
        %4346 = vmatprep.subr.bf16.mxu0 0
        %4347 = vmatpush1.bf16.msra.mxu0 0
        %4348 = vmatprep.subr.bf16.mxu0 0
        %4349 = vmatpush1.bf16.msra.mxu0 0
        %4350 = vmatprep.subr.bf16.mxu0 0
        %4351 = vmatpush1.bf16.msra.mxu0 0
        %4352 = vmatprep.subr.bf16.mxu0 0
        %4353 = vmatpush1.bf16.msra.mxu0 0
        %4354 = vmatprep.mubr.bf16.mxu0 0
        %4355 = vmatmul.mubr.bf16.gmra.mrb[0].mxu0 %v3743
        %v4356 = vpop.f32.mrb[0].mxu0
        %v4357 = vadd.f32 0.0, %v4356
        %v4358 = vpop.f32.mrb[0].mxu0
        %v4359 = vpop.f32.mrb[0].mxu0
        %v4360 = vadd.f32 0.0, %v4359
        %v4361 = vpop.f32.mrb[0].mxu0
        %4362 = vmatprep.mubr.bf16.mxu0 0
        %4363 = vmatmul.mubr.bf16.gmra.mrb[0].mxu0 %v3746
        %v4364 = vpop.f32.mrb[0].mxu0
        %v4365 = vadd.f32 0.0, %v4364
        %v4366 = vpop.f32.mrb[0].mxu0
        %v4367 = vpop.f32.mrb[0].mxu0
        %v4368 = vadd.f32 0.0, %v4367
        %v4369 = vpop.f32.mrb[0].mxu0
        %4370 = vmatprep.mubr.bf16.mxu0 0
        %4371 = vmatmul.mubr.bf16.gmra.mrb[0].mxu0 %v3749
        %v4372 = vpop.f32.mrb[0].mxu0
        %v4373 = vadd.f32 0.0, %v4372
        %v4374 = vpop.f32.mrb[0].mxu0
        %v4375 = vpop.f32.mrb[0].mxu0
        %v4376 = vadd.f32 0.0, %v4375
        %v4377 = vpop.f32.mrb[0].mxu0
        %4378 = vmatprep.mubr.bf16.mxu0 0
        %4379 = vmatmul.mubr.bf16.gmra.mrb[0].mxu0 %v3752
        %v4380 = vpop.f32.mrb[0].mxu0
        %v4381 = vadd.f32 0.0, %v4380
        %v4382 = vpop.f32.mrb[0].mxu0
        %v4383 = vpop.f32.mrb[0].mxu0
        %v4384 = vadd.f32 0.0, %v4383
        %v4385 = vpop.f32.mrb[0].mxu0
        %4386 = vdwg.mxu0
        %4387 = vmatprep.subr.bf16.mxu0 0
        %4388 = vmatpush1.bf16.msra.mxu0 %v3401
        %4389 = vmatprep.subr.bf16.mxu0 0
        %4390 = vmatpush1.bf16.msra.mxu0 %v3402
        %4391 = vmatprep.subr.bf16.mxu0 0
        %4392 = vmatpush1.bf16.msra.mxu0 0
        %4393 = vmatprep.subr.bf16.mxu0 0
        %4394 = vmatpush1.bf16.msra.mxu0 0
        %4395 = vmatprep.subr.bf16.mxu0 0
        %4396 = vmatpush1.bf16.msra.mxu0 0
        %4397 = vmatprep.subr.bf16.mxu0 0
        %4398 = vmatpush1.bf16.msra.mxu0 0
        %4399 = vmatprep.subr.bf16.mxu0 0
        %4400 = vmatpush1.bf16.msra.mxu0 0
        %4401 = vmatprep.subr.bf16.mxu0 0
        %4402 = vmatpush1.bf16.msra.mxu0 0
        %4403 = vmatprep.subr.bf16.mxu0 0
        %4404 = vmatpush1.bf16.msra.mxu0 0
        %4405 = vmatprep.subr.bf16.mxu0 0
        %4406 = vmatpush1.bf16.msra.mxu0 0
        %4407 = vmatprep.subr.bf16.mxu0 0
        %4408 = vmatpush1.bf16.msra.mxu0 0
        %4409 = vmatprep.subr.bf16.mxu0 0
        %4410 = vmatpush1.bf16.msra.mxu0 0
        %4411 = vmatprep.subr.bf16.mxu0 0
        %4412 = vmatpush1.bf16.msra.mxu0 0
        %4413 = vmatprep.subr.bf16.mxu0 0
        %4414 = vmatpush1.bf16.msra.mxu0 0
        %4415 = vmatprep.subr.bf16.mxu0 0
        %4416 = vmatpush1.bf16.msra.mxu0 0
        %4417 = vmatprep.subr.bf16.mxu0 0
        %4418 = vmatpush1.bf16.msra.mxu0 0
        %4419 = vmatprep.mubr.bf16.mxu0 0
        %4420 = vmatmul.mubr.bf16.gmra.mrb[0].mxu0 %v3629
        %v4421 = vpop.f32.mrb[0].mxu0
        %v4422 = vadd.f32 %v4357, %v4421
        %v4423 = vpop.f32.mrb[0].mxu0
        %v4424 = vpop.f32.mrb[0].mxu0
        %v4425 = vadd.f32 %v4360, %v4424
        %v4426 = vpop.f32.mrb[0].mxu0
        %4427 = vmatprep.mubr.bf16.mxu0 0
        %4428 = vmatmul.mubr.bf16.gmra.mrb[0].mxu0 %v3632
        %v4429 = vpop.f32.mrb[0].mxu0
        %v4430 = vadd.f32 %v4365, %v4429
        %v4431 = vpop.f32.mrb[0].mxu0
        %v4432 = vpop.f32.mrb[0].mxu0
        %v4433 = vadd.f32 %v4368, %v4432
        %v4434 = vpop.f32.mrb[0].mxu0
        %4435 = vmatprep.mubr.bf16.mxu0 0
        %4436 = vmatmul.mubr.bf16.gmra.mrb[0].mxu0 %v3635
        %v4437 = vpop.f32.mrb[0].mxu0
        %v4438 = vadd.f32 %v4373, %v4437
        %v4439 = vpop.f32.mrb[0].mxu0
        %v4440 = vpop.f32.mrb[0].mxu0
        %v4441 = vadd.f32 %v4376, %v4440
        %v4442 = vpop.f32.mrb[0].mxu0
        %4443 = vmatprep.mubr.bf16.mxu0 0
        %4444 = vmatmul.mubr.bf16.gmra.mrb[0].mxu0 %v3638
        %v4445 = vpop.f32.mrb[0].mxu0
        %v4446 = vadd.f32 %v4381, %v4445
        %v4447 = vpop.f32.mrb[0].mxu0
        %v4448 = vpop.f32.mrb[0].mxu0
        %v4449 = vadd.f32 %v4384, %v4448
        %v4450 = vpop.f32.mrb[0].mxu0
        %4451 = vdwg.mxu0
        %4452 = vmatprep.subr.bf16.mxu0 0
        %4453 = vmatpush1.bf16.msra.mxu0 %v3507
        %4454 = vmatprep.subr.bf16.mxu0 0
        %4455 = vmatpush1.bf16.msra.mxu0 %v3508
        %4456 = vmatprep.subr.bf16.mxu0 0
        %4457 = vmatpush1.bf16.msra.mxu0 0
        %4458 = vmatprep.subr.bf16.mxu0 0
        %4459 = vmatpush1.bf16.msra.mxu0 0
        %4460 = vmatprep.subr.bf16.mxu0 0
        %4461 = vmatpush1.bf16.msra.mxu0 0
        %4462 = vmatprep.subr.bf16.mxu0 0
        %4463 = vmatpush1.bf16.msra.mxu0 0
        %4464 = vmatprep.subr.bf16.mxu0 0
        %4465 = vmatpush1.bf16.msra.mxu0 0
        %4466 = vmatprep.subr.bf16.mxu0 0
        %4467 = vmatpush1.bf16.msra.mxu0 0
        %4468 = vmatprep.subr.bf16.mxu0 0
        %4469 = vmatpush1.bf16.msra.mxu0 0
        %4470 = vmatprep.subr.bf16.mxu0 0
        %4471 = vmatpush1.bf16.msra.mxu0 0
        %4472 = vmatprep.subr.bf16.mxu0 0
        %4473 = vmatpush1.bf16.msra.mxu0 0
        %4474 = vmatprep.subr.bf16.mxu0 0
        %4475 = vmatpush1.bf16.msra.mxu0 0
        %4476 = vmatprep.subr.bf16.mxu0 0
        %4477 = vmatpush1.bf16.msra.mxu0 0
        %4478 = vmatprep.subr.bf16.mxu0 0
        %4479 = vmatpush1.bf16.msra.mxu0 0
        %4480 = vmatprep.subr.bf16.mxu0 0
        %4481 = vmatpush1.bf16.msra.mxu0 0
        %4482 = vmatprep.subr.bf16.mxu0 0
        %4483 = vmatpush1.bf16.msra.mxu0 0
        %4484 = vmatprep.mubr.bf16.mxu0 0
        %4485 = vmatmul.mubr.bf16.gmra.mrb[0].mxu0 %v3857
        %v4486 = vpop.f32.mrb[0].mxu0
        %v4487 = vadd.f32 0.0, %v4486
        %v4488 = vpop.f32.mrb[0].mxu0
        %v4489 = vpop.f32.mrb[0].mxu0
        %v4490 = vadd.f32 0.0, %v4489
        %v4491 = vpop.f32.mrb[0].mxu0
        %4492 = vmatprep.mubr.bf16.mxu0 0
        %4493 = vmatmul.mubr.bf16.gmra.mrb[0].mxu0 %v3860
        %v4494 = vpop.f32.mrb[0].mxu0
        %v4495 = vadd.f32 0.0, %v4494
        %v4496 = vpop.f32.mrb[0].mxu0
        %v4497 = vpop.f32.mrb[0].mxu0
        %v4498 = vadd.f32 0.0, %v4497
        %v4499 = vpop.f32.mrb[0].mxu0
        %4500 = vmatprep.mubr.bf16.mxu0 0
        %4501 = vmatmul.mubr.bf16.gmra.mrb[0].mxu0 %v3863
        %v4502 = vpop.f32.mrb[0].mxu0
        %v4503 = vadd.f32 0.0, %v4502
        %v4504 = vpop.f32.mrb[0].mxu0
        %v4505 = vpop.f32.mrb[0].mxu0
        %v4506 = vadd.f32 0.0, %v4505
        %v4507 = vpop.f32.mrb[0].mxu0
        %4508 = vmatprep.mubr.bf16.mxu0 0
        %4509 = vmatmul.mubr.bf16.gmra.mrb[0].mxu0 %v3866
        %v4510 = vpop.f32.mrb[0].mxu0
        %v4511 = vadd.f32 0.0, %v4510
        %v4512 = vpop.f32.mrb[0].mxu0
        %v4513 = vpop.f32.mrb[0].mxu0
        %v4514 = vadd.f32 0.0, %v4513
        %v4515 = vpop.f32.mrb[0].mxu0
        %4516 = vdwg.mxu0
        %v4517 = vadd.f32 %v4422, %v4487
        %v4518 = vadd.f32 %v4425, %v4490
        %v4519 = vadd.f32 %v4430, %v4495
        %v4520 = vadd.f32 %v4433, %v4498
        %v4521 = vadd.f32 %v4438, %v4503
        %v4522 = vadd.f32 %v4441, %v4506
        %v4523 = vadd.f32 %v4446, %v4511
        %v4524 = vadd.f32 %v4449, %v4514
        %4525 = vmatprep.subr.bf16.mxu0 0
        %4526 = vmatpush1.bf16.msra.mxu0 %v3624
        %4527 = vmatprep.subr.bf16.mxu0 0
        %4528 = vmatpush1.bf16.msra.mxu0 %v3625
        %4529 = vmatprep.subr.bf16.mxu0 0
        %4530 = vmatpush1.bf16.msra.mxu0 0
        %4531 = vmatprep.subr.bf16.mxu0 0
        %4532 = vmatpush1.bf16.msra.mxu0 0
        %4533 = vmatprep.subr.bf16.mxu0 0
        %4534 = vmatpush1.bf16.msra.mxu0 0
        %4535 = vmatprep.subr.bf16.mxu0 0
        %4536 = vmatpush1.bf16.msra.mxu0 0
        %4537 = vmatprep.subr.bf16.mxu0 0
        %4538 = vmatpush1.bf16.msra.mxu0 0
        %4539 = vmatprep.subr.bf16.mxu0 0
        %4540 = vmatpush1.bf16.msra.mxu0 0
        %4541 = vmatprep.subr.bf16.mxu0 0
        %4542 = vmatpush1.bf16.msra.mxu0 0
        %4543 = vmatprep.subr.bf16.mxu0 0
        %4544 = vmatpush1.bf16.msra.mxu0 0
        %4545 = vmatprep.subr.bf16.mxu0 0
        %4546 = vmatpush1.bf16.msra.mxu0 0
        %4547 = vmatprep.subr.bf16.mxu0 0
        %4548 = vmatpush1.bf16.msra.mxu0 0
        %4549 = vmatprep.subr.bf16.mxu0 0
        %4550 = vmatpush1.bf16.msra.mxu0 0
        %4551 = vmatprep.subr.bf16.mxu0 0
        %4552 = vmatpush1.bf16.msra.mxu0 0
        %4553 = vmatprep.subr.bf16.mxu0 0
        %4554 = vmatpush1.bf16.msra.mxu0 0
        %4555 = vmatprep.subr.bf16.mxu0 0
        %4556 = vmatpush1.bf16.msra.mxu0 0
        %4557 = vmatprep.mubr.bf16.mxu0 0
        %4558 = vmatmul.mubr.bf16.gmra.mrb[0].mxu0 %v3974
        %v4559 = vpop.f32.mrb[0].mxu0
        %v4560 = vadd.f32 0.0, %v4559
        %v4561 = vpop.f32.mrb[0].mxu0
        %v4562 = vpop.f32.mrb[0].mxu0
        %v4563 = vadd.f32 0.0, %v4562
        %v4564 = vpop.f32.mrb[0].mxu0
        %4565 = vmatprep.mubr.bf16.mxu0 0
        %4566 = vmatmul.mubr.bf16.gmra.mrb[0].mxu0 %v3977
        %v4567 = vpop.f32.mrb[0].mxu0
        %v4568 = vadd.f32 0.0, %v4567
        %v4569 = vpop.f32.mrb[0].mxu0
        %v4570 = vpop.f32.mrb[0].mxu0
        %v4571 = vadd.f32 0.0, %v4570
        %v4572 = vpop.f32.mrb[0].mxu0
        %4573 = vmatprep.mubr.bf16.mxu0 0
        %4574 = vmatmul.mubr.bf16.gmra.mrb[0].mxu0 %v3980
        %v4575 = vpop.f32.mrb[0].mxu0
        %v4576 = vadd.f32 0.0, %v4575
        %v4577 = vpop.f32.mrb[0].mxu0
        %v4578 = vpop.f32.mrb[0].mxu0
        %v4579 = vadd.f32 0.0, %v4578
        %v4580 = vpop.f32.mrb[0].mxu0
        %4581 = vmatprep.mubr.bf16.mxu0 0
        %4582 = vmatmul.mubr.bf16.gmra.mrb[0].mxu0 %v3983
        %v4583 = vpop.f32.mrb[0].mxu0
        %v4584 = vadd.f32 0.0, %v4583
        %v4585 = vpop.f32.mrb[0].mxu0
        %v4586 = vpop.f32.mrb[0].mxu0
        %v4587 = vadd.f32 0.0, %v4586
        %v4588 = vpop.f32.mrb[0].mxu0
        %4589 = vdwg.mxu0
        %v4590 = vadd.f32 %v4517, %v4560
        %v4591 = vadd.f32 %v4518, %v4563
        %v4592 = vadd.f32 %v4519, %v4568
        %v4593 = vadd.f32 %v4520, %v4571
        %v4594 = vadd.f32 %v4521, %v4576
        %v4595 = vadd.f32 %v4522, %v4579
        %v4596 = vadd.f32 %v4523, %v4584
        %v4597 = vadd.f32 %v4524, %v4587
        %4598 = vmatprep.subr.bf16.mxu0 0
        %4599 = vmatpush1.bf16.msra.mxu0 %v3738
        %4600 = vmatprep.subr.bf16.mxu0 0
        %4601 = vmatpush1.bf16.msra.mxu0 %v3739
        %4602 = vmatprep.subr.bf16.mxu0 0
        %4603 = vmatpush1.bf16.msra.mxu0 0
        %4604 = vmatprep.subr.bf16.mxu0 0
        %4605 = vmatpush1.bf16.msra.mxu0 0
        %4606 = vmatprep.subr.bf16.mxu0 0
        %4607 = vmatpush1.bf16.msra.mxu0 0
        %4608 = vmatprep.subr.bf16.mxu0 0
        %4609 = vmatpush1.bf16.msra.mxu0 0
        %4610 = vmatprep.subr.bf16.mxu0 0
        %4611 = vmatpush1.bf16.msra.mxu0 0
        %4612 = vmatprep.subr.bf16.mxu0 0
        %4613 = vmatpush1.bf16.msra.mxu0 0
        %4614 = vmatprep.subr.bf16.mxu0 0
        %4615 = vmatpush1.bf16.msra.mxu0 0
        %4616 = vmatprep.subr.bf16.mxu0 0
        %4617 = vmatpush1.bf16.msra.mxu0 0
        %4618 = vmatprep.subr.bf16.mxu0 0
        %4619 = vmatpush1.bf16.msra.mxu0 0
        %4620 = vmatprep.subr.bf16.mxu0 0
        %4621 = vmatpush1.bf16.msra.mxu0 0
        %4622 = vmatprep.subr.bf16.mxu0 0
        %4623 = vmatpush1.bf16.msra.mxu0 0
        %4624 = vmatprep.subr.bf16.mxu0 0
        %4625 = vmatpush1.bf16.msra.mxu0 0
        %4626 = vmatprep.subr.bf16.mxu0 0
        %4627 = vmatpush1.bf16.msra.mxu0 0
        %4628 = vmatprep.subr.bf16.mxu0 0
        %4629 = vmatpush1.bf16.msra.mxu0 0
        %4630 = vmatprep.mubr.bf16.mxu0 0
        %4631 = vmatmul.mubr.bf16.gmra.mrb[0].mxu0 %v4088
        %v4632 = vpop.f32.mrb[0].mxu0
        %v4633 = vadd.f32 0.0, %v4632
        %v4634 = vpop.f32.mrb[0].mxu0
        %v4635 = vpop.f32.mrb[0].mxu0
        %v4636 = vadd.f32 0.0, %v4635
        %v4637 = vpop.f32.mrb[0].mxu0
        %4638 = vmatprep.mubr.bf16.mxu0 0
        %4639 = vmatmul.mubr.bf16.gmra.mrb[0].mxu0 %v4091
        %v4640 = vpop.f32.mrb[0].mxu0
        %v4641 = vadd.f32 0.0, %v4640
        %v4642 = vpop.f32.mrb[0].mxu0
        %v4643 = vpop.f32.mrb[0].mxu0
        %v4644 = vadd.f32 0.0, %v4643
        %v4645 = vpop.f32.mrb[0].mxu0
        %4646 = vmatprep.mubr.bf16.mxu0 0
        %4647 = vmatmul.mubr.bf16.gmra.mrb[0].mxu0 %v4094
        %v4648 = vpop.f32.mrb[0].mxu0
        %v4649 = vadd.f32 0.0, %v4648
        %v4650 = vpop.f32.mrb[0].mxu0
        %v4651 = vpop.f32.mrb[0].mxu0
        %v4652 = vadd.f32 0.0, %v4651
        %v4653 = vpop.f32.mrb[0].mxu0
        %4654 = vmatprep.mubr.bf16.mxu0 0
        %4655 = vmatmul.mubr.bf16.gmra.mrb[0].mxu0 %v4097
        %v4656 = vpop.f32.mrb[0].mxu0
        %v4657 = vadd.f32 0.0, %v4656
        %v4658 = vpop.f32.mrb[0].mxu0
        %v4659 = vpop.f32.mrb[0].mxu0
        %v4660 = vadd.f32 0.0, %v4659
        %v4661 = vpop.f32.mrb[0].mxu0
        %4662 = vdwg.mxu0
        %v4663 = vadd.f32 %v4590, %v4633
        %v4664 = vadd.f32 %v4591, %v4636
        %v4665 = vadd.f32 %v4592, %v4641
        %v4666 = vadd.f32 %v4593, %v4644
        %v4667 = vadd.f32 %v4594, %v4649
        %v4668 = vadd.f32 %v4595, %v4652
        %v4669 = vadd.f32 %v4596, %v4657
        %v4670 = vadd.f32 %v4597, %v4660
        %4671 = vmatprep.subr.bf16.mxu0 0
        %4672 = vmatpush1.bf16.msra.mxu0 %v3852
        %4673 = vmatprep.subr.bf16.mxu0 0
        %4674 = vmatpush1.bf16.msra.mxu0 %v3853
        %4675 = vmatprep.subr.bf16.mxu0 0
        %4676 = vmatpush1.bf16.msra.mxu0 0
        %4677 = vmatprep.subr.bf16.mxu0 0
        %4678 = vmatpush1.bf16.msra.mxu0 0
        %4679 = vmatprep.subr.bf16.mxu0 0
        %4680 = vmatpush1.bf16.msra.mxu0 0
        %4681 = vmatprep.subr.bf16.mxu0 0
        %4682 = vmatpush1.bf16.msra.mxu0 0
        %4683 = vmatprep.subr.bf16.mxu0 0
        %4684 = vmatpush1.bf16.msra.mxu0 0
        %4685 = vmatprep.subr.bf16.mxu0 0
        %4686 = vmatpush1.bf16.msra.mxu0 0
        %4687 = vmatprep.subr.bf16.mxu0 0
        %4688 = vmatpush1.bf16.msra.mxu0 0
        %4689 = vmatprep.subr.bf16.mxu0 0
        %4690 = vmatpush1.bf16.msra.mxu0 0
        %4691 = vmatprep.subr.bf16.mxu0 0
        %4692 = vmatpush1.bf16.msra.mxu0 0
        %4693 = vmatprep.subr.bf16.mxu0 0
        %4694 = vmatpush1.bf16.msra.mxu0 0
        %4695 = vmatprep.subr.bf16.mxu0 0
        %4696 = vmatpush1.bf16.msra.mxu0 0
        %4697 = vmatprep.subr.bf16.mxu0 0
        %4698 = vmatpush1.bf16.msra.mxu0 0
        %4699 = vmatprep.subr.bf16.mxu0 0
        %4700 = vmatpush1.bf16.msra.mxu0 0
        %4701 = vmatprep.subr.bf16.mxu0 0
        %4702 = vmatpush1.bf16.msra.mxu0 0
        %4703 = vmatprep.mubr.bf16.mxu0 0
        %4704 = vmatmul.mubr.bf16.gmra.mrb[0].mxu0 %v4202
        %v4705 = vpop.f32.mrb[0].mxu0
        %v4706 = vadd.f32 0.0, %v4705
        %v4707 = vpop.f32.mrb[0].mxu0
        %v4708 = vpop.f32.mrb[0].mxu0
        %v4709 = vadd.f32 0.0, %v4708
        %v4710 = vpop.f32.mrb[0].mxu0
        %4711 = vmatprep.mubr.bf16.mxu0 0
        %4712 = vmatmul.mubr.bf16.gmra.mrb[0].mxu0 %v4205
        %v4713 = vpop.f32.mrb[0].mxu0
        %v4714 = vadd.f32 0.0, %v4713
        %v4715 = vpop.f32.mrb[0].mxu0
        %v4716 = vpop.f32.mrb[0].mxu0
        %v4717 = vadd.f32 0.0, %v4716
        %v4718 = vpop.f32.mrb[0].mxu0
        %4719 = vmatprep.mubr.bf16.mxu0 0
        %4720 = vmatmul.mubr.bf16.gmra.mrb[0].mxu0 %v4208
        %v4721 = vpop.f32.mrb[0].mxu0
        %v4722 = vadd.f32 0.0, %v4721
        %v4723 = vpop.f32.mrb[0].mxu0
        %v4724 = vpop.f32.mrb[0].mxu0
        %v4725 = vadd.f32 0.0, %v4724
        %v4726 = vpop.f32.mrb[0].mxu0
        %4727 = vmatprep.mubr.bf16.mxu0 0
        %4728 = vmatmul.mubr.bf16.gmra.mrb[0].mxu0 %v4211
        %v4729 = vpop.f32.mrb[0].mxu0
        %v4730 = vadd.f32 0.0, %v4729
        %v4731 = vpop.f32.mrb[0].mxu0
        %v4732 = vpop.f32.mrb[0].mxu0
        %v4733 = vadd.f32 0.0, %v4732
        %v4734 = vpop.f32.mrb[0].mxu0
        %4735 = vdwg.mxu0
        %v4736 = vadd.f32 %v4663, %v4706
        %v4737 = vadd.f32 %v4664, %v4709
        %v4738 = vadd.f32 %v4665, %v4714
        %v4739 = vadd.f32 %v4666, %v4717
        %v4740 = vadd.f32 %v4667, %v4722
        %v4741 = vadd.f32 %v4668, %v4725
        %v4742 = vadd.f32 %v4669, %v4730
        %v4743 = vadd.f32 %v4670, %v4733
        %s4744 = sadd.s32 %s3268, 3
        %s4745 = smul.u32 %s4744, 80
        %s4746 = scalar_lea.vmem [#allocation3], %s4745
        %v4747 = vld [vmem:[%s4746 + $0x7] sm:$0xff]
        %v4748 = vld [vmem:[%s4746 + $0xf] sm:$0xff]
        %v4749 = vld [vmem:[%s4746 + $0x17] sm:$0xff]
        %v4750 = vld [vmem:[%s4746 + $0x1f] sm:$0xff]
        %v4751 = vld [vmem:[%s4746 + $0x27] sm:$0xff]
        %v4752 = vld [vmem:[%s4746 + $0x2f] sm:$0xff]
        %v4753 = vld [vmem:[%s4746 + $0x37] sm:$0xff]
        %v4754 = vld [vmem:[%s4746 + $0x3f] sm:$0xff]
        %v4755 = vpack.c.bf16 %v4748, %v4747
        %v4756 = vpack.c.bf16 %v4750, %v4749
        %v4757 = vpack.c.bf16 %v4752, %v4751
        %v4758 = vpack.c.bf16 %v4754, %v4753
        %v4760 = vsel %vm610, %v4755, 0
        %v4763 = vsel %vm610, %v4756, 0
        %v4766 = vsel %vm610, %v4757, 0
        %v4769 = vsel %vm610, %v4758, 0
        %4771 = vmatprep.subr.bf16.mxu0 0
        %4772 = vmatpush1.bf16.msra.mxu0 %v3969
        %4773 = vmatprep.subr.bf16.mxu0 0
        %4774 = vmatpush1.bf16.msra.mxu0 %v3970
        %4775 = vmatprep.subr.bf16.mxu0 0
        %4776 = vmatpush1.bf16.msra.mxu0 0
        %4777 = vmatprep.subr.bf16.mxu0 0
        %4778 = vmatpush1.bf16.msra.mxu0 0
        %4779 = vmatprep.subr.bf16.mxu0 0
        %4780 = vmatpush1.bf16.msra.mxu0 0
        %4781 = vmatprep.subr.bf16.mxu0 0
        %4782 = vmatpush1.bf16.msra.mxu0 0
        %4783 = vmatprep.subr.bf16.mxu0 0
        %4784 = vmatpush1.bf16.msra.mxu0 0
        %4785 = vmatprep.subr.bf16.mxu0 0
        %4786 = vmatpush1.bf16.msra.mxu0 0
        %4787 = vmatprep.subr.bf16.mxu0 0
        %4788 = vmatpush1.bf16.msra.mxu0 0
        %4789 = vmatprep.subr.bf16.mxu0 0
        %4790 = vmatpush1.bf16.msra.mxu0 0
        %4791 = vmatprep.subr.bf16.mxu0 0
        %4792 = vmatpush1.bf16.msra.mxu0 0
        %4793 = vmatprep.subr.bf16.mxu0 0
        %4794 = vmatpush1.bf16.msra.mxu0 0
        %4795 = vmatprep.subr.bf16.mxu0 0
        %4796 = vmatpush1.bf16.msra.mxu0 0
        %4797 = vmatprep.subr.bf16.mxu0 0
        %4798 = vmatpush1.bf16.msra.mxu0 0
        %4799 = vmatprep.subr.bf16.mxu0 0
        %4800 = vmatpush1.bf16.msra.mxu0 0
        %4801 = vmatprep.subr.bf16.mxu0 0
        %4802 = vmatpush1.bf16.msra.mxu0 0
        %4803 = vmatprep.mubr.bf16.mxu0 0
        %4804 = vmatmul.mubr.bf16.gmra.mrb[0].mxu0 %v4760
        %v4805 = vpop.f32.mrb[0].mxu0
        %v4806 = vadd.f32 0.0, %v4805
        %v4807 = vpop.f32.mrb[0].mxu0
        %v4808 = vpop.f32.mrb[0].mxu0
        %v4809 = vadd.f32 0.0, %v4808
        %v4810 = vpop.f32.mrb[0].mxu0
        %4811 = vmatprep.mubr.bf16.mxu0 0
        %4812 = vmatmul.mubr.bf16.gmra.mrb[0].mxu0 %v4763
        %v4813 = vpop.f32.mrb[0].mxu0
        %v4814 = vadd.f32 0.0, %v4813
        %v4815 = vpop.f32.mrb[0].mxu0
        %v4816 = vpop.f32.mrb[0].mxu0
        %v4817 = vadd.f32 0.0, %v4816
        %v4818 = vpop.f32.mrb[0].mxu0
        %4819 = vmatprep.mubr.bf16.mxu0 0
        %4820 = vmatmul.mubr.bf16.gmra.mrb[0].mxu0 %v4766
        %v4821 = vpop.f32.mrb[0].mxu0
        %v4822 = vadd.f32 0.0, %v4821
        %v4823 = vpop.f32.mrb[0].mxu0
        %v4824 = vpop.f32.mrb[0].mxu0
        %v4825 = vadd.f32 0.0, %v4824
        %v4826 = vpop.f32.mrb[0].mxu0
        %4827 = vmatprep.mubr.bf16.mxu0 0
        %4828 = vmatmul.mubr.bf16.gmra.mrb[0].mxu0 %v4769
        %v4829 = vpop.f32.mrb[0].mxu0
        %v4830 = vadd.f32 0.0, %v4829
        %v4831 = vpop.f32.mrb[0].mxu0
        %v4832 = vpop.f32.mrb[0].mxu0
        %v4833 = vadd.f32 0.0, %v4832
        %v4834 = vpop.f32.mrb[0].mxu0
        %4835 = vdwg.mxu0
        %v4836 = vadd.f32 %v4736, %v4806
        %v4837 = vadd.f32 %v4737, %v4809
        %v4838 = vadd.f32 %v4738, %v4814
        %v4839 = vadd.f32 %v4739, %v4817
        %v4840 = vadd.f32 %v4740, %v4822
        %v4841 = vadd.f32 %v4741, %v4825
        %v4842 = vadd.f32 %v4742, %v4830
        %v4843 = vadd.f32 %v4743, %v4833
        %v4844 = vld [vmem:[%s4746 + $0x8] sm:$0xff]
        %v4845 = vld [vmem:[%s4746 + $0x10] sm:$0xff]
        %v4846 = vld [vmem:[%s4746 + $0x18] sm:$0xff]
        %v4847 = vld [vmem:[%s4746 + $0x20] sm:$0xff]
        %v4848 = vld [vmem:[%s4746 + $0x28] sm:$0xff]
        %v4849 = vld [vmem:[%s4746 + $0x30] sm:$0xff]
        %v4850 = vld [vmem:[%s4746 + $0x38] sm:$0xff]
        %v4851 = vld [vmem:[%s4746 + $0x40] sm:$0xff]
        %v4852 = vpack.c.bf16 %v4845, %v4844
        %v4853 = vpack.c.bf16 %v4847, %v4846
        %v4854 = vpack.c.bf16 %v4849, %v4848
        %v4855 = vpack.c.bf16 %v4851, %v4850
        %v4857 = vsel %vm610, %v4852, 0
        %v4860 = vsel %vm610, %v4853, 0
        %v4863 = vsel %vm610, %v4854, 0
        %v4866 = vsel %vm610, %v4855, 0
        %4868 = vmatprep.subr.bf16.mxu0 0
        %4869 = vmatpush1.bf16.msra.mxu0 %v4083
        %4870 = vmatprep.subr.bf16.mxu0 0
        %4871 = vmatpush1.bf16.msra.mxu0 %v4084
        %4872 = vmatprep.subr.bf16.mxu0 0
        %4873 = vmatpush1.bf16.msra.mxu0 0
        %4874 = vmatprep.subr.bf16.mxu0 0
        %4875 = vmatpush1.bf16.msra.mxu0 0
        %4876 = vmatprep.subr.bf16.mxu0 0
        %4877 = vmatpush1.bf16.msra.mxu0 0
        %4878 = vmatprep.subr.bf16.mxu0 0
        %4879 = vmatpush1.bf16.msra.mxu0 0
        %4880 = vmatprep.subr.bf16.mxu0 0
        %4881 = vmatpush1.bf16.msra.mxu0 0
        %4882 = vmatprep.subr.bf16.mxu0 0
        %4883 = vmatpush1.bf16.msra.mxu0 0
        %4884 = vmatprep.subr.bf16.mxu0 0
        %4885 = vmatpush1.bf16.msra.mxu0 0
        %4886 = vmatprep.subr.bf16.mxu0 0
        %4887 = vmatpush1.bf16.msra.mxu0 0
        %4888 = vmatprep.subr.bf16.mxu0 0
        %4889 = vmatpush1.bf16.msra.mxu0 0
        %4890 = vmatprep.subr.bf16.mxu0 0
        %4891 = vmatpush1.bf16.msra.mxu0 0
        %4892 = vmatprep.subr.bf16.mxu0 0
        %4893 = vmatpush1.bf16.msra.mxu0 0
        %4894 = vmatprep.subr.bf16.mxu0 0
        %4895 = vmatpush1.bf16.msra.mxu0 0
        %4896 = vmatprep.subr.bf16.mxu0 0
        %4897 = vmatpush1.bf16.msra.mxu0 0
        %4898 = vmatprep.subr.bf16.mxu0 0
        %4899 = vmatpush1.bf16.msra.mxu0 0
        %4900 = vmatprep.mubr.bf16.mxu0 0
        %4901 = vmatmul.mubr.bf16.gmra.mrb[0].mxu0 %v4857
        %v4902 = vpop.f32.mrb[0].mxu0
        %v4903 = vadd.f32 0.0, %v4902
        %v4904 = vpop.f32.mrb[0].mxu0
        %v4905 = vpop.f32.mrb[0].mxu0
        %v4906 = vadd.f32 0.0, %v4905
        %v4907 = vpop.f32.mrb[0].mxu0
        %4908 = vmatprep.mubr.bf16.mxu0 0
        %4909 = vmatmul.mubr.bf16.gmra.mrb[0].mxu0 %v4860
        %v4910 = vpop.f32.mrb[0].mxu0
        %v4911 = vadd.f32 0.0, %v4910
        %v4912 = vpop.f32.mrb[0].mxu0
        %v4913 = vpop.f32.mrb[0].mxu0
        %v4914 = vadd.f32 0.0, %v4913
        %v4915 = vpop.f32.mrb[0].mxu0
        %4916 = vmatprep.mubr.bf16.mxu0 0
        %4917 = vmatmul.mubr.bf16.gmra.mrb[0].mxu0 %v4863
        %v4918 = vpop.f32.mrb[0].mxu0
        %v4919 = vadd.f32 0.0, %v4918
        %v4920 = vpop.f32.mrb[0].mxu0
        %v4921 = vpop.f32.mrb[0].mxu0
        %v4922 = vadd.f32 0.0, %v4921
        %v4923 = vpop.f32.mrb[0].mxu0
        %4924 = vmatprep.mubr.bf16.mxu0 0
        %4925 = vmatmul.mubr.bf16.gmra.mrb[0].mxu0 %v4866
        %v4926 = vpop.f32.mrb[0].mxu0
        %v4927 = vadd.f32 0.0, %v4926
        %v4928 = vpop.f32.mrb[0].mxu0
        %v4929 = vpop.f32.mrb[0].mxu0
        %v4930 = vadd.f32 0.0, %v4929
        %v4931 = vpop.f32.mrb[0].mxu0
        %4932 = vdwg.mxu0
        %v4933 = vadd.f32 %v4836, %v4903
        %v4934 = vadd.f32 %v4837, %v4906
        %v4935 = vadd.f32 %v4838, %v4911
        %v4936 = vadd.f32 %v4839, %v4914
        %v4937 = vadd.f32 %v4840, %v4919
        %v4938 = vadd.f32 %v4841, %v4922
        %v4939 = vadd.f32 %v4842, %v4927
        %v4940 = vadd.f32 %v4843, %v4930
        %v4941 = vld [vmem:[%s4746 + $0x9] sm:$0xff]
        %v4942 = vld [vmem:[%s4746 + $0x11] sm:$0xff]
        %v4943 = vld [vmem:[%s4746 + $0x19] sm:$0xff]
        %v4944 = vld [vmem:[%s4746 + $0x21] sm:$0xff]
        %v4945 = vld [vmem:[%s4746 + $0x29] sm:$0xff]
        %v4946 = vld [vmem:[%s4746 + $0x31] sm:$0xff]
        %v4947 = vld [vmem:[%s4746 + $0x39] sm:$0xff]
        %v4948 = vld [vmem:[%s4746 + $0x41] sm:$0xff]
        %v4949 = vpack.c.bf16 %v4942, %v4941
        %v4950 = vpack.c.bf16 %v4944, %v4943
        %v4951 = vpack.c.bf16 %v4946, %v4945
        %v4952 = vpack.c.bf16 %v4948, %v4947
        %v4954 = vsel %vm610, %v4949, 0
        %v4957 = vsel %vm610, %v4950, 0
        %v4960 = vsel %vm610, %v4951, 0
        %v4963 = vsel %vm610, %v4952, 0
        %4965 = vmatprep.subr.bf16.mxu0 0
        %4966 = vmatpush1.bf16.msra.mxu0 %v4197
        %4967 = vmatprep.subr.bf16.mxu0 0
        %4968 = vmatpush1.bf16.msra.mxu0 %v4198
        %4969 = vmatprep.subr.bf16.mxu0 0
        %4970 = vmatpush1.bf16.msra.mxu0 0
        %4971 = vmatprep.subr.bf16.mxu0 0
        %4972 = vmatpush1.bf16.msra.mxu0 0
        %4973 = vmatprep.subr.bf16.mxu0 0
        %4974 = vmatpush1.bf16.msra.mxu0 0
        %4975 = vmatprep.subr.bf16.mxu0 0
        %4976 = vmatpush1.bf16.msra.mxu0 0
        %4977 = vmatprep.subr.bf16.mxu0 0
        %4978 = vmatpush1.bf16.msra.mxu0 0
        %4979 = vmatprep.subr.bf16.mxu0 0
        %4980 = vmatpush1.bf16.msra.mxu0 0
        %4981 = vmatprep.subr.bf16.mxu0 0
        %4982 = vmatpush1.bf16.msra.mxu0 0
        %4983 = vmatprep.subr.bf16.mxu0 0
        %4984 = vmatpush1.bf16.msra.mxu0 0
        %4985 = vmatprep.subr.bf16.mxu0 0
        %4986 = vmatpush1.bf16.msra.mxu0 0
        %4987 = vmatprep.subr.bf16.mxu0 0
        %4988 = vmatpush1.bf16.msra.mxu0 0
        %4989 = vmatprep.subr.bf16.mxu0 0
        %4990 = vmatpush1.bf16.msra.mxu0 0
        %4991 = vmatprep.subr.bf16.mxu0 0
        %4992 = vmatpush1.bf16.msra.mxu0 0
        %4993 = vmatprep.subr.bf16.mxu0 0
        %4994 = vmatpush1.bf16.msra.mxu0 0
        %4995 = vmatprep.subr.bf16.mxu0 0
        %4996 = vmatpush1.bf16.msra.mxu0 0
        %4997 = vmatprep.mubr.bf16.mxu0 0
        %4998 = vmatmul.mubr.bf16.gmra.mrb[0].mxu0 %v4954
        %v4999 = vpop.f32.mrb[0].mxu0
        %v5000 = vadd.f32 0.0, %v4999
        %v5001 = vpop.f32.mrb[0].mxu0
        %v5002 = vpop.f32.mrb[0].mxu0
        %v5003 = vadd.f32 0.0, %v5002
        %v5004 = vpop.f32.mrb[0].mxu0
        %5005 = vmatprep.mubr.bf16.mxu0 0
        %5006 = vmatmul.mubr.bf16.gmra.mrb[0].mxu0 %v4957
        %v5007 = vpop.f32.mrb[0].mxu0
        %v5008 = vadd.f32 0.0, %v5007
        %v5009 = vpop.f32.mrb[0].mxu0
        %v5010 = vpop.f32.mrb[0].mxu0
        %v5011 = vadd.f32 0.0, %v5010
        %v5012 = vpop.f32.mrb[0].mxu0
        %5013 = vmatprep.mubr.bf16.mxu0 0
        %5014 = vmatmul.mubr.bf16.gmra.mrb[0].mxu0 %v4960
        %v5015 = vpop.f32.mrb[0].mxu0
        %v5016 = vadd.f32 0.0, %v5015
        %v5017 = vpop.f32.mrb[0].mxu0
        %v5018 = vpop.f32.mrb[0].mxu0
        %v5019 = vadd.f32 0.0, %v5018
        %v5020 = vpop.f32.mrb[0].mxu0
        %5021 = vmatprep.mubr.bf16.mxu0 0
        %5022 = vmatmul.mubr.bf16.gmra.mrb[0].mxu0 %v4963
        %v5023 = vpop.f32.mrb[0].mxu0
        %v5024 = vadd.f32 0.0, %v5023
        %v5025 = vpop.f32.mrb[0].mxu0
        %v5026 = vpop.f32.mrb[0].mxu0
        %v5027 = vadd.f32 0.0, %v5026
        %v5028 = vpop.f32.mrb[0].mxu0
        %5029 = vdwg.mxu0
        %v5030 = vadd.f32 %v4933, %v5000
        %v5031 = vadd.f32 %v4934, %v5003
        %v5032 = vadd.f32 %v4935, %v5008
        %v5033 = vadd.f32 %v4936, %v5011
        %v5034 = vadd.f32 %v4937, %v5016
        %v5035 = vadd.f32 %v4938, %v5019
        %v5036 = vadd.f32 %v4939, %v5024
        %v5037 = vadd.f32 %v4940, %v5027
        %v5038 = vmul.f32 %v5030, %v4290
        %v5039 = vmul.f32 %v5031, %v4290
        %v5040 = vmul.f32 %v5032, %v4290
        %v5041 = vmul.f32 %v5033, %v4290
        %v5042 = vmul.f32 %v5034, %v4290
        %v5043 = vmul.f32 %v5035, %v4290
        %v5044 = vmul.f32 %v5036, %v4290
        %v5045 = vmul.f32 %v5037, %v4290
        %v5046 = vadd.f32 %v5038, %v4304
        %v5047 = vadd.f32 %v5039, %v4304
        %v5048 = vadd.f32 %v5040, %v4304
        %v5049 = vadd.f32 %v5041, %v4304
        %v5050 = vadd.f32 %v5042, %v4304
        %v5051 = vadd.f32 %v5043, %v4304
        %v5052 = vadd.f32 %v5044, %v4304
        %v5053 = vadd.f32 %v5045, %v4304
        %v5054 = vmax.f32 %v5046, 0.0
        %v5055 = vmax.f32 %v5047, 0.0
        %v5056 = vmax.f32 %v5048, 0.0
        %v5057 = vmax.f32 %v5049, 0.0
        %v5058 = vmax.f32 %v5050, 0.0
        %v5059 = vmax.f32 %v5051, 0.0
        %v5060 = vmax.f32 %v5052, 0.0
        %v5061 = vmax.f32 %v5053, 0.0
        %v5062 = vmax.f32 %v4314, %v5054
        %v5063 = vmax.f32 %v4315, %v5055
        %v5064 = vmax.f32 %v4316, %v5056
        %v5065 = vmax.f32 %v4317, %v5057
        %v5066 = vmax.f32 %v4318, %v5058
        %v5067 = vmax.f32 %v4319, %v5059
        %v5068 = vmax.f32 %v4320, %v5060
        %v5069 = vmax.f32 %v4321, %v5061
        %vm5070 = vcmask 523264
        %5071 = vst.msk [vmem:[#allocation5] sm:$0xff] %vm5070, %v5062
        %5072 = vst.msk [vmem:[#allocation5 + $0x8] sm:$0xff] %vm5070, %v5063
        %5073 = vst.msk [vmem:[#allocation5 + $0x10] sm:$0xff] %vm5070, %v5064
        %5074 = vst.msk [vmem:[#allocation5 + $0x18] sm:$0xff] %vm5070, %v5065
        %5075 = vst.msk [vmem:[#allocation5 + $0x20] sm:$0xff] %vm5070, %v5066
        %5076 = vst.msk [vmem:[#allocation5 + $0x28] sm:$0xff] %vm5070, %v5067
        %5077 = vst.msk [vmem:[#allocation5 + $0x30] sm:$0xff] %vm5070, %v5068
        %5078 = vst.msk [vmem:[#allocation5 + $0x38] sm:$0xff] %vm5070, %v5069
        %v5079 = vld [vmem:[#allocation5] ss:$2 sm:$0xff]
        %s5080 = scalar_lea.vmem [#allocation5], 16
        %v5081 = vld [vmem:[%s5080] ss:$2 sm:$0xff]
        %s5082 = scalar_lea.vmem [#allocation5], 32
        %v5083 = vld [vmem:[%s5082] ss:$2 sm:$0xff]
        %s5084 = scalar_lea.vmem [#allocation5], 48
        %v5085 = vld [vmem:[%s5084] ss:$2 sm:$0xff]
        %s5086 = scalar_lea.vmem [#allocation5], 1
        %v5087 = vld [vmem:[%s5086] ss:$2 sm:$0xff]
        %s5088 = scalar_lea.vmem [#allocation5], 17
        %v5089 = vld [vmem:[%s5088] ss:$2 sm:$0xff]
        %s5090 = scalar_lea.vmem [#allocation5], 33
        %v5091 = vld [vmem:[%s5090] ss:$2 sm:$0xff]
        %s5092 = scalar_lea.vmem [#allocation5], 49
        %v5093 = vld [vmem:[%s5092] ss:$2 sm:$0xff]
        %v5094 = vmax.f32 %v5079, %v5087
        %v5095 = vmax.f32 %v5081, %v5089
        %v5096 = vmax.f32 %v5083, %v5091
        %v5097 = vmax.f32 %v5085, %v5093
        %s5098 = smul.u32 %s3263, 32
        %s5099 = scalar_lea.vmem [#allocation6], %s5098
        %5100 = vst.msk [vmem:[%s5099] sm:$0xff] %vm5070, %v5094
        %5101 = vst.msk [vmem:[%s5099 + $0x8] sm:$0xff] %vm5070, %v5095
        %5102 = vst.msk [vmem:[%s5099 + $0x10] sm:$0xff] %vm5070, %v5096
        %5103 = vst.msk [vmem:[%s5099 + $0x18] sm:$0xff] %vm5070, %v5097
      $region60: #{audio_cnn_forward.2} parent=47 // loop_footer
        %s3267 = sadd.s32 1, %s3263
      $region61: #{audio_cnn_forward.2} parent=47 // loop_footer_branch
        %3262 = sbr.rel target = $region57
      $region62: #{audio_cnn_forward.2} parent=47 // loop_exit
        _
      %v5104 = vld [vmem:[#allocation6] sm:$0xff]
      %v5105 = vld [vmem:[#allocation6 + $0x8] sm:$0xff]
      %v5106 = vld [vmem:[#allocation6 + $0x10] sm:$0xff]
      %v5107 = vld [vmem:[#allocation6 + $0x18] sm:$0xff]
      %v5108 = vld [vmem:[#allocation6 + $0x20] sm:$0xff]
      %v5109 = vld [vmem:[#allocation6 + $0x28] sm:$0xff]
      %v5110 = vld [vmem:[#allocation6 + $0x30] sm:$0xff]
      %v5111 = vld [vmem:[#allocation6 + $0x38] sm:$0xff]
      %v5112 = vld [vmem:[#allocation6 + $0x40] sm:$0xff]
      %v5113 = vld [vmem:[#allocation6 + $0x48] sm:$0xff]
      %v5114 = vld [vmem:[#allocation6 + $0x50] sm:$0xff]
      %v5115 = vld [vmem:[#allocation6 + $0x58] sm:$0xff]
      %v5116 = vld [vmem:[#allocation6 + $0x60] sm:$0xff]
      %v5117 = vld [vmem:[#allocation6 + $0x68] sm:$0xff]
      %v5118 = vld [vmem:[#allocation6 + $0x70] sm:$0xff]
      %v5119 = vld [vmem:[#allocation6 + $0x78] sm:$0xff]
      %v5120 = vpack.c.bf16 %v5105, %v5104
      %v5121 = vpack.c.bf16 %v5107, %v5106
      %v5122 = vpack.c.bf16 %v5109, %v5108
      %v5123 = vpack.c.bf16 %v5111, %v5110
      %v5124 = vpack.c.bf16 %v5113, %v5112
      %v5125 = vpack.c.bf16 %v5115, %v5114
      %v5126 = vpack.c.bf16 %v5117, %v5116
      %v5127 = vpack.c.bf16 %v5119, %v5118
      %v5136 = vunpack.c.l.b16 %v5120
      %v5137 = vunpack.c.h.b16 %v5120
      %v5138 = vunpack.c.l.b16 %v5121
      %v5139 = vunpack.c.h.b16 %v5121
      %v5140 = vunpack.c.l.b16 %v5122
      %v5141 = vunpack.c.h.b16 %v5122
      %v5142 = vunpack.c.l.b16 %v5123
      %v5143 = vunpack.c.h.b16 %v5123
      %v5144 = vunpack.c.l.b16 %v5124
      %v5145 = vunpack.c.h.b16 %v5124
      %v5146 = vunpack.c.l.b16 %v5125
      %v5147 = vunpack.c.h.b16 %v5125
      %v5148 = vunpack.c.l.b16 %v5126
      %v5149 = vunpack.c.h.b16 %v5126
      %v5150 = vunpack.c.l.b16 %v5127
      %v5151 = vunpack.c.h.b16 %v5127
      %v5152 = vpack.c.b16 %v5136, %v5136
      %v5153 = vpack.c.b16 %v5137, %v5137
      %v5154 = vpack.c.b16 %v5138, %v5138
      %v5155 = vpack.c.b16 %v5139, %v5139
      %v5156 = vpack.c.b16 %v5140, %v5140
      %v5157 = vpack.c.b16 %v5141, %v5141
      %v5158 = vpack.c.b16 %v5142, %v5142
      %v5159 = vpack.c.b16 %v5143, %v5143
      %v5160 = vpack.c.b16 %v5144, %v5144
      %v5161 = vpack.c.b16 %v5145, %v5145
      %v5162 = vpack.c.b16 %v5146, %v5146
      %v5163 = vpack.c.b16 %v5147, %v5147
      %v5164 = vpack.c.b16 %v5148, %v5148
      %v5165 = vpack.c.b16 %v5149, %v5149
      %v5166 = vpack.c.b16 %v5150, %v5150
      %v5167 = vpack.c.b16 %v5151, %v5151
      %vm5184 = vcmask 519168
      %5185 = vst.msk [vmem:[%s278] sm:$0xf] %vm5184, %v5152
      %5186 = vst.msk [vmem:[%s278 + $0x4] sm:$0xf] %vm5184, %v5153
      %5187 = vst.msk [vmem:[%s278 + $0x8] sm:$0xf] %vm5184, %v5154
      %5188 = vst.msk [vmem:[%s278 + $0xc] sm:$0xf] %vm5184, %v5155
      %5189 = vst.msk [vmem:[%s278 + $0x10] sm:$0xf] %vm5184, %v5156
      %5190 = vst.msk [vmem:[%s278 + $0x14] sm:$0xf] %vm5184, %v5157
      %5191 = vst.msk [vmem:[%s278 + $0x18] sm:$0xf] %vm5184, %v5158
      %5192 = vst.msk [vmem:[%s278 + $0x1c] sm:$0xf] %vm5184, %v5159
      %5193 = vst.msk [vmem:[%s278 + $0x20] sm:$0xf] %vm5184, %v5160
      %5194 = vst.msk [vmem:[%s278 + $0x24] sm:$0xf] %vm5184, %v5161
      %5195 = vst.msk [vmem:[%s278 + $0x28] sm:$0xf] %vm5184, %v5162
      %5196 = vst.msk [vmem:[%s278 + $0x2c] sm:$0xf] %vm5184, %v5163
      %5197 = vst.msk [vmem:[%s278 + $0x30] sm:$0xf] %vm5184, %v5164
      %5198 = vst.msk [vmem:[%s278 + $0x34] sm:$0xf] %vm5184, %v5165
      %5199 = vst.msk [vmem:[%s278 + $0x38] sm:$0xf] %vm5184, %v5166
      %5200 = vst.msk [vmem:[%s278 + $0x3c] sm:$0xf] %vm5184, %v5167
      %p5201 = scmp.lt.s32.totalorder %s18, 1
      %s5202 = scalar_select %p5201, %s18, 1
      %s5203 = smul.addr %s5202, 16
      %s5204 = smul.addr %s5203, 4
      %s5205 = scalar_lea.vmem %s7, %s5204
      // Predicated region
      $region63: #{audio_cnn_forward.2} parent=47 // pred_check
        %p5206 = pneg %p188
      $region64: #{audio_cnn_forward.2} parent=47 // pred_check_branch
        %5208 = sbr.rel (%p5206) target = $region66
      $region65: #{audio_cnn_forward.2} parent=47 // pred_region
        _
      $region66: #{audio_cnn_forward.2} parent=47 // pred_fallthru
        _
    $region48: #{audio_cnn_forward.2} parent=5 // pred_fallthru
      _
    %p5209 = scmp.le.s32.totalorder 2, %s13
    // Predicated region
    $region67: #{audio_cnn_forward.2} parent=5 // pred_check
      %p5210 = pneg %p5209
    $region68: #{audio_cnn_forward.2} parent=5 // pred_check_branch
      %5212 = sbr.rel (%p5210) target = $region70
    $region69: #{audio_cnn_forward.2} parent=5 // pred_region
      %s5213 = ssub.s32 %s13, 2
      // Predicated region
      $region71: #{audio_cnn_forward.2} parent=69 // pred_check
        %p5214 = pneg %p194
      $region72: #{audio_cnn_forward.2} parent=69 // pred_check_branch
        %5216 = sbr.rel (%p5214) target = $region74
      $region73: #{audio_cnn_forward.2} parent=69 // pred_region
        %p5217 = scmp.lt.s32.totalorder %s19, 1
        %s5218 = scalar_select %p5217, %s19, 1
        %s5219 = smul.addr %s5218, 16
        %s5220 = smul.addr %s5219, 4
        %s5221 = scalar_lea.vmem %s7, %s5220
      $region74: #{audio_cnn_forward.2} parent=69 // pred_fallthru
        _
    $region70: #{audio_cnn_forward.2} parent=5 // pred_fallthru
      _
  $region6: #{audio_cnn_forward.2} parent=0 // loop_footer
    %s17 = sadd.s32 1, %s13
  $region7: #{audio_cnn_forward.2} parent=0 // loop_footer_branch
    %12 = sbr.rel target = $region3
  $region8: #{audio_cnn_forward.2} parent=0 // loop_exit
    _

</llo_original>
